<compile_context>
chip_gen: v7x
topology: tpu7x:2x2x1
jax: 0.10.0
libtpu: 0.0.40
codegen_flags: <defaults>
</compile_context>

<pallas_src>
import jax
import jax.numpy as jnp
from jax.experimental import pallas as pl
from jax.experimental.pallas import tpu as pltpu


# ----------------------------------------------------------------------------
# Fully fused kernel: `block_b` batch elements per grid step.
# ----------------------------------------------------------------------------
def _fused_kernel(gammas_ref, x_ref,
                  w1_ref, s1_ref, h1_ref, wq1_ref, bq1_ref,
                  w2_ref, s2_ref, h2_ref, wq2_ref, bq2_ref,
                  w3_ref, s3_ref, h3_ref, wq3_ref, bq3_ref,
                  wf_ref, sf_ref, hf_ref,
                  o_ref):
    f32 = jnp.float32
    bf16 = jnp.bfloat16
    bt, n, cin = x_ref.shape
    SEG = 128                      # lane-aligned QKV segment width

    def cbr(xv, w_ref, sc_ref, sh_ref):
        # 1x1 conv (conv-bias/BN folded into scale/shift) + ReLU.
        y = jnp.dot(xv.astype(bf16), w_ref[...], preferred_element_type=f32)
        return jnp.maximum(y * sc_ref[...] + sh_ref[...], 0.0)

    def attn(xv, wq_ref, bq_ref, gamma):
        # Fused QKV projection; each of Wf|Wg|Wh starts at a 128-lane boundary,
        # so the slices below are lane-aligned free static views.
        qkv = jnp.dot(xv.astype(bf16), wq_ref[...],
                      preferred_element_type=f32) + bq_ref[...]   # (bt*n, 3*SEG)
        f = qkv[:, 0 * SEG:1 * SEG].reshape(bt, n, SEG)
        g = qkv[:, 1 * SEG:2 * SEG].reshape(bt, n, SEG)
        h = qkv[:, 2 * SEG:3 * SEG].reshape(bt, n, SEG)
        # TODO(synk): for large N (H*W) switch to flash-style KV tiling so the
        # (n, n) f32 softmax temporaries never materialize (v7x: 64 MiB VMEM).
        s = jnp.einsum('bnd,bmd->bnm', f.astype(bf16), g.astype(bf16),
                       preferred_element_type=f32)                # (bt, n, n)
        s = s - jnp.max(s, axis=-1, keepdims=True)
        p = jnp.exp(s)
        beta = p * pl.reciprocal(jnp.sum(p, axis=-1, keepdims=True), approx=True)
        o = jnp.einsum('bnm,bmd->bnd', beta.astype(bf16), h.astype(bf16),
                       preferred_element_type=f32)                # (bt, n, SEG)
        return gamma * o.reshape(bt * n, SEG) + xv

    x0 = x_ref[...].reshape(bt * n, cin)                          # bf16

    x1 = attn(cbr(x0, w1_ref, s1_ref, h1_ref), wq1_ref, bq1_ref, gammas_ref[0])
    x2 = attn(cbr(x1, w2_ref, s2_ref, h2_ref), wq2_ref, bq2_ref, gammas_ref[1])
    x3 = attn(cbr(x2, w3_ref, s3_ref, h3_ref), wq3_ref, bq3_ref, gammas_ref[2])

    # Final 1x1 conv (no bias) + BN + ReLU.
    y = jnp.maximum(jnp.dot(x3.astype(bf16), wf_ref[...],
                            preferred_element_type=f32)
                    * sf_ref[...] + hf_ref[...], 0.0)             # (bt*n, 512)

    # Global average pool as a single MXU matmul against a constant 1/n row
    # (keeps the epilogue off the VPU/XLU sublane-reduce path).
    cout = y.shape[-1]
    ones_row = jnp.full((bt, 1, n), 1.0 / n, dtype=bf16)
    gap = jnp.einsum('bkn,bnd->bkd', ones_row,
                     y.reshape(bt, n, cout).astype(bf16),
                     preferred_element_type=f32)                  # (bt, 1, 512)
    o_ref[...] = gap


# ----------------------------------------------------------------------------
# Wrapper: layout padding + pallas_call.
# ----------------------------------------------------------------------------
def attention_block_forward(x_nchw, params, *, block_b=None):
    B, C, H, W = x_nchw.shape
    N = H * W
    CP = 128      # padded channel width for every intermediate stage
    SEG = 128     # lane-aligned QKV segment width

    # Channels-last, flattened spatial, bf16 (first matmul consumes bf16).
    x = jnp.transpose(x_nchw, (0, 2, 3, 1)).reshape(B, N, C).astype(jnp.bfloat16)

    p = params
    to_bf16 = lambda a: a.astype(jnp.bfloat16)

    def pad2d(a, rows, cols):
        out = jnp.zeros((rows, cols), jnp.float32)
        return out.at[:a.shape[0], :a.shape[1]].set(a.astype(jnp.float32))

    def pad_qkv(ap, c):
        # [ Wf | pad->128 | Wg | pad->128 | Wh | pad->128 ], rows padded to CP.
        c8 = c // 8
        wq = jnp.zeros((CP, 3 * SEG), jnp.float32)
        wq = wq.at[:c, 0:c8].set(ap["wf"])
        wq = wq.at[:c, SEG:SEG + c8].set(ap["wg"])
        wq = wq.at[:c, 2 * SEG:2 * SEG + c].set(ap["wh"])
        bq = jnp.zeros((1, 3 * SEG), jnp.float32)
        bq = bq.at[:, 0:c8].set(ap["bf"])
        bq = bq.at[:, SEG:SEG + c8].set(ap["bg"])
        bq = bq.at[:, 2 * SEG:2 * SEG + c].set(ap["bh"])
        return to_bf16(wq), bq

    gammas = jnp.stack([p["attn1"]["gamma"],
                        p["attn2"]["gamma"],
                        p["attn3"]["gamma"]]).astype(jnp.float32)   # (3,) SMEM

    wq1, bq1 = pad_qkv(p["attn1"], 32)
    wq2, bq2 = pad_qkv(p["attn2"], 64)
    wq3, bq3 = pad_qkv(p["attn3"], 96)

    args = [
        gammas, x,
        to_bf16(pad2d(p["w1"], C, CP)),  pad2d(p["sc1"], 1, CP), pad2d(p["sh1"], 1, CP), wq1, bq1,
        to_bf16(pad2d(p["w2"], CP, CP)), pad2d(p["sc2"], 1, CP), pad2d(p["sh2"], 1, CP), wq2, bq2,
        to_bf16(pad2d(p["w3"], CP, CP)), pad2d(p["sc3"], 1, CP), pad2d(p["sh3"], 1, CP), wq3, bq3,
        to_bf16(pad2d(p["wfinal"], CP, 512)), p["scf"], p["shf"],
    ]

    # Pick batch-block size: amortize per-step overhead, but keep >= 2 grid
    # steps so both v7x TensorCores stay busy, and keep softmax temporaries
    # within a conservative VMEM budget.
    if block_b is None:
        per_b = 3 * N * N * 4 + 16 * N * CP          # dominant VMEM per element
        max_bt = max(1, (24 * 1024 * 1024) // per_b)
        divisors = [d for d in range(1, B + 1) if B % d == 0 and d <= max_bt]
        pref = [d for d in divisors if B // d >= 2]
        block_b = max(pref) if pref else (max(divisors) if divisors else 1)
    grid_b = B // block_b

    def full_spec(a):
        nd = a.ndim
        return pl.BlockSpec(a.shape, lambda b, _nd=nd: (0,) * _nd)

    in_specs = [
        pl.BlockSpec(memory_space=pltpu.MemorySpace.SMEM),          # gammas
        pl.BlockSpec((block_b, N, C), lambda b: (b, 0, 0)),         # x
    ] + [full_spec(a) for a in args[2:]]

    Cout = p["wfinal"].shape[1]
    out = pl.pallas_call(
        _fused_kernel,
        out_shape=jax.ShapeDtypeStruct((B, 1, Cout), jnp.float32),
        grid=(grid_b,),
        in_specs=in_specs,
        out_specs=pl.BlockSpec((block_b, 1, Cout), lambda b: (b, 0, 0)),
        compiler_params=pltpu.CompilerParams(
            dimension_semantics=("parallel",),
            # 48 MiB: below v7x's 64 MiB physical VMEM, ample on v5e/v6e.
            vmem_limit_bytes=48 * 1024 * 1024),
    )(*args)
    return out.reshape(B, Cout)


# ----------------------------------------------------------------------------
# Parameter setup (deterministic, synthetic)
# ----------------------------------------------------------------------------
def _fold_bn(conv_bias, bn_gamma, bn_beta, bn_mean, bn_var, eps=1e-5):
    inv = bn_gamma / jnp.sqrt(bn_var + eps)
    scale = inv
    shift = (conv_bias - bn_mean) * inv + bn_beta
    return scale[None, :].astype(jnp.float32), shift[None, :].astype(jnp.float32)


def init_params(key, input_channels):
    ks = iter(jax.random.split(key, 40))

    def w(shape, s=0.1):
        return (s * jax.random.normal(next(ks), shape)).astype(jnp.float32)

    def bn_fold(conv_bias, c):
        # fresh BatchNorm2d: weight=1, bias=0, running_mean=0, running_var=1
        return _fold_bn(conv_bias, jnp.ones((c,)), jnp.zeros((c,)),
                        jnp.zeros((c,)), jnp.ones((c,)))

    def attn_params(c):
        c8 = c // 8
        return dict(
            wf=w((c, c8)), bf=w((1, c8), 0.02),
            wg=w((c, c8)), bg=w((1, c8), 0.02),
            wh=w((c, c)),  bh=w((1, c), 0.02),
            # NOTE: the PyTorch module initializes gamma to 0 (torch.zeros(1));
            # use a nonzero value here so the attention branch is actually
            # exercised by the correctness check (forward holds for any gamma).
            gamma=jnp.asarray(0.1, jnp.float32),
        )

    p = {}
    # stage 1: Cin -> 32
    p["w1"] = w((input_channels, 32)); b1 = w((32,), 0.02)
    p["sc1"], p["sh1"] = bn_fold(b1, 32)
    p["attn1"] = attn_params(32)
    # stage 2: 32 -> 64
    p["w2"] = w((32, 64)); b2 = w((64,), 0.02)
    p["sc2"], p["sh2"] = bn_fold(b2, 64)
    p["attn2"] = attn_params(64)
    # stage 3: 64 -> 96
    p["w3"] = w((64, 96)); b3 = w((96,), 0.02)
    p["sc3"], p["sh3"] = bn_fold(b3, 96)
    p["attn3"] = attn_params(96)
    # final: 96 -> 512, conv has no bias
    p["wfinal"] = w((96, 512))
    p["scf"], p["shf"] = bn_fold(jnp.zeros((512,)), 512)
    return p


# Pure-JAX reference (unpadded weights, f32 HIGHEST precision).
def reference_forward(x_nchw, params):
    B, C, H, W = x_nchw.shape
    hp = jax.lax.Precision.HIGHEST
    x = jnp.transpose(x_nchw, (0, 2, 3, 1)).reshape(B, H * W, C).astype(jnp.float32)

    def cbr(x, w, sc, sh):
        return jnp.maximum(jnp.einsum("bnc,cd->bnd", x, w, precision=hp) * sc + sh, 0.0)

    def attn(x, ap):
        f = jnp.einsum("bnc,cd->bnd", x, ap["wf"], precision=hp) + ap["bf"]
        g = jnp.einsum("bnc,cd->bnd", x, ap["wg"], precision=hp) + ap["bg"]
        h = jnp.einsum("bnc,cd->bnd", x, ap["wh"], precision=hp) + ap["bh"]
        s = jnp.einsum("bnd,bmd->bnm", f, g, precision=hp)
        beta = jax.nn.softmax(s, axis=-1)
        o = jnp.einsum("bnm,bmc->bnc", beta, h, precision=hp)
        return ap["gamma"] * o + x

    x1 = attn(cbr(x, params["w1"], params["sc1"], params["sh1"]), params["attn1"])
    x2 = attn(cbr(x1, params["w2"], params["sc2"], params["sh2"]), params["attn2"])
    x3 = attn(cbr(x2, params["w3"], params["sc3"], params["sh3"]), params["attn3"])
    y = jnp.maximum(jnp.einsum("bnc,cd->bnd", x3, params["wfinal"], precision=hp)
                    * params["scf"] + params["shf"], 0.0)
    return jnp.mean(y, axis=1)


if __name__ == "__main__":
    key = jax.random.PRNGKey(0)
    k_x, k_p = jax.random.split(key)

    B, C_in, H, W = 2, 4, 16, 16
    x = jax.random.normal(k_x, (B, C_in, H, W), dtype=jnp.float32)
    params = init_params(k_p, C_in)

    out = attention_block_forward(x, params)
    out = jax.block_until_ready(out)

    ref = reference_forward(x, params)
    assert out.shape == (B, 512), out.shape
    assert bool(jnp.all(jnp.isfinite(out)))
    assert bool(jnp.allclose(out, ref, rtol=1e-2, atol=1e-2)), \
        float(jnp.max(jnp.abs(out - ref)))

    print("KERNEL_OK")
</pallas_src>

<mosaic_0001>
module attributes {stable_mosaic.version = 11 : i64} {
  func.func @_fused_kernel(%arg0: i32, %arg1: memref<3xf32, #tpu.memory_space<smem>>, %arg2: memref<1x256x4xbf16, #tpu.memory_space<vmem>>, %arg3: memref<4x128xbf16, #tpu.memory_space<vmem>>, %arg4: memref<1x128xf32, #tpu.memory_space<vmem>>, %arg5: memref<1x128xf32, #tpu.memory_space<vmem>>, %arg6: memref<128x384xbf16, #tpu.memory_space<vmem>>, %arg7: memref<1x384xf32, #tpu.memory_space<vmem>>, %arg8: memref<128x128xbf16, #tpu.memory_space<vmem>>, %arg9: memref<1x128xf32, #tpu.memory_space<vmem>>, %arg10: memref<1x128xf32, #tpu.memory_space<vmem>>, %arg11: memref<128x384xbf16, #tpu.memory_space<vmem>>, %arg12: memref<1x384xf32, #tpu.memory_space<vmem>>, %arg13: memref<128x128xbf16, #tpu.memory_space<vmem>>, %arg14: memref<1x128xf32, #tpu.memory_space<vmem>>, %arg15: memref<1x128xf32, #tpu.memory_space<vmem>>, %arg16: memref<128x384xbf16, #tpu.memory_space<vmem>>, %arg17: memref<1x384xf32, #tpu.memory_space<vmem>>, %arg18: memref<128x512xbf16, #tpu.memory_space<vmem>>, %arg19: memref<1x512xf32, #tpu.memory_space<vmem>>, %arg20: memref<1x512xf32, #tpu.memory_space<vmem>>, %arg21: memref<1x1x512xf32, #tpu.memory_space<vmem>>) attributes {dimension_semantics = [#tpu.dimension_semantics<parallel>], iteration_bounds = array<i64: 2>, scalar_prefetch = 0 : i64, scratch_operands = 0 : i64, tpu.core_type = #tpu.core_type<tc>, window_params = [{transform_indices = @transform_0, window_bounds = array<i64: 3>}, {transform_indices = @transform_1, window_bounds = array<i64: 1, 256, 4>}, {pipeline_mode = #tpu.pipeline_mode<synchronous>, transform_indices = @transform_2, window_bounds = array<i64: 4, 128>}, {pipeline_mode = #tpu.pipeline_mode<synchronous>, transform_indices = @transform_3, window_bounds = array<i64: 1, 128>}, {pipeline_mode = #tpu.pipeline_mode<synchronous>, transform_indices = @transform_4, window_bounds = array<i64: 1, 128>}, {pipeline_mode = #tpu.pipeline_mode<synchronous>, transform_indices = @transform_5, window_bounds = array<i64: 128, 384>}, {pipeline_mode = #tpu.pipeline_mode<synchronous>, transform_indices = @transform_6, window_bounds = array<i64: 1, 384>}, {pipeline_mode = #tpu.pipeline_mode<synchronous>, transform_indices = @transform_7, window_bounds = array<i64: 128, 128>}, {pipeline_mode = #tpu.pipeline_mode<synchronous>, transform_indices = @transform_8, window_bounds = array<i64: 1, 128>}, {pipeline_mode = #tpu.pipeline_mode<synchronous>, transform_indices = @transform_9, window_bounds = array<i64: 1, 128>}, {pipeline_mode = #tpu.pipeline_mode<synchronous>, transform_indices = @transform_10, window_bounds = array<i64: 128, 384>}, {pipeline_mode = #tpu.pipeline_mode<synchronous>, transform_indices = @transform_11, window_bounds = array<i64: 1, 384>}, {pipeline_mode = #tpu.pipeline_mode<synchronous>, transform_indices = @transform_12, window_bounds = array<i64: 128, 128>}, {pipeline_mode = #tpu.pipeline_mode<synchronous>, transform_indices = @transform_13, window_bounds = array<i64: 1, 128>}, {pipeline_mode = #tpu.pipeline_mode<synchronous>, transform_indices = @transform_14, window_bounds = array<i64: 1, 128>}, {pipeline_mode = #tpu.pipeline_mode<synchronous>, transform_indices = @transform_15, window_bounds = array<i64: 128, 384>}, {pipeline_mode = #tpu.pipeline_mode<synchronous>, transform_indices = @transform_16, window_bounds = array<i64: 1, 384>}, {pipeline_mode = #tpu.pipeline_mode<synchronous>, transform_indices = @transform_17, window_bounds = array<i64: 128, 512>}, {pipeline_mode = #tpu.pipeline_mode<synchronous>, transform_indices = @transform_18, window_bounds = array<i64: 1, 512>}, {pipeline_mode = #tpu.pipeline_mode<synchronous>, transform_indices = @transform_19, window_bounds = array<i64: 1, 512>}, {transform_indices = @transform_20, window_bounds = array<i64: 1, 1, 512>}]} {
    %c0 = arith.constant 0 : index
    %c0_0 = arith.constant 0 : index
    %c0_1 = arith.constant 0 : index
    %0 = vector.load %arg2[%c0, %c0_0, %c0_1] : memref<1x256x4xbf16, #tpu.memory_space<vmem>>, vector<1x256x4xbf16>
    %1 = vector.shape_cast %0 : vector<1x256x4xbf16> to vector<256x4xbf16>
    %c0_2 = arith.constant 0 : index
    %c0_3 = arith.constant 0 : index
    %2 = vector.load %arg3[%c0_2, %c0_3] : memref<4x128xbf16, #tpu.memory_space<vmem>>, vector<4x128xbf16>
    %cst = arith.constant dense<0.000000e+00> : vector<256x128xf32>
    %3 = tpu.matmul %1, %2, %cst {dimension_numbers = #tpu.dot_dimension_numbers<[1], [0], [0], [1], [0, 0, 1, 1], [], []>} : vector<256x4xbf16>, vector<4x128xbf16>, vector<256x128xf32> -> vector<256x128xf32>
    %c0_4 = arith.constant 0 : index
    %c0_5 = arith.constant 0 : index
    %4 = vector.load %arg4[%c0_4, %c0_5] : memref<1x128xf32, #tpu.memory_space<vmem>>, vector<1x128xf32>
    %5 = vector.broadcast %4 : vector<1x128xf32> to vector<256x128xf32>
    %6 = arith.mulf %3, %5 : vector<256x128xf32>
    %c0_6 = arith.constant 0 : index
    %c0_7 = arith.constant 0 : index
    %7 = vector.load %arg5[%c0_6, %c0_7] : memref<1x128xf32, #tpu.memory_space<vmem>>, vector<1x128xf32>
    %8 = vector.broadcast %7 : vector<1x128xf32> to vector<256x128xf32>
    %9 = arith.addf %6, %8 : vector<256x128xf32>
    %cst_8 = arith.constant 0.000000e+00 : f32
    %10 = vector.broadcast %cst_8 : f32 to vector<256x128xf32>
    %11 = arith.maximumf %9, %10 : vector<256x128xf32>
    %c0_9 = arith.constant 0 : index
    %12 = memref.load %arg1[%c0_9] : memref<3xf32, #tpu.memory_space<smem>>
    %13 = arith.truncf %11 : vector<256x128xf32> to vector<256x128xbf16>
    %c0_10 = arith.constant 0 : index
    %c0_11 = arith.constant 0 : index
    %14 = vector.load %arg6[%c0_10, %c0_11] : memref<128x384xbf16, #tpu.memory_space<vmem>>, vector<128x384xbf16>
    %cst_12 = arith.constant dense<0.000000e+00> : vector<256x384xf32>
    %15 = tpu.matmul %13, %14, %cst_12 {dimension_numbers = #tpu.dot_dimension_numbers<[1], [0], [0], [1], [0, 0, 1, 1], [], []>} : vector<256x128xbf16>, vector<128x384xbf16>, vector<256x384xf32> -> vector<256x384xf32>
    %c0_13 = arith.constant 0 : index
    %c0_14 = arith.constant 0 : index
    %16 = vector.load %arg7[%c0_13, %c0_14] : memref<1x384xf32, #tpu.memory_space<vmem>>, vector<1x384xf32>
    %17 = vector.broadcast %16 : vector<1x384xf32> to vector<256x384xf32>
    %18 = arith.addf %15, %17 : vector<256x384xf32>
    %19 = vector.extract_strided_slice %18 {offsets = [0, 0], sizes = [256, 128], strides = [1, 1]} : vector<256x384xf32> to vector<256x128xf32>
    %20 = vector.shape_cast %19 : vector<256x128xf32> to vector<1x256x128xf32>
    %21 = vector.extract_strided_slice %18 {offsets = [0, 128], sizes = [256, 128], strides = [1, 1]} : vector<256x384xf32> to vector<256x128xf32>
    %22 = vector.shape_cast %21 : vector<256x128xf32> to vector<1x256x128xf32>
    %23 = vector.extract_strided_slice %18 {offsets = [0, 256], sizes = [256, 128], strides = [1, 1]} : vector<256x384xf32> to vector<256x128xf32>
    %24 = vector.shape_cast %23 : vector<256x128xf32> to vector<1x256x128xf32>
    %25 = arith.truncf %20 : vector<1x256x128xf32> to vector<1x256x128xbf16>
    %26 = arith.truncf %22 : vector<1x256x128xf32> to vector<1x256x128xbf16>
    "tpu.trace_start"() <{level = 10 : i32, message = "bnd,bmd->bnm"}> : () -> ()
    %cst_15 = arith.constant dense<0.000000e+00> : vector<1x256x256xf32>
    %27 = tpu.matmul %25, %26, %cst_15 {dimension_numbers = #tpu.dot_dimension_numbers<[2], [2], [1], [1], [0, 0, 0, 1, 1, 1], [0], [0]>} : vector<1x256x128xbf16>, vector<1x256x128xbf16>, vector<1x256x256xf32> -> vector<1x256x256xf32>
    "tpu.trace_stop"() : () -> ()
    %cst_16 = arith.constant dense<0xFF800000> : vector<1x256xf32>
    %28 = vector.multi_reduction <maximumf>, %27, %cst_16 [2] : vector<1x256x256xf32> to vector<1x256xf32>
    %29 = vector.shape_cast %28 : vector<1x256xf32> to vector<1x256x1xf32>
    %30 = vector.broadcast %29 : vector<1x256x1xf32> to vector<1x256x256xf32>
    %31 = arith.subf %27, %30 : vector<1x256x256xf32>
    %32 = math.exp %31 : vector<1x256x256xf32>
    %cst_17 = arith.constant dense<0.000000e+00> : vector<1x256xf32>
    %33 = vector.multi_reduction <add>, %32, %cst_17 [2] : vector<1x256x256xf32> to vector<1x256xf32>
    %34 = vector.shape_cast %33 : vector<1x256xf32> to vector<1x256x1xf32>
    %35 = tpu.reciprocal %34 {approx = true} : vector<1x256x1xf32> -> vector<1x256x1xf32>
    %36 = vector.broadcast %35 : vector<1x256x1xf32> to vector<1x256x256xf32>
    %37 = arith.mulf %32, %36 : vector<1x256x256xf32>
    %38 = arith.truncf %37 : vector<1x256x256xf32> to vector<1x256x256xbf16>
    %39 = arith.truncf %24 : vector<1x256x128xf32> to vector<1x256x128xbf16>
    "tpu.trace_start"() <{level = 10 : i32, message = "bnm,bmd->bnd"}> : () -> ()
    %cst_18 = arith.constant dense<0.000000e+00> : vector<1x256x128xf32>
    %40 = tpu.matmul %38, %39, %cst_18 {dimension_numbers = #tpu.dot_dimension_numbers<[2], [1], [1], [2], [0, 0, 0, 1, 1, 2], [0], [0]>} : vector<1x256x256xbf16>, vector<1x256x128xbf16>, vector<1x256x128xf32> -> vector<1x256x128xf32>
    "tpu.trace_stop"() : () -> ()
    %41 = vector.shape_cast %40 : vector<1x256x128xf32> to vector<256x128xf32>
    %42 = vector.broadcast %12 : f32 to vector<256x128xf32>
    %43 = arith.mulf %42, %41 : vector<256x128xf32>
    %44 = arith.addf %43, %11 : vector<256x128xf32>
    %45 = arith.truncf %44 : vector<256x128xf32> to vector<256x128xbf16>
    %c0_19 = arith.constant 0 : index
    %c0_20 = arith.constant 0 : index
    %46 = vector.load %arg8[%c0_19, %c0_20] : memref<128x128xbf16, #tpu.memory_space<vmem>>, vector<128x128xbf16>
    %cst_21 = arith.constant dense<0.000000e+00> : vector<256x128xf32>
    %47 = tpu.matmul %45, %46, %cst_21 {dimension_numbers = #tpu.dot_dimension_numbers<[1], [0], [0], [1], [0, 0, 1, 1], [], []>} : vector<256x128xbf16>, vector<128x128xbf16>, vector<256x128xf32> -> vector<256x128xf32>
    %c0_22 = arith.constant 0 : index
    %c0_23 = arith.constant 0 : index
    %48 = vector.load %arg9[%c0_22, %c0_23] : memref<1x128xf32, #tpu.memory_space<vmem>>, vector<1x128xf32>
    %49 = vector.broadcast %48 : vector<1x128xf32> to vector<256x128xf32>
    %50 = arith.mulf %47, %49 : vector<256x128xf32>
    %c0_24 = arith.constant 0 : index
    %c0_25 = arith.constant 0 : index
    %51 = vector.load %arg10[%c0_24, %c0_25] : memref<1x128xf32, #tpu.memory_space<vmem>>, vector<1x128xf32>
    %52 = vector.broadcast %51 : vector<1x128xf32> to vector<256x128xf32>
    %53 = arith.addf %50, %52 : vector<256x128xf32>
    %cst_26 = arith.constant 0.000000e+00 : f32
    %54 = vector.broadcast %cst_26 : f32 to vector<256x128xf32>
    %55 = arith.maximumf %53, %54 : vector<256x128xf32>
    %c1 = arith.constant 1 : index
    %56 = memref.load %arg1[%c1] : memref<3xf32, #tpu.memory_space<smem>>
    %57 = arith.truncf %55 : vector<256x128xf32> to vector<256x128xbf16>
    %c0_27 = arith.constant 0 : index
    %c0_28 = arith.constant 0 : index
    %58 = vector.load %arg11[%c0_27, %c0_28] : memref<128x384xbf16, #tpu.memory_space<vmem>>, vector<128x384xbf16>
    %cst_29 = arith.constant dense<0.000000e+00> : vector<256x384xf32>
    %59 = tpu.matmul %57, %58, %cst_29 {dimension_numbers = #tpu.dot_dimension_numbers<[1], [0], [0], [1], [0, 0, 1, 1], [], []>} : vector<256x128xbf16>, vector<128x384xbf16>, vector<256x384xf32> -> vector<256x384xf32>
    %c0_30 = arith.constant 0 : index
    %c0_31 = arith.constant 0 : index
    %60 = vector.load %arg12[%c0_30, %c0_31] : memref<1x384xf32, #tpu.memory_space<vmem>>, vector<1x384xf32>
    %61 = vector.broadcast %60 : vector<1x384xf32> to vector<256x384xf32>
    %62 = arith.addf %59, %61 : vector<256x384xf32>
    %63 = vector.extract_strided_slice %62 {offsets = [0, 0], sizes = [256, 128], strides = [1, 1]} : vector<256x384xf32> to vector<256x128xf32>
    %64 = vector.shape_cast %63 : vector<256x128xf32> to vector<1x256x128xf32>
    %65 = vector.extract_strided_slice %62 {offsets = [0, 128], sizes = [256, 128], strides = [1, 1]} : vector<256x384xf32> to vector<256x128xf32>
    %66 = vector.shape_cast %65 : vector<256x128xf32> to vector<1x256x128xf32>
    %67 = vector.extract_strided_slice %62 {offsets = [0, 256], sizes = [256, 128], strides = [1, 1]} : vector<256x384xf32> to vector<256x128xf32>
    %68 = vector.shape_cast %67 : vector<256x128xf32> to vector<1x256x128xf32>
    %69 = arith.truncf %64 : vector<1x256x128xf32> to vector<1x256x128xbf16>
    %70 = arith.truncf %66 : vector<1x256x128xf32> to vector<1x256x128xbf16>
    "tpu.trace_start"() <{level = 10 : i32, message = "bnd,bmd->bnm"}> : () -> ()
    %cst_32 = arith.constant dense<0.000000e+00> : vector<1x256x256xf32>
    %71 = tpu.matmul %69, %70, %cst_32 {dimension_numbers = #tpu.dot_dimension_numbers<[2], [2], [1], [1], [0, 0, 0, 1, 1, 1], [0], [0]>} : vector<1x256x128xbf16>, vector<1x256x128xbf16>, vector<1x256x256xf32> -> vector<1x256x256xf32>
    "tpu.trace_stop"() : () -> ()
    %cst_33 = arith.constant dense<0xFF800000> : vector<1x256xf32>
    %72 = vector.multi_reduction <maximumf>, %71, %cst_33 [2] : vector<1x256x256xf32> to vector<1x256xf32>
    %73 = vector.shape_cast %72 : vector<1x256xf32> to vector<1x256x1xf32>
    %74 = vector.broadcast %73 : vector<1x256x1xf32> to vector<1x256x256xf32>
    %75 = arith.subf %71, %74 : vector<1x256x256xf32>
    %76 = math.exp %75 : vector<1x256x256xf32>
    %cst_34 = arith.constant dense<0.000000e+00> : vector<1x256xf32>
    %77 = vector.multi_reduction <add>, %76, %cst_34 [2] : vector<1x256x256xf32> to vector<1x256xf32>
    %78 = vector.shape_cast %77 : vector<1x256xf32> to vector<1x256x1xf32>
    %79 = tpu.reciprocal %78 {approx = true} : vector<1x256x1xf32> -> vector<1x256x1xf32>
    %80 = vector.broadcast %79 : vector<1x256x1xf32> to vector<1x256x256xf32>
    %81 = arith.mulf %76, %80 : vector<1x256x256xf32>
    %82 = arith.truncf %81 : vector<1x256x256xf32> to vector<1x256x256xbf16>
    %83 = arith.truncf %68 : vector<1x256x128xf32> to vector<1x256x128xbf16>
    "tpu.trace_start"() <{level = 10 : i32, message = "bnm,bmd->bnd"}> : () -> ()
    %cst_35 = arith.constant dense<0.000000e+00> : vector<1x256x128xf32>
    %84 = tpu.matmul %82, %83, %cst_35 {dimension_numbers = #tpu.dot_dimension_numbers<[2], [1], [1], [2], [0, 0, 0, 1, 1, 2], [0], [0]>} : vector<1x256x256xbf16>, vector<1x256x128xbf16>, vector<1x256x128xf32> -> vector<1x256x128xf32>
    "tpu.trace_stop"() : () -> ()
    %85 = vector.shape_cast %84 : vector<1x256x128xf32> to vector<256x128xf32>
    %86 = vector.broadcast %56 : f32 to vector<256x128xf32>
    %87 = arith.mulf %86, %85 : vector<256x128xf32>
    %88 = arith.addf %87, %55 : vector<256x128xf32>
    %89 = arith.truncf %88 : vector<256x128xf32> to vector<256x128xbf16>
    %c0_36 = arith.constant 0 : index
    %c0_37 = arith.constant 0 : index
    %90 = vector.load %arg13[%c0_36, %c0_37] : memref<128x128xbf16, #tpu.memory_space<vmem>>, vector<128x128xbf16>
    %cst_38 = arith.constant dense<0.000000e+00> : vector<256x128xf32>
    %91 = tpu.matmul %89, %90, %cst_38 {dimension_numbers = #tpu.dot_dimension_numbers<[1], [0], [0], [1], [0, 0, 1, 1], [], []>} : vector<256x128xbf16>, vector<128x128xbf16>, vector<256x128xf32> -> vector<256x128xf32>
    %c0_39 = arith.constant 0 : index
    %c0_40 = arith.constant 0 : index
    %92 = vector.load %arg14[%c0_39, %c0_40] : memref<1x128xf32, #tpu.memory_space<vmem>>, vector<1x128xf32>
    %93 = vector.broadcast %92 : vector<1x128xf32> to vector<256x128xf32>
    %94 = arith.mulf %91, %93 : vector<256x128xf32>
    %c0_41 = arith.constant 0 : index
    %c0_42 = arith.constant 0 : index
    %95 = vector.load %arg15[%c0_41, %c0_42] : memref<1x128xf32, #tpu.memory_space<vmem>>, vector<1x128xf32>
    %96 = vector.broadcast %95 : vector<1x128xf32> to vector<256x128xf32>
    %97 = arith.addf %94, %96 : vector<256x128xf32>
    %cst_43 = arith.constant 0.000000e+00 : f32
    %98 = vector.broadcast %cst_43 : f32 to vector<256x128xf32>
    %99 = arith.maximumf %97, %98 : vector<256x128xf32>
    %c2 = arith.constant 2 : index
    %100 = memref.load %arg1[%c2] : memref<3xf32, #tpu.memory_space<smem>>
    %101 = arith.truncf %99 : vector<256x128xf32> to vector<256x128xbf16>
    %c0_44 = arith.constant 0 : index
    %c0_45 = arith.constant 0 : index
    %102 = vector.load %arg16[%c0_44, %c0_45] : memref<128x384xbf16, #tpu.memory_space<vmem>>, vector<128x384xbf16>
    %cst_46 = arith.constant dense<0.000000e+00> : vector<256x384xf32>
    %103 = tpu.matmul %101, %102, %cst_46 {dimension_numbers = #tpu.dot_dimension_numbers<[1], [0], [0], [1], [0, 0, 1, 1], [], []>} : vector<256x128xbf16>, vector<128x384xbf16>, vector<256x384xf32> -> vector<256x384xf32>
    %c0_47 = arith.constant 0 : index
    %c0_48 = arith.constant 0 : index
    %104 = vector.load %arg17[%c0_47, %c0_48] : memref<1x384xf32, #tpu.memory_space<vmem>>, vector<1x384xf32>
    %105 = vector.broadcast %104 : vector<1x384xf32> to vector<256x384xf32>
    %106 = arith.addf %103, %105 : vector<256x384xf32>
    %107 = vector.extract_strided_slice %106 {offsets = [0, 0], sizes = [256, 128], strides = [1, 1]} : vector<256x384xf32> to vector<256x128xf32>
    %108 = vector.shape_cast %107 : vector<256x128xf32> to vector<1x256x128xf32>
    %109 = vector.extract_strided_slice %106 {offsets = [0, 128], sizes = [256, 128], strides = [1, 1]} : vector<256x384xf32> to vector<256x128xf32>
    %110 = vector.shape_cast %109 : vector<256x128xf32> to vector<1x256x128xf32>
    %111 = vector.extract_strided_slice %106 {offsets = [0, 256], sizes = [256, 128], strides = [1, 1]} : vector<256x384xf32> to vector<256x128xf32>
    %112 = vector.shape_cast %111 : vector<256x128xf32> to vector<1x256x128xf32>
    %113 = arith.truncf %108 : vector<1x256x128xf32> to vector<1x256x128xbf16>
    %114 = arith.truncf %110 : vector<1x256x128xf32> to vector<1x256x128xbf16>
    "tpu.trace_start"() <{level = 10 : i32, message = "bnd,bmd->bnm"}> : () -> ()
    %cst_49 = arith.constant dense<0.000000e+00> : vector<1x256x256xf32>
    %115 = tpu.matmul %113, %114, %cst_49 {dimension_numbers = #tpu.dot_dimension_numbers<[2], [2], [1], [1], [0, 0, 0, 1, 1, 1], [0], [0]>} : vector<1x256x128xbf16>, vector<1x256x128xbf16>, vector<1x256x256xf32> -> vector<1x256x256xf32>
    "tpu.trace_stop"() : () -> ()
    %cst_50 = arith.constant dense<0xFF800000> : vector<1x256xf32>
    %116 = vector.multi_reduction <maximumf>, %115, %cst_50 [2] : vector<1x256x256xf32> to vector<1x256xf32>
    %117 = vector.shape_cast %116 : vector<1x256xf32> to vector<1x256x1xf32>
    %118 = vector.broadcast %117 : vector<1x256x1xf32> to vector<1x256x256xf32>
    %119 = arith.subf %115, %118 : vector<1x256x256xf32>
    %120 = math.exp %119 : vector<1x256x256xf32>
    %cst_51 = arith.constant dense<0.000000e+00> : vector<1x256xf32>
    %121 = vector.multi_reduction <add>, %120, %cst_51 [2] : vector<1x256x256xf32> to vector<1x256xf32>
    %122 = vector.shape_cast %121 : vector<1x256xf32> to vector<1x256x1xf32>
    %123 = tpu.reciprocal %122 {approx = true} : vector<1x256x1xf32> -> vector<1x256x1xf32>
    %124 = vector.broadcast %123 : vector<1x256x1xf32> to vector<1x256x256xf32>
    %125 = arith.mulf %120, %124 : vector<1x256x256xf32>
    %126 = arith.truncf %125 : vector<1x256x256xf32> to vector<1x256x256xbf16>
    %127 = arith.truncf %112 : vector<1x256x128xf32> to vector<1x256x128xbf16>
    "tpu.trace_start"() <{level = 10 : i32, message = "bnm,bmd->bnd"}> : () -> ()
    %cst_52 = arith.constant dense<0.000000e+00> : vector<1x256x128xf32>
    %128 = tpu.matmul %126, %127, %cst_52 {dimension_numbers = #tpu.dot_dimension_numbers<[2], [1], [1], [2], [0, 0, 0, 1, 1, 2], [0], [0]>} : vector<1x256x256xbf16>, vector<1x256x128xbf16>, vector<1x256x128xf32> -> vector<1x256x128xf32>
    "tpu.trace_stop"() : () -> ()
    %129 = vector.shape_cast %128 : vector<1x256x128xf32> to vector<256x128xf32>
    %130 = vector.broadcast %100 : f32 to vector<256x128xf32>
    %131 = arith.mulf %130, %129 : vector<256x128xf32>
    %132 = arith.addf %131, %99 : vector<256x128xf32>
    %133 = arith.truncf %132 : vector<256x128xf32> to vector<256x128xbf16>
    %c0_53 = arith.constant 0 : index
    %c0_54 = arith.constant 0 : index
    %134 = vector.load %arg18[%c0_53, %c0_54] : memref<128x512xbf16, #tpu.memory_space<vmem>>, vector<128x512xbf16>
    %cst_55 = arith.constant dense<0.000000e+00> : vector<256x512xf32>
    %135 = tpu.matmul %133, %134, %cst_55 {dimension_numbers = #tpu.dot_dimension_numbers<[1], [0], [0], [1], [0, 0, 1, 1], [], []>} : vector<256x128xbf16>, vector<128x512xbf16>, vector<256x512xf32> -> vector<256x512xf32>
    %c0_56 = arith.constant 0 : index
    %c0_57 = arith.constant 0 : index
    %136 = vector.load %arg19[%c0_56, %c0_57] : memref<1x512xf32, #tpu.memory_space<vmem>>, vector<1x512xf32>
    %137 = vector.broadcast %136 : vector<1x512xf32> to vector<256x512xf32>
    %138 = arith.mulf %135, %137 : vector<256x512xf32>
    %c0_58 = arith.constant 0 : index
    %c0_59 = arith.constant 0 : index
    %139 = vector.load %arg20[%c0_58, %c0_59] : memref<1x512xf32, #tpu.memory_space<vmem>>, vector<1x512xf32>
    %140 = vector.broadcast %139 : vector<1x512xf32> to vector<256x512xf32>
    %141 = arith.addf %138, %140 : vector<256x512xf32>
    %cst_60 = arith.constant 0.000000e+00 : f32
    %142 = vector.broadcast %cst_60 : f32 to vector<256x512xf32>
    %143 = arith.maximumf %141, %142 : vector<256x512xf32>
    %cst_61 = arith.constant 3.906250e-03 : bf16
    %144 = vector.broadcast %cst_61 : bf16 to vector<1x1x256xbf16>
    %145 = vector.shape_cast %143 : vector<256x512xf32> to vector<1x256x512xf32>
    %146 = arith.truncf %145 : vector<1x256x512xf32> to vector<1x256x512xbf16>
    "tpu.trace_start"() <{level = 10 : i32, message = "bkn,bnd->bkd"}> : () -> ()
    %cst_62 = arith.constant dense<0.000000e+00> : vector<1x1x512xf32>
    %147 = tpu.matmul %144, %146, %cst_62 {dimension_numbers = #tpu.dot_dimension_numbers<[2], [1], [1], [2], [0, 0, 0, 1, 1, 2], [0], [0]>} : vector<1x1x256xbf16>, vector<1x256x512xbf16>, vector<1x1x512xf32> -> vector<1x1x512xf32>
    "tpu.trace_stop"() : () -> ()
    %c0_63 = arith.constant 0 : index
    %c0_64 = arith.constant 0 : index
    %c0_65 = arith.constant 0 : index
    %148 = vector.load %arg21[%c0_63, %c0_64, %c0_65] : memref<1x1x512xf32, #tpu.memory_space<vmem>>, vector<1x1x512xf32>
    tpu.vector_store %arg21[%c0_63, %c0_64, %c0_65], %147 {strides = array<i32>} : memref<1x1x512xf32, #tpu.memory_space<vmem>>, vector<1x1x512xf32>,
    return
  }
  func.func @transform_0(%arg0: i32) -> i32 {
    %c0_i32 = arith.constant 0 : i32
    %c0_i32_0 = arith.constant 0 : i32
    return %c0_i32 : i32
  }
  func.func @transform_1(%arg0: i32) -> (i32, i32, i32) {
    %c0_i32 = arith.constant 0 : i32
    %c0_i32_0 = arith.constant 0 : i32
    %c0_i32_1 = arith.constant 0 : i32
    return %arg0, %c0_i32, %c0_i32_0 : i32, i32, i32
  }
  func.func @transform_2(%arg0: i32) -> (i32, i32) {
    %c0_i32 = arith.constant 0 : i32
    %c0_i32_0 = arith.constant 0 : i32
    %c0_i32_1 = arith.constant 0 : i32
    return %c0_i32, %c0_i32_0 : i32, i32
  }
  func.func @transform_3(%arg0: i32) -> (i32, i32) {
    %c0_i32 = arith.constant 0 : i32
    %c0_i32_0 = arith.constant 0 : i32
    %c0_i32_1 = arith.constant 0 : i32
    return %c0_i32, %c0_i32_0 : i32, i32
  }
  func.func @transform_4(%arg0: i32) -> (i32, i32) {
    %c0_i32 = arith.constant 0 : i32
    %c0_i32_0 = arith.constant 0 : i32
    %c0_i32_1 = arith.constant 0 : i32
    return %c0_i32, %c0_i32_0 : i32, i32
  }
  func.func @transform_5(%arg0: i32) -> (i32, i32) {
    %c0_i32 = arith.constant 0 : i32
    %c0_i32_0 = arith.constant 0 : i32
    %c0_i32_1 = arith.constant 0 : i32
    return %c0_i32, %c0_i32_0 : i32, i32
  }
  func.func @transform_6(%arg0: i32) -> (i32, i32) {
    %c0_i32 = arith.constant 0 : i32
    %c0_i32_0 = arith.constant 0 : i32
    %c0_i32_1 = arith.constant 0 : i32
    return %c0_i32, %c0_i32_0 : i32, i32
  }
  func.func @transform_7(%arg0: i32) -> (i32, i32) {
    %c0_i32 = arith.constant 0 : i32
    %c0_i32_0 = arith.constant 0 : i32
    %c0_i32_1 = arith.constant 0 : i32
    return %c0_i32, %c0_i32_0 : i32, i32
  }
  func.func @transform_8(%arg0: i32) -> (i32, i32) {
    %c0_i32 = arith.constant 0 : i32
    %c0_i32_0 = arith.constant 0 : i32
    %c0_i32_1 = arith.constant 0 : i32
    return %c0_i32, %c0_i32_0 : i32, i32
  }
  func.func @transform_9(%arg0: i32) -> (i32, i32) {
    %c0_i32 = arith.constant 0 : i32
    %c0_i32_0 = arith.constant 0 : i32
    %c0_i32_1 = arith.constant 0 : i32
    return %c0_i32, %c0_i32_0 : i32, i32
  }
  func.func @transform_10(%arg0: i32) -> (i32, i32) {
    %c0_i32 = arith.constant 0 : i32
    %c0_i32_0 = arith.constant 0 : i32
    %c0_i32_1 = arith.constant 0 : i32
    return %c0_i32, %c0_i32_0 : i32, i32
  }
  func.func @transform_11(%arg0: i32) -> (i32, i32) {
    %c0_i32 = arith.constant 0 : i32
    %c0_i32_0 = arith.constant 0 : i32
    %c0_i32_1 = arith.constant 0 : i32
    return %c0_i32, %c0_i32_0 : i32, i32
  }
  func.func @transform_12(%arg0: i32) -> (i32, i32) {
    %c0_i32 = arith.constant 0 : i32
    %c0_i32_0 = arith.constant 0 : i32
    %c0_i32_1 = arith.constant 0 : i32
    return %c0_i32, %c0_i32_0 : i32, i32
  }
  func.func @transform_13(%arg0: i32) -> (i32, i32) {
    %c0_i32 = arith.constant 0 : i32
    %c0_i32_0 = arith.constant 0 : i32
    %c0_i32_1 = arith.constant 0 : i32
    return %c0_i32, %c0_i32_0 : i32, i32
  }
  func.func @transform_14(%arg0: i32) -> (i32, i32) {
    %c0_i32 = arith.constant 0 : i32
    %c0_i32_0 = arith.constant 0 : i32
    %c0_i32_1 = arith.constant 0 : i32
    return %c0_i32, %c0_i32_0 : i32, i32
  }
  func.func @transform_15(%arg0: i32) -> (i32, i32) {
    %c0_i32 = arith.constant 0 : i32
    %c0_i32_0 = arith.constant 0 : i32
    %c0_i32_1 = arith.constant 0 : i32
    return %c0_i32, %c0_i32_0 : i32, i32
  }
  func.func @transform_16(%arg0: i32) -> (i32, i32) {
    %c0_i32 = arith.constant 0 : i32
    %c0_i32_0 = arith.constant 0 : i32
    %c0_i32_1 = arith.constant 0 : i32
    return %c0_i32, %c0_i32_0 : i32, i32
  }
  func.func @transform_17(%arg0: i32) -> (i32, i32) {
    %c0_i32 = arith.constant 0 : i32
    %c0_i32_0 = arith.constant 0 : i32
    %c0_i32_1 = arith.constant 0 : i32
    return %c0_i32, %c0_i32_0 : i32, i32
  }
  func.func @transform_18(%arg0: i32) -> (i32, i32) {
    %c0_i32 = arith.constant 0 : i32
    %c0_i32_0 = arith.constant 0 : i32
    %c0_i32_1 = arith.constant 0 : i32
    return %c0_i32, %c0_i32_0 : i32, i32
  }
  func.func @transform_19(%arg0: i32) -> (i32, i32) {
    %c0_i32 = arith.constant 0 : i32
    %c0_i32_0 = arith.constant 0 : i32
    %c0_i32_1 = arith.constant 0 : i32
    return %c0_i32, %c0_i32_0 : i32, i32
  }
  func.func @transform_20(%arg0: i32) -> (i32, i32, i32) {
    %c0_i32 = arith.constant 0 : i32
    %c0_i32_0 = arith.constant 0 : i32
    %c0_i32_1 = arith.constant 0 : i32
    return %arg0, %c0_i32, %c0_i32_0 : i32, i32, i32
  }
}

</mosaic_0001>

<llo_original>
// kernel: tpu_custom_call.1
$region0: #{tpu_custom_call.1}
  #allocation0 [shape = 'u32[]', space=smem, size = 0x4, offset = 0x4, fixed_abs, tag = 'smem constant byte address 0x4 - core index']
  #allocation1 [shape = 'u32[144,128]{1,0:T(1,128)}', space=vmem, size = 0x12000, scoped, tag = 'internal scratch']
  %s0 = inlined_call_operand.hbm [shape: f32[3], index: 0, kind: input, shape index: {}]
  %s1 = inlined_call_operand.vmem [shape: bf16[2,256,4], index: 1, kind: input, shape index: {}]
  %s2 = inlined_call_operand.hbm [shape: bf16[4,128], index: 2, kind: input, shape index: {}]
  %s3 = inlined_call_operand.hbm [shape: f32[1,128], index: 3, kind: input, shape index: {}]
  %s4 = inlined_call_operand.hbm [shape: f32[1,128], index: 4, kind: input, shape index: {}]
  %s5 = inlined_call_operand.hbm [shape: bf16[128,384], index: 5, kind: input, shape index: {}]
  %s6 = inlined_call_operand.hbm [shape: f32[1,384], index: 6, kind: input, shape index: {}]
  %s7 = inlined_call_operand.vmem [shape: bf16[128,128], index: 7, kind: input, shape index: {}]
  %s8 = inlined_call_operand.hbm [shape: f32[1,128], index: 8, kind: input, shape index: {}]
  %s9 = inlined_call_operand.hbm [shape: f32[1,128], index: 9, kind: input, shape index: {}]
  %s10 = inlined_call_operand.hbm [shape: bf16[128,384], index: 10, kind: input, shape index: {}]
  %s11 = inlined_call_operand.hbm [shape: f32[1,384], index: 11, kind: input, shape index: {}]
  %s12 = inlined_call_operand.hbm [shape: bf16[128,128], index: 12, kind: input, shape index: {}]
  %s13 = inlined_call_operand.hbm [shape: f32[1,128], index: 13, kind: input, shape index: {}]
  %s14 = inlined_call_operand.hbm [shape: f32[1,128], index: 14, kind: input, shape index: {}]
  %s15 = inlined_call_operand.hbm [shape: bf16[128,384], index: 15, kind: input, shape index: {}]
  %s16 = inlined_call_operand.hbm [shape: f32[1,384], index: 16, kind: input, shape index: {}]
  %s17 = inlined_call_operand.vmem [shape: bf16[128,512], index: 17, kind: input, shape index: {}]
  %s18 = inlined_call_operand.vmem [shape: f32[1,512], index: 18, kind: input, shape index: {}]
  %s19 = inlined_call_operand.vmem [shape: f32[1,512], index: 19, kind: input, shape index: {}]
  %s20 = inlined_call_operand.hbm [shape: f32[2,1,512], index: 20, kind: output, shape index: {}]
  %s21 = sld [smem:[#allocation0]]
  $region173: #{tpu_custom_call.1} parent=0
    _
  %s23 = ssub.s32 1, %s21
  %s24 = scalar_select 0, %s23, %s21
  $region1: #{tpu_custom_call.1} parent=0
    #allocation2 [shape = 'u8[512]{0}', space=smem, size = 0x200, scoped, tag = 'input window, operand 0, single buffered']
    #allocation3 [shape = 's32[2]{0}', space=sflag, size = 0x8, scoped, tag = 'scoped memory for tpu_custom_call.1']
    #allocation4 [shape = 's32[2]{0}', space=sflag, size = 0x8, scoped, tag = 'scoped memory for tpu_custom_call.1']
    #allocation5 [shape = 's32[2]{0}', space=sflag, size = 0x8, scoped, tag = 'scoped memory for tpu_custom_call.1']
    #allocation6 [shape = 'u8[1024]{0}', space=vmem, size = 0x400, scoped, tag = 'input window, operand 2, single buffered']
    #allocation7 [shape = 'u8[512]{0}', space=vmem, size = 0x400, scoped, tag = 'input window, operand 3, single buffered']
    #allocation8 [shape = 's32[1]{0}', space=sflag, size = 0x4, scoped, tag = 'scoped memory for tpu_custom_call.1']
    #allocation9 [shape = 'u8[512]{0}', space=vmem, size = 0x400, scoped, tag = 'input window, operand 4, single buffered']
    #allocation10 [shape = 'u8[98304]{0}', space=vmem, size = 0x18000, scoped, tag = 'input window, operand 5, single buffered']
    #allocation11 [shape = 's32[1]{0}', space=sflag, size = 0x4, scoped, tag = 'scoped memory for tpu_custom_call.1']
    #allocation12 [shape = 'u8[1536]{0}', space=vmem, size = 0x800, scoped, tag = 'input window, operand 6, single buffered']
    #allocation13 [shape = 'u8[512]{0}', space=vmem, size = 0x400, scoped, tag = 'input window, operand 8, single buffered']
    #allocation14 [shape = 's32[1]{0}', space=sflag, size = 0x4, scoped, tag = 'scoped memory for tpu_custom_call.1']
    #allocation15 [shape = 'u8[512]{0}', space=vmem, size = 0x400, scoped, tag = 'input window, operand 9, single buffered']
    #allocation16 [shape = 'u8[98304]{0}', space=vmem, size = 0x18000, scoped, tag = 'input window, operand 10, single buffered']
    #allocation17 [shape = 's32[1]{0}', space=sflag, size = 0x4, scoped, tag = 'scoped memory for tpu_custom_call.1']
    #allocation18 [shape = 'u8[1536]{0}', space=vmem, size = 0x800, scoped, tag = 'input window, operand 11, single buffered']
    #allocation19 [shape = 'u8[32768]{0}', space=vmem, size = 0x8000, scoped, tag = 'input window, operand 12, single buffered']
    #allocation20 [shape = 's32[1]{0}', space=sflag, size = 0x4, scoped, tag = 'scoped memory for tpu_custom_call.1']
    #allocation21 [shape = 'u8[512]{0}', space=vmem, size = 0x400, scoped, tag = 'input window, operand 13, single buffered']
    #allocation22 [shape = 'u8[512]{0}', space=vmem, size = 0x400, scoped, tag = 'input window, operand 14, single buffered']
    #allocation23 [shape = 's32[1]{0}', space=sflag, size = 0x4, scoped, tag = 'scoped memory for tpu_custom_call.1']
    #allocation24 [shape = 'u8[98304]{0}', space=vmem, size = 0x18000, scoped, tag = 'input window, operand 15, single buffered']
    #allocation25 [shape = 'u8[1536]{0}', space=vmem, size = 0x800, scoped, tag = 'input window, operand 16, single buffered']
    #allocation26 [shape = 's32[1]{0}', space=sflag, size = 0x4, scoped, tag = 'scoped memory for tpu_custom_call.1']
    #allocation27 [shape = 'u8[4096]{0}', space=vmem, size = 0x1000, scoped, tag = 'output window, operand 0']
    %25 = vsyncpa [#allocation5], 0
    %26 = vsyncpa [#allocation3], 0
    %27 = vsyncpa [#allocation8], 0
    %28 = vsyncpa [#allocation11], 0
    %29 = vsyncpa [#allocation14], 0
    %30 = vsyncpa [#allocation17], 0
    %31 = vsyncpa [#allocation20], 0
    %32 = vsyncpa [#allocation23], 0
    %33 = vsyncpa [#allocation26], 0
    %34 = vsyncpa [#allocation4], 0
    %s35 = scalar_lea.sflag [#allocation4], 1
    %36 = vsyncpa %s35, 0
    loop: start=0, step=1, limit=4
    $region2: #{tpu_custom_call.1} parent=1 // loop_pre_header
      _
    $region3: #{tpu_custom_call.1} parent=1 // loop_header
      %s38 = sphi 0, %s42
      %p39 = scmp.ge.s32.totalorder %s38, 4
      %s46 = sphi 0, %s46
      %s48 = sphi 0, %s46
      %s49 = sphi 0, %s48
      %s63 = sphi 0, %s49
      %s69 = sphi 0, %s71
      %s72 = sphi 0, %s69
      %s73 = sphi 0, %s72
      %s89 = sphi 0, %s73
      %s93 = sphi 0, %s93
      %s95 = sphi 0, %s93
      %s96 = sphi 0, %s95
      %s110 = sphi 0, %s96
      %s114 = sphi 0, %s114
      %s116 = sphi 0, %s114
      %s117 = sphi 0, %s116
      %s131 = sphi 0, %s117
      %s135 = sphi 0, %s135
      %s137 = sphi 0, %s135
      %s138 = sphi 0, %s137
      %s152 = sphi 0, %s138
      %s156 = sphi 0, %s156
      %s158 = sphi 0, %s156
      %s159 = sphi 0, %s158
      %s173 = sphi 0, %s159
      %s177 = sphi 0, %s177
      %s179 = sphi 0, %s177
      %s180 = sphi 0, %s179
      %s194 = sphi 0, %s180
      %s198 = sphi 0, %s198
      %s200 = sphi 0, %s198
      %s201 = sphi 0, %s200
      %s215 = sphi 0, %s201
      %s219 = sphi 0, %s219
      %s221 = sphi 0, %s219
      %s222 = sphi 0, %s221
      %s236 = sphi 0, %s222
      %s240 = sphi 0, %s240
      %s242 = sphi 0, %s240
      %s243 = sphi 0, %s242
      %s257 = sphi 0, %s243
      %s261 = sphi 0, %s261
      %s263 = sphi 0, %s261
      %s264 = sphi 0, %s263
      %s278 = sphi 0, %s264
      %s282 = sphi 0, %s282
      %s284 = sphi 0, %s282
      %s285 = sphi 0, %s284
      %s299 = sphi 0, %s285
      %s303 = sphi 0, %s303
      %s305 = sphi 0, %s303
      %s306 = sphi 0, %s305
      %s320 = sphi 0, %s306
      %s324 = sphi 0, %s324
      %s326 = sphi 0, %s324
      %s327 = sphi 0, %s326
      %s341 = sphi 0, %s327
      %s345 = sphi 0, %s345
      %s347 = sphi 0, %s345
      %s348 = sphi 0, %s347
      %s362 = sphi 0, %s348
      %s366 = sphi 0, %s366
      %s368 = sphi 0, %s366
      %s369 = sphi 0, %s368
      %s383 = sphi 0, %s369
      %s387 = sphi 0, %s387
      %s389 = sphi 0, %s387
      %s390 = sphi 0, %s389
      %s404 = sphi 0, %s390
      %s408 = sphi 0, %s408
      %s410 = sphi 0, %s408
      %s411 = sphi 0, %s410
      %s425 = sphi 0, %s411
      %s429 = sphi 0, %s429
      %s431 = sphi 0, %s429
      %s432 = sphi 0, %s431
      %s446 = sphi 0, %s432
      %s450 = sphi 0, %s450
      %s452 = sphi 0, %s450
      %s453 = sphi 0, %s452
      %s467 = sphi 0, %s453
      %s473 = sphi 0, %s475
      %s476 = sphi 0, %s473
      %s477 = sphi 0, %s476
      %s493 = sphi 0, %s477
    $region4: #{tpu_custom_call.1} parent=1 // loop_header_branch
      %41 = sbr.rel (%p39) target = $region8
    $region5: #{tpu_custom_call.1} parent=1 // loop_body
      %s43 = ssub.s32 %s38, 1
      %s44 = ssub.s32 %s38, 2
      %s45 = sadd.s32 %s38, 1
      %s47 = sadd.s32 %s46, 1
      %p50 = scmp.eq.s32.totalorder %s38, 1
      %p51 = scmp.ne.s32.totalorder %s46, %s48
      %p52 = scmp.eq.s32.totalorder %s38, 0
      %p53 = por %p51, %p52
      %p54 = scmp.ne.s32.totalorder %s46, %s48
      %p55 = scmp.eq.s32.totalorder %s43, 1
      %p56 = por %p54, %p55
      %p57 = scmp.ne.s32.totalorder %s48, %s49
      %p58 = scmp.eq.s32.totalorder %s43, 0
      %p59 = por %p57, %p58
      %p60 = scmp.ne.s32.totalorder %s48, %s49
      %p61 = scmp.eq.s32.totalorder %s44, 1
      %p62 = por %p60, %p61
      %p64 = scmp.ne.s32.totalorder %s49, %s63
      %p65 = scmp.eq.s32.totalorder %s44, 0
      %p66 = por %p64, %p65
      %s67 = ssub.s32 %s38, %s45
      %p68 = scmp.eq.s32.totalorder %s67, 0
      %s70 = sadd.s32 %s69, 1
      %s71 = scalar_select %p68, %s69, %s70
      %p74 = pneg %p68
      %p75 = scmp.eq.s32.totalorder %s38, 1
      %p76 = por %p74, %p75
      %p77 = scmp.ne.s32.totalorder %s69, %s72
      %p78 = scmp.eq.s32.totalorder %s38, 0
      %p79 = por %p77, %p78
      %p80 = scmp.ne.s32.totalorder %s69, %s72
      %p81 = scmp.eq.s32.totalorder %s43, 1
      %p82 = por %p80, %p81
      %p83 = scmp.ne.s32.totalorder %s72, %s73
      %p84 = scmp.eq.s32.totalorder %s43, 0
      %p85 = por %p83, %p84
      %p86 = scmp.ne.s32.totalorder %s72, %s73
      %p87 = scmp.eq.s32.totalorder %s44, 1
      %p88 = por %p86, %p87
      %p90 = scmp.ne.s32.totalorder %s73, %s89
      %p91 = scmp.eq.s32.totalorder %s44, 0
      %p92 = por %p90, %p91
      %s94 = sadd.s32 %s93, 1
      %p97 = scmp.eq.s32.totalorder %s38, 1
      %p98 = scmp.ne.s32.totalorder %s93, %s95
      %p99 = scmp.eq.s32.totalorder %s38, 0
      %p100 = por %p98, %p99
      %p101 = scmp.ne.s32.totalorder %s93, %s95
      %p102 = scmp.eq.s32.totalorder %s43, 1
      %p103 = por %p101, %p102
      %p104 = scmp.ne.s32.totalorder %s95, %s96
      %p105 = scmp.eq.s32.totalorder %s43, 0
      %p106 = por %p104, %p105
      %p107 = scmp.ne.s32.totalorder %s95, %s96
      %p108 = scmp.eq.s32.totalorder %s44, 1
      %p109 = por %p107, %p108
      %p111 = scmp.ne.s32.totalorder %s96, %s110
      %p112 = scmp.eq.s32.totalorder %s44, 0
      %p113 = por %p111, %p112
      %s115 = sadd.s32 %s114, 1
      %p118 = scmp.eq.s32.totalorder %s38, 1
      %p119 = scmp.ne.s32.totalorder %s114, %s116
      %p120 = scmp.eq.s32.totalorder %s38, 0
      %p121 = por %p119, %p120
      %p122 = scmp.ne.s32.totalorder %s114, %s116
      %p123 = scmp.eq.s32.totalorder %s43, 1
      %p124 = por %p122, %p123
      %p125 = scmp.ne.s32.totalorder %s116, %s117
      %p126 = scmp.eq.s32.totalorder %s43, 0
      %p127 = por %p125, %p126
      %p128 = scmp.ne.s32.totalorder %s116, %s117
      %p129 = scmp.eq.s32.totalorder %s44, 1
      %p130 = por %p128, %p129
      %p132 = scmp.ne.s32.totalorder %s117, %s131
      %p133 = scmp.eq.s32.totalorder %s44, 0
      %p134 = por %p132, %p133
      %s136 = sadd.s32 %s135, 1
      %p139 = scmp.eq.s32.totalorder %s38, 1
      %p140 = scmp.ne.s32.totalorder %s135, %s137
      %p141 = scmp.eq.s32.totalorder %s38, 0
      %p142 = por %p140, %p141
      %p143 = scmp.ne.s32.totalorder %s135, %s137
      %p144 = scmp.eq.s32.totalorder %s43, 1
      %p145 = por %p143, %p144
      %p146 = scmp.ne.s32.totalorder %s137, %s138
      %p147 = scmp.eq.s32.totalorder %s43, 0
      %p148 = por %p146, %p147
      %p149 = scmp.ne.s32.totalorder %s137, %s138
      %p150 = scmp.eq.s32.totalorder %s44, 1
      %p151 = por %p149, %p150
      %p153 = scmp.ne.s32.totalorder %s138, %s152
      %p154 = scmp.eq.s32.totalorder %s44, 0
      %p155 = por %p153, %p154
      %s157 = sadd.s32 %s156, 1
      %p160 = scmp.eq.s32.totalorder %s38, 1
      %p161 = scmp.ne.s32.totalorder %s156, %s158
      %p162 = scmp.eq.s32.totalorder %s38, 0
      %p163 = por %p161, %p162
      %p164 = scmp.ne.s32.totalorder %s156, %s158
      %p165 = scmp.eq.s32.totalorder %s43, 1
      %p166 = por %p164, %p165
      %p167 = scmp.ne.s32.totalorder %s158, %s159
      %p168 = scmp.eq.s32.totalorder %s43, 0
      %p169 = por %p167, %p168
      %p170 = scmp.ne.s32.totalorder %s158, %s159
      %p171 = scmp.eq.s32.totalorder %s44, 1
      %p172 = por %p170, %p171
      %p174 = scmp.ne.s32.totalorder %s159, %s173
      %p175 = scmp.eq.s32.totalorder %s44, 0
      %p176 = por %p174, %p175
      %s178 = sadd.s32 %s177, 1
      %p181 = scmp.eq.s32.totalorder %s38, 1
      %p182 = scmp.ne.s32.totalorder %s177, %s179
      %p183 = scmp.eq.s32.totalorder %s38, 0
      %p184 = por %p182, %p183
      %p185 = scmp.ne.s32.totalorder %s177, %s179
      %p186 = scmp.eq.s32.totalorder %s43, 1
      %p187 = por %p185, %p186
      %p188 = scmp.ne.s32.totalorder %s179, %s180
      %p189 = scmp.eq.s32.totalorder %s43, 0
      %p190 = por %p188, %p189
      %p191 = scmp.ne.s32.totalorder %s179, %s180
      %p192 = scmp.eq.s32.totalorder %s44, 1
      %p193 = por %p191, %p192
      %p195 = scmp.ne.s32.totalorder %s180, %s194
      %p196 = scmp.eq.s32.totalorder %s44, 0
      %p197 = por %p195, %p196
      %s199 = sadd.s32 %s198, 1
      %p202 = scmp.eq.s32.totalorder %s38, 1
      %p203 = scmp.ne.s32.totalorder %s198, %s200
      %p204 = scmp.eq.s32.totalorder %s38, 0
      %p205 = por %p203, %p204
      %p206 = scmp.ne.s32.totalorder %s198, %s200
      %p207 = scmp.eq.s32.totalorder %s43, 1
      %p208 = por %p206, %p207
      %p209 = scmp.ne.s32.totalorder %s200, %s201
      %p210 = scmp.eq.s32.totalorder %s43, 0
      %p211 = por %p209, %p210
      %p212 = scmp.ne.s32.totalorder %s200, %s201
      %p213 = scmp.eq.s32.totalorder %s44, 1
      %p214 = por %p212, %p213
      %p216 = scmp.ne.s32.totalorder %s201, %s215
      %p217 = scmp.eq.s32.totalorder %s44, 0
      %p218 = por %p216, %p217
      %s220 = sadd.s32 %s219, 1
      %p223 = scmp.eq.s32.totalorder %s38, 1
      %p224 = scmp.ne.s32.totalorder %s219, %s221
      %p225 = scmp.eq.s32.totalorder %s38, 0
      %p226 = por %p224, %p225
      %p227 = scmp.ne.s32.totalorder %s219, %s221
      %p228 = scmp.eq.s32.totalorder %s43, 1
      %p229 = por %p227, %p228
      %p230 = scmp.ne.s32.totalorder %s221, %s222
      %p231 = scmp.eq.s32.totalorder %s43, 0
      %p232 = por %p230, %p231
      %p233 = scmp.ne.s32.totalorder %s221, %s222
      %p234 = scmp.eq.s32.totalorder %s44, 1
      %p235 = por %p233, %p234
      %p237 = scmp.ne.s32.totalorder %s222, %s236
      %p238 = scmp.eq.s32.totalorder %s44, 0
      %p239 = por %p237, %p238
      %s241 = sadd.s32 %s240, 1
      %p244 = scmp.eq.s32.totalorder %s38, 1
      %p245 = scmp.ne.s32.totalorder %s240, %s242
      %p246 = scmp.eq.s32.totalorder %s38, 0
      %p247 = por %p245, %p246
      %p248 = scmp.ne.s32.totalorder %s240, %s242
      %p249 = scmp.eq.s32.totalorder %s43, 1
      %p250 = por %p248, %p249
      %p251 = scmp.ne.s32.totalorder %s242, %s243
      %p252 = scmp.eq.s32.totalorder %s43, 0
      %p253 = por %p251, %p252
      %p254 = scmp.ne.s32.totalorder %s242, %s243
      %p255 = scmp.eq.s32.totalorder %s44, 1
      %p256 = por %p254, %p255
      %p258 = scmp.ne.s32.totalorder %s243, %s257
      %p259 = scmp.eq.s32.totalorder %s44, 0
      %p260 = por %p258, %p259
      %s262 = sadd.s32 %s261, 1
      %p265 = scmp.eq.s32.totalorder %s38, 1
      %p266 = scmp.ne.s32.totalorder %s261, %s263
      %p267 = scmp.eq.s32.totalorder %s38, 0
      %p268 = por %p266, %p267
      %p269 = scmp.ne.s32.totalorder %s261, %s263
      %p270 = scmp.eq.s32.totalorder %s43, 1
      %p271 = por %p269, %p270
      %p272 = scmp.ne.s32.totalorder %s263, %s264
      %p273 = scmp.eq.s32.totalorder %s43, 0
      %p274 = por %p272, %p273
      %p275 = scmp.ne.s32.totalorder %s263, %s264
      %p276 = scmp.eq.s32.totalorder %s44, 1
      %p277 = por %p275, %p276
      %p279 = scmp.ne.s32.totalorder %s264, %s278
      %p280 = scmp.eq.s32.totalorder %s44, 0
      %p281 = por %p279, %p280
      %s283 = sadd.s32 %s282, 1
      %p286 = scmp.eq.s32.totalorder %s38, 1
      %p287 = scmp.ne.s32.totalorder %s282, %s284
      %p288 = scmp.eq.s32.totalorder %s38, 0
      %p289 = por %p287, %p288
      %p290 = scmp.ne.s32.totalorder %s282, %s284
      %p291 = scmp.eq.s32.totalorder %s43, 1
      %p292 = por %p290, %p291
      %p293 = scmp.ne.s32.totalorder %s284, %s285
      %p294 = scmp.eq.s32.totalorder %s43, 0
      %p295 = por %p293, %p294
      %p296 = scmp.ne.s32.totalorder %s284, %s285
      %p297 = scmp.eq.s32.totalorder %s44, 1
      %p298 = por %p296, %p297
      %p300 = scmp.ne.s32.totalorder %s285, %s299
      %p301 = scmp.eq.s32.totalorder %s44, 0
      %p302 = por %p300, %p301
      %s304 = sadd.s32 %s303, 1
      %p307 = scmp.eq.s32.totalorder %s38, 1
      %p308 = scmp.ne.s32.totalorder %s303, %s305
      %p309 = scmp.eq.s32.totalorder %s38, 0
      %p310 = por %p308, %p309
      %p311 = scmp.ne.s32.totalorder %s303, %s305
      %p312 = scmp.eq.s32.totalorder %s43, 1
      %p313 = por %p311, %p312
      %p314 = scmp.ne.s32.totalorder %s305, %s306
      %p315 = scmp.eq.s32.totalorder %s43, 0
      %p316 = por %p314, %p315
      %p317 = scmp.ne.s32.totalorder %s305, %s306
      %p318 = scmp.eq.s32.totalorder %s44, 1
      %p319 = por %p317, %p318
      %p321 = scmp.ne.s32.totalorder %s306, %s320
      %p322 = scmp.eq.s32.totalorder %s44, 0
      %p323 = por %p321, %p322
      %s325 = sadd.s32 %s324, 1
      %p328 = scmp.eq.s32.totalorder %s38, 1
      %p329 = scmp.ne.s32.totalorder %s324, %s326
      %p330 = scmp.eq.s32.totalorder %s38, 0
      %p331 = por %p329, %p330
      %p332 = scmp.ne.s32.totalorder %s324, %s326
      %p333 = scmp.eq.s32.totalorder %s43, 1
      %p334 = por %p332, %p333
      %p335 = scmp.ne.s32.totalorder %s326, %s327
      %p336 = scmp.eq.s32.totalorder %s43, 0
      %p337 = por %p335, %p336
      %p338 = scmp.ne.s32.totalorder %s326, %s327
      %p339 = scmp.eq.s32.totalorder %s44, 1
      %p340 = por %p338, %p339
      %p342 = scmp.ne.s32.totalorder %s327, %s341
      %p343 = scmp.eq.s32.totalorder %s44, 0
      %p344 = por %p342, %p343
      %s346 = sadd.s32 %s345, 1
      %p349 = scmp.eq.s32.totalorder %s38, 1
      %p350 = scmp.ne.s32.totalorder %s345, %s347
      %p351 = scmp.eq.s32.totalorder %s38, 0
      %p352 = por %p350, %p351
      %p353 = scmp.ne.s32.totalorder %s345, %s347
      %p354 = scmp.eq.s32.totalorder %s43, 1
      %p355 = por %p353, %p354
      %p356 = scmp.ne.s32.totalorder %s347, %s348
      %p357 = scmp.eq.s32.totalorder %s43, 0
      %p358 = por %p356, %p357
      %p359 = scmp.ne.s32.totalorder %s347, %s348
      %p360 = scmp.eq.s32.totalorder %s44, 1
      %p361 = por %p359, %p360
      %p363 = scmp.ne.s32.totalorder %s348, %s362
      %p364 = scmp.eq.s32.totalorder %s44, 0
      %p365 = por %p363, %p364
      %s367 = sadd.s32 %s366, 1
      %p370 = scmp.eq.s32.totalorder %s38, 1
      %p371 = scmp.ne.s32.totalorder %s366, %s368
      %p372 = scmp.eq.s32.totalorder %s38, 0
      %p373 = por %p371, %p372
      %p374 = scmp.ne.s32.totalorder %s366, %s368
      %p375 = scmp.eq.s32.totalorder %s43, 1
      %p376 = por %p374, %p375
      %p377 = scmp.ne.s32.totalorder %s368, %s369
      %p378 = scmp.eq.s32.totalorder %s43, 0
      %p379 = por %p377, %p378
      %p380 = scmp.ne.s32.totalorder %s368, %s369
      %p381 = scmp.eq.s32.totalorder %s44, 1
      %p382 = por %p380, %p381
      %p384 = scmp.ne.s32.totalorder %s369, %s383
      %p385 = scmp.eq.s32.totalorder %s44, 0
      %p386 = por %p384, %p385
      %s388 = sadd.s32 %s387, 1
      %p391 = scmp.eq.s32.totalorder %s38, 1
      %p392 = scmp.ne.s32.totalorder %s387, %s389
      %p393 = scmp.eq.s32.totalorder %s38, 0
      %p394 = por %p392, %p393
      %p395 = scmp.ne.s32.totalorder %s387, %s389
      %p396 = scmp.eq.s32.totalorder %s43, 1
      %p397 = por %p395, %p396
      %p398 = scmp.ne.s32.totalorder %s389, %s390
      %p399 = scmp.eq.s32.totalorder %s43, 0
      %p400 = por %p398, %p399
      %p401 = scmp.ne.s32.totalorder %s389, %s390
      %p402 = scmp.eq.s32.totalorder %s44, 1
      %p403 = por %p401, %p402
      %p405 = scmp.ne.s32.totalorder %s390, %s404
      %p406 = scmp.eq.s32.totalorder %s44, 0
      %p407 = por %p405, %p406
      %s409 = sadd.s32 %s408, 1
      %p412 = scmp.eq.s32.totalorder %s38, 1
      %p413 = scmp.ne.s32.totalorder %s408, %s410
      %p414 = scmp.eq.s32.totalorder %s38, 0
      %p415 = por %p413, %p414
      %p416 = scmp.ne.s32.totalorder %s408, %s410
      %p417 = scmp.eq.s32.totalorder %s43, 1
      %p418 = por %p416, %p417
      %p419 = scmp.ne.s32.totalorder %s410, %s411
      %p420 = scmp.eq.s32.totalorder %s43, 0
      %p421 = por %p419, %p420
      %p422 = scmp.ne.s32.totalorder %s410, %s411
      %p423 = scmp.eq.s32.totalorder %s44, 1
      %p424 = por %p422, %p423
      %p426 = scmp.ne.s32.totalorder %s411, %s425
      %p427 = scmp.eq.s32.totalorder %s44, 0
      %p428 = por %p426, %p427
      %s430 = sadd.s32 %s429, 1
      %p433 = scmp.eq.s32.totalorder %s38, 1
      %p434 = scmp.ne.s32.totalorder %s429, %s431
      %p435 = scmp.eq.s32.totalorder %s38, 0
      %p436 = por %p434, %p435
      %p437 = scmp.ne.s32.totalorder %s429, %s431
      %p438 = scmp.eq.s32.totalorder %s43, 1
      %p439 = por %p437, %p438
      %p440 = scmp.ne.s32.totalorder %s431, %s432
      %p441 = scmp.eq.s32.totalorder %s43, 0
      %p442 = por %p440, %p441
      %p443 = scmp.ne.s32.totalorder %s431, %s432
      %p444 = scmp.eq.s32.totalorder %s44, 1
      %p445 = por %p443, %p444
      %p447 = scmp.ne.s32.totalorder %s432, %s446
      %p448 = scmp.eq.s32.totalorder %s44, 0
      %p449 = por %p447, %p448
      %s451 = sadd.s32 %s450, 1
      %p454 = scmp.eq.s32.totalorder %s38, 1
      %p455 = scmp.ne.s32.totalorder %s450, %s452
      %p456 = scmp.eq.s32.totalorder %s38, 0
      %p457 = por %p455, %p456
      %p458 = scmp.ne.s32.totalorder %s450, %s452
      %p459 = scmp.eq.s32.totalorder %s43, 1
      %p460 = por %p458, %p459
      %p461 = scmp.ne.s32.totalorder %s452, %s453
      %p462 = scmp.eq.s32.totalorder %s43, 0
      %p463 = por %p461, %p462
      %p464 = scmp.ne.s32.totalorder %s452, %s453
      %p465 = scmp.eq.s32.totalorder %s44, 1
      %p466 = por %p464, %p465
      %p468 = scmp.ne.s32.totalorder %s453, %s467
      %p469 = scmp.eq.s32.totalorder %s44, 0
      %p470 = por %p468, %p469
      %s471 = ssub.s32 %s38, %s45
      %p472 = scmp.eq.s32.totalorder %s471, 0
      %s474 = sadd.s32 %s473, 1
      %s475 = scalar_select %p472, %s473, %s474
      %p478 = pneg %p472
      %p479 = scmp.eq.s32.totalorder %s38, 1
      %p480 = por %p478, %p479
      %p481 = scmp.ne.s32.totalorder %s473, %s476
      %p482 = scmp.eq.s32.totalorder %s38, 0
      %p483 = por %p481, %p482
      %p484 = scmp.ne.s32.totalorder %s473, %s476
      %p485 = scmp.eq.s32.totalorder %s43, 1
      %p486 = por %p484, %p485
      %p487 = scmp.ne.s32.totalorder %s476, %s477
      %p488 = scmp.eq.s32.totalorder %s43, 0
      %p489 = por %p487, %p488
      %p490 = scmp.ne.s32.totalorder %s476, %s477
      %p491 = scmp.eq.s32.totalorder %s44, 1
      %p492 = por %p490, %p491
      %p494 = scmp.ne.s32.totalorder %s477, %s493
      %p495 = scmp.eq.s32.totalorder %s44, 0
      %p496 = por %p494, %p495
      %p497 = scmp.le.s32.totalorder 1, %s38
      %p498 = scmp.lt.s32.totalorder %s38, 3
      %p499 = pnand %p497, %p498
      %p500 = pneg %p499
      // Predicated region
      $region9: #{tpu_custom_call.1} parent=5 // pred_check
        _
      $region10: #{tpu_custom_call.1} parent=5 // pred_check_branch
        %502 = sbr.rel (%p499) target = $region12
      $region11: #{tpu_custom_call.1} parent=5 // pred_region
        %s503 = ssub.s32 %s38, 1
        // Predicated region
        $region13: #{tpu_custom_call.1} parent=11 // pred_check
          %p504 = pneg %p59
        $region14: #{tpu_custom_call.1} parent=11 // pred_check_branch
          %506 = sbr.rel (%p504) target = $region16
        $region15: #{tpu_custom_call.1} parent=11 // pred_region
          %s508 = ssub.s32 16, 16
          %509 = vsyncadd [#allocation5], %s508
          %512 = dma.hbm_to_smem %s0, 16, [#allocation2], [#allocation5]
        $region16: #{tpu_custom_call.1} parent=11 // pred_fallthru
          _
        // Predicated region
        $region17: #{tpu_custom_call.1} parent=11 // pred_check
          %p513 = pneg %p106
        $region18: #{tpu_custom_call.1} parent=11 // pred_check_branch
          %515 = sbr.rel (%p513) target = $region20
        $region19: #{tpu_custom_call.1} parent=11 // pred_region
          %s517 = ssub.s32 32, 32
          %518 = vsyncadd [#allocation3], %s517
          %s520 = sshll.u32 [#allocation6], 4
          %s521 = int_to_ptr.vmem [resolvable:$true] %s520
          %523 = dma.hbm_to_vmem [thread:$0]  %s2, 32, %s521, [#allocation3]
        $region20: #{tpu_custom_call.1} parent=11 // pred_fallthru
          _
        // Predicated region
        $region21: #{tpu_custom_call.1} parent=11 // pred_check
          %p524 = pneg %p127
        $region22: #{tpu_custom_call.1} parent=11 // pred_check_branch
          %526 = sbr.rel (%p524) target = $region24
        $region23: #{tpu_custom_call.1} parent=11 // pred_region
          %s528 = ssub.s32 16, 16
          %529 = vsyncadd [#allocation8], %s528
          %s531 = sshll.u32 [#allocation7], 4
          %s532 = int_to_ptr.vmem [resolvable:$true] %s531
          %534 = dma.hbm_to_vmem [thread:$0]  %s3, 16, %s532, [#allocation8]
        $region24: #{tpu_custom_call.1} parent=11 // pred_fallthru
          _
        // Predicated region
        $region25: #{tpu_custom_call.1} parent=11 // pred_check
          %p535 = pneg %p148
        $region26: #{tpu_custom_call.1} parent=11 // pred_check_branch
          %537 = sbr.rel (%p535) target = $region28
        $region27: #{tpu_custom_call.1} parent=11 // pred_region
          %s539 = ssub.s32 16, 16
          %540 = vsyncadd [#allocation8], %s539
          %s542 = sshll.u32 [#allocation9], 4
          %s543 = int_to_ptr.vmem [resolvable:$true] %s542
          %545 = dma.hbm_to_vmem [thread:$0]  %s4, 16, %s543, [#allocation8]
        $region28: #{tpu_custom_call.1} parent=11 // pred_fallthru
          _
        // Predicated region
        $region29: #{tpu_custom_call.1} parent=11 // pred_check
          %p546 = pneg %p169
        $region30: #{tpu_custom_call.1} parent=11 // pred_check_branch
          %548 = sbr.rel (%p546) target = $region32
        $region31: #{tpu_custom_call.1} parent=11 // pred_region
          %s550 = ssub.s32 3072, 3072
          %551 = vsyncadd [#allocation11], %s550
          %s552 = sshll.u32 [#allocation10], 4
          %s553 = int_to_ptr.vmem [resolvable:$true] %s552
          %558 = dma.hbm_to_vmem [thread:$0]  %s5, 3072, %s553, [#allocation11], 192, 192, 12
        $region32: #{tpu_custom_call.1} parent=11 // pred_fallthru
          _
        // Predicated region
        $region33: #{tpu_custom_call.1} parent=11 // pred_check
          %p559 = pneg %p190
        $region34: #{tpu_custom_call.1} parent=11 // pred_check_branch
          %561 = sbr.rel (%p559) target = $region36
        $region35: #{tpu_custom_call.1} parent=11 // pred_region
          %s563 = ssub.s32 48, 48
          %564 = vsyncadd [#allocation11], %s563
          %s566 = sshll.u32 [#allocation12], 4
          %s567 = int_to_ptr.vmem [resolvable:$true] %s566
          %569 = dma.hbm_to_vmem [thread:$0]  %s6, 48, %s567, [#allocation11]
        $region36: #{tpu_custom_call.1} parent=11 // pred_fallthru
          _
        // Predicated region
        $region37: #{tpu_custom_call.1} parent=11 // pred_check
          %p570 = pneg %p211
        $region38: #{tpu_custom_call.1} parent=11 // pred_check_branch
          %572 = sbr.rel (%p570) target = $region40
        $region39: #{tpu_custom_call.1} parent=11 // pred_region
          _
        $region40: #{tpu_custom_call.1} parent=11 // pred_fallthru
          _
        // Predicated region
        $region41: #{tpu_custom_call.1} parent=11 // pred_check
          %p573 = pneg %p232
        $region42: #{tpu_custom_call.1} parent=11 // pred_check_branch
          %575 = sbr.rel (%p573) target = $region44
        $region43: #{tpu_custom_call.1} parent=11 // pred_region
          %s577 = ssub.s32 16, 16
          %578 = vsyncadd [#allocation14], %s577
          %s580 = sshll.u32 [#allocation13], 4
          %s581 = int_to_ptr.vmem [resolvable:$true] %s580
          %583 = dma.hbm_to_vmem [thread:$0]  %s8, 16, %s581, [#allocation14]
        $region44: #{tpu_custom_call.1} parent=11 // pred_fallthru
          _
        // Predicated region
        $region45: #{tpu_custom_call.1} parent=11 // pred_check
          %p584 = pneg %p253
        $region46: #{tpu_custom_call.1} parent=11 // pred_check_branch
          %586 = sbr.rel (%p584) target = $region48
        $region47: #{tpu_custom_call.1} parent=11 // pred_region
          %s588 = ssub.s32 16, 16
          %589 = vsyncadd [#allocation14], %s588
          %s591 = sshll.u32 [#allocation15], 4
          %s592 = int_to_ptr.vmem [resolvable:$true] %s591
          %594 = dma.hbm_to_vmem [thread:$0]  %s9, 16, %s592, [#allocation14]
        $region48: #{tpu_custom_call.1} parent=11 // pred_fallthru
          _
        // Predicated region
        $region49: #{tpu_custom_call.1} parent=11 // pred_check
          %p595 = pneg %p274
        $region50: #{tpu_custom_call.1} parent=11 // pred_check_branch
          %597 = sbr.rel (%p595) target = $region52
        $region51: #{tpu_custom_call.1} parent=11 // pred_region
          %s599 = ssub.s32 3072, 3072
          %600 = vsyncadd [#allocation17], %s599
          %s601 = sshll.u32 [#allocation16], 4
          %s602 = int_to_ptr.vmem [resolvable:$true] %s601
          %607 = dma.hbm_to_vmem [thread:$0]  %s10, 3072, %s602, [#allocation17], 192, 192, 12
        $region52: #{tpu_custom_call.1} parent=11 // pred_fallthru
          _
        // Predicated region
        $region53: #{tpu_custom_call.1} parent=11 // pred_check
          %p608 = pneg %p295
        $region54: #{tpu_custom_call.1} parent=11 // pred_check_branch
          %610 = sbr.rel (%p608) target = $region56
        $region55: #{tpu_custom_call.1} parent=11 // pred_region
          %s612 = ssub.s32 48, 48
          %613 = vsyncadd [#allocation17], %s612
          %s615 = sshll.u32 [#allocation18], 4
          %s616 = int_to_ptr.vmem [resolvable:$true] %s615
          %618 = dma.hbm_to_vmem [thread:$0]  %s11, 48, %s616, [#allocation17]
        $region56: #{tpu_custom_call.1} parent=11 // pred_fallthru
          _
        // Predicated region
        $region57: #{tpu_custom_call.1} parent=11 // pred_check
          %p619 = pneg %p316
        $region58: #{tpu_custom_call.1} parent=11 // pred_check_branch
          %621 = sbr.rel (%p619) target = $region60
        $region59: #{tpu_custom_call.1} parent=11 // pred_region
          %s623 = ssub.s32 1024, 1024
          %624 = vsyncadd [#allocation20], %s623
          %s625 = sshll.u32 [#allocation19], 4
          %s626 = int_to_ptr.vmem [resolvable:$true] %s625
          %631 = dma.hbm_to_vmem [thread:$0]  %s12, 1024, %s626, [#allocation20], 64, 64, 4
        $region60: #{tpu_custom_call.1} parent=11 // pred_fallthru
          _
        // Predicated region
        $region61: #{tpu_custom_call.1} parent=11 // pred_check
          %p632 = pneg %p337
        $region62: #{tpu_custom_call.1} parent=11 // pred_check_branch
          %634 = sbr.rel (%p632) target = $region64
        $region63: #{tpu_custom_call.1} parent=11 // pred_region
          %s636 = ssub.s32 16, 16
          %637 = vsyncadd [#allocation20], %s636
          %s639 = sshll.u32 [#allocation21], 4
          %s640 = int_to_ptr.vmem [resolvable:$true] %s639
          %642 = dma.hbm_to_vmem [thread:$0]  %s13, 16, %s640, [#allocation20]
        $region64: #{tpu_custom_call.1} parent=11 // pred_fallthru
          _
        // Predicated region
        $region65: #{tpu_custom_call.1} parent=11 // pred_check
          %p643 = pneg %p358
        $region66: #{tpu_custom_call.1} parent=11 // pred_check_branch
          %645 = sbr.rel (%p643) target = $region68
        $region67: #{tpu_custom_call.1} parent=11 // pred_region
          %s647 = ssub.s32 16, 16
          %648 = vsyncadd [#allocation23], %s647
          %s650 = sshll.u32 [#allocation22], 4
          %s651 = int_to_ptr.vmem [resolvable:$true] %s650
          %653 = dma.hbm_to_vmem [thread:$0]  %s14, 16, %s651, [#allocation23]
        $region68: #{tpu_custom_call.1} parent=11 // pred_fallthru
          _
        // Predicated region
        $region69: #{tpu_custom_call.1} parent=11 // pred_check
          %p654 = pneg %p379
        $region70: #{tpu_custom_call.1} parent=11 // pred_check_branch
          %656 = sbr.rel (%p654) target = $region72
        $region71: #{tpu_custom_call.1} parent=11 // pred_region
          %s658 = ssub.s32 3072, 3072
          %659 = vsyncadd [#allocation23], %s658
          %s660 = sshll.u32 [#allocation24], 4
          %s661 = int_to_ptr.vmem [resolvable:$true] %s660
          %666 = dma.hbm_to_vmem [thread:$0]  %s15, 3072, %s661, [#allocation23], 192, 192, 12
        $region72: #{tpu_custom_call.1} parent=11 // pred_fallthru
          _
        // Predicated region
        $region73: #{tpu_custom_call.1} parent=11 // pred_check
          %p667 = pneg %p400
        $region74: #{tpu_custom_call.1} parent=11 // pred_check_branch
          %669 = sbr.rel (%p667) target = $region76
        $region75: #{tpu_custom_call.1} parent=11 // pred_region
          %s671 = ssub.s32 48, 48
          %672 = vsyncadd [#allocation26], %s671
          %s674 = sshll.u32 [#allocation25], 4
          %s675 = int_to_ptr.vmem [resolvable:$true] %s674
          %677 = dma.hbm_to_vmem [thread:$0]  %s16, 48, %s675, [#allocation26]
        $region76: #{tpu_custom_call.1} parent=11 // pred_fallthru
          _
        // Predicated region
        $region77: #{tpu_custom_call.1} parent=11 // pred_check
          %p678 = pneg %p421
        $region78: #{tpu_custom_call.1} parent=11 // pred_check_branch
          %680 = sbr.rel (%p678) target = $region80
        $region79: #{tpu_custom_call.1} parent=11 // pred_region
          _
        $region80: #{tpu_custom_call.1} parent=11 // pred_fallthru
          _
        // Predicated region
        $region81: #{tpu_custom_call.1} parent=11 // pred_check
          %p681 = pneg %p442
        $region82: #{tpu_custom_call.1} parent=11 // pred_check_branch
          %683 = sbr.rel (%p681) target = $region84
        $region83: #{tpu_custom_call.1} parent=11 // pred_region
          _
        $region84: #{tpu_custom_call.1} parent=11 // pred_fallthru
          _
        // Predicated region
        $region85: #{tpu_custom_call.1} parent=11 // pred_check
          %p684 = pneg %p463
        $region86: #{tpu_custom_call.1} parent=11 // pred_check_branch
          %686 = sbr.rel (%p684) target = $region88
        $region87: #{tpu_custom_call.1} parent=11 // pred_region
          _
        $region88: #{tpu_custom_call.1} parent=11 // pred_fallthru
          _
      $region12: #{tpu_custom_call.1} parent=5 // pred_fallthru
        _
      %p687 = scmp.lt.s32.totalorder %s38, 2
      // Predicated region
      $region89: #{tpu_custom_call.1} parent=5 // pred_check
        %p688 = pneg %p687
      $region90: #{tpu_custom_call.1} parent=5 // pred_check_branch
        %690 = sbr.rel (%p688) target = $region92
      $region91: #{tpu_custom_call.1} parent=5 // pred_region
        // Predicated region
        $region93: #{tpu_custom_call.1} parent=91 // pred_check
          %p691 = pneg %p79
        $region94: #{tpu_custom_call.1} parent=91 // pred_check_branch
          %693 = sbr.rel (%p691) target = $region96
        $region95: #{tpu_custom_call.1} parent=91 // pred_region
          %p694 = scmp.lt.s32.totalorder %s38, 1
          %s695 = scalar_select %p694, %s38, 1
          %s696 = smul.addr %s695, 32
          %s697 = smul.addr %s696, 4
          %s698 = scalar_lea.vmem %s1, %s697
        $region96: #{tpu_custom_call.1} parent=91 // pred_fallthru
          _
      $region92: #{tpu_custom_call.1} parent=5 // pred_fallthru
        _
      %p699 = scmp.le.s32.totalorder 1, %s38
      %p700 = scmp.lt.s32.totalorder %s38, 3
      %p701 = pnand %p699, %p700
      %p702 = pneg %p701
      // Predicated region
      $region97: #{tpu_custom_call.1} parent=5 // pred_check
        _
      $region98: #{tpu_custom_call.1} parent=5 // pred_check_branch
        %704 = sbr.rel (%p701) target = $region100
      $region99: #{tpu_custom_call.1} parent=5 // pred_region
        %s705 = ssub.s32 %s38, 1
        // Predicated region
        $region101: #{tpu_custom_call.1} parent=99 // pred_check
          %p706 = pneg %p59
        $region102: #{tpu_custom_call.1} parent=99 // pred_check_branch
          %708 = sbr.rel (%p706) target = $region104
        $region103: #{tpu_custom_call.1} parent=99 // pred_region
          %709 = dma.done [#allocation5], 16
        $region104: #{tpu_custom_call.1} parent=99 // pred_fallthru
          _
        // Predicated region
        $region105: #{tpu_custom_call.1} parent=99 // pred_check
          %p710 = pneg %p106
        $region106: #{tpu_custom_call.1} parent=99 // pred_check_branch
          %712 = sbr.rel (%p710) target = $region108
        $region107: #{tpu_custom_call.1} parent=99 // pred_region
          %713 = dma.done [#allocation3], 32
        $region108: #{tpu_custom_call.1} parent=99 // pred_fallthru
          _
        // Predicated region
        $region109: #{tpu_custom_call.1} parent=99 // pred_check
          %p714 = pneg %p127
        $region110: #{tpu_custom_call.1} parent=99 // pred_check_branch
          %716 = sbr.rel (%p714) target = $region112
        $region111: #{tpu_custom_call.1} parent=99 // pred_region
          %717 = dma.done [#allocation8], 16
        $region112: #{tpu_custom_call.1} parent=99 // pred_fallthru
          _
        // Predicated region
        $region113: #{tpu_custom_call.1} parent=99 // pred_check
          %p718 = pneg %p148
        $region114: #{tpu_custom_call.1} parent=99 // pred_check_branch
          %720 = sbr.rel (%p718) target = $region116
        $region115: #{tpu_custom_call.1} parent=99 // pred_region
          %721 = dma.done [#allocation8], 16
        $region116: #{tpu_custom_call.1} parent=99 // pred_fallthru
          _
        // Predicated region
        $region117: #{tpu_custom_call.1} parent=99 // pred_check
          %p722 = pneg %p169
        $region118: #{tpu_custom_call.1} parent=99 // pred_check_branch
          %724 = sbr.rel (%p722) target = $region120
        $region119: #{tpu_custom_call.1} parent=99 // pred_region
          %725 = dma.done [#allocation11], 3072
        $region120: #{tpu_custom_call.1} parent=99 // pred_fallthru
          _
        // Predicated region
        $region121: #{tpu_custom_call.1} parent=99 // pred_check
          %p726 = pneg %p190
        $region122: #{tpu_custom_call.1} parent=99 // pred_check_branch
          %728 = sbr.rel (%p726) target = $region124
        $region123: #{tpu_custom_call.1} parent=99 // pred_region
          %729 = dma.done [#allocation11], 48
        $region124: #{tpu_custom_call.1} parent=99 // pred_fallthru
          _
        // Predicated region
        $region125: #{tpu_custom_call.1} parent=99 // pred_check
          %p730 = pneg %p232
        $region126: #{tpu_custom_call.1} parent=99 // pred_check_branch
          %732 = sbr.rel (%p730) target = $region128
        $region127: #{tpu_custom_call.1} parent=99 // pred_region
          %733 = dma.done [#allocation14], 16
        $region128: #{tpu_custom_call.1} parent=99 // pred_fallthru
          _
        // Predicated region
        $region129: #{tpu_custom_call.1} parent=99 // pred_check
          %p734 = pneg %p253
        $region130: #{tpu_custom_call.1} parent=99 // pred_check_branch
          %736 = sbr.rel (%p734) target = $region132
        $region131: #{tpu_custom_call.1} parent=99 // pred_region
          %737 = dma.done [#allocation14], 16
        $region132: #{tpu_custom_call.1} parent=99 // pred_fallthru
          _
        // Predicated region
        $region133: #{tpu_custom_call.1} parent=99 // pred_check
          %p738 = pneg %p274
        $region134: #{tpu_custom_call.1} parent=99 // pred_check_branch
          %740 = sbr.rel (%p738) target = $region136
        $region135: #{tpu_custom_call.1} parent=99 // pred_region
          %741 = dma.done [#allocation17], 3072
        $region136: #{tpu_custom_call.1} parent=99 // pred_fallthru
          _
        // Predicated region
        $region137: #{tpu_custom_call.1} parent=99 // pred_check
          %p742 = pneg %p295
        $region138: #{tpu_custom_call.1} parent=99 // pred_check_branch
          %744 = sbr.rel (%p742) target = $region140
        $region139: #{tpu_custom_call.1} parent=99 // pred_region
          %745 = dma.done [#allocation17], 48
        $region140: #{tpu_custom_call.1} parent=99 // pred_fallthru
          _
        // Predicated region
        $region141: #{tpu_custom_call.1} parent=99 // pred_check
          %p746 = pneg %p316
        $region142: #{tpu_custom_call.1} parent=99 // pred_check_branch
          %748 = sbr.rel (%p746) target = $region144
        $region143: #{tpu_custom_call.1} parent=99 // pred_region
          %749 = dma.done [#allocation20], 1024
        $region144: #{tpu_custom_call.1} parent=99 // pred_fallthru
          _
        // Predicated region
        $region145: #{tpu_custom_call.1} parent=99 // pred_check
          %p750 = pneg %p337
        $region146: #{tpu_custom_call.1} parent=99 // pred_check_branch
          %752 = sbr.rel (%p750) target = $region148
        $region147: #{tpu_custom_call.1} parent=99 // pred_region
          %753 = dma.done [#allocation20], 16
        $region148: #{tpu_custom_call.1} parent=99 // pred_fallthru
          _
        // Predicated region
        $region149: #{tpu_custom_call.1} parent=99 // pred_check
          %p754 = pneg %p358
        $region150: #{tpu_custom_call.1} parent=99 // pred_check_branch
          %756 = sbr.rel (%p754) target = $region152
        $region151: #{tpu_custom_call.1} parent=99 // pred_region
          %757 = dma.done [#allocation23], 16
        $region152: #{tpu_custom_call.1} parent=99 // pred_fallthru
          _
        // Predicated region
        $region153: #{tpu_custom_call.1} parent=99 // pred_check
          %p758 = pneg %p379
        $region154: #{tpu_custom_call.1} parent=99 // pred_check_branch
          %760 = sbr.rel (%p758) target = $region156
        $region155: #{tpu_custom_call.1} parent=99 // pred_region
          %761 = dma.done [#allocation23], 3072
        $region156: #{tpu_custom_call.1} parent=99 // pred_fallthru
          _
        // Predicated region
        $region157: #{tpu_custom_call.1} parent=99 // pred_check
          %p762 = pneg %p400
        $region158: #{tpu_custom_call.1} parent=99 // pred_check_branch
          %764 = sbr.rel (%p762) target = $region160
        $region159: #{tpu_custom_call.1} parent=99 // pred_region
          %765 = dma.done [#allocation26], 48
        $region160: #{tpu_custom_call.1} parent=99 // pred_fallthru
          _
        %766 = sfence
        %p767 = pneg %p59
        %p768 = pneg %p56
        %p769 = scmp.lt.s32.totalorder %s43, 1
        %s770 = scalar_select %p769, %s43, 1
        %s771 = smul.addr %s770, 32
        %s772 = smul.addr %s771, 4
        %s773 = scalar_lea.vmem %s1, %s772
        %p774 = pneg %p85
        %p775 = pneg %p82
        %p776 = pneg %p106
        %p777 = pneg %p103
        %p778 = pneg %p127
        %p779 = pneg %p124
        %p780 = pneg %p148
        %p781 = pneg %p145
        %p782 = pneg %p169
        %p783 = pneg %p166
        %p784 = pneg %p190
        %p785 = pneg %p187
        %p786 = pneg %p211
        %p787 = pneg %p208
        %p788 = pneg %p232
        %p789 = pneg %p229
        %p790 = pneg %p253
        %p791 = pneg %p250
        %p792 = pneg %p274
        %p793 = pneg %p271
        %p794 = pneg %p295
        %p795 = pneg %p292
        %p796 = pneg %p316
        %p797 = pneg %p313
        %p798 = pneg %p337
        %p799 = pneg %p334
        %p800 = pneg %p358
        %p801 = pneg %p355
        %p802 = pneg %p379
        %p803 = pneg %p376
        %p804 = pneg %p400
        %p805 = pneg %p397
        %p806 = pneg %p421
        %p807 = pneg %p418
        %p808 = pneg %p442
        %p809 = pneg %p439
        %p810 = pneg %p463
        %p811 = pneg %p460
        %p812 = pneg %p489
        %p813 = pneg %p486
        %s814 = sand.u32 %s476, 1
        %s815 = scalar_lea.sflag [#allocation4], %s814
        %s816 = sand.u32 %s476, 1
        %s817 = smul.addr %s816, 4
        %s818 = scalar_lea.vmem [#allocation27], %s817
        %p819 = scmp.lt.s32.totalorder %s43, 1
        %s820 = scalar_select %p819, %s43, 1
        %s821 = smul.addr %s820, 32
        %s822 = smul.addr %s821, 4
        %s823 = scalar_lea.vmem %s1, %s822
        %v826 = vld [vmem:[%s823] sm:$0xf]
        %v827 = vld [vmem:[%s823 + $0x4] sm:$0xf]
        %v828 = vld [vmem:[%s823 + $0x8] sm:$0xf]
        %v829 = vld [vmem:[%s823 + $0xc] sm:$0xf]
        %v830 = vld [vmem:[%s823 + $0x10] sm:$0xf]
        %v831 = vld [vmem:[%s823 + $0x14] sm:$0xf]
        %v832 = vld [vmem:[%s823 + $0x18] sm:$0xf]
        %v833 = vld [vmem:[%s823 + $0x1c] sm:$0xf]
        %v834 = vld [vmem:[%s823 + $0x20] sm:$0xf]
        %v835 = vld [vmem:[%s823 + $0x24] sm:$0xf]
        %v836 = vld [vmem:[%s823 + $0x28] sm:$0xf]
        %v837 = vld [vmem:[%s823 + $0x2c] sm:$0xf]
        %v838 = vld [vmem:[%s823 + $0x30] sm:$0xf]
        %v839 = vld [vmem:[%s823 + $0x34] sm:$0xf]
        %v840 = vld [vmem:[%s823 + $0x38] sm:$0xf]
        %v841 = vld [vmem:[%s823 + $0x3c] sm:$0xf]
        %v842 = vld [vmem:[%s823 + $0x40] sm:$0xf]
        %v843 = vld [vmem:[%s823 + $0x44] sm:$0xf]
        %v844 = vld [vmem:[%s823 + $0x48] sm:$0xf]
        %v845 = vld [vmem:[%s823 + $0x4c] sm:$0xf]
        %v846 = vld [vmem:[%s823 + $0x50] sm:$0xf]
        %v847 = vld [vmem:[%s823 + $0x54] sm:$0xf]
        %v848 = vld [vmem:[%s823 + $0x58] sm:$0xf]
        %v849 = vld [vmem:[%s823 + $0x5c] sm:$0xf]
        %v850 = vld [vmem:[%s823 + $0x60] sm:$0xf]
        %v851 = vld [vmem:[%s823 + $0x64] sm:$0xf]
        %v852 = vld [vmem:[%s823 + $0x68] sm:$0xf]
        %v853 = vld [vmem:[%s823 + $0x6c] sm:$0xf]
        %v854 = vld [vmem:[%s823 + $0x70] sm:$0xf]
        %v855 = vld [vmem:[%s823 + $0x74] sm:$0xf]
        %v856 = vld [vmem:[%s823 + $0x78] sm:$0xf]
        %v857 = vld [vmem:[%s823 + $0x7c] sm:$0xf]
        %v858 = vld [vmem:[#allocation6] sm:$0x3]
        %v891 = vunpack.c.l.b16 %v826
        %v892 = vunpack.c.l.b16 %v827
        %v893 = vunpack.c.l.b16 %v828
        %v894 = vunpack.c.l.b16 %v829
        %v895 = vunpack.c.l.b16 %v830
        %v896 = vunpack.c.l.b16 %v831
        %v897 = vunpack.c.l.b16 %v832
        %v898 = vunpack.c.l.b16 %v833
        %v899 = vunpack.c.l.b16 %v834
        %v900 = vunpack.c.l.b16 %v835
        %v901 = vunpack.c.l.b16 %v836
        %v902 = vunpack.c.l.b16 %v837
        %v903 = vunpack.c.l.b16 %v838
        %v904 = vunpack.c.l.b16 %v839
        %v905 = vunpack.c.l.b16 %v840
        %v906 = vunpack.c.l.b16 %v841
        %v907 = vunpack.c.l.b16 %v842
        %v908 = vunpack.c.l.b16 %v843
        %v909 = vunpack.c.l.b16 %v844
        %v910 = vunpack.c.l.b16 %v845
        %v911 = vunpack.c.l.b16 %v846
        %v912 = vunpack.c.l.b16 %v847
        %v913 = vunpack.c.l.b16 %v848
        %v914 = vunpack.c.l.b16 %v849
        %v915 = vunpack.c.l.b16 %v850
        %v916 = vunpack.c.l.b16 %v851
        %v917 = vunpack.c.l.b16 %v852
        %v918 = vunpack.c.l.b16 %v853
        %v919 = vunpack.c.l.b16 %v854
        %v920 = vunpack.c.l.b16 %v855
        %v921 = vunpack.c.l.b16 %v856
        %v922 = vunpack.c.l.b16 %v857
        %v923 = vpack.c.b16 %v892, %v891
        %v924 = vpack.c.b16 %v894, %v893
        %v925 = vpack.c.b16 %v896, %v895
        %v926 = vpack.c.b16 %v898, %v897
        %v927 = vpack.c.b16 %v900, %v899
        %v928 = vpack.c.b16 %v902, %v901
        %v929 = vpack.c.b16 %v904, %v903
        %v930 = vpack.c.b16 %v906, %v905
        %v931 = vpack.c.b16 %v908, %v907
        %v932 = vpack.c.b16 %v910, %v909
        %v933 = vpack.c.b16 %v912, %v911
        %v934 = vpack.c.b16 %v914, %v913
        %v935 = vpack.c.b16 %v916, %v915
        %v936 = vpack.c.b16 %v918, %v917
        %v937 = vpack.c.b16 %v920, %v919
        %v938 = vpack.c.b16 %v922, %v921
        %vm939 = vcmask 31744
        %v941 = vsel %vm939, %v923, 0
        %v944 = vsel %vm939, %v924, 0
        %v947 = vsel %vm939, %v925, 0
        %v950 = vsel %vm939, %v926, 0
        %v953 = vsel %vm939, %v927, 0
        %v956 = vsel %vm939, %v928, 0
        %v959 = vsel %vm939, %v929, 0
        %v962 = vsel %vm939, %v930, 0
        %v965 = vsel %vm939, %v931, 0
        %v968 = vsel %vm939, %v932, 0
        %v971 = vsel %vm939, %v933, 0
        %v974 = vsel %vm939, %v934, 0
        %v977 = vsel %vm939, %v935, 0
        %v980 = vsel %vm939, %v936, 0
        %v983 = vsel %vm939, %v937, 0
        %v986 = vsel %vm939, %v938, 0
        %vm988 = vcmask 1041408
        %v990 = vsel %vm988, %v858, 0
        %992 = vmatprep.subr.bf16.mxu0 0
        %993 = vmatpush1.bf16.msra.mxu0 %v990
        %994 = vmatprep.subr.bf16.mxu0 0
        %995 = vmatpush1.bf16.msra.mxu0 0
        %996 = vmatprep.subr.bf16.mxu0 0
        %997 = vmatpush1.bf16.msra.mxu0 0
        %998 = vmatprep.subr.bf16.mxu0 0
        %999 = vmatpush1.bf16.msra.mxu0 0
        %1000 = vmatprep.subr.bf16.mxu0 0
        %1001 = vmatpush1.bf16.msra.mxu0 0
        %1002 = vmatprep.subr.bf16.mxu0 0
        %1003 = vmatpush1.bf16.msra.mxu0 0
        %1004 = vmatprep.subr.bf16.mxu0 0
        %1005 = vmatpush1.bf16.msra.mxu0 0
        %1006 = vmatprep.subr.bf16.mxu0 0
        %1007 = vmatpush1.bf16.msra.mxu0 0
        %1008 = vmatprep.subr.bf16.mxu0 0
        %1009 = vmatpush1.bf16.msra.mxu0 0
        %1010 = vmatprep.subr.bf16.mxu0 0
        %1011 = vmatpush1.bf16.msra.mxu0 0
        %1012 = vmatprep.subr.bf16.mxu0 0
        %1013 = vmatpush1.bf16.msra.mxu0 0
        %1014 = vmatprep.subr.bf16.mxu0 0
        %1015 = vmatpush1.bf16.msra.mxu0 0
        %1016 = vmatprep.subr.bf16.mxu0 0
        %1017 = vmatpush1.bf16.msra.mxu0 0
        %1018 = vmatprep.subr.bf16.mxu0 0
        %1019 = vmatpush1.bf16.msra.mxu0 0
        %1020 = vmatprep.subr.bf16.mxu0 0
        %1021 = vmatpush1.bf16.msra.mxu0 0
        %1022 = vmatprep.subr.bf16.mxu0 0
        %1023 = vmatpush1.bf16.msra.mxu0 0
        %1024 = vmatprep.mubr.bf16.mxu0 0
        %1025 = vmatmul.mubr.bf16.gmra.mrb[0].mxu0 %v941
        %v1026 = vpop.f32.mrb[0].mxu0
        %v1027 = vadd.f32 0.0, %v1026
        %v1028 = vpop.f32.mrb[0].mxu0
        %v1029 = vpop.f32.mrb[0].mxu0
        %v1030 = vadd.f32 0.0, %v1029
        %v1031 = vpop.f32.mrb[0].mxu0
        %1032 = vmatprep.mubr.bf16.mxu0 0
        %1033 = vmatmul.mubr.bf16.gmra.mrb[0].mxu0 %v944
        %v1034 = vpop.f32.mrb[0].mxu0
        %v1035 = vadd.f32 0.0, %v1034
        %v1036 = vpop.f32.mrb[0].mxu0
        %v1037 = vpop.f32.mrb[0].mxu0
        %v1038 = vadd.f32 0.0, %v1037
        %v1039 = vpop.f32.mrb[0].mxu0
        %1040 = vmatprep.mubr.bf16.mxu0 0
        %1041 = vmatmul.mubr.bf16.gmra.mrb[0].mxu0 %v947
        %v1042 = vpop.f32.mrb[0].mxu0
        %v1043 = vadd.f32 0.0, %v1042
        %v1044 = vpop.f32.mrb[0].mxu0
        %v1045 = vpop.f32.mrb[0].mxu0
        %v1046 = vadd.f32 0.0, %v1045
        %v1047 = vpop.f32.mrb[0].mxu0
        %1048 = vmatprep.mubr.bf16.mxu0 0
        %1049 = vmatmul.mubr.bf16.gmra.mrb[0].mxu0 %v950
        %v1050 = vpop.f32.mrb[0].mxu0
        %v1051 = vadd.f32 0.0, %v1050
        %v1052 = vpop.f32.mrb[0].mxu0
        %v1053 = vpop.f32.mrb[0].mxu0
        %v1054 = vadd.f32 0.0, %v1053
        %v1055 = vpop.f32.mrb[0].mxu0
        %1056 = vmatprep.mubr.bf16.mxu0 0
        %1057 = vmatmul.mubr.bf16.gmra.mrb[0].mxu0 %v953
        %v1058 = vpop.f32.mrb[0].mxu0
        %v1059 = vadd.f32 0.0, %v1058
        %v1060 = vpop.f32.mrb[0].mxu0
        %v1061 = vpop.f32.mrb[0].mxu0
        %v1062 = vadd.f32 0.0, %v1061
        %v1063 = vpop.f32.mrb[0].mxu0
        %1064 = vmatprep.mubr.bf16.mxu0 0
        %1065 = vmatmul.mubr.bf16.gmra.mrb[0].mxu0 %v956
        %v1066 = vpop.f32.mrb[0].mxu0
        %v1067 = vadd.f32 0.0, %v1066
        %v1068 = vpop.f32.mrb[0].mxu0
        %v1069 = vpop.f32.mrb[0].mxu0
        %v1070 = vadd.f32 0.0, %v1069
        %v1071 = vpop.f32.mrb[0].mxu0
        %1072 = vmatprep.mubr.bf16.mxu0 0
        %1073 = vmatmul.mubr.bf16.gmra.mrb[0].mxu0 %v959
        %v1074 = vpop.f32.mrb[0].mxu0
        %v1075 = vadd.f32 0.0, %v1074
        %v1076 = vpop.f32.mrb[0].mxu0
        %v1077 = vpop.f32.mrb[0].mxu0
        %v1078 = vadd.f32 0.0, %v1077
        %v1079 = vpop.f32.mrb[0].mxu0
        %1080 = vmatprep.mubr.bf16.mxu0 0
        %1081 = vmatmul.mubr.bf16.gmra.mrb[0].mxu0 %v962
        %v1082 = vpop.f32.mrb[0].mxu0
        %v1083 = vadd.f32 0.0, %v1082
        %v1084 = vpop.f32.mrb[0].mxu0
        %v1085 = vpop.f32.mrb[0].mxu0
        %v1086 = vadd.f32 0.0, %v1085
        %v1087 = vpop.f32.mrb[0].mxu0
        %1088 = vmatprep.mubr.bf16.mxu0 0
        %1089 = vmatmul.mubr.bf16.gmra.mrb[0].mxu0 %v965
        %v1090 = vpop.f32.mrb[0].mxu0
        %v1091 = vadd.f32 0.0, %v1090
        %v1092 = vpop.f32.mrb[0].mxu0
        %v1093 = vpop.f32.mrb[0].mxu0
        %v1094 = vadd.f32 0.0, %v1093
        %v1095 = vpop.f32.mrb[0].mxu0
        %1096 = vmatprep.mubr.bf16.mxu0 0
        %1097 = vmatmul.mubr.bf16.gmra.mrb[0].mxu0 %v968
        %v1098 = vpop.f32.mrb[0].mxu0
        %v1099 = vadd.f32 0.0, %v1098
        %v1100 = vpop.f32.mrb[0].mxu0
        %v1101 = vpop.f32.mrb[0].mxu0
        %v1102 = vadd.f32 0.0, %v1101
        %v1103 = vpop.f32.mrb[0].mxu0
        %1104 = vmatprep.mubr.bf16.mxu0 0
        %1105 = vmatmul.mubr.bf16.gmra.mrb[0].mxu0 %v971
        %v1106 = vpop.f32.mrb[0].mxu0
        %v1107 = vadd.f32 0.0, %v1106
        %v1108 = vpop.f32.mrb[0].mxu0
        %v1109 = vpop.f32.mrb[0].mxu0
        %v1110 = vadd.f32 0.0, %v1109
        %v1111 = vpop.f32.mrb[0].mxu0
        %1112 = vmatprep.mubr.bf16.mxu0 0
        %1113 = vmatmul.mubr.bf16.gmra.mrb[0].mxu0 %v974
        %v1114 = vpop.f32.mrb[0].mxu0
        %v1115 = vadd.f32 0.0, %v1114
        %v1116 = vpop.f32.mrb[0].mxu0
        %v1117 = vpop.f32.mrb[0].mxu0
        %v1118 = vadd.f32 0.0, %v1117
        %v1119 = vpop.f32.mrb[0].mxu0
        %1120 = vmatprep.mubr.bf16.mxu0 0
        %1121 = vmatmul.mubr.bf16.gmra.mrb[0].mxu0 %v977
        %v1122 = vpop.f32.mrb[0].mxu0
        %v1123 = vadd.f32 0.0, %v1122
        %v1124 = vpop.f32.mrb[0].mxu0
        %v1125 = vpop.f32.mrb[0].mxu0
        %v1126 = vadd.f32 0.0, %v1125
        %v1127 = vpop.f32.mrb[0].mxu0
        %1128 = vmatprep.mubr.bf16.mxu0 0
        %1129 = vmatmul.mubr.bf16.gmra.mrb[0].mxu0 %v980
        %v1130 = vpop.f32.mrb[0].mxu0
        %v1131 = vadd.f32 0.0, %v1130
        %v1132 = vpop.f32.mrb[0].mxu0
        %v1133 = vpop.f32.mrb[0].mxu0
        %v1134 = vadd.f32 0.0, %v1133
        %v1135 = vpop.f32.mrb[0].mxu0
        %1136 = vmatprep.mubr.bf16.mxu0 0
        %1137 = vmatmul.mubr.bf16.gmra.mrb[0].mxu0 %v983
        %v1138 = vpop.f32.mrb[0].mxu0
        %v1139 = vadd.f32 0.0, %v1138
        %v1140 = vpop.f32.mrb[0].mxu0
        %v1141 = vpop.f32.mrb[0].mxu0
        %v1142 = vadd.f32 0.0, %v1141
        %v1143 = vpop.f32.mrb[0].mxu0
        %1144 = vmatprep.mubr.bf16.mxu0 0
        %1145 = vmatmul.mubr.bf16.gmra.mrb[0].mxu0 %v986
        %v1146 = vpop.f32.mrb[0].mxu0
        %v1147 = vadd.f32 0.0, %v1146
        %v1148 = vpop.f32.mrb[0].mxu0
        %v1149 = vpop.f32.mrb[0].mxu0
        %v1150 = vadd.f32 0.0, %v1149
        %v1151 = vpop.f32.mrb[0].mxu0
        %1152 = vdwg.mxu0
        %v1153 = vld [vmem:[#allocation7] sm:$0x1]
        %v1155 = vlaneseq
        %v1156 = vshrl.u32 %v1155, 7
        %v1157 = vsub.s32 0, %v1156
        %v1158 = vrot.slane %v1153, %v1157
        %v1160 = vmul.f32 %v1027, %v1158
        %v1161 = vmul.f32 %v1030, %v1158
        %v1162 = vmul.f32 %v1035, %v1158
        %v1163 = vmul.f32 %v1038, %v1158
        %v1164 = vmul.f32 %v1043, %v1158
        %v1165 = vmul.f32 %v1046, %v1158
        %v1166 = vmul.f32 %v1051, %v1158
        %v1167 = vmul.f32 %v1054, %v1158
        %v1168 = vmul.f32 %v1059, %v1158
        %v1169 = vmul.f32 %v1062, %v1158
        %v1170 = vmul.f32 %v1067, %v1158
        %v1171 = vmul.f32 %v1070, %v1158
        %v1172 = vmul.f32 %v1075, %v1158
        %v1173 = vmul.f32 %v1078, %v1158
        %v1174 = vmul.f32 %v1083, %v1158
        %v1175 = vmul.f32 %v1086, %v1158
        %v1176 = vmul.f32 %v1091, %v1158
        %v1177 = vmul.f32 %v1094, %v1158
        %v1178 = vmul.f32 %v1099, %v1158
        %v1179 = vmul.f32 %v1102, %v1158
        %v1180 = vmul.f32 %v1107, %v1158
        %v1181 = vmul.f32 %v1110, %v1158
        %v1182 = vmul.f32 %v1115, %v1158
        %v1183 = vmul.f32 %v1118, %v1158
        %v1184 = vmul.f32 %v1123, %v1158
        %v1185 = vmul.f32 %v1126, %v1158
        %v1186 = vmul.f32 %v1131, %v1158
        %v1187 = vmul.f32 %v1134, %v1158
        %v1188 = vmul.f32 %v1139, %v1158
        %v1189 = vmul.f32 %v1142, %v1158
        %v1190 = vmul.f32 %v1147, %v1158
        %v1191 = vmul.f32 %v1150, %v1158
        %v1192 = vld [vmem:[#allocation9] sm:$0x1]
        %v1194 = vlaneseq
        %v1195 = vshrl.u32 %v1194, 7
        %v1196 = vsub.s32 0, %v1195
        %v1197 = vrot.slane %v1192, %v1196
        %v1199 = vadd.f32 %v1160, %v1197
        %v1200 = vadd.f32 %v1161, %v1197
        %v1201 = vadd.f32 %v1162, %v1197
        %v1202 = vadd.f32 %v1163, %v1197
        %v1203 = vadd.f32 %v1164, %v1197
        %v1204 = vadd.f32 %v1165, %v1197
        %v1205 = vadd.f32 %v1166, %v1197
        %v1206 = vadd.f32 %v1167, %v1197
        %v1207 = vadd.f32 %v1168, %v1197
        %v1208 = vadd.f32 %v1169, %v1197
        %v1209 = vadd.f32 %v1170, %v1197
        %v1210 = vadd.f32 %v1171, %v1197
        %v1211 = vadd.f32 %v1172, %v1197
        %v1212 = vadd.f32 %v1173, %v1197
        %v1213 = vadd.f32 %v1174, %v1197
        %v1214 = vadd.f32 %v1175, %v1197
        %v1215 = vadd.f32 %v1176, %v1197
        %v1216 = vadd.f32 %v1177, %v1197
        %v1217 = vadd.f32 %v1178, %v1197
        %v1218 = vadd.f32 %v1179, %v1197
        %v1219 = vadd.f32 %v1180, %v1197
        %v1220 = vadd.f32 %v1181, %v1197
        %v1221 = vadd.f32 %v1182, %v1197
        %v1222 = vadd.f32 %v1183, %v1197
        %v1223 = vadd.f32 %v1184, %v1197
        %v1224 = vadd.f32 %v1185, %v1197
        %v1225 = vadd.f32 %v1186, %v1197
        %v1226 = vadd.f32 %v1187, %v1197
        %v1227 = vadd.f32 %v1188, %v1197
        %v1228 = vadd.f32 %v1189, %v1197
        %v1229 = vadd.f32 %v1190, %v1197
        %v1230 = vadd.f32 %v1191, %v1197
        %v1231 = vmax.f32 %v1199, 0.0
        %v1232 = vmax.f32 %v1200, 0.0
        %v1233 = vmax.f32 %v1201, 0.0
        %v1234 = vmax.f32 %v1202, 0.0
        %v1235 = vmax.f32 %v1203, 0.0
        %v1236 = vmax.f32 %v1204, 0.0
        %v1237 = vmax.f32 %v1205, 0.0
        %v1238 = vmax.f32 %v1206, 0.0
        %v1239 = vmax.f32 %v1207, 0.0
        %v1240 = vmax.f32 %v1208, 0.0
        %v1241 = vmax.f32 %v1209, 0.0
        %v1242 = vmax.f32 %v1210, 0.0
        %v1243 = vmax.f32 %v1211, 0.0
        %v1244 = vmax.f32 %v1212, 0.0
        %v1245 = vmax.f32 %v1213, 0.0
        %v1246 = vmax.f32 %v1214, 0.0
        %v1247 = vmax.f32 %v1215, 0.0
        %v1248 = vmax.f32 %v1216, 0.0
        %v1249 = vmax.f32 %v1217, 0.0
        %v1250 = vmax.f32 %v1218, 0.0
        %v1251 = vmax.f32 %v1219, 0.0
        %v1252 = vmax.f32 %v1220, 0.0
        %v1253 = vmax.f32 %v1221, 0.0
        %v1254 = vmax.f32 %v1222, 0.0
        %v1255 = vmax.f32 %v1223, 0.0
        %v1256 = vmax.f32 %v1224, 0.0
        %v1257 = vmax.f32 %v1225, 0.0
        %v1258 = vmax.f32 %v1226, 0.0
        %v1259 = vmax.f32 %v1227, 0.0
        %v1260 = vmax.f32 %v1228, 0.0
        %v1261 = vmax.f32 %v1229, 0.0
        %v1262 = vmax.f32 %v1230, 0.0
        %s1263 = sld [smem:[#allocation2]]
        %v1264 = vpack.c.bf16 %v1232, %v1231
        %v1265 = vpack.c.bf16 %v1234, %v1233
        %v1266 = vpack.c.bf16 %v1236, %v1235
        %v1267 = vpack.c.bf16 %v1238, %v1237
        %v1268 = vpack.c.bf16 %v1240, %v1239
        %v1269 = vpack.c.bf16 %v1242, %v1241
        %v1270 = vpack.c.bf16 %v1244, %v1243
        %v1271 = vpack.c.bf16 %v1246, %v1245
        %v1272 = vpack.c.bf16 %v1248, %v1247
        %v1273 = vpack.c.bf16 %v1250, %v1249
        %v1274 = vpack.c.bf16 %v1252, %v1251
        %v1275 = vpack.c.bf16 %v1254, %v1253
        %v1276 = vpack.c.bf16 %v1256, %v1255
        %v1277 = vpack.c.bf16 %v1258, %v1257
        %v1278 = vpack.c.bf16 %v1260, %v1259
        %v1279 = vpack.c.bf16 %v1262, %v1261
        %v1280 = vld [vmem:[#allocation10] sm:$0xff]
        %v1281 = vld [vmem:[#allocation10 + $0x8] sm:$0xf]
        %v1282 = vld [vmem:[#allocation10 + $0xc] sm:$0xff]
        %v1283 = vld [vmem:[#allocation10 + $0x14] sm:$0xf]
        %v1284 = vld [vmem:[#allocation10 + $0x18] sm:$0xff]
        %v1285 = vld [vmem:[#allocation10 + $0x20] sm:$0xf]
        %v1286 = vld [vmem:[#allocation10 + $0x24] sm:$0xff]
        %v1287 = vld [vmem:[#allocation10 + $0x2c] sm:$0xf]
        %v1288 = vld [vmem:[#allocation10 + $0x30] sm:$0xff]
        %v1289 = vld [vmem:[#allocation10 + $0x38] sm:$0xf]
        %v1290 = vld [vmem:[#allocation10 + $0x3c] sm:$0xff]
        %v1291 = vld [vmem:[#allocation10 + $0x44] sm:$0xf]
        %v1292 = vld [vmem:[#allocation10 + $0x48] sm:$0xff]
        %v1293 = vld [vmem:[#allocation10 + $0x50] sm:$0xf]
        %v1294 = vld [vmem:[#allocation10 + $0x54] sm:$0xff]
        %v1295 = vld [vmem:[#allocation10 + $0x5c] sm:$0xf]
        %v1296 = vld [vmem:[#allocation10 + $0x60] sm:$0xff]
        %v1297 = vld [vmem:[#allocation10 + $0x68] sm:$0xf]
        %v1298 = vld [vmem:[#allocation10 + $0x6c] sm:$0xff]
        %v1299 = vld [vmem:[#allocation10 + $0x74] sm:$0xf]
        %v1300 = vld [vmem:[#allocation10 + $0x78] sm:$0xff]
        %v1301 = vld [vmem:[#allocation10 + $0x80] sm:$0xf]
        %v1302 = vld [vmem:[#allocation10 + $0x84] sm:$0xff]
        %v1303 = vld [vmem:[#allocation10 + $0x8c] sm:$0xf]
        %v1304 = vld [vmem:[#allocation10 + $0x90] sm:$0xff]
        %v1305 = vld [vmem:[#allocation10 + $0x98] sm:$0xf]
        %v1306 = vld [vmem:[#allocation10 + $0x9c] sm:$0xff]
        %v1307 = vld [vmem:[#allocation10 + $0xa4] sm:$0xf]
        %v1308 = vld [vmem:[#allocation10 + $0xa8] sm:$0xff]
        %v1309 = vld [vmem:[#allocation10 + $0xb0] sm:$0xf]
        %v1310 = vld [vmem:[#allocation10 + $0xb4] sm:$0xff]
        %v1311 = vld [vmem:[#allocation10 + $0xbc] sm:$0xf]
        %v1312 = vld [vmem:[#allocation12] sm:$0x7]
        %v1314 = vlaneseq
        %v1315 = vshrl.u32 %v1314, 7
        %v1316 = vsub.s32 0, %v1315
        %v1317 = vrot.slane %v1312, %v1316
        %v1318 = vlaneseq
        %v1319 = vshrl.u32 %v1318, 7
        %v1320 = vsub.s32 1, %v1319
        %v1321 = vrot.slane %v1312, %v1320
        %v1322 = vlaneseq
        %v1323 = vshrl.u32 %v1322, 7
        %v1324 = vsub.s32 2, %v1323
        %v1325 = vrot.slane %v1312, %v1324
        %v1361 = vunpack.c.l.b16 %v1280
        %v1362 = vunpack.c.h.b16 %v1280
        %v1363 = vunpack.c.l.b16 %v1281
        %v1364 = vunpack.c.l.b16 %v1282
        %v1365 = vunpack.c.h.b16 %v1282
        %v1366 = vunpack.c.l.b16 %v1283
        %v1367 = vunpack.c.l.b16 %v1284
        %v1368 = vunpack.c.h.b16 %v1284
        %v1369 = vunpack.c.l.b16 %v1285
        %v1370 = vunpack.c.l.b16 %v1286
        %v1371 = vunpack.c.h.b16 %v1286
        %v1372 = vunpack.c.l.b16 %v1287
        %v1373 = vunpack.c.l.b16 %v1288
        %v1374 = vunpack.c.h.b16 %v1288
        %v1375 = vunpack.c.l.b16 %v1289
        %v1376 = vunpack.c.l.b16 %v1290
        %v1377 = vunpack.c.h.b16 %v1290
        %v1378 = vunpack.c.l.b16 %v1291
        %v1379 = vunpack.c.l.b16 %v1292
        %v1380 = vunpack.c.h.b16 %v1292
        %v1381 = vunpack.c.l.b16 %v1293
        %v1382 = vunpack.c.l.b16 %v1294
        %v1383 = vunpack.c.h.b16 %v1294
        %v1384 = vunpack.c.l.b16 %v1295
        %v1385 = vunpack.c.l.b16 %v1296
        %v1386 = vunpack.c.h.b16 %v1296
        %v1387 = vunpack.c.l.b16 %v1297
        %v1388 = vunpack.c.l.b16 %v1298
        %v1389 = vunpack.c.h.b16 %v1298
        %v1390 = vunpack.c.l.b16 %v1299
        %v1391 = vunpack.c.l.b16 %v1300
        %v1392 = vunpack.c.h.b16 %v1300
        %v1393 = vunpack.c.l.b16 %v1301
        %v1394 = vunpack.c.l.b16 %v1302
        %v1395 = vunpack.c.h.b16 %v1302
        %v1396 = vunpack.c.l.b16 %v1303
        %v1397 = vunpack.c.l.b16 %v1304
        %v1398 = vunpack.c.h.b16 %v1304
        %v1399 = vunpack.c.l.b16 %v1305
        %v1400 = vunpack.c.l.b16 %v1306
        %v1401 = vunpack.c.h.b16 %v1306
        %v1402 = vunpack.c.l.b16 %v1307
        %v1403 = vunpack.c.l.b16 %v1308
        %v1404 = vunpack.c.h.b16 %v1308
        %v1405 = vunpack.c.l.b16 %v1309
        %v1406 = vunpack.c.l.b16 %v1310
        %v1407 = vunpack.c.h.b16 %v1310
        %v1408 = vunpack.c.l.b16 %v1311
        %v1409 = vpack.c.b16 %v1364, %v1361
        %v1410 = vpack.c.b16 %v1365, %v1362
        %v1411 = vpack.c.b16 %v1366, %v1363
        %v1412 = vpack.c.b16 %v1370, %v1367
        %v1413 = vpack.c.b16 %v1371, %v1368
        %v1414 = vpack.c.b16 %v1372, %v1369
        %v1415 = vpack.c.b16 %v1376, %v1373
        %v1416 = vpack.c.b16 %v1377, %v1374
        %v1417 = vpack.c.b16 %v1378, %v1375
        %v1418 = vpack.c.b16 %v1382, %v1379
        %v1419 = vpack.c.b16 %v1383, %v1380
        %v1420 = vpack.c.b16 %v1384, %v1381
        %v1421 = vpack.c.b16 %v1388, %v1385
        %v1422 = vpack.c.b16 %v1389, %v1386
        %v1423 = vpack.c.b16 %v1390, %v1387
        %v1424 = vpack.c.b16 %v1394, %v1391
        %v1425 = vpack.c.b16 %v1395, %v1392
        %v1426 = vpack.c.b16 %v1396, %v1393
        %v1427 = vpack.c.b16 %v1400, %v1397
        %v1428 = vpack.c.b16 %v1401, %v1398
        %v1429 = vpack.c.b16 %v1402, %v1399
        %v1430 = vpack.c.b16 %v1406, %v1403
        %v1431 = vpack.c.b16 %v1407, %v1404
        %v1432 = vpack.c.b16 %v1408, %v1405
        %1457 = vmatprep.subr.bf16.mxu0 %v1410
        %1458 = vmatpush1.bf16.msra.mxu0 %v1409
        %1459 = vmatprep.subr.bf16.mxu0 %v1413
        %1460 = vmatpush1.bf16.msra.mxu0 %v1412
        %1461 = vmatprep.subr.bf16.mxu0 %v1416
        %1462 = vmatpush1.bf16.msra.mxu0 %v1415
        %1463 = vmatprep.subr.bf16.mxu0 %v1419
        %1464 = vmatpush1.bf16.msra.mxu0 %v1418
        %1465 = vmatprep.subr.bf16.mxu0 %v1422
        %1466 = vmatpush1.bf16.msra.mxu0 %v1421
        %1467 = vmatprep.subr.bf16.mxu0 %v1425
        %1468 = vmatpush1.bf16.msra.mxu0 %v1424
        %1469 = vmatprep.subr.bf16.mxu0 %v1428
        %1470 = vmatpush1.bf16.msra.mxu0 %v1427
        %1471 = vmatprep.subr.bf16.mxu0 %v1431
        %1472 = vmatpush1.bf16.msra.mxu0 %v1430
        %1473 = vmatprep.subr.bf16.mxu0 0
        %1474 = vmatpush1.bf16.msra.mxu0 0
        %1475 = vmatprep.subr.bf16.mxu0 0
        %1476 = vmatpush1.bf16.msra.mxu0 0
        %1477 = vmatprep.subr.bf16.mxu0 0
        %1478 = vmatpush1.bf16.msra.mxu0 0
        %1479 = vmatprep.subr.bf16.mxu0 0
        %1480 = vmatpush1.bf16.msra.mxu0 0
        %1481 = vmatprep.subr.bf16.mxu0 0
        %1482 = vmatpush1.bf16.msra.mxu0 0
        %1483 = vmatprep.subr.bf16.mxu0 0
        %1484 = vmatpush1.bf16.msra.mxu0 0
        %1485 = vmatprep.subr.bf16.mxu0 0
        %1486 = vmatpush1.bf16.msra.mxu0 0
        %1487 = vmatprep.subr.bf16.mxu0 0
        %1488 = vmatpush1.bf16.msra.mxu0 0
        %1489 = vmatprep.mubr.bf16.mxu0 0
        %1490 = vmatmul.mubr.bf16.gmra.mrb[0].mxu0 %v1264
        %v1491 = vpop.f32.mrb[0].mxu0
        %v1492 = vadd.f32 %v1317, %v1491
        %v1493 = vpop.f32.mrb[0].mxu0
        %v1494 = vadd.f32 %v1321, %v1493
        %v1495 = vpop.f32.mrb[0].mxu0
        %v1496 = vadd.f32 %v1317, %v1495
        %v1497 = vpop.f32.mrb[0].mxu0
        %v1498 = vadd.f32 %v1321, %v1497
        %1499 = vmatprep.mubr.bf16.mxu0 0
        %1500 = vmatmul.mubr.bf16.gmra.mrb[0].mxu0 %v1265
        %v1501 = vpop.f32.mrb[0].mxu0
        %v1502 = vadd.f32 %v1317, %v1501
        %v1503 = vpop.f32.mrb[0].mxu0
        %v1504 = vadd.f32 %v1321, %v1503
        %v1505 = vpop.f32.mrb[0].mxu0
        %v1506 = vadd.f32 %v1317, %v1505
        %v1507 = vpop.f32.mrb[0].mxu0
        %v1508 = vadd.f32 %v1321, %v1507
        %1509 = vmatprep.mubr.bf16.mxu0 0
        %1510 = vmatmul.mubr.bf16.gmra.mrb[0].mxu0 %v1266
        %v1511 = vpop.f32.mrb[0].mxu0
        %v1512 = vadd.f32 %v1317, %v1511
        %v1513 = vpop.f32.mrb[0].mxu0
        %v1514 = vadd.f32 %v1321, %v1513
        %v1515 = vpop.f32.mrb[0].mxu0
        %v1516 = vadd.f32 %v1317, %v1515
        %v1517 = vpop.f32.mrb[0].mxu0
        %v1518 = vadd.f32 %v1321, %v1517
        %1519 = vmatprep.mubr.bf16.mxu0 0
        %1520 = vmatmul.mubr.bf16.gmra.mrb[0].mxu0 %v1267
        %v1521 = vpop.f32.mrb[0].mxu0
        %v1522 = vadd.f32 %v1317, %v1521
        %v1523 = vpop.f32.mrb[0].mxu0
        %v1524 = vadd.f32 %v1321, %v1523
        %v1525 = vpop.f32.mrb[0].mxu0
        %v1526 = vadd.f32 %v1317, %v1525
        %v1527 = vpop.f32.mrb[0].mxu0
        %v1528 = vadd.f32 %v1321, %v1527
        %1529 = vmatprep.mubr.bf16.mxu0 0
        %1530 = vmatmul.mubr.bf16.gmra.mrb[0].mxu0 %v1268
        %v1531 = vpop.f32.mrb[0].mxu0
        %v1532 = vadd.f32 %v1317, %v1531
        %v1533 = vpop.f32.mrb[0].mxu0
        %v1534 = vadd.f32 %v1321, %v1533
        %v1535 = vpop.f32.mrb[0].mxu0
        %v1536 = vadd.f32 %v1317, %v1535
        %v1537 = vpop.f32.mrb[0].mxu0
        %v1538 = vadd.f32 %v1321, %v1537
        %1539 = vmatprep.mubr.bf16.mxu0 0
        %1540 = vmatmul.mubr.bf16.gmra.mrb[0].mxu0 %v1269
        %v1541 = vpop.f32.mrb[0].mxu0
        %v1542 = vadd.f32 %v1317, %v1541
        %v1543 = vpop.f32.mrb[0].mxu0
        %v1544 = vadd.f32 %v1321, %v1543
        %v1545 = vpop.f32.mrb[0].mxu0
        %v1546 = vadd.f32 %v1317, %v1545
        %v1547 = vpop.f32.mrb[0].mxu0
        %v1548 = vadd.f32 %v1321, %v1547
        %1549 = vmatprep.mubr.bf16.mxu0 0
        %1550 = vmatmul.mubr.bf16.gmra.mrb[0].mxu0 %v1270
        %v1551 = vpop.f32.mrb[0].mxu0
        %v1552 = vadd.f32 %v1317, %v1551
        %v1553 = vpop.f32.mrb[0].mxu0
        %v1554 = vadd.f32 %v1321, %v1553
        %v1555 = vpop.f32.mrb[0].mxu0
        %v1556 = vadd.f32 %v1317, %v1555
        %v1557 = vpop.f32.mrb[0].mxu0
        %v1558 = vadd.f32 %v1321, %v1557
        %1559 = vmatprep.mubr.bf16.mxu0 0
        %1560 = vmatmul.mubr.bf16.gmra.mrb[0].mxu0 %v1271
        %v1561 = vpop.f32.mrb[0].mxu0
        %v1562 = vadd.f32 %v1317, %v1561
        %v1563 = vpop.f32.mrb[0].mxu0
        %v1564 = vadd.f32 %v1321, %v1563
        %v1565 = vpop.f32.mrb[0].mxu0
        %v1566 = vadd.f32 %v1317, %v1565
        %v1567 = vpop.f32.mrb[0].mxu0
        %v1568 = vadd.f32 %v1321, %v1567
        %1569 = vmatprep.mubr.bf16.mxu0 0
        %1570 = vmatmul.mubr.bf16.gmra.mrb[0].mxu0 %v1272
        %v1571 = vpop.f32.mrb[0].mxu0
        %v1572 = vadd.f32 %v1317, %v1571
        %v1573 = vpop.f32.mrb[0].mxu0
        %v1574 = vadd.f32 %v1321, %v1573
        %v1575 = vpop.f32.mrb[0].mxu0
        %v1576 = vadd.f32 %v1317, %v1575
        %v1577 = vpop.f32.mrb[0].mxu0
        %v1578 = vadd.f32 %v1321, %v1577
        %1579 = vmatprep.mubr.bf16.mxu0 0
        %1580 = vmatmul.mubr.bf16.gmra.mrb[0].mxu0 %v1273
        %v1581 = vpop.f32.mrb[0].mxu0
        %v1582 = vadd.f32 %v1317, %v1581
        %v1583 = vpop.f32.mrb[0].mxu0
        %v1584 = vadd.f32 %v1321, %v1583
        %v1585 = vpop.f32.mrb[0].mxu0
        %v1586 = vadd.f32 %v1317, %v1585
        %v1587 = vpop.f32.mrb[0].mxu0
        %v1588 = vadd.f32 %v1321, %v1587
        %1589 = vmatprep.mubr.bf16.mxu0 0
        %1590 = vmatmul.mubr.bf16.gmra.mrb[0].mxu0 %v1274
        %v1591 = vpop.f32.mrb[0].mxu0
        %v1592 = vadd.f32 %v1317, %v1591
        %v1593 = vpop.f32.mrb[0].mxu0
        %v1594 = vadd.f32 %v1321, %v1593
        %v1595 = vpop.f32.mrb[0].mxu0
        %v1596 = vadd.f32 %v1317, %v1595
        %v1597 = vpop.f32.mrb[0].mxu0
        %v1598 = vadd.f32 %v1321, %v1597
        %1599 = vmatprep.mubr.bf16.mxu0 0
        %1600 = vmatmul.mubr.bf16.gmra.mrb[0].mxu0 %v1275
        %v1601 = vpop.f32.mrb[0].mxu0
        %v1602 = vadd.f32 %v1317, %v1601
        %v1603 = vpop.f32.mrb[0].mxu0
        %v1604 = vadd.f32 %v1321, %v1603
        %v1605 = vpop.f32.mrb[0].mxu0
        %v1606 = vadd.f32 %v1317, %v1605
        %v1607 = vpop.f32.mrb[0].mxu0
        %v1608 = vadd.f32 %v1321, %v1607
        %1609 = vmatprep.mubr.bf16.mxu0 0
        %1610 = vmatmul.mubr.bf16.gmra.mrb[0].mxu0 %v1276
        %v1611 = vpop.f32.mrb[0].mxu0
        %v1612 = vadd.f32 %v1317, %v1611
        %v1613 = vpop.f32.mrb[0].mxu0
        %v1614 = vadd.f32 %v1321, %v1613
        %v1615 = vpop.f32.mrb[0].mxu0
        %v1616 = vadd.f32 %v1317, %v1615
        %v1617 = vpop.f32.mrb[0].mxu0
        %v1618 = vadd.f32 %v1321, %v1617
        %1619 = vmatprep.mubr.bf16.mxu0 0
        %1620 = vmatmul.mubr.bf16.gmra.mrb[0].mxu0 %v1277
        %v1621 = vpop.f32.mrb[0].mxu0
        %v1622 = vadd.f32 %v1317, %v1621
        %v1623 = vpop.f32.mrb[0].mxu0
        %v1624 = vadd.f32 %v1321, %v1623
        %v1625 = vpop.f32.mrb[0].mxu0
        %v1626 = vadd.f32 %v1317, %v1625
        %v1627 = vpop.f32.mrb[0].mxu0
        %v1628 = vadd.f32 %v1321, %v1627
        %1629 = vmatprep.mubr.bf16.mxu0 0
        %1630 = vmatmul.mubr.bf16.gmra.mrb[0].mxu0 %v1278
        %v1631 = vpop.f32.mrb[0].mxu0
        %v1632 = vadd.f32 %v1317, %v1631
        %v1633 = vpop.f32.mrb[0].mxu0
        %v1634 = vadd.f32 %v1321, %v1633
        %v1635 = vpop.f32.mrb[0].mxu0
        %v1636 = vadd.f32 %v1317, %v1635
        %v1637 = vpop.f32.mrb[0].mxu0
        %v1638 = vadd.f32 %v1321, %v1637
        %1639 = vmatprep.mubr.bf16.mxu0 0
        %1640 = vmatmul.mubr.bf16.gmra.mrb[0].mxu0 %v1279
        %v1641 = vpop.f32.mrb[0].mxu0
        %v1642 = vadd.f32 %v1317, %v1641
        %v1643 = vpop.f32.mrb[0].mxu0
        %v1644 = vadd.f32 %v1321, %v1643
        %v1645 = vpop.f32.mrb[0].mxu0
        %v1646 = vadd.f32 %v1317, %v1645
        %v1647 = vpop.f32.mrb[0].mxu0
        %v1648 = vadd.f32 %v1321, %v1647
        %1649 = vdwg.mxu0
        %1650 = vmatprep.subr.bf16.mxu0 0
        %1651 = vmatpush1.bf16.msra.mxu0 %v1411
        %1652 = vmatprep.subr.bf16.mxu0 0
        %1653 = vmatpush1.bf16.msra.mxu0 %v1414
        %1654 = vmatprep.subr.bf16.mxu0 0
        %1655 = vmatpush1.bf16.msra.mxu0 %v1417
        %1656 = vmatprep.subr.bf16.mxu0 0
        %1657 = vmatpush1.bf16.msra.mxu0 %v1420
        %1658 = vmatprep.subr.bf16.mxu0 0
        %1659 = vmatpush1.bf16.msra.mxu0 %v1423
        %1660 = vmatprep.subr.bf16.mxu0 0
        %1661 = vmatpush1.bf16.msra.mxu0 %v1426
        %1662 = vmatprep.subr.bf16.mxu0 0
        %1663 = vmatpush1.bf16.msra.mxu0 %v1429
        %1664 = vmatprep.subr.bf16.mxu0 0
        %1665 = vmatpush1.bf16.msra.mxu0 %v1432
        %1666 = vmatprep.subr.bf16.mxu0 0
        %1667 = vmatpush1.bf16.msra.mxu0 0
        %1668 = vmatprep.subr.bf16.mxu0 0
        %1669 = vmatpush1.bf16.msra.mxu0 0
        %1670 = vmatprep.subr.bf16.mxu0 0
        %1671 = vmatpush1.bf16.msra.mxu0 0
        %1672 = vmatprep.subr.bf16.mxu0 0
        %1673 = vmatpush1.bf16.msra.mxu0 0
        %1674 = vmatprep.subr.bf16.mxu0 0
        %1675 = vmatpush1.bf16.msra.mxu0 0
        %1676 = vmatprep.subr.bf16.mxu0 0
        %1677 = vmatpush1.bf16.msra.mxu0 0
        %1678 = vmatprep.subr.bf16.mxu0 0
        %1679 = vmatpush1.bf16.msra.mxu0 0
        %1680 = vmatprep.subr.bf16.mxu0 0
        %1681 = vmatpush1.bf16.msra.mxu0 0
        %1682 = vmatprep.mubr.bf16.mxu0 0
        %1683 = vmatmul.mubr.bf16.gmra.mrb[0].mxu0 %v1264
        %v1684 = vpop.f32.mrb[0].mxu0
        %v1685 = vadd.f32 %v1325, %v1684
        %v1686 = vpop.f32.mrb[0].mxu0
        %v1687 = vpop.f32.mrb[0].mxu0
        %v1688 = vadd.f32 %v1325, %v1687
        %v1689 = vpop.f32.mrb[0].mxu0
        %1690 = vmatprep.mubr.bf16.mxu0 0
        %1691 = vmatmul.mubr.bf16.gmra.mrb[0].mxu0 %v1265
        %v1692 = vpop.f32.mrb[0].mxu0
        %v1693 = vadd.f32 %v1325, %v1692
        %v1694 = vpop.f32.mrb[0].mxu0
        %v1695 = vpop.f32.mrb[0].mxu0
        %v1696 = vadd.f32 %v1325, %v1695
        %v1697 = vpop.f32.mrb[0].mxu0
        %1698 = vmatprep.mubr.bf16.mxu0 0
        %1699 = vmatmul.mubr.bf16.gmra.mrb[0].mxu0 %v1266
        %v1700 = vpop.f32.mrb[0].mxu0
        %v1701 = vadd.f32 %v1325, %v1700
        %v1702 = vpop.f32.mrb[0].mxu0
        %v1703 = vpop.f32.mrb[0].mxu0
        %v1704 = vadd.f32 %v1325, %v1703
        %v1705 = vpop.f32.mrb[0].mxu0
        %1706 = vmatprep.mubr.bf16.mxu0 0
        %1707 = vmatmul.mubr.bf16.gmra.mrb[0].mxu0 %v1267
        %v1708 = vpop.f32.mrb[0].mxu0
        %v1709 = vadd.f32 %v1325, %v1708
        %v1710 = vpop.f32.mrb[0].mxu0
        %v1711 = vpop.f32.mrb[0].mxu0
        %v1712 = vadd.f32 %v1325, %v1711
        %v1713 = vpop.f32.mrb[0].mxu0
        %1714 = vmatprep.mubr.bf16.mxu0 0
        %1715 = vmatmul.mubr.bf16.gmra.mrb[0].mxu0 %v1268
        %v1716 = vpop.f32.mrb[0].mxu0
        %v1717 = vadd.f32 %v1325, %v1716
        %v1718 = vpop.f32.mrb[0].mxu0
        %v1719 = vpop.f32.mrb[0].mxu0
        %v1720 = vadd.f32 %v1325, %v1719
        %v1721 = vpop.f32.mrb[0].mxu0
        %1722 = vmatprep.mubr.bf16.mxu0 0
        %1723 = vmatmul.mubr.bf16.gmra.mrb[0].mxu0 %v1269
        %v1724 = vpop.f32.mrb[0].mxu0
        %v1725 = vadd.f32 %v1325, %v1724
        %v1726 = vpop.f32.mrb[0].mxu0
        %v1727 = vpop.f32.mrb[0].mxu0
        %v1728 = vadd.f32 %v1325, %v1727
        %v1729 = vpop.f32.mrb[0].mxu0
        %1730 = vmatprep.mubr.bf16.mxu0 0
        %1731 = vmatmul.mubr.bf16.gmra.mrb[0].mxu0 %v1270
        %v1732 = vpop.f32.mrb[0].mxu0
        %v1733 = vadd.f32 %v1325, %v1732
        %v1734 = vpop.f32.mrb[0].mxu0
        %v1735 = vpop.f32.mrb[0].mxu0
        %v1736 = vadd.f32 %v1325, %v1735
        %v1737 = vpop.f32.mrb[0].mxu0
        %1738 = vmatprep.mubr.bf16.mxu0 0
        %1739 = vmatmul.mubr.bf16.gmra.mrb[0].mxu0 %v1271
        %v1740 = vpop.f32.mrb[0].mxu0
        %v1741 = vadd.f32 %v1325, %v1740
        %v1742 = vpop.f32.mrb[0].mxu0
        %v1743 = vpop.f32.mrb[0].mxu0
        %v1744 = vadd.f32 %v1325, %v1743
        %v1745 = vpop.f32.mrb[0].mxu0
        %1746 = vmatprep.mubr.bf16.mxu0 0
        %1747 = vmatmul.mubr.bf16.gmra.mrb[0].mxu0 %v1272
        %v1748 = vpop.f32.mrb[0].mxu0
        %v1749 = vadd.f32 %v1325, %v1748
        %v1750 = vpop.f32.mrb[0].mxu0
        %v1751 = vpop.f32.mrb[0].mxu0
        %v1752 = vadd.f32 %v1325, %v1751
        %v1753 = vpop.f32.mrb[0].mxu0
        %1754 = vmatprep.mubr.bf16.mxu0 0
        %1755 = vmatmul.mubr.bf16.gmra.mrb[0].mxu0 %v1273
        %v1756 = vpop.f32.mrb[0].mxu0
        %v1757 = vadd.f32 %v1325, %v1756
        %v1758 = vpop.f32.mrb[0].mxu0
        %v1759 = vpop.f32.mrb[0].mxu0
        %v1760 = vadd.f32 %v1325, %v1759
        %v1761 = vpop.f32.mrb[0].mxu0
        %1762 = vmatprep.mubr.bf16.mxu0 0
        %1763 = vmatmul.mubr.bf16.gmra.mrb[0].mxu0 %v1274
        %v1764 = vpop.f32.mrb[0].mxu0
        %v1765 = vadd.f32 %v1325, %v1764
        %v1766 = vpop.f32.mrb[0].mxu0
        %v1767 = vpop.f32.mrb[0].mxu0
        %v1768 = vadd.f32 %v1325, %v1767
        %v1769 = vpop.f32.mrb[0].mxu0
        %1770 = vmatprep.mubr.bf16.mxu0 0
        %1771 = vmatmul.mubr.bf16.gmra.mrb[0].mxu0 %v1275
        %v1772 = vpop.f32.mrb[0].mxu0
        %v1773 = vadd.f32 %v1325, %v1772
        %v1774 = vpop.f32.mrb[0].mxu0
        %v1775 = vpop.f32.mrb[0].mxu0
        %v1776 = vadd.f32 %v1325, %v1775
        %v1777 = vpop.f32.mrb[0].mxu0
        %1778 = vmatprep.mubr.bf16.mxu0 0
        %1779 = vmatmul.mubr.bf16.gmra.mrb[0].mxu0 %v1276
        %v1780 = vpop.f32.mrb[0].mxu0
        %v1781 = vadd.f32 %v1325, %v1780
        %v1782 = vpop.f32.mrb[0].mxu0
        %v1783 = vpop.f32.mrb[0].mxu0
        %v1784 = vadd.f32 %v1325, %v1783
        %v1785 = vpop.f32.mrb[0].mxu0
        %1786 = vmatprep.mubr.bf16.mxu0 0
        %1787 = vmatmul.mubr.bf16.gmra.mrb[0].mxu0 %v1277
        %v1788 = vpop.f32.mrb[0].mxu0
        %v1789 = vadd.f32 %v1325, %v1788
        %v1790 = vpop.f32.mrb[0].mxu0
        %v1791 = vpop.f32.mrb[0].mxu0
        %v1792 = vadd.f32 %v1325, %v1791
        %v1793 = vpop.f32.mrb[0].mxu0
        %1794 = vmatprep.mubr.bf16.mxu0 0
        %1795 = vmatmul.mubr.bf16.gmra.mrb[0].mxu0 %v1278
        %v1796 = vpop.f32.mrb[0].mxu0
        %v1797 = vadd.f32 %v1325, %v1796
        %v1798 = vpop.f32.mrb[0].mxu0
        %v1799 = vpop.f32.mrb[0].mxu0
        %v1800 = vadd.f32 %v1325, %v1799
        %v1801 = vpop.f32.mrb[0].mxu0
        %1802 = vmatprep.mubr.bf16.mxu0 0
        %1803 = vmatmul.mubr.bf16.gmra.mrb[0].mxu0 %v1279
        %v1804 = vpop.f32.mrb[0].mxu0
        %v1805 = vadd.f32 %v1325, %v1804
        %v1806 = vpop.f32.mrb[0].mxu0
        %v1807 = vpop.f32.mrb[0].mxu0
        %v1808 = vadd.f32 %v1325, %v1807
        %v1809 = vpop.f32.mrb[0].mxu0
        %1810 = vdwg.mxu0
        %v1811 = vpack.c.bf16 %v1496, %v1492
        %v1812 = vpack.c.bf16 %v1506, %v1502
        %v1813 = vpack.c.bf16 %v1516, %v1512
        %v1814 = vpack.c.bf16 %v1526, %v1522
        %v1815 = vpack.c.bf16 %v1536, %v1532
        %v1816 = vpack.c.bf16 %v1546, %v1542
        %v1817 = vpack.c.bf16 %v1556, %v1552
        %v1818 = vpack.c.bf16 %v1566, %v1562
        %v1819 = vpack.c.bf16 %v1576, %v1572
        %v1820 = vpack.c.bf16 %v1586, %v1582
        %v1821 = vpack.c.bf16 %v1596, %v1592
        %v1822 = vpack.c.bf16 %v1606, %v1602
        %v1823 = vpack.c.bf16 %v1616, %v1612
        %v1824 = vpack.c.bf16 %v1626, %v1622
        %v1825 = vpack.c.bf16 %v1636, %v1632
        %v1826 = vpack.c.bf16 %v1646, %v1642
        %v1827 = vpack.c.bf16 %v1498, %v1494
        %v1828 = vpack.c.bf16 %v1508, %v1504
        %v1829 = vpack.c.bf16 %v1518, %v1514
        %v1830 = vpack.c.bf16 %v1528, %v1524
        %v1831 = vpack.c.bf16 %v1538, %v1534
        %v1832 = vpack.c.bf16 %v1548, %v1544
        %v1833 = vpack.c.bf16 %v1558, %v1554
        %v1834 = vpack.c.bf16 %v1568, %v1564
        %v1835 = vpack.c.bf16 %v1578, %v1574
        %v1836 = vpack.c.bf16 %v1588, %v1584
        %v1837 = vpack.c.bf16 %v1598, %v1594
        %v1838 = vpack.c.bf16 %v1608, %v1604
        %v1839 = vpack.c.bf16 %v1618, %v1614
        %v1840 = vpack.c.bf16 %v1628, %v1624
        %v1841 = vpack.c.bf16 %v1638, %v1634
        %v1842 = vpack.c.bf16 %v1648, %v1644
        %1843 = vmatprep.subr.bf16.mxu0 0
        %1844 = vmatpush1.bf16.xpose.msra.mxu0 %v1827
        %1845 = vmatprep.subr.bf16.mxu0 0
        %1846 = vmatpush1.bf16.xpose.msra.mxu0 %v1828
        %1847 = vmatprep.subr.bf16.mxu0 0
        %1848 = vmatpush1.bf16.xpose.msra.mxu0 %v1829
        %1849 = vmatprep.subr.bf16.mxu0 0
        %1850 = vmatpush1.bf16.xpose.msra.mxu0 %v1830
        %1851 = vmatprep.subr.bf16.mxu0 0
        %1852 = vmatpush1.bf16.xpose.msra.mxu0 %v1831
        %1853 = vmatprep.subr.bf16.mxu0 0
        %1854 = vmatpush1.bf16.xpose.msra.mxu0 %v1832
        %1855 = vmatprep.subr.bf16.mxu0 0
        %1856 = vmatpush1.bf16.xpose.msra.mxu0 %v1833
        %1857 = vmatprep.subr.bf16.mxu0 0
        %1858 = vmatpush1.bf16.xpose.msra.mxu0 %v1834
        %1859 = vmatprep.subr.bf16.mxu0 0
        %1860 = vmatpush1.bf16.xpose.msra.mxu0 %v1835
        %1861 = vmatprep.subr.bf16.mxu0 0
        %1862 = vmatpush1.bf16.xpose.msra.mxu0 %v1836
        %1863 = vmatprep.subr.bf16.mxu0 0
        %1864 = vmatpush1.bf16.xpose.msra.mxu0 %v1837
        %1865 = vmatprep.subr.bf16.mxu0 0
        %1866 = vmatpush1.bf16.xpose.msra.mxu0 %v1838
        %1867 = vmatprep.subr.bf16.mxu0 0
        %1868 = vmatpush1.bf16.xpose.msra.mxu0 %v1839
        %1869 = vmatprep.subr.bf16.mxu0 0
        %1870 = vmatpush1.bf16.xpose.msra.mxu0 %v1840
        %1871 = vmatprep.subr.bf16.mxu0 0
        %1872 = vmatpush1.bf16.xpose.msra.mxu0 %v1841
        %1873 = vmatprep.subr.bf16.mxu0 0
        %1874 = vmatpush1.bf16.xpose.msra.mxu0 %v1842
        %1875 = vmatprep.mubr.bf16.mxu0 0
        %1876 = vmatmul.mubr.bf16.gmra.mrb[0].mxu0 %v1811
        %v1877 = vpop.f32.mrb[0].mxu0
        %v1878 = vadd.f32 0.0, %v1877
        %v1879 = vpop.f32.mrb[0].mxu0
        %v1880 = vadd.f32 0.0, %v1879
        %v1881 = vpop.f32.mrb[0].mxu0
        %v1882 = vadd.f32 0.0, %v1881
        %v1883 = vpop.f32.mrb[0].mxu0
        %v1884 = vadd.f32 0.0, %v1883
        %1885 = vmatprep.mubr.bf16.mxu0 0
        %1886 = vmatmul.mubr.bf16.gmra.mrb[0].mxu0 %v1812
        %v1887 = vpop.f32.mrb[0].mxu0
        %v1888 = vadd.f32 0.0, %v1887
        %v1889 = vpop.f32.mrb[0].mxu0
        %v1890 = vadd.f32 0.0, %v1889
        %v1891 = vpop.f32.mrb[0].mxu0
        %v1892 = vadd.f32 0.0, %v1891
        %v1893 = vpop.f32.mrb[0].mxu0
        %v1894 = vadd.f32 0.0, %v1893
        %1895 = vmatprep.mubr.bf16.mxu0 0
        %1896 = vmatmul.mubr.bf16.gmra.mrb[0].mxu0 %v1813
        %v1897 = vpop.f32.mrb[0].mxu0
        %v1898 = vadd.f32 0.0, %v1897
        %v1899 = vpop.f32.mrb[0].mxu0
        %v1900 = vadd.f32 0.0, %v1899
        %v1901 = vpop.f32.mrb[0].mxu0
        %v1902 = vadd.f32 0.0, %v1901
        %v1903 = vpop.f32.mrb[0].mxu0
        %v1904 = vadd.f32 0.0, %v1903
        %1905 = vmatprep.mubr.bf16.mxu0 0
        %1906 = vmatmul.mubr.bf16.gmra.mrb[0].mxu0 %v1814
        %v1907 = vpop.f32.mrb[0].mxu0
        %v1908 = vadd.f32 0.0, %v1907
        %v1909 = vpop.f32.mrb[0].mxu0
        %v1910 = vadd.f32 0.0, %v1909
        %v1911 = vpop.f32.mrb[0].mxu0
        %v1912 = vadd.f32 0.0, %v1911
        %v1913 = vpop.f32.mrb[0].mxu0
        %v1914 = vadd.f32 0.0, %v1913
        %1915 = vmatprep.mubr.bf16.mxu0 0
        %1916 = vmatmul.mubr.bf16.gmra.mrb[0].mxu0 %v1815
        %v1917 = vpop.f32.mrb[0].mxu0
        %v1918 = vadd.f32 0.0, %v1917
        %v1919 = vpop.f32.mrb[0].mxu0
        %v1920 = vadd.f32 0.0, %v1919
        %v1921 = vpop.f32.mrb[0].mxu0
        %v1922 = vadd.f32 0.0, %v1921
        %v1923 = vpop.f32.mrb[0].mxu0
        %v1924 = vadd.f32 0.0, %v1923
        %1925 = vmatprep.mubr.bf16.mxu0 0
        %1926 = vmatmul.mubr.bf16.gmra.mrb[0].mxu0 %v1816
        %v1927 = vpop.f32.mrb[0].mxu0
        %v1928 = vadd.f32 0.0, %v1927
        %v1929 = vpop.f32.mrb[0].mxu0
        %v1930 = vadd.f32 0.0, %v1929
        %v1931 = vpop.f32.mrb[0].mxu0
        %v1932 = vadd.f32 0.0, %v1931
        %v1933 = vpop.f32.mrb[0].mxu0
        %v1934 = vadd.f32 0.0, %v1933
        %1935 = vmatprep.mubr.bf16.mxu0 0
        %1936 = vmatmul.mubr.bf16.gmra.mrb[0].mxu0 %v1817
        %v1937 = vpop.f32.mrb[0].mxu0
        %v1938 = vadd.f32 0.0, %v1937
        %v1939 = vpop.f32.mrb[0].mxu0
        %v1940 = vadd.f32 0.0, %v1939
        %v1941 = vpop.f32.mrb[0].mxu0
        %v1942 = vadd.f32 0.0, %v1941
        %v1943 = vpop.f32.mrb[0].mxu0
        %v1944 = vadd.f32 0.0, %v1943
        %1945 = vmatprep.mubr.bf16.mxu0 0
        %1946 = vmatmul.mubr.bf16.gmra.mrb[0].mxu0 %v1818
        %v1947 = vpop.f32.mrb[0].mxu0
        %v1948 = vadd.f32 0.0, %v1947
        %v1949 = vpop.f32.mrb[0].mxu0
        %v1950 = vadd.f32 0.0, %v1949
        %v1951 = vpop.f32.mrb[0].mxu0
        %v1952 = vadd.f32 0.0, %v1951
        %v1953 = vpop.f32.mrb[0].mxu0
        %v1954 = vadd.f32 0.0, %v1953
        %1955 = vmatprep.mubr.bf16.mxu0 0
        %1956 = vmatmul.mubr.bf16.gmra.mrb[0].mxu0 %v1819
        %v1957 = vpop.f32.mrb[0].mxu0
        %v1958 = vadd.f32 0.0, %v1957
        %v1959 = vpop.f32.mrb[0].mxu0
        %v1960 = vadd.f32 0.0, %v1959
        %v1961 = vpop.f32.mrb[0].mxu0
        %v1962 = vadd.f32 0.0, %v1961
        %v1963 = vpop.f32.mrb[0].mxu0
        %v1964 = vadd.f32 0.0, %v1963
        %1965 = vmatprep.mubr.bf16.mxu0 0
        %1966 = vmatmul.mubr.bf16.gmra.mrb[0].mxu0 %v1820
        %v1967 = vpop.f32.mrb[0].mxu0
        %v1968 = vadd.f32 0.0, %v1967
        %v1969 = vpop.f32.mrb[0].mxu0
        %v1970 = vadd.f32 0.0, %v1969
        %v1971 = vpop.f32.mrb[0].mxu0
        %v1972 = vadd.f32 0.0, %v1971
        %v1973 = vpop.f32.mrb[0].mxu0
        %v1974 = vadd.f32 0.0, %v1973
        %1975 = vmatprep.mubr.bf16.mxu0 0
        %1976 = vmatmul.mubr.bf16.gmra.mrb[0].mxu0 %v1821
        %v1977 = vpop.f32.mrb[0].mxu0
        %v1978 = vadd.f32 0.0, %v1977
        %v1979 = vpop.f32.mrb[0].mxu0
        %v1980 = vadd.f32 0.0, %v1979
        %v1981 = vpop.f32.mrb[0].mxu0
        %v1982 = vadd.f32 0.0, %v1981
        %v1983 = vpop.f32.mrb[0].mxu0
        %v1984 = vadd.f32 0.0, %v1983
        %1985 = vmatprep.mubr.bf16.mxu0 0
        %1986 = vmatmul.mubr.bf16.gmra.mrb[0].mxu0 %v1822
        %v1987 = vpop.f32.mrb[0].mxu0
        %v1988 = vadd.f32 0.0, %v1987
        %v1989 = vpop.f32.mrb[0].mxu0
        %v1990 = vadd.f32 0.0, %v1989
        %v1991 = vpop.f32.mrb[0].mxu0
        %v1992 = vadd.f32 0.0, %v1991
        %v1993 = vpop.f32.mrb[0].mxu0
        %v1994 = vadd.f32 0.0, %v1993
        %1995 = vmatprep.mubr.bf16.mxu0 0
        %1996 = vmatmul.mubr.bf16.gmra.mrb[0].mxu0 %v1823
        %v1997 = vpop.f32.mrb[0].mxu0
        %v1998 = vadd.f32 0.0, %v1997
        %v1999 = vpop.f32.mrb[0].mxu0
        %v2000 = vadd.f32 0.0, %v1999
        %v2001 = vpop.f32.mrb[0].mxu0
        %v2002 = vadd.f32 0.0, %v2001
        %v2003 = vpop.f32.mrb[0].mxu0
        %v2004 = vadd.f32 0.0, %v2003
        %2005 = vmatprep.mubr.bf16.mxu0 0
        %2006 = vmatmul.mubr.bf16.gmra.mrb[0].mxu0 %v1824
        %v2007 = vpop.f32.mrb[0].mxu0
        %v2008 = vadd.f32 0.0, %v2007
        %v2009 = vpop.f32.mrb[0].mxu0
        %v2010 = vadd.f32 0.0, %v2009
        %v2011 = vpop.f32.mrb[0].mxu0
        %v2012 = vadd.f32 0.0, %v2011
        %v2013 = vpop.f32.mrb[0].mxu0
        %v2014 = vadd.f32 0.0, %v2013
        %2015 = vmatprep.mubr.bf16.mxu0 0
        %2016 = vmatmul.mubr.bf16.gmra.mrb[0].mxu0 %v1825
        %v2017 = vpop.f32.mrb[0].mxu0
        %v2018 = vadd.f32 0.0, %v2017
        %v2019 = vpop.f32.mrb[0].mxu0
        %v2020 = vadd.f32 0.0, %v2019
        %v2021 = vpop.f32.mrb[0].mxu0
        %v2022 = vadd.f32 0.0, %v2021
        %v2023 = vpop.f32.mrb[0].mxu0
        %v2024 = vadd.f32 0.0, %v2023
        %2025 = vmatprep.mubr.bf16.mxu0 0
        %2026 = vmatmul.mubr.bf16.gmra.mrb[0].mxu0 %v1826
        %v2027 = vpop.f32.mrb[0].mxu0
        %v2028 = vadd.f32 0.0, %v2027
        %v2029 = vpop.f32.mrb[0].mxu0
        %v2030 = vadd.f32 0.0, %v2029
        %v2031 = vpop.f32.mrb[0].mxu0
        %v2032 = vadd.f32 0.0, %v2031
        %v2033 = vpop.f32.mrb[0].mxu0
        %v2034 = vadd.f32 0.0, %v2033
        %2035 = vdwg.mxu0
        %v2036 = vmax.f32 %v1878, %v1880
        %2037 = vmax.xlane.f32.xlu0 %v2036
        %v2038 = vpop.xlane.xlu0 %2037
        %v2039 = vmax.f32 %v1882, %v1884
        %2040 = vmax.xlane.f32.xlu0 %v2039
        %v2041 = vpop.xlane.xlu0 %2040
        %v2042 = vmax.f32 %v1888, %v1890
        %2043 = vmax.xlane.f32.xlu0 %v2042
        %v2044 = vpop.xlane.xlu0 %2043
        %v2045 = vmax.f32 %v1892, %v1894
        %2046 = vmax.xlane.f32.xlu0 %v2045
        %v2047 = vpop.xlane.xlu0 %2046
        %v2048 = vmax.f32 %v1898, %v1900
        %2049 = vmax.xlane.f32.xlu0 %v2048
        %v2050 = vpop.xlane.xlu0 %2049
        %v2051 = vmax.f32 %v1902, %v1904
        %2052 = vmax.xlane.f32.xlu0 %v2051
        %v2053 = vpop.xlane.xlu0 %2052
        %v2054 = vmax.f32 %v1908, %v1910
        %2055 = vmax.xlane.f32.xlu0 %v2054
        %v2056 = vpop.xlane.xlu0 %2055
        %v2057 = vmax.f32 %v1912, %v1914
        %2058 = vmax.xlane.f32.xlu0 %v2057
        %v2059 = vpop.xlane.xlu0 %2058
        %v2060 = vmax.f32 %v1918, %v1920
        %2061 = vmax.xlane.f32.xlu0 %v2060
        %v2062 = vpop.xlane.xlu0 %2061
        %v2063 = vmax.f32 %v1922, %v1924
        %2064 = vmax.xlane.f32.xlu0 %v2063
        %v2065 = vpop.xlane.xlu0 %2064
        %v2066 = vmax.f32 %v1928, %v1930
        %2067 = vmax.xlane.f32.xlu0 %v2066
        %v2068 = vpop.xlane.xlu0 %2067
        %v2069 = vmax.f32 %v1932, %v1934
        %2070 = vmax.xlane.f32.xlu0 %v2069
        %v2071 = vpop.xlane.xlu0 %2070
        %v2072 = vmax.f32 %v1938, %v1940
        %2073 = vmax.xlane.f32.xlu0 %v2072
        %v2074 = vpop.xlane.xlu0 %2073
        %v2075 = vmax.f32 %v1942, %v1944
        %2076 = vmax.xlane.f32.xlu0 %v2075
        %v2077 = vpop.xlane.xlu0 %2076
        %v2078 = vmax.f32 %v1948, %v1950
        %2079 = vmax.xlane.f32.xlu0 %v2078
        %v2080 = vpop.xlane.xlu0 %2079
        %v2081 = vmax.f32 %v1952, %v1954
        %2082 = vmax.xlane.f32.xlu0 %v2081
        %v2083 = vpop.xlane.xlu0 %2082
        %v2084 = vmax.f32 %v1958, %v1960
        %2085 = vmax.xlane.f32.xlu0 %v2084
        %v2086 = vpop.xlane.xlu0 %2085
        %v2087 = vmax.f32 %v1962, %v1964
        %2088 = vmax.xlane.f32.xlu0 %v2087
        %v2089 = vpop.xlane.xlu0 %2088
        %v2090 = vmax.f32 %v1968, %v1970
        %2091 = vmax.xlane.f32.xlu0 %v2090
        %v2092 = vpop.xlane.xlu0 %2091
        %v2093 = vmax.f32 %v1972, %v1974
        %2094 = vmax.xlane.f32.xlu0 %v2093
        %v2095 = vpop.xlane.xlu0 %2094
        %v2096 = vmax.f32 %v1978, %v1980
        %2097 = vmax.xlane.f32.xlu0 %v2096
        %v2098 = vpop.xlane.xlu0 %2097
        %v2099 = vmax.f32 %v1982, %v1984
        %2100 = vmax.xlane.f32.xlu0 %v2099
        %v2101 = vpop.xlane.xlu0 %2100
        %v2102 = vmax.f32 %v1988, %v1990
        %2103 = vmax.xlane.f32.xlu0 %v2102
        %v2104 = vpop.xlane.xlu0 %2103
        %v2105 = vmax.f32 %v1992, %v1994
        %2106 = vmax.xlane.f32.xlu0 %v2105
        %v2107 = vpop.xlane.xlu0 %2106
        %v2108 = vmax.f32 %v1998, %v2000
        %2109 = vmax.xlane.f32.xlu0 %v2108
        %v2110 = vpop.xlane.xlu0 %2109
        %v2111 = vmax.f32 %v2002, %v2004
        %2112 = vmax.xlane.f32.xlu0 %v2111
        %v2113 = vpop.xlane.xlu0 %2112
        %v2114 = vmax.f32 %v2008, %v2010
        %2115 = vmax.xlane.f32.xlu0 %v2114
        %v2116 = vpop.xlane.xlu0 %2115
        %v2117 = vmax.f32 %v2012, %v2014
        %2118 = vmax.xlane.f32.xlu0 %v2117
        %v2119 = vpop.xlane.xlu0 %2118
        %v2120 = vmax.f32 %v2018, %v2020
        %2121 = vmax.xlane.f32.xlu0 %v2120
        %v2122 = vpop.xlane.xlu0 %2121
        %v2123 = vmax.f32 %v2022, %v2024
        %2124 = vmax.xlane.f32.xlu0 %v2123
        %v2125 = vpop.xlane.xlu0 %2124
        %v2126 = vmax.f32 %v2028, %v2030
        %2127 = vmax.xlane.f32.xlu0 %v2126
        %v2128 = vpop.xlane.xlu0 %2127
        %v2129 = vmax.f32 %v2032, %v2034
        %2130 = vmax.xlane.f32.xlu0 %v2129
        %v2131 = vpop.xlane.xlu0 %2130
        %v2132 = vsub.f32 %v1878, %v2038
        %v2133 = vsub.f32 %v1880, %v2038
        %v2134 = vsub.f32 %v1882, %v2041
        %v2135 = vsub.f32 %v1884, %v2041
        %v2136 = vsub.f32 %v1888, %v2044
        %v2137 = vsub.f32 %v1890, %v2044
        %v2138 = vsub.f32 %v1892, %v2047
        %v2139 = vsub.f32 %v1894, %v2047
        %v2140 = vsub.f32 %v1898, %v2050
        %v2141 = vsub.f32 %v1900, %v2050
        %v2142 = vsub.f32 %v1902, %v2053
        %v2143 = vsub.f32 %v1904, %v2053
        %v2144 = vsub.f32 %v1908, %v2056
        %v2145 = vsub.f32 %v1910, %v2056
        %v2146 = vsub.f32 %v1912, %v2059
        %v2147 = vsub.f32 %v1914, %v2059
        %v2148 = vsub.f32 %v1918, %v2062
        %v2149 = vsub.f32 %v1920, %v2062
        %v2150 = vsub.f32 %v1922, %v2065
        %v2151 = vsub.f32 %v1924, %v2065
        %v2152 = vsub.f32 %v1928, %v2068
        %v2153 = vsub.f32 %v1930, %v2068
        %v2154 = vsub.f32 %v1932, %v2071
        %v2155 = vsub.f32 %v1934, %v2071
        %v2156 = vsub.f32 %v1938, %v2074
        %v2157 = vsub.f32 %v1940, %v2074
        %v2158 = vsub.f32 %v1942, %v2077
        %v2159 = vsub.f32 %v1944, %v2077
        %v2160 = vsub.f32 %v1948, %v2080
        %v2161 = vsub.f32 %v1950, %v2080
        %v2162 = vsub.f32 %v1952, %v2083
        %v2163 = vsub.f32 %v1954, %v2083
        %v2164 = vsub.f32 %v1958, %v2086
        %v2165 = vsub.f32 %v1960, %v2086
        %v2166 = vsub.f32 %v1962, %v2089
        %v2167 = vsub.f32 %v1964, %v2089
        %v2168 = vsub.f32 %v1968, %v2092
        %v2169 = vsub.f32 %v1970, %v2092
        %v2170 = vsub.f32 %v1972, %v2095
        %v2171 = vsub.f32 %v1974, %v2095
        %v2172 = vsub.f32 %v1978, %v2098
        %v2173 = vsub.f32 %v1980, %v2098
        %v2174 = vsub.f32 %v1982, %v2101
        %v2175 = vsub.f32 %v1984, %v2101
        %v2176 = vsub.f32 %v1988, %v2104
        %v2177 = vsub.f32 %v1990, %v2104
        %v2178 = vsub.f32 %v1992, %v2107
        %v2179 = vsub.f32 %v1994, %v2107
        %v2180 = vsub.f32 %v1998, %v2110
        %v2181 = vsub.f32 %v2000, %v2110
        %v2182 = vsub.f32 %v2002, %v2113
        %v2183 = vsub.f32 %v2004, %v2113
        %v2184 = vsub.f32 %v2008, %v2116
        %v2185 = vsub.f32 %v2010, %v2116
        %v2186 = vsub.f32 %v2012, %v2119
        %v2187 = vsub.f32 %v2014, %v2119
        %v2188 = vsub.f32 %v2018, %v2122
        %v2189 = vsub.f32 %v2020, %v2122
        %v2190 = vsub.f32 %v2022, %v2125
        %v2191 = vsub.f32 %v2024, %v2125
        %v2192 = vsub.f32 %v2028, %v2128
        %v2193 = vsub.f32 %v2030, %v2128
        %v2194 = vsub.f32 %v2032, %v2131
        %v2195 = vsub.f32 %v2034, %v2131
        %v2196 = vmul.f32 %v2132, 1.442695
        %v2197 = vpow.pop %v2196
        %v2198 = vmul.f32 %v2133, 1.442695
        %v2199 = vpow.pop %v2198
        %v2200 = vmul.f32 %v2134, 1.442695
        %v2201 = vpow.pop %v2200
        %v2202 = vmul.f32 %v2135, 1.442695
        %v2203 = vpow.pop %v2202
        %v2204 = vmul.f32 %v2136, 1.442695
        %v2205 = vpow.pop %v2204
        %v2206 = vmul.f32 %v2137, 1.442695
        %v2207 = vpow.pop %v2206
        %v2208 = vmul.f32 %v2138, 1.442695
        %v2209 = vpow.pop %v2208
        %v2210 = vmul.f32 %v2139, 1.442695
        %v2211 = vpow.pop %v2210
        %v2212 = vmul.f32 %v2140, 1.442695
        %v2213 = vpow.pop %v2212
        %v2214 = vmul.f32 %v2141, 1.442695
        %v2215 = vpow.pop %v2214
        %v2216 = vmul.f32 %v2142, 1.442695
        %v2217 = vpow.pop %v2216
        %v2218 = vmul.f32 %v2143, 1.442695
        %v2219 = vpow.pop %v2218
        %v2220 = vmul.f32 %v2144, 1.442695
        %v2221 = vpow.pop %v2220
        %v2222 = vmul.f32 %v2145, 1.442695
        %v2223 = vpow.pop %v2222
        %v2224 = vmul.f32 %v2146, 1.442695
        %v2225 = vpow.pop %v2224
        %v2226 = vmul.f32 %v2147, 1.442695
        %v2227 = vpow.pop %v2226
        %v2228 = vmul.f32 %v2148, 1.442695
        %v2229 = vpow.pop %v2228
        %v2230 = vmul.f32 %v2149, 1.442695
        %v2231 = vpow.pop %v2230
        %v2232 = vmul.f32 %v2150, 1.442695
        %v2233 = vpow.pop %v2232
        %v2234 = vmul.f32 %v2151, 1.442695
        %v2235 = vpow.pop %v2234
        %v2236 = vmul.f32 %v2152, 1.442695
        %v2237 = vpow.pop %v2236
        %v2238 = vmul.f32 %v2153, 1.442695
        %v2239 = vpow.pop %v2238
        %v2240 = vmul.f32 %v2154, 1.442695
        %v2241 = vpow.pop %v2240
        %v2242 = vmul.f32 %v2155, 1.442695
        %v2243 = vpow.pop %v2242
        %v2244 = vmul.f32 %v2156, 1.442695
        %v2245 = vpow.pop %v2244
        %v2246 = vmul.f32 %v2157, 1.442695
        %v2247 = vpow.pop %v2246
        %v2248 = vmul.f32 %v2158, 1.442695
        %v2249 = vpow.pop %v2248
        %v2250 = vmul.f32 %v2159, 1.442695
        %v2251 = vpow.pop %v2250
        %v2252 = vmul.f32 %v2160, 1.442695
        %v2253 = vpow.pop %v2252
        %v2254 = vmul.f32 %v2161, 1.442695
        %v2255 = vpow.pop %v2254
        %v2256 = vmul.f32 %v2162, 1.442695
        %v2257 = vpow.pop %v2256
        %v2258 = vmul.f32 %v2163, 1.442695
        %v2259 = vpow.pop %v2258
        %v2260 = vmul.f32 %v2164, 1.442695
        %v2261 = vpow.pop %v2260
        %v2262 = vmul.f32 %v2165, 1.442695
        %v2263 = vpow.pop %v2262
        %v2264 = vmul.f32 %v2166, 1.442695
        %v2265 = vpow.pop %v2264
        %v2266 = vmul.f32 %v2167, 1.442695
        %v2267 = vpow.pop %v2266
        %v2268 = vmul.f32 %v2168, 1.442695
        %v2269 = vpow.pop %v2268
        %v2270 = vmul.f32 %v2169, 1.442695
        %v2271 = vpow.pop %v2270
        %v2272 = vmul.f32 %v2170, 1.442695
        %v2273 = vpow.pop %v2272
        %v2274 = vmul.f32 %v2171, 1.442695
        %v2275 = vpow.pop %v2274
        %v2276 = vmul.f32 %v2172, 1.442695
        %v2277 = vpow.pop %v2276
        %v2278 = vmul.f32 %v2173, 1.442695
        %v2279 = vpow.pop %v2278
        %v2280 = vmul.f32 %v2174, 1.442695
        %v2281 = vpow.pop %v2280
        %v2282 = vmul.f32 %v2175, 1.442695
        %v2283 = vpow.pop %v2282
        %v2284 = vmul.f32 %v2176, 1.442695
        %v2285 = vpow.pop %v2284
        %v2286 = vmul.f32 %v2177, 1.442695
        %v2287 = vpow.pop %v2286
        %v2288 = vmul.f32 %v2178, 1.442695
        %v2289 = vpow.pop %v2288
        %v2290 = vmul.f32 %v2179, 1.442695
        %v2291 = vpow.pop %v2290
        %v2292 = vmul.f32 %v2180, 1.442695
        %v2293 = vpow.pop %v2292
        %v2294 = vmul.f32 %v2181, 1.442695
        %v2295 = vpow.pop %v2294
        %v2296 = vmul.f32 %v2182, 1.442695
        %v2297 = vpow.pop %v2296
        %v2298 = vmul.f32 %v2183, 1.442695
        %v2299 = vpow.pop %v2298
        %v2300 = vmul.f32 %v2184, 1.442695
        %v2301 = vpow.pop %v2300
        %v2302 = vmul.f32 %v2185, 1.442695
        %v2303 = vpow.pop %v2302
        %v2304 = vmul.f32 %v2186, 1.442695
        %v2305 = vpow.pop %v2304
        %v2306 = vmul.f32 %v2187, 1.442695
        %v2307 = vpow.pop %v2306
        %v2308 = vmul.f32 %v2188, 1.442695
        %v2309 = vpow.pop %v2308
        %v2310 = vmul.f32 %v2189, 1.442695
        %v2311 = vpow.pop %v2310
        %v2312 = vmul.f32 %v2190, 1.442695
        %v2313 = vpow.pop %v2312
        %v2314 = vmul.f32 %v2191, 1.442695
        %v2315 = vpow.pop %v2314
        %v2316 = vmul.f32 %v2192, 1.442695
        %v2317 = vpow.pop %v2316
        %v2318 = vmul.f32 %v2193, 1.442695
        %v2319 = vpow.pop %v2318
        %v2320 = vmul.f32 %v2194, 1.442695
        %v2321 = vpow.pop %v2320
        %v2322 = vmul.f32 %v2195, 1.442695
        %v2323 = vpow.pop %v2322
        %v2324 = vadd.f32 %v2197, %v2199
        %2325 = vadd.xlane.f32.xlu0 %v2324
        %v2326 = vpop.xlane.xlu0 %2325
        %v2327 = vadd.f32 %v2201, %v2203
        %2328 = vadd.xlane.f32.xlu0 %v2327
        %v2329 = vpop.xlane.xlu0 %2328
        %v2330 = vadd.f32 %v2205, %v2207
        %2331 = vadd.xlane.f32.xlu0 %v2330
        %v2332 = vpop.xlane.xlu0 %2331
        %v2333 = vadd.f32 %v2209, %v2211
        %2334 = vadd.xlane.f32.xlu0 %v2333
        %v2335 = vpop.xlane.xlu0 %2334
        %v2336 = vadd.f32 %v2213, %v2215
        %2337 = vadd.xlane.f32.xlu0 %v2336
        %v2338 = vpop.xlane.xlu0 %2337
        %v2339 = vadd.f32 %v2217, %v2219
        %2340 = vadd.xlane.f32.xlu0 %v2339
        %v2341 = vpop.xlane.xlu0 %2340
        %v2342 = vadd.f32 %v2221, %v2223
        %2343 = vadd.xlane.f32.xlu0 %v2342
        %v2344 = vpop.xlane.xlu0 %2343
        %v2345 = vadd.f32 %v2225, %v2227
        %2346 = vadd.xlane.f32.xlu0 %v2345
        %v2347 = vpop.xlane.xlu0 %2346
        %v2348 = vadd.f32 %v2229, %v2231
        %2349 = vadd.xlane.f32.xlu0 %v2348
        %v2350 = vpop.xlane.xlu0 %2349
        %v2351 = vadd.f32 %v2233, %v2235
        %2352 = vadd.xlane.f32.xlu0 %v2351
        %v2353 = vpop.xlane.xlu0 %2352
        %v2354 = vadd.f32 %v2237, %v2239
        %2355 = vadd.xlane.f32.xlu0 %v2354
        %v2356 = vpop.xlane.xlu0 %2355
        %v2357 = vadd.f32 %v2241, %v2243
        %2358 = vadd.xlane.f32.xlu0 %v2357
        %v2359 = vpop.xlane.xlu0 %2358
        %v2360 = vadd.f32 %v2245, %v2247
        %2361 = vadd.xlane.f32.xlu0 %v2360
        %v2362 = vpop.xlane.xlu0 %2361
        %v2363 = vadd.f32 %v2249, %v2251
        %2364 = vadd.xlane.f32.xlu0 %v2363
        %v2365 = vpop.xlane.xlu0 %2364
        %v2366 = vadd.f32 %v2253, %v2255
        %2367 = vadd.xlane.f32.xlu0 %v2366
        %v2368 = vpop.xlane.xlu0 %2367
        %v2369 = vadd.f32 %v2257, %v2259
        %2370 = vadd.xlane.f32.xlu0 %v2369
        %v2371 = vpop.xlane.xlu0 %2370
        %v2372 = vadd.f32 %v2261, %v2263
        %2373 = vadd.xlane.f32.xlu0 %v2372
        %v2374 = vpop.xlane.xlu0 %2373
        %v2375 = vadd.f32 %v2265, %v2267
        %2376 = vadd.xlane.f32.xlu0 %v2375
        %v2377 = vpop.xlane.xlu0 %2376
        %v2378 = vadd.f32 %v2269, %v2271
        %2379 = vadd.xlane.f32.xlu0 %v2378
        %v2380 = vpop.xlane.xlu0 %2379
        %v2381 = vadd.f32 %v2273, %v2275
        %2382 = vadd.xlane.f32.xlu0 %v2381
        %v2383 = vpop.xlane.xlu0 %2382
        %v2384 = vadd.f32 %v2277, %v2279
        %2385 = vadd.xlane.f32.xlu0 %v2384
        %v2386 = vpop.xlane.xlu0 %2385
        %v2387 = vadd.f32 %v2281, %v2283
        %2388 = vadd.xlane.f32.xlu0 %v2387
        %v2389 = vpop.xlane.xlu0 %2388
        %v2390 = vadd.f32 %v2285, %v2287
        %2391 = vadd.xlane.f32.xlu0 %v2390
        %v2392 = vpop.xlane.xlu0 %2391
        %v2393 = vadd.f32 %v2289, %v2291
        %2394 = vadd.xlane.f32.xlu0 %v2393
        %v2395 = vpop.xlane.xlu0 %2394
        %v2396 = vadd.f32 %v2293, %v2295
        %2397 = vadd.xlane.f32.xlu0 %v2396
        %v2398 = vpop.xlane.xlu0 %2397
        %v2399 = vadd.f32 %v2297, %v2299
        %2400 = vadd.xlane.f32.xlu0 %v2399
        %v2401 = vpop.xlane.xlu0 %2400
        %v2402 = vadd.f32 %v2301, %v2303
        %2403 = vadd.xlane.f32.xlu0 %v2402
        %v2404 = vpop.xlane.xlu0 %2403
        %v2405 = vadd.f32 %v2305, %v2307
        %2406 = vadd.xlane.f32.xlu0 %v2405
        %v2407 = vpop.xlane.xlu0 %2406
        %v2408 = vadd.f32 %v2309, %v2311
        %2409 = vadd.xlane.f32.xlu0 %v2408
        %v2410 = vpop.xlane.xlu0 %2409
        %v2411 = vadd.f32 %v2313, %v2315
        %2412 = vadd.xlane.f32.xlu0 %v2411
        %v2413 = vpop.xlane.xlu0 %2412
        %v2414 = vadd.f32 %v2317, %v2319
        %2415 = vadd.xlane.f32.xlu0 %v2414
        %v2416 = vpop.xlane.xlu0 %2415
        %v2417 = vadd.f32 %v2321, %v2323
        %2418 = vadd.xlane.f32.xlu0 %v2417
        %v2419 = vpop.xlane.xlu0 %2418
        %v2420 = vrcp.pop %v2326
        %v2421 = vrcp.pop %v2329
        %v2422 = vrcp.pop %v2332
        %v2423 = vrcp.pop %v2335
        %v2424 = vrcp.pop %v2338
        %v2425 = vrcp.pop %v2341
        %v2426 = vrcp.pop %v2344
        %v2427 = vrcp.pop %v2347
        %v2428 = vrcp.pop %v2350
        %v2429 = vrcp.pop %v2353
        %v2430 = vrcp.pop %v2356
        %v2431 = vrcp.pop %v2359
        %v2432 = vrcp.pop %v2362
        %v2433 = vrcp.pop %v2365
        %v2434 = vrcp.pop %v2368
        %v2435 = vrcp.pop %v2371
        %v2436 = vrcp.pop %v2374
        %v2437 = vrcp.pop %v2377
        %v2438 = vrcp.pop %v2380
        %v2439 = vrcp.pop %v2383
        %v2440 = vrcp.pop %v2386
        %v2441 = vrcp.pop %v2389
        %v2442 = vrcp.pop %v2392
        %v2443 = vrcp.pop %v2395
        %v2444 = vrcp.pop %v2398
        %v2445 = vrcp.pop %v2401
        %v2446 = vrcp.pop %v2404
        %v2447 = vrcp.pop %v2407
        %v2448 = vrcp.pop %v2410
        %v2449 = vrcp.pop %v2413
        %v2450 = vrcp.pop %v2416
        %v2451 = vrcp.pop %v2419
        %v2452 = vmul.f32 %v2197, %v2420
        %v2453 = vmul.f32 %v2199, %v2420
        %v2454 = vmul.f32 %v2201, %v2421
        %v2455 = vmul.f32 %v2203, %v2421
        %v2456 = vmul.f32 %v2205, %v2422
        %v2457 = vmul.f32 %v2207, %v2422
        %v2458 = vmul.f32 %v2209, %v2423
        %v2459 = vmul.f32 %v2211, %v2423
        %v2460 = vmul.f32 %v2213, %v2424
        %v2461 = vmul.f32 %v2215, %v2424
        %v2462 = vmul.f32 %v2217, %v2425
        %v2463 = vmul.f32 %v2219, %v2425
        %v2464 = vmul.f32 %v2221, %v2426
        %v2465 = vmul.f32 %v2223, %v2426
        %v2466 = vmul.f32 %v2225, %v2427
        %v2467 = vmul.f32 %v2227, %v2427
        %v2468 = vmul.f32 %v2229, %v2428
        %v2469 = vmul.f32 %v2231, %v2428
        %v2470 = vmul.f32 %v2233, %v2429
        %v2471 = vmul.f32 %v2235, %v2429
        %v2472 = vmul.f32 %v2237, %v2430
        %v2473 = vmul.f32 %v2239, %v2430
        %v2474 = vmul.f32 %v2241, %v2431
        %v2475 = vmul.f32 %v2243, %v2431
        %v2476 = vmul.f32 %v2245, %v2432
        %v2477 = vmul.f32 %v2247, %v2432
        %v2478 = vmul.f32 %v2249, %v2433
        %v2479 = vmul.f32 %v2251, %v2433
        %v2480 = vmul.f32 %v2253, %v2434
        %v2481 = vmul.f32 %v2255, %v2434
        %v2482 = vmul.f32 %v2257, %v2435
        %v2483 = vmul.f32 %v2259, %v2435
        %v2484 = vmul.f32 %v2261, %v2436
        %v2485 = vmul.f32 %v2263, %v2436
        %v2486 = vmul.f32 %v2265, %v2437
        %v2487 = vmul.f32 %v2267, %v2437
        %v2488 = vmul.f32 %v2269, %v2438
        %v2489 = vmul.f32 %v2271, %v2438
        %v2490 = vmul.f32 %v2273, %v2439
        %v2491 = vmul.f32 %v2275, %v2439
        %v2492 = vmul.f32 %v2277, %v2440
        %v2493 = vmul.f32 %v2279, %v2440
        %v2494 = vmul.f32 %v2281, %v2441
        %v2495 = vmul.f32 %v2283, %v2441
        %v2496 = vmul.f32 %v2285, %v2442
        %v2497 = vmul.f32 %v2287, %v2442
        %v2498 = vmul.f32 %v2289, %v2443
        %v2499 = vmul.f32 %v2291, %v2443
        %v2500 = vmul.f32 %v2293, %v2444
        %v2501 = vmul.f32 %v2295, %v2444
        %v2502 = vmul.f32 %v2297, %v2445
        %v2503 = vmul.f32 %v2299, %v2445
        %v2504 = vmul.f32 %v2301, %v2446
        %v2505 = vmul.f32 %v2303, %v2446
        %v2506 = vmul.f32 %v2305, %v2447
        %v2507 = vmul.f32 %v2307, %v2447
        %v2508 = vmul.f32 %v2309, %v2448
        %v2509 = vmul.f32 %v2311, %v2448
        %v2510 = vmul.f32 %v2313, %v2449
        %v2511 = vmul.f32 %v2315, %v2449
        %v2512 = vmul.f32 %v2317, %v2450
        %v2513 = vmul.f32 %v2319, %v2450
        %v2514 = vmul.f32 %v2321, %v2451
        %v2515 = vmul.f32 %v2323, %v2451
        %v2516 = vpack.c.bf16 %v2454, %v2452
        %v2517 = vpack.c.bf16 %v2455, %v2453
        %v2518 = vpack.c.bf16 %v2458, %v2456
        %v2519 = vpack.c.bf16 %v2459, %v2457
        %v2520 = vpack.c.bf16 %v2462, %v2460
        %v2521 = vpack.c.bf16 %v2463, %v2461
        %v2522 = vpack.c.bf16 %v2466, %v2464
        %v2523 = vpack.c.bf16 %v2467, %v2465
        %v2524 = vpack.c.bf16 %v2470, %v2468
        %v2525 = vpack.c.bf16 %v2471, %v2469
        %v2526 = vpack.c.bf16 %v2474, %v2472
        %v2527 = vpack.c.bf16 %v2475, %v2473
        %v2528 = vpack.c.bf16 %v2478, %v2476
        %v2529 = vpack.c.bf16 %v2479, %v2477
        %v2530 = vpack.c.bf16 %v2482, %v2480
        %v2531 = vpack.c.bf16 %v2483, %v2481
        %v2532 = vpack.c.bf16 %v2486, %v2484
        %v2533 = vpack.c.bf16 %v2487, %v2485
        %v2534 = vpack.c.bf16 %v2490, %v2488
        %v2535 = vpack.c.bf16 %v2491, %v2489
        %v2536 = vpack.c.bf16 %v2494, %v2492
        %v2537 = vpack.c.bf16 %v2495, %v2493
        %v2538 = vpack.c.bf16 %v2498, %v2496
        %v2539 = vpack.c.bf16 %v2499, %v2497
        %v2540 = vpack.c.bf16 %v2502, %v2500
        %v2541 = vpack.c.bf16 %v2503, %v2501
        %v2542 = vpack.c.bf16 %v2506, %v2504
        %v2543 = vpack.c.bf16 %v2507, %v2505
        %v2544 = vpack.c.bf16 %v2510, %v2508
        %v2545 = vpack.c.bf16 %v2511, %v2509
        %v2546 = vpack.c.bf16 %v2514, %v2512
        %v2547 = vpack.c.bf16 %v2515, %v2513
        %v2548 = vpack.c.bf16 %v1688, %v1685
        %v2549 = vpack.c.bf16 %v1696, %v1693
        %v2550 = vpack.c.bf16 %v1704, %v1701
        %v2551 = vpack.c.bf16 %v1712, %v1709
        %v2552 = vpack.c.bf16 %v1720, %v1717
        %v2553 = vpack.c.bf16 %v1728, %v1725
        %v2554 = vpack.c.bf16 %v1736, %v1733
        %v2555 = vpack.c.bf16 %v1744, %v1741
        %v2556 = vpack.c.bf16 %v1752, %v1749
        %v2557 = vpack.c.bf16 %v1760, %v1757
        %v2558 = vpack.c.bf16 %v1768, %v1765
        %v2559 = vpack.c.bf16 %v1776, %v1773
        %v2560 = vpack.c.bf16 %v1784, %v1781
        %v2561 = vpack.c.bf16 %v1792, %v1789
        %v2562 = vpack.c.bf16 %v1800, %v1797
        %v2563 = vpack.c.bf16 %v1808, %v1805
        %2564 = vmatprep.subr.bf16.mxu0 0
        %2565 = vmatpush1.bf16.msra.mxu0 %v2548
        %2566 = vmatprep.subr.bf16.mxu0 0
        %2567 = vmatpush1.bf16.msra.mxu0 %v2549
        %2568 = vmatprep.subr.bf16.mxu0 0
        %2569 = vmatpush1.bf16.msra.mxu0 %v2550
        %2570 = vmatprep.subr.bf16.mxu0 0
        %2571 = vmatpush1.bf16.msra.mxu0 %v2551
        %2572 = vmatprep.subr.bf16.mxu0 0
        %2573 = vmatpush1.bf16.msra.mxu0 %v2552
        %2574 = vmatprep.subr.bf16.mxu0 0
        %2575 = vmatpush1.bf16.msra.mxu0 %v2553
        %2576 = vmatprep.subr.bf16.mxu0 0
        %2577 = vmatpush1.bf16.msra.mxu0 %v2554
        %2578 = vmatprep.subr.bf16.mxu0 0
        %2579 = vmatpush1.bf16.msra.mxu0 %v2555
        %2580 = vmatprep.subr.bf16.mxu0 0
        %2581 = vmatpush1.bf16.msra.mxu0 %v2556
        %2582 = vmatprep.subr.bf16.mxu0 0
        %2583 = vmatpush1.bf16.msra.mxu0 %v2557
        %2584 = vmatprep.subr.bf16.mxu0 0
        %2585 = vmatpush1.bf16.msra.mxu0 %v2558
        %2586 = vmatprep.subr.bf16.mxu0 0
        %2587 = vmatpush1.bf16.msra.mxu0 %v2559
        %2588 = vmatprep.subr.bf16.mxu0 0
        %2589 = vmatpush1.bf16.msra.mxu0 %v2560
        %2590 = vmatprep.subr.bf16.mxu0 0
        %2591 = vmatpush1.bf16.msra.mxu0 %v2561
        %2592 = vmatprep.subr.bf16.mxu0 0
        %2593 = vmatpush1.bf16.msra.mxu0 %v2562
        %2594 = vmatprep.subr.bf16.mxu0 0
        %2595 = vmatpush1.bf16.msra.mxu0 %v2563
        %2596 = vmatprep.mubr.bf16.mxu0 %v2517
        %2597 = vmatmul.mubr.bf16.gmra.mrb[0].mxu0 %v2516
        %v2598 = vpop.f32.mrb[0].mxu0
        %v2599 = vadd.f32 0.0, %v2598
        %v2600 = vpop.f32.mrb[0].mxu0
        %v2601 = vpop.f32.mrb[0].mxu0
        %v2602 = vadd.f32 0.0, %v2601
        %v2603 = vpop.f32.mrb[0].mxu0
        %2604 = vmatprep.mubr.bf16.mxu0 %v2519
        %2605 = vmatmul.mubr.bf16.gmra.mrb[0].mxu0 %v2518
        %v2606 = vpop.f32.mrb[0].mxu0
        %v2607 = vadd.f32 0.0, %v2606
        %v2608 = vpop.f32.mrb[0].mxu0
        %v2609 = vpop.f32.mrb[0].mxu0
        %v2610 = vadd.f32 0.0, %v2609
        %v2611 = vpop.f32.mrb[0].mxu0
        %2612 = vmatprep.mubr.bf16.mxu0 %v2521
        %2613 = vmatmul.mubr.bf16.gmra.mrb[0].mxu0 %v2520
        %v2614 = vpop.f32.mrb[0].mxu0
        %v2615 = vadd.f32 0.0, %v2614
        %v2616 = vpop.f32.mrb[0].mxu0
        %v2617 = vpop.f32.mrb[0].mxu0
        %v2618 = vadd.f32 0.0, %v2617
        %v2619 = vpop.f32.mrb[0].mxu0
        %2620 = vmatprep.mubr.bf16.mxu0 %v2523
        %2621 = vmatmul.mubr.bf16.gmra.mrb[0].mxu0 %v2522
        %v2622 = vpop.f32.mrb[0].mxu0
        %v2623 = vadd.f32 0.0, %v2622
        %v2624 = vpop.f32.mrb[0].mxu0
        %v2625 = vpop.f32.mrb[0].mxu0
        %v2626 = vadd.f32 0.0, %v2625
        %v2627 = vpop.f32.mrb[0].mxu0
        %2628 = vmatprep.mubr.bf16.mxu0 %v2525
        %2629 = vmatmul.mubr.bf16.gmra.mrb[0].mxu0 %v2524
        %v2630 = vpop.f32.mrb[0].mxu0
        %v2631 = vadd.f32 0.0, %v2630
        %v2632 = vpop.f32.mrb[0].mxu0
        %v2633 = vpop.f32.mrb[0].mxu0
        %v2634 = vadd.f32 0.0, %v2633
        %v2635 = vpop.f32.mrb[0].mxu0
        %2636 = vmatprep.mubr.bf16.mxu0 %v2527
        %2637 = vmatmul.mubr.bf16.gmra.mrb[0].mxu0 %v2526
        %v2638 = vpop.f32.mrb[0].mxu0
        %v2639 = vadd.f32 0.0, %v2638
        %v2640 = vpop.f32.mrb[0].mxu0
        %v2641 = vpop.f32.mrb[0].mxu0
        %v2642 = vadd.f32 0.0, %v2641
        %v2643 = vpop.f32.mrb[0].mxu0
        %2644 = vmatprep.mubr.bf16.mxu0 %v2529
        %2645 = vmatmul.mubr.bf16.gmra.mrb[0].mxu0 %v2528
        %v2646 = vpop.f32.mrb[0].mxu0
        %v2647 = vadd.f32 0.0, %v2646
        %v2648 = vpop.f32.mrb[0].mxu0
        %v2649 = vpop.f32.mrb[0].mxu0
        %v2650 = vadd.f32 0.0, %v2649
        %v2651 = vpop.f32.mrb[0].mxu0
        %2652 = vmatprep.mubr.bf16.mxu0 %v2531
        %2653 = vmatmul.mubr.bf16.gmra.mrb[0].mxu0 %v2530
        %v2654 = vpop.f32.mrb[0].mxu0
        %v2655 = vadd.f32 0.0, %v2654
        %v2656 = vpop.f32.mrb[0].mxu0
        %v2657 = vpop.f32.mrb[0].mxu0
        %v2658 = vadd.f32 0.0, %v2657
        %v2659 = vpop.f32.mrb[0].mxu0
        %2660 = vmatprep.mubr.bf16.mxu0 %v2533
        %2661 = vmatmul.mubr.bf16.gmra.mrb[0].mxu0 %v2532
        %v2662 = vpop.f32.mrb[0].mxu0
        %v2663 = vadd.f32 0.0, %v2662
        %v2664 = vpop.f32.mrb[0].mxu0
        %v2665 = vpop.f32.mrb[0].mxu0
        %v2666 = vadd.f32 0.0, %v2665
        %v2667 = vpop.f32.mrb[0].mxu0
        %2668 = vmatprep.mubr.bf16.mxu0 %v2535
        %2669 = vmatmul.mubr.bf16.gmra.mrb[0].mxu0 %v2534
        %v2670 = vpop.f32.mrb[0].mxu0
        %v2671 = vadd.f32 0.0, %v2670
        %v2672 = vpop.f32.mrb[0].mxu0
        %v2673 = vpop.f32.mrb[0].mxu0
        %v2674 = vadd.f32 0.0, %v2673
        %v2675 = vpop.f32.mrb[0].mxu0
        %2676 = vmatprep.mubr.bf16.mxu0 %v2537
        %2677 = vmatmul.mubr.bf16.gmra.mrb[0].mxu0 %v2536
        %v2678 = vpop.f32.mrb[0].mxu0
        %v2679 = vadd.f32 0.0, %v2678
        %v2680 = vpop.f32.mrb[0].mxu0
        %v2681 = vpop.f32.mrb[0].mxu0
        %v2682 = vadd.f32 0.0, %v2681
        %v2683 = vpop.f32.mrb[0].mxu0
        %2684 = vmatprep.mubr.bf16.mxu0 %v2539
        %2685 = vmatmul.mubr.bf16.gmra.mrb[0].mxu0 %v2538
        %v2686 = vpop.f32.mrb[0].mxu0
        %v2687 = vadd.f32 0.0, %v2686
        %v2688 = vpop.f32.mrb[0].mxu0
        %v2689 = vpop.f32.mrb[0].mxu0
        %v2690 = vadd.f32 0.0, %v2689
        %v2691 = vpop.f32.mrb[0].mxu0
        %2692 = vmatprep.mubr.bf16.mxu0 %v2541
        %2693 = vmatmul.mubr.bf16.gmra.mrb[0].mxu0 %v2540
        %v2694 = vpop.f32.mrb[0].mxu0
        %v2695 = vadd.f32 0.0, %v2694
        %v2696 = vpop.f32.mrb[0].mxu0
        %v2697 = vpop.f32.mrb[0].mxu0
        %v2698 = vadd.f32 0.0, %v2697
        %v2699 = vpop.f32.mrb[0].mxu0
        %2700 = vmatprep.mubr.bf16.mxu0 %v2543
        %2701 = vmatmul.mubr.bf16.gmra.mrb[0].mxu0 %v2542
        %v2702 = vpop.f32.mrb[0].mxu0
        %v2703 = vadd.f32 0.0, %v2702
        %v2704 = vpop.f32.mrb[0].mxu0
        %v2705 = vpop.f32.mrb[0].mxu0
        %v2706 = vadd.f32 0.0, %v2705
        %v2707 = vpop.f32.mrb[0].mxu0
        %2708 = vmatprep.mubr.bf16.mxu0 %v2545
        %2709 = vmatmul.mubr.bf16.gmra.mrb[0].mxu0 %v2544
        %v2710 = vpop.f32.mrb[0].mxu0
        %v2711 = vadd.f32 0.0, %v2710
        %v2712 = vpop.f32.mrb[0].mxu0
        %v2713 = vpop.f32.mrb[0].mxu0
        %v2714 = vadd.f32 0.0, %v2713
        %v2715 = vpop.f32.mrb[0].mxu0
        %2716 = vmatprep.mubr.bf16.mxu0 %v2547
        %2717 = vmatmul.mubr.bf16.gmra.mrb[0].mxu0 %v2546
        %v2718 = vpop.f32.mrb[0].mxu0
        %v2719 = vadd.f32 0.0, %v2718
        %v2720 = vpop.f32.mrb[0].mxu0
        %v2721 = vpop.f32.mrb[0].mxu0
        %v2722 = vadd.f32 0.0, %v2721
        %v2723 = vpop.f32.mrb[0].mxu0
        %2724 = vdwg.mxu0
        %v2725 = vstv %s1263
        %v2726 = vmul.f32 %v2725, %v2599
        %v2727 = vmul.f32 %v2725, %v2602
        %v2728 = vmul.f32 %v2725, %v2607
        %v2729 = vmul.f32 %v2725, %v2610
        %v2730 = vmul.f32 %v2725, %v2615
        %v2731 = vmul.f32 %v2725, %v2618
        %v2732 = vmul.f32 %v2725, %v2623
        %v2733 = vmul.f32 %v2725, %v2626
        %v2734 = vmul.f32 %v2725, %v2631
        %v2735 = vmul.f32 %v2725, %v2634
        %v2736 = vmul.f32 %v2725, %v2639
        %v2737 = vmul.f32 %v2725, %v2642
        %v2738 = vmul.f32 %v2725, %v2647
        %v2739 = vmul.f32 %v2725, %v2650
        %v2740 = vmul.f32 %v2725, %v2655
        %v2741 = vmul.f32 %v2725, %v2658
        %v2742 = vmul.f32 %v2725, %v2663
        %v2743 = vmul.f32 %v2725, %v2666
        %v2744 = vmul.f32 %v2725, %v2671
        %v2745 = vmul.f32 %v2725, %v2674
        %v2746 = vmul.f32 %v2725, %v2679
        %v2747 = vmul.f32 %v2725, %v2682
        %v2748 = vmul.f32 %v2725, %v2687
        %v2749 = vmul.f32 %v2725, %v2690
        %v2750 = vmul.f32 %v2725, %v2695
        %v2751 = vmul.f32 %v2725, %v2698
        %v2752 = vmul.f32 %v2725, %v2703
        %v2753 = vmul.f32 %v2725, %v2706
        %v2754 = vmul.f32 %v2725, %v2711
        %v2755 = vmul.f32 %v2725, %v2714
        %v2756 = vmul.f32 %v2725, %v2719
        %v2757 = vmul.f32 %v2725, %v2722
        %v2758 = vadd.f32 %v2726, %v1231
        %v2759 = vadd.f32 %v2727, %v1232
        %v2760 = vadd.f32 %v2728, %v1233
        %v2761 = vadd.f32 %v2729, %v1234
        %v2762 = vadd.f32 %v2730, %v1235
        %v2763 = vadd.f32 %v2731, %v1236
        %v2764 = vadd.f32 %v2732, %v1237
        %v2765 = vadd.f32 %v2733, %v1238
        %v2766 = vadd.f32 %v2734, %v1239
        %v2767 = vadd.f32 %v2735, %v1240
        %v2768 = vadd.f32 %v2736, %v1241
        %v2769 = vadd.f32 %v2737, %v1242
        %v2770 = vadd.f32 %v2738, %v1243
        %v2771 = vadd.f32 %v2739, %v1244
        %v2772 = vadd.f32 %v2740, %v1245
        %v2773 = vadd.f32 %v2741, %v1246
        %v2774 = vadd.f32 %v2742, %v1247
        %v2775 = vadd.f32 %v2743, %v1248
        %v2776 = vadd.f32 %v2744, %v1249
        %v2777 = vadd.f32 %v2745, %v1250
        %v2778 = vadd.f32 %v2746, %v1251
        %v2779 = vadd.f32 %v2747, %v1252
        %v2780 = vadd.f32 %v2748, %v1253
        %v2781 = vadd.f32 %v2749, %v1254
        %v2782 = vadd.f32 %v2750, %v1255
        %v2783 = vadd.f32 %v2751, %v1256
        %v2784 = vadd.f32 %v2752, %v1257
        %v2785 = vadd.f32 %v2753, %v1258
        %v2786 = vadd.f32 %v2754, %v1259
        %v2787 = vadd.f32 %v2755, %v1260
        %v2788 = vadd.f32 %v2756, %v1261
        %v2789 = vadd.f32 %v2757, %v1262
        %v2790 = vpack.c.bf16 %v2759, %v2758
        %v2791 = vpack.c.bf16 %v2761, %v2760
        %v2792 = vpack.c.bf16 %v2763, %v2762
        %v2793 = vpack.c.bf16 %v2765, %v2764
        %v2794 = vpack.c.bf16 %v2767, %v2766
        %v2795 = vpack.c.bf16 %v2769, %v2768
        %v2796 = vpack.c.bf16 %v2771, %v2770
        %v2797 = vpack.c.bf16 %v2773, %v2772
        %v2798 = vpack.c.bf16 %v2775, %v2774
        %v2799 = vpack.c.bf16 %v2777, %v2776
        %v2800 = vpack.c.bf16 %v2779, %v2778
        %v2801 = vpack.c.bf16 %v2781, %v2780
        %v2802 = vpack.c.bf16 %v2783, %v2782
        %v2803 = vpack.c.bf16 %v2785, %v2784
        %v2804 = vpack.c.bf16 %v2787, %v2786
        %v2805 = vpack.c.bf16 %v2789, %v2788
        %v2806 = vld [vmem:[%s7] sm:$0xf]
        %v2807 = vld [vmem:[%s7 + $0x4] sm:$0xf]
        %v2808 = vld [vmem:[%s7 + $0x8] sm:$0xf]
        %v2809 = vld [vmem:[%s7 + $0xc] sm:$0xf]
        %v2810 = vld [vmem:[%s7 + $0x10] sm:$0xf]
        %v2811 = vld [vmem:[%s7 + $0x14] sm:$0xf]
        %v2812 = vld [vmem:[%s7 + $0x18] sm:$0xf]
        %v2813 = vld [vmem:[%s7 + $0x1c] sm:$0xf]
        %v2814 = vld [vmem:[%s7 + $0x20] sm:$0xf]
        %v2815 = vld [vmem:[%s7 + $0x24] sm:$0xf]
        %v2816 = vld [vmem:[%s7 + $0x28] sm:$0xf]
        %v2817 = vld [vmem:[%s7 + $0x2c] sm:$0xf]
        %v2818 = vld [vmem:[%s7 + $0x30] sm:$0xf]
        %v2819 = vld [vmem:[%s7 + $0x34] sm:$0xf]
        %v2820 = vld [vmem:[%s7 + $0x38] sm:$0xf]
        %v2821 = vld [vmem:[%s7 + $0x3c] sm:$0xf]
        %v2838 = vunpack.c.l.b16 %v2806
        %v2839 = vunpack.c.l.b16 %v2807
        %v2840 = vunpack.c.l.b16 %v2808
        %v2841 = vunpack.c.l.b16 %v2809
        %v2842 = vunpack.c.l.b16 %v2810
        %v2843 = vunpack.c.l.b16 %v2811
        %v2844 = vunpack.c.l.b16 %v2812
        %v2845 = vunpack.c.l.b16 %v2813
        %v2846 = vunpack.c.l.b16 %v2814
        %v2847 = vunpack.c.l.b16 %v2815
        %v2848 = vunpack.c.l.b16 %v2816
        %v2849 = vunpack.c.l.b16 %v2817
        %v2850 = vunpack.c.l.b16 %v2818
        %v2851 = vunpack.c.l.b16 %v2819
        %v2852 = vunpack.c.l.b16 %v2820
        %v2853 = vunpack.c.l.b16 %v2821
        %v2854 = vpack.c.b16 %v2839, %v2838
        %v2855 = vpack.c.b16 %v2841, %v2840
        %v2856 = vpack.c.b16 %v2843, %v2842
        %v2857 = vpack.c.b16 %v2845, %v2844
        %v2858 = vpack.c.b16 %v2847, %v2846
        %v2859 = vpack.c.b16 %v2849, %v2848
        %v2860 = vpack.c.b16 %v2851, %v2850
        %v2861 = vpack.c.b16 %v2853, %v2852
        %2870 = vmatprep.subr.bf16.mxu0 0
        %2871 = vmatpush1.bf16.msra.mxu0 %v2854
        %2872 = vmatprep.subr.bf16.mxu0 0
        %2873 = vmatpush1.bf16.msra.mxu0 %v2855
        %2874 = vmatprep.subr.bf16.mxu0 0
        %2875 = vmatpush1.bf16.msra.mxu0 %v2856
        %2876 = vmatprep.subr.bf16.mxu0 0
        %2877 = vmatpush1.bf16.msra.mxu0 %v2857
        %2878 = vmatprep.subr.bf16.mxu0 0
        %2879 = vmatpush1.bf16.msra.mxu0 %v2858
        %2880 = vmatprep.subr.bf16.mxu0 0
        %2881 = vmatpush1.bf16.msra.mxu0 %v2859
        %2882 = vmatprep.subr.bf16.mxu0 0
        %2883 = vmatpush1.bf16.msra.mxu0 %v2860
        %2884 = vmatprep.subr.bf16.mxu0 0
        %2885 = vmatpush1.bf16.msra.mxu0 %v2861
        %2886 = vmatprep.subr.bf16.mxu0 0
        %2887 = vmatpush1.bf16.msra.mxu0 0
        %2888 = vmatprep.subr.bf16.mxu0 0
        %2889 = vmatpush1.bf16.msra.mxu0 0
        %2890 = vmatprep.subr.bf16.mxu0 0
        %2891 = vmatpush1.bf16.msra.mxu0 0
        %2892 = vmatprep.subr.bf16.mxu0 0
        %2893 = vmatpush1.bf16.msra.mxu0 0
        %2894 = vmatprep.subr.bf16.mxu0 0
        %2895 = vmatpush1.bf16.msra.mxu0 0
        %2896 = vmatprep.subr.bf16.mxu0 0
        %2897 = vmatpush1.bf16.msra.mxu0 0
        %2898 = vmatprep.subr.bf16.mxu0 0
        %2899 = vmatpush1.bf16.msra.mxu0 0
        %2900 = vmatprep.subr.bf16.mxu0 0
        %2901 = vmatpush1.bf16.msra.mxu0 0
        %2902 = vmatprep.mubr.bf16.mxu0 0
        %2903 = vmatmul.mubr.bf16.gmra.mrb[0].mxu0 %v2790
        %v2904 = vpop.f32.mrb[0].mxu0
        %v2905 = vadd.f32 0.0, %v2904
        %v2906 = vpop.f32.mrb[0].mxu0
        %v2907 = vpop.f32.mrb[0].mxu0
        %v2908 = vadd.f32 0.0, %v2907
        %v2909 = vpop.f32.mrb[0].mxu0
        %2910 = vmatprep.mubr.bf16.mxu0 0
        %2911 = vmatmul.mubr.bf16.gmra.mrb[0].mxu0 %v2791
        %v2912 = vpop.f32.mrb[0].mxu0
        %v2913 = vadd.f32 0.0, %v2912
        %v2914 = vpop.f32.mrb[0].mxu0
        %v2915 = vpop.f32.mrb[0].mxu0
        %v2916 = vadd.f32 0.0, %v2915
        %v2917 = vpop.f32.mrb[0].mxu0
        %2918 = vmatprep.mubr.bf16.mxu0 0
        %2919 = vmatmul.mubr.bf16.gmra.mrb[0].mxu0 %v2792
        %v2920 = vpop.f32.mrb[0].mxu0
        %v2921 = vadd.f32 0.0, %v2920
        %v2922 = vpop.f32.mrb[0].mxu0
        %v2923 = vpop.f32.mrb[0].mxu0
        %v2924 = vadd.f32 0.0, %v2923
        %v2925 = vpop.f32.mrb[0].mxu0
        %2926 = vmatprep.mubr.bf16.mxu0 0
        %2927 = vmatmul.mubr.bf16.gmra.mrb[0].mxu0 %v2793
        %v2928 = vpop.f32.mrb[0].mxu0
        %v2929 = vadd.f32 0.0, %v2928
        %v2930 = vpop.f32.mrb[0].mxu0
        %v2931 = vpop.f32.mrb[0].mxu0
        %v2932 = vadd.f32 0.0, %v2931
        %v2933 = vpop.f32.mrb[0].mxu0
        %2934 = vmatprep.mubr.bf16.mxu0 0
        %2935 = vmatmul.mubr.bf16.gmra.mrb[0].mxu0 %v2794
        %v2936 = vpop.f32.mrb[0].mxu0
        %v2937 = vadd.f32 0.0, %v2936
        %v2938 = vpop.f32.mrb[0].mxu0
        %v2939 = vpop.f32.mrb[0].mxu0
        %v2940 = vadd.f32 0.0, %v2939
        %v2941 = vpop.f32.mrb[0].mxu0
        %2942 = vmatprep.mubr.bf16.mxu0 0
        %2943 = vmatmul.mubr.bf16.gmra.mrb[0].mxu0 %v2795
        %v2944 = vpop.f32.mrb[0].mxu0
        %v2945 = vadd.f32 0.0, %v2944
        %v2946 = vpop.f32.mrb[0].mxu0
        %v2947 = vpop.f32.mrb[0].mxu0
        %v2948 = vadd.f32 0.0, %v2947
        %v2949 = vpop.f32.mrb[0].mxu0
        %2950 = vmatprep.mubr.bf16.mxu0 0
        %2951 = vmatmul.mubr.bf16.gmra.mrb[0].mxu0 %v2796
        %v2952 = vpop.f32.mrb[0].mxu0
        %v2953 = vadd.f32 0.0, %v2952
        %v2954 = vpop.f32.mrb[0].mxu0
        %v2955 = vpop.f32.mrb[0].mxu0
        %v2956 = vadd.f32 0.0, %v2955
        %v2957 = vpop.f32.mrb[0].mxu0
        %2958 = vmatprep.mubr.bf16.mxu0 0
        %2959 = vmatmul.mubr.bf16.gmra.mrb[0].mxu0 %v2797
        %v2960 = vpop.f32.mrb[0].mxu0
        %v2961 = vadd.f32 0.0, %v2960
        %v2962 = vpop.f32.mrb[0].mxu0
        %v2963 = vpop.f32.mrb[0].mxu0
        %v2964 = vadd.f32 0.0, %v2963
        %v2965 = vpop.f32.mrb[0].mxu0
        %2966 = vmatprep.mubr.bf16.mxu0 0
        %2967 = vmatmul.mubr.bf16.gmra.mrb[0].mxu0 %v2798
        %v2968 = vpop.f32.mrb[0].mxu0
        %v2969 = vadd.f32 0.0, %v2968
        %v2970 = vpop.f32.mrb[0].mxu0
        %v2971 = vpop.f32.mrb[0].mxu0
        %v2972 = vadd.f32 0.0, %v2971
        %v2973 = vpop.f32.mrb[0].mxu0
        %2974 = vmatprep.mubr.bf16.mxu0 0
        %2975 = vmatmul.mubr.bf16.gmra.mrb[0].mxu0 %v2799
        %v2976 = vpop.f32.mrb[0].mxu0
        %v2977 = vadd.f32 0.0, %v2976
        %v2978 = vpop.f32.mrb[0].mxu0
        %v2979 = vpop.f32.mrb[0].mxu0
        %v2980 = vadd.f32 0.0, %v2979
        %v2981 = vpop.f32.mrb[0].mxu0
        %2982 = vmatprep.mubr.bf16.mxu0 0
        %2983 = vmatmul.mubr.bf16.gmra.mrb[0].mxu0 %v2800
        %v2984 = vpop.f32.mrb[0].mxu0
        %v2985 = vadd.f32 0.0, %v2984
        %v2986 = vpop.f32.mrb[0].mxu0
        %v2987 = vpop.f32.mrb[0].mxu0
        %v2988 = vadd.f32 0.0, %v2987
        %v2989 = vpop.f32.mrb[0].mxu0
        %2990 = vmatprep.mubr.bf16.mxu0 0
        %2991 = vmatmul.mubr.bf16.gmra.mrb[0].mxu0 %v2801
        %v2992 = vpop.f32.mrb[0].mxu0
        %v2993 = vadd.f32 0.0, %v2992
        %v2994 = vpop.f32.mrb[0].mxu0
        %v2995 = vpop.f32.mrb[0].mxu0
        %v2996 = vadd.f32 0.0, %v2995
        %v2997 = vpop.f32.mrb[0].mxu0
        %2998 = vmatprep.mubr.bf16.mxu0 0
        %2999 = vmatmul.mubr.bf16.gmra.mrb[0].mxu0 %v2802
        %v3000 = vpop.f32.mrb[0].mxu0
        %v3001 = vadd.f32 0.0, %v3000
        %v3002 = vpop.f32.mrb[0].mxu0
        %v3003 = vpop.f32.mrb[0].mxu0
        %v3004 = vadd.f32 0.0, %v3003
        %v3005 = vpop.f32.mrb[0].mxu0
        %3006 = vmatprep.mubr.bf16.mxu0 0
        %3007 = vmatmul.mubr.bf16.gmra.mrb[0].mxu0 %v2803
        %v3008 = vpop.f32.mrb[0].mxu0
        %v3009 = vadd.f32 0.0, %v3008
        %v3010 = vpop.f32.mrb[0].mxu0
        %v3011 = vpop.f32.mrb[0].mxu0
        %v3012 = vadd.f32 0.0, %v3011
        %v3013 = vpop.f32.mrb[0].mxu0
        %3014 = vmatprep.mubr.bf16.mxu0 0
        %3015 = vmatmul.mubr.bf16.gmra.mrb[0].mxu0 %v2804
        %v3016 = vpop.f32.mrb[0].mxu0
        %v3017 = vadd.f32 0.0, %v3016
        %v3018 = vpop.f32.mrb[0].mxu0
        %v3019 = vpop.f32.mrb[0].mxu0
        %v3020 = vadd.f32 0.0, %v3019
        %v3021 = vpop.f32.mrb[0].mxu0
        %3022 = vmatprep.mubr.bf16.mxu0 0
        %3023 = vmatmul.mubr.bf16.gmra.mrb[0].mxu0 %v2805
        %v3024 = vpop.f32.mrb[0].mxu0
        %v3025 = vadd.f32 0.0, %v3024
        %v3026 = vpop.f32.mrb[0].mxu0
        %v3027 = vpop.f32.mrb[0].mxu0
        %v3028 = vadd.f32 0.0, %v3027
        %v3029 = vpop.f32.mrb[0].mxu0
        %3030 = vdwg.mxu0
        %v3031 = vld [vmem:[#allocation13] sm:$0x1]
        %v3033 = vlaneseq
        %v3034 = vshrl.u32 %v3033, 7
        %v3035 = vsub.s32 0, %v3034
        %v3036 = vrot.slane %v3031, %v3035
        %v3038 = vmul.f32 %v2905, %v3036
        %v3039 = vmul.f32 %v2908, %v3036
        %v3040 = vmul.f32 %v2913, %v3036
        %v3041 = vmul.f32 %v2916, %v3036
        %v3042 = vmul.f32 %v2921, %v3036
        %v3043 = vmul.f32 %v2924, %v3036
        %v3044 = vmul.f32 %v2929, %v3036
        %v3045 = vmul.f32 %v2932, %v3036
        %v3046 = vmul.f32 %v2937, %v3036
        %v3047 = vmul.f32 %v2940, %v3036
        %v3048 = vmul.f32 %v2945, %v3036
        %v3049 = vmul.f32 %v2948, %v3036
        %v3050 = vmul.f32 %v2953, %v3036
        %v3051 = vmul.f32 %v2956, %v3036
        %v3052 = vmul.f32 %v2961, %v3036
        %v3053 = vmul.f32 %v2964, %v3036
        %v3054 = vmul.f32 %v2969, %v3036
        %v3055 = vmul.f32 %v2972, %v3036
        %v3056 = vmul.f32 %v2977, %v3036
        %v3057 = vmul.f32 %v2980, %v3036
        %v3058 = vmul.f32 %v2985, %v3036
        %v3059 = vmul.f32 %v2988, %v3036
        %v3060 = vmul.f32 %v2993, %v3036
        %v3061 = vmul.f32 %v2996, %v3036
        %v3062 = vmul.f32 %v3001, %v3036
        %v3063 = vmul.f32 %v3004, %v3036
        %v3064 = vmul.f32 %v3009, %v3036
        %v3065 = vmul.f32 %v3012, %v3036
        %v3066 = vmul.f32 %v3017, %v3036
        %v3067 = vmul.f32 %v3020, %v3036
        %v3068 = vmul.f32 %v3025, %v3036
        %v3069 = vmul.f32 %v3028, %v3036
        %v3070 = vld [vmem:[#allocation15] sm:$0x1]
        %v3072 = vlaneseq
        %v3073 = vshrl.u32 %v3072, 7
        %v3074 = vsub.s32 0, %v3073
        %v3075 = vrot.slane %v3070, %v3074
        %v3077 = vadd.f32 %v3038, %v3075
        %v3078 = vadd.f32 %v3039, %v3075
        %v3079 = vadd.f32 %v3040, %v3075
        %v3080 = vadd.f32 %v3041, %v3075
        %v3081 = vadd.f32 %v3042, %v3075
        %v3082 = vadd.f32 %v3043, %v3075
        %v3083 = vadd.f32 %v3044, %v3075
        %v3084 = vadd.f32 %v3045, %v3075
        %v3085 = vadd.f32 %v3046, %v3075
        %v3086 = vadd.f32 %v3047, %v3075
        %v3087 = vadd.f32 %v3048, %v3075
        %v3088 = vadd.f32 %v3049, %v3075
        %v3089 = vadd.f32 %v3050, %v3075
        %v3090 = vadd.f32 %v3051, %v3075
        %v3091 = vadd.f32 %v3052, %v3075
        %v3092 = vadd.f32 %v3053, %v3075
        %v3093 = vadd.f32 %v3054, %v3075
        %v3094 = vadd.f32 %v3055, %v3075
        %v3095 = vadd.f32 %v3056, %v3075
        %v3096 = vadd.f32 %v3057, %v3075
        %v3097 = vadd.f32 %v3058, %v3075
        %v3098 = vadd.f32 %v3059, %v3075
        %v3099 = vadd.f32 %v3060, %v3075
        %v3100 = vadd.f32 %v3061, %v3075
        %v3101 = vadd.f32 %v3062, %v3075
        %v3102 = vadd.f32 %v3063, %v3075
        %v3103 = vadd.f32 %v3064, %v3075
        %v3104 = vadd.f32 %v3065, %v3075
        %v3105 = vadd.f32 %v3066, %v3075
        %v3106 = vadd.f32 %v3067, %v3075
        %v3107 = vadd.f32 %v3068, %v3075
        %v3108 = vadd.f32 %v3069, %v3075
        %v3109 = vmax.f32 %v3077, 0.0
        %v3110 = vmax.f32 %v3078, 0.0
        %v3111 = vmax.f32 %v3079, 0.0
        %v3112 = vmax.f32 %v3080, 0.0
        %v3113 = vmax.f32 %v3081, 0.0
        %v3114 = vmax.f32 %v3082, 0.0
        %v3115 = vmax.f32 %v3083, 0.0
        %v3116 = vmax.f32 %v3084, 0.0
        %v3117 = vmax.f32 %v3085, 0.0
        %v3118 = vmax.f32 %v3086, 0.0
        %v3119 = vmax.f32 %v3087, 0.0
        %v3120 = vmax.f32 %v3088, 0.0
        %v3121 = vmax.f32 %v3089, 0.0
        %v3122 = vmax.f32 %v3090, 0.0
        %v3123 = vmax.f32 %v3091, 0.0
        %v3124 = vmax.f32 %v3092, 0.0
        %v3125 = vmax.f32 %v3093, 0.0
        %v3126 = vmax.f32 %v3094, 0.0
        %v3127 = vmax.f32 %v3095, 0.0
        %v3128 = vmax.f32 %v3096, 0.0
        %v3129 = vmax.f32 %v3097, 0.0
        %v3130 = vmax.f32 %v3098, 0.0
        %v3131 = vmax.f32 %v3099, 0.0
        %v3132 = vmax.f32 %v3100, 0.0
        %v3133 = vmax.f32 %v3101, 0.0
        %v3134 = vmax.f32 %v3102, 0.0
        %v3135 = vmax.f32 %v3103, 0.0
        %v3136 = vmax.f32 %v3104, 0.0
        %v3137 = vmax.f32 %v3105, 0.0
        %v3138 = vmax.f32 %v3106, 0.0
        %v3139 = vmax.f32 %v3107, 0.0
        %v3140 = vmax.f32 %v3108, 0.0
        %s3141 = sld [smem:[#allocation2 + $0x1]]
        %v3142 = vpack.c.bf16 %v3110, %v3109
        %v3143 = vpack.c.bf16 %v3112, %v3111
        %v3144 = vpack.c.bf16 %v3114, %v3113
        %v3145 = vpack.c.bf16 %v3116, %v3115
        %v3146 = vpack.c.bf16 %v3118, %v3117
        %v3147 = vpack.c.bf16 %v3120, %v3119
        %v3148 = vpack.c.bf16 %v3122, %v3121
        %v3149 = vpack.c.bf16 %v3124, %v3123
        %v3150 = vpack.c.bf16 %v3126, %v3125
        %v3151 = vpack.c.bf16 %v3128, %v3127
        %v3152 = vpack.c.bf16 %v3130, %v3129
        %v3153 = vpack.c.bf16 %v3132, %v3131
        %v3154 = vpack.c.bf16 %v3134, %v3133
        %v3155 = vpack.c.bf16 %v3136, %v3135
        %v3156 = vpack.c.bf16 %v3138, %v3137
        %v3157 = vpack.c.bf16 %v3140, %v3139
        %v3158 = vld [vmem:[#allocation16] sm:$0xff]
        %v3159 = vld [vmem:[#allocation16 + $0x8] sm:$0xf]
        %v3160 = vld [vmem:[#allocation16 + $0xc] sm:$0xff]
        %v3161 = vld [vmem:[#allocation16 + $0x14] sm:$0xf]
        %v3162 = vld [vmem:[#allocation16 + $0x18] sm:$0xff]
        %v3163 = vld [vmem:[#allocation16 + $0x20] sm:$0xf]
        %v3164 = vld [vmem:[#allocation16 + $0x24] sm:$0xff]
        %v3165 = vld [vmem:[#allocation16 + $0x2c] sm:$0xf]
        %v3166 = vld [vmem:[#allocation16 + $0x30] sm:$0xff]
        %v3167 = vld [vmem:[#allocation16 + $0x38] sm:$0xf]
        %v3168 = vld [vmem:[#allocation16 + $0x3c] sm:$0xff]
        %v3169 = vld [vmem:[#allocation16 + $0x44] sm:$0xf]
        %v3170 = vld [vmem:[#allocation16 + $0x48] sm:$0xff]
        %v3171 = vld [vmem:[#allocation16 + $0x50] sm:$0xf]
        %v3172 = vld [vmem:[#allocation16 + $0x54] sm:$0xff]
        %v3173 = vld [vmem:[#allocation16 + $0x5c] sm:$0xf]
        %v3174 = vld [vmem:[#allocation16 + $0x60] sm:$0xff]
        %v3175 = vld [vmem:[#allocation16 + $0x68] sm:$0xf]
        %v3176 = vld [vmem:[#allocation16 + $0x6c] sm:$0xff]
        %v3177 = vld [vmem:[#allocation16 + $0x74] sm:$0xf]
        %v3178 = vld [vmem:[#allocation16 + $0x78] sm:$0xff]
        %v3179 = vld [vmem:[#allocation16 + $0x80] sm:$0xf]
        %v3180 = vld [vmem:[#allocation16 + $0x84] sm:$0xff]
        %v3181 = vld [vmem:[#allocation16 + $0x8c] sm:$0xf]
        %v3182 = vld [vmem:[#allocation16 + $0x90] sm:$0xff]
        %v3183 = vld [vmem:[#allocation16 + $0x98] sm:$0xf]
        %v3184 = vld [vmem:[#allocation16 + $0x9c] sm:$0xff]
        %v3185 = vld [vmem:[#allocation16 + $0xa4] sm:$0xf]
        %v3186 = vld [vmem:[#allocation16 + $0xa8] sm:$0xff]
        %v3187 = vld [vmem:[#allocation16 + $0xb0] sm:$0xf]
        %v3188 = vld [vmem:[#allocation16 + $0xb4] sm:$0xff]
        %v3189 = vld [vmem:[#allocation16 + $0xbc] sm:$0xf]
        %v3190 = vld [vmem:[#allocation18] sm:$0x7]
        %v3192 = vlaneseq
        %v3193 = vshrl.u32 %v3192, 7
        %v3194 = vsub.s32 0, %v3193
        %v3195 = vrot.slane %v3190, %v3194
        %v3196 = vlaneseq
        %v3197 = vshrl.u32 %v3196, 7
        %v3198 = vsub.s32 1, %v3197
        %v3199 = vrot.slane %v3190, %v3198
        %v3200 = vlaneseq
        %v3201 = vshrl.u32 %v3200, 7
        %v3202 = vsub.s32 2, %v3201
        %v3203 = vrot.slane %v3190, %v3202
        %v3239 = vunpack.c.l.b16 %v3158
        %v3240 = vunpack.c.h.b16 %v3158
        %v3241 = vunpack.c.l.b16 %v3159
        %v3242 = vunpack.c.l.b16 %v3160
        %v3243 = vunpack.c.h.b16 %v3160
        %v3244 = vunpack.c.l.b16 %v3161
        %v3245 = vunpack.c.l.b16 %v3162
        %v3246 = vunpack.c.h.b16 %v3162
        %v3247 = vunpack.c.l.b16 %v3163
        %v3248 = vunpack.c.l.b16 %v3164
        %v3249 = vunpack.c.h.b16 %v3164
        %v3250 = vunpack.c.l.b16 %v3165
        %v3251 = vunpack.c.l.b16 %v3166
        %v3252 = vunpack.c.h.b16 %v3166
        %v3253 = vunpack.c.l.b16 %v3167
        %v3254 = vunpack.c.l.b16 %v3168
        %v3255 = vunpack.c.h.b16 %v3168
        %v3256 = vunpack.c.l.b16 %v3169
        %v3257 = vunpack.c.l.b16 %v3170
        %v3258 = vunpack.c.h.b16 %v3170
        %v3259 = vunpack.c.l.b16 %v3171
        %v3260 = vunpack.c.l.b16 %v3172
        %v3261 = vunpack.c.h.b16 %v3172
        %v3262 = vunpack.c.l.b16 %v3173
        %v3263 = vunpack.c.l.b16 %v3174
        %v3264 = vunpack.c.h.b16 %v3174
        %v3265 = vunpack.c.l.b16 %v3175
        %v3266 = vunpack.c.l.b16 %v3176
        %v3267 = vunpack.c.h.b16 %v3176
        %v3268 = vunpack.c.l.b16 %v3177
        %v3269 = vunpack.c.l.b16 %v3178
        %v3270 = vunpack.c.h.b16 %v3178
        %v3271 = vunpack.c.l.b16 %v3179
        %v3272 = vunpack.c.l.b16 %v3180
        %v3273 = vunpack.c.h.b16 %v3180
        %v3274 = vunpack.c.l.b16 %v3181
        %v3275 = vunpack.c.l.b16 %v3182
        %v3276 = vunpack.c.h.b16 %v3182
        %v3277 = vunpack.c.l.b16 %v3183
        %v3278 = vunpack.c.l.b16 %v3184
        %v3279 = vunpack.c.h.b16 %v3184
        %v3280 = vunpack.c.l.b16 %v3185
        %v3281 = vunpack.c.l.b16 %v3186
        %v3282 = vunpack.c.h.b16 %v3186
        %v3283 = vunpack.c.l.b16 %v3187
        %v3284 = vunpack.c.l.b16 %v3188
        %v3285 = vunpack.c.h.b16 %v3188
        %v3286 = vunpack.c.l.b16 %v3189
        %v3287 = vpack.c.b16 %v3242, %v3239
        %v3288 = vpack.c.b16 %v3243, %v3240
        %v3289 = vpack.c.b16 %v3244, %v3241
        %v3290 = vpack.c.b16 %v3248, %v3245
        %v3291 = vpack.c.b16 %v3249, %v3246
        %v3292 = vpack.c.b16 %v3250, %v3247
        %v3293 = vpack.c.b16 %v3254, %v3251
        %v3294 = vpack.c.b16 %v3255, %v3252
        %v3295 = vpack.c.b16 %v3256, %v3253
        %v3296 = vpack.c.b16 %v3260, %v3257
        %v3297 = vpack.c.b16 %v3261, %v3258
        %v3298 = vpack.c.b16 %v3262, %v3259
        %v3299 = vpack.c.b16 %v3266, %v3263
        %v3300 = vpack.c.b16 %v3267, %v3264
        %v3301 = vpack.c.b16 %v3268, %v3265
        %v3302 = vpack.c.b16 %v3272, %v3269
        %v3303 = vpack.c.b16 %v3273, %v3270
        %v3304 = vpack.c.b16 %v3274, %v3271
        %v3305 = vpack.c.b16 %v3278, %v3275
        %v3306 = vpack.c.b16 %v3279, %v3276
        %v3307 = vpack.c.b16 %v3280, %v3277
        %v3308 = vpack.c.b16 %v3284, %v3281
        %v3309 = vpack.c.b16 %v3285, %v3282
        %v3310 = vpack.c.b16 %v3286, %v3283
        %3335 = vmatprep.subr.bf16.mxu0 %v3288
        %3336 = vmatpush1.bf16.msra.mxu0 %v3287
        %3337 = vmatprep.subr.bf16.mxu0 %v3291
        %3338 = vmatpush1.bf16.msra.mxu0 %v3290
        %3339 = vmatprep.subr.bf16.mxu0 %v3294
        %3340 = vmatpush1.bf16.msra.mxu0 %v3293
        %3341 = vmatprep.subr.bf16.mxu0 %v3297
        %3342 = vmatpush1.bf16.msra.mxu0 %v3296
        %3343 = vmatprep.subr.bf16.mxu0 %v3300
        %3344 = vmatpush1.bf16.msra.mxu0 %v3299
        %3345 = vmatprep.subr.bf16.mxu0 %v3303
        %3346 = vmatpush1.bf16.msra.mxu0 %v3302
        %3347 = vmatprep.subr.bf16.mxu0 %v3306
        %3348 = vmatpush1.bf16.msra.mxu0 %v3305
        %3349 = vmatprep.subr.bf16.mxu0 %v3309
        %3350 = vmatpush1.bf16.msra.mxu0 %v3308
        %3351 = vmatprep.subr.bf16.mxu0 0
        %3352 = vmatpush1.bf16.msra.mxu0 0
        %3353 = vmatprep.subr.bf16.mxu0 0
        %3354 = vmatpush1.bf16.msra.mxu0 0
        %3355 = vmatprep.subr.bf16.mxu0 0
        %3356 = vmatpush1.bf16.msra.mxu0 0
        %3357 = vmatprep.subr.bf16.mxu0 0
        %3358 = vmatpush1.bf16.msra.mxu0 0
        %3359 = vmatprep.subr.bf16.mxu0 0
        %3360 = vmatpush1.bf16.msra.mxu0 0
        %3361 = vmatprep.subr.bf16.mxu0 0
        %3362 = vmatpush1.bf16.msra.mxu0 0
        %3363 = vmatprep.subr.bf16.mxu0 0
        %3364 = vmatpush1.bf16.msra.mxu0 0
        %3365 = vmatprep.subr.bf16.mxu0 0
        %3366 = vmatpush1.bf16.msra.mxu0 0
        %3367 = vmatprep.mubr.bf16.mxu0 0
        %3368 = vmatmul.mubr.bf16.gmra.mrb[0].mxu0 %v3142
        %v3369 = vpop.f32.mrb[0].mxu0
        %v3370 = vadd.f32 %v3195, %v3369
        %v3371 = vpop.f32.mrb[0].mxu0
        %v3372 = vadd.f32 %v3199, %v3371
        %v3373 = vpop.f32.mrb[0].mxu0
        %v3374 = vadd.f32 %v3195, %v3373
        %v3375 = vpop.f32.mrb[0].mxu0
        %v3376 = vadd.f32 %v3199, %v3375
        %3377 = vmatprep.mubr.bf16.mxu0 0
        %3378 = vmatmul.mubr.bf16.gmra.mrb[0].mxu0 %v3143
        %v3379 = vpop.f32.mrb[0].mxu0
        %v3380 = vadd.f32 %v3195, %v3379
        %v3381 = vpop.f32.mrb[0].mxu0
        %v3382 = vadd.f32 %v3199, %v3381
        %v3383 = vpop.f32.mrb[0].mxu0
        %v3384 = vadd.f32 %v3195, %v3383
        %v3385 = vpop.f32.mrb[0].mxu0
        %v3386 = vadd.f32 %v3199, %v3385
        %3387 = vmatprep.mubr.bf16.mxu0 0
        %3388 = vmatmul.mubr.bf16.gmra.mrb[0].mxu0 %v3144
        %v3389 = vpop.f32.mrb[0].mxu0
        %v3390 = vadd.f32 %v3195, %v3389
        %v3391 = vpop.f32.mrb[0].mxu0
        %v3392 = vadd.f32 %v3199, %v3391
        %v3393 = vpop.f32.mrb[0].mxu0
        %v3394 = vadd.f32 %v3195, %v3393
        %v3395 = vpop.f32.mrb[0].mxu0
        %v3396 = vadd.f32 %v3199, %v3395
        %3397 = vmatprep.mubr.bf16.mxu0 0
        %3398 = vmatmul.mubr.bf16.gmra.mrb[0].mxu0 %v3145
        %v3399 = vpop.f32.mrb[0].mxu0
        %v3400 = vadd.f32 %v3195, %v3399
        %v3401 = vpop.f32.mrb[0].mxu0
        %v3402 = vadd.f32 %v3199, %v3401
        %v3403 = vpop.f32.mrb[0].mxu0
        %v3404 = vadd.f32 %v3195, %v3403
        %v3405 = vpop.f32.mrb[0].mxu0
        %v3406 = vadd.f32 %v3199, %v3405
        %3407 = vmatprep.mubr.bf16.mxu0 0
        %3408 = vmatmul.mubr.bf16.gmra.mrb[0].mxu0 %v3146
        %v3409 = vpop.f32.mrb[0].mxu0
        %v3410 = vadd.f32 %v3195, %v3409
        %v3411 = vpop.f32.mrb[0].mxu0
        %v3412 = vadd.f32 %v3199, %v3411
        %v3413 = vpop.f32.mrb[0].mxu0
        %v3414 = vadd.f32 %v3195, %v3413
        %v3415 = vpop.f32.mrb[0].mxu0
        %v3416 = vadd.f32 %v3199, %v3415
        %3417 = vmatprep.mubr.bf16.mxu0 0
        %3418 = vmatmul.mubr.bf16.gmra.mrb[0].mxu0 %v3147
        %v3419 = vpop.f32.mrb[0].mxu0
        %v3420 = vadd.f32 %v3195, %v3419
        %v3421 = vpop.f32.mrb[0].mxu0
        %v3422 = vadd.f32 %v3199, %v3421
        %v3423 = vpop.f32.mrb[0].mxu0
        %v3424 = vadd.f32 %v3195, %v3423
        %v3425 = vpop.f32.mrb[0].mxu0
        %v3426 = vadd.f32 %v3199, %v3425
        %3427 = vmatprep.mubr.bf16.mxu0 0
        %3428 = vmatmul.mubr.bf16.gmra.mrb[0].mxu0 %v3148
        %v3429 = vpop.f32.mrb[0].mxu0
        %v3430 = vadd.f32 %v3195, %v3429
        %v3431 = vpop.f32.mrb[0].mxu0
        %v3432 = vadd.f32 %v3199, %v3431
        %v3433 = vpop.f32.mrb[0].mxu0
        %v3434 = vadd.f32 %v3195, %v3433
        %v3435 = vpop.f32.mrb[0].mxu0
        %v3436 = vadd.f32 %v3199, %v3435
        %3437 = vmatprep.mubr.bf16.mxu0 0
        %3438 = vmatmul.mubr.bf16.gmra.mrb[0].mxu0 %v3149
        %v3439 = vpop.f32.mrb[0].mxu0
        %v3440 = vadd.f32 %v3195, %v3439
        %v3441 = vpop.f32.mrb[0].mxu0
        %v3442 = vadd.f32 %v3199, %v3441
        %v3443 = vpop.f32.mrb[0].mxu0
        %v3444 = vadd.f32 %v3195, %v3443
        %v3445 = vpop.f32.mrb[0].mxu0
        %v3446 = vadd.f32 %v3199, %v3445
        %3447 = vmatprep.mubr.bf16.mxu0 0
        %3448 = vmatmul.mubr.bf16.gmra.mrb[0].mxu0 %v3150
        %v3449 = vpop.f32.mrb[0].mxu0
        %v3450 = vadd.f32 %v3195, %v3449
        %v3451 = vpop.f32.mrb[0].mxu0
        %v3452 = vadd.f32 %v3199, %v3451
        %v3453 = vpop.f32.mrb[0].mxu0
        %v3454 = vadd.f32 %v3195, %v3453
        %v3455 = vpop.f32.mrb[0].mxu0
        %v3456 = vadd.f32 %v3199, %v3455
        %3457 = vmatprep.mubr.bf16.mxu0 0
        %3458 = vmatmul.mubr.bf16.gmra.mrb[0].mxu0 %v3151
        %v3459 = vpop.f32.mrb[0].mxu0
        %v3460 = vadd.f32 %v3195, %v3459
        %v3461 = vpop.f32.mrb[0].mxu0
        %v3462 = vadd.f32 %v3199, %v3461
        %v3463 = vpop.f32.mrb[0].mxu0
        %v3464 = vadd.f32 %v3195, %v3463
        %v3465 = vpop.f32.mrb[0].mxu0
        %v3466 = vadd.f32 %v3199, %v3465
        %3467 = vmatprep.mubr.bf16.mxu0 0
        %3468 = vmatmul.mubr.bf16.gmra.mrb[0].mxu0 %v3152
        %v3469 = vpop.f32.mrb[0].mxu0
        %v3470 = vadd.f32 %v3195, %v3469
        %v3471 = vpop.f32.mrb[0].mxu0
        %v3472 = vadd.f32 %v3199, %v3471
        %v3473 = vpop.f32.mrb[0].mxu0
        %v3474 = vadd.f32 %v3195, %v3473
        %v3475 = vpop.f32.mrb[0].mxu0
        %v3476 = vadd.f32 %v3199, %v3475
        %3477 = vmatprep.mubr.bf16.mxu0 0
        %3478 = vmatmul.mubr.bf16.gmra.mrb[0].mxu0 %v3153
        %v3479 = vpop.f32.mrb[0].mxu0
        %v3480 = vadd.f32 %v3195, %v3479
        %v3481 = vpop.f32.mrb[0].mxu0
        %v3482 = vadd.f32 %v3199, %v3481
        %v3483 = vpop.f32.mrb[0].mxu0
        %v3484 = vadd.f32 %v3195, %v3483
        %v3485 = vpop.f32.mrb[0].mxu0
        %v3486 = vadd.f32 %v3199, %v3485
        %3487 = vmatprep.mubr.bf16.mxu0 0
        %3488 = vmatmul.mubr.bf16.gmra.mrb[0].mxu0 %v3154
        %v3489 = vpop.f32.mrb[0].mxu0
        %v3490 = vadd.f32 %v3195, %v3489
        %v3491 = vpop.f32.mrb[0].mxu0
        %v3492 = vadd.f32 %v3199, %v3491
        %v3493 = vpop.f32.mrb[0].mxu0
        %v3494 = vadd.f32 %v3195, %v3493
        %v3495 = vpop.f32.mrb[0].mxu0
        %v3496 = vadd.f32 %v3199, %v3495
        %3497 = vmatprep.mubr.bf16.mxu0 0
        %3498 = vmatmul.mubr.bf16.gmra.mrb[0].mxu0 %v3155
        %v3499 = vpop.f32.mrb[0].mxu0
        %v3500 = vadd.f32 %v3195, %v3499
        %v3501 = vpop.f32.mrb[0].mxu0
        %v3502 = vadd.f32 %v3199, %v3501
        %v3503 = vpop.f32.mrb[0].mxu0
        %v3504 = vadd.f32 %v3195, %v3503
        %v3505 = vpop.f32.mrb[0].mxu0
        %v3506 = vadd.f32 %v3199, %v3505
        %3507 = vmatprep.mubr.bf16.mxu0 0
        %3508 = vmatmul.mubr.bf16.gmra.mrb[0].mxu0 %v3156
        %v3509 = vpop.f32.mrb[0].mxu0
        %v3510 = vadd.f32 %v3195, %v3509
        %v3511 = vpop.f32.mrb[0].mxu0
        %v3512 = vadd.f32 %v3199, %v3511
        %v3513 = vpop.f32.mrb[0].mxu0
        %v3514 = vadd.f32 %v3195, %v3513
        %v3515 = vpop.f32.mrb[0].mxu0
        %v3516 = vadd.f32 %v3199, %v3515
        %3517 = vmatprep.mubr.bf16.mxu0 0
        %3518 = vmatmul.mubr.bf16.gmra.mrb[0].mxu0 %v3157
        %v3519 = vpop.f32.mrb[0].mxu0
        %v3520 = vadd.f32 %v3195, %v3519
        %v3521 = vpop.f32.mrb[0].mxu0
        %v3522 = vadd.f32 %v3199, %v3521
        %v3523 = vpop.f32.mrb[0].mxu0
        %v3524 = vadd.f32 %v3195, %v3523
        %v3525 = vpop.f32.mrb[0].mxu0
        %v3526 = vadd.f32 %v3199, %v3525
        %3527 = vdwg.mxu0
        %3528 = vmatprep.subr.bf16.mxu0 0
        %3529 = vmatpush1.bf16.msra.mxu0 %v3289
        %3530 = vmatprep.subr.bf16.mxu0 0
        %3531 = vmatpush1.bf16.msra.mxu0 %v3292
        %3532 = vmatprep.subr.bf16.mxu0 0
        %3533 = vmatpush1.bf16.msra.mxu0 %v3295
        %3534 = vmatprep.subr.bf16.mxu0 0
        %3535 = vmatpush1.bf16.msra.mxu0 %v3298
        %3536 = vmatprep.subr.bf16.mxu0 0
        %3537 = vmatpush1.bf16.msra.mxu0 %v3301
        %3538 = vmatprep.subr.bf16.mxu0 0
        %3539 = vmatpush1.bf16.msra.mxu0 %v3304
        %3540 = vmatprep.subr.bf16.mxu0 0
        %3541 = vmatpush1.bf16.msra.mxu0 %v3307
        %3542 = vmatprep.subr.bf16.mxu0 0
        %3543 = vmatpush1.bf16.msra.mxu0 %v3310
        %3544 = vmatprep.subr.bf16.mxu0 0
        %3545 = vmatpush1.bf16.msra.mxu0 0
        %3546 = vmatprep.subr.bf16.mxu0 0
        %3547 = vmatpush1.bf16.msra.mxu0 0
        %3548 = vmatprep.subr.bf16.mxu0 0
        %3549 = vmatpush1.bf16.msra.mxu0 0
        %3550 = vmatprep.subr.bf16.mxu0 0
        %3551 = vmatpush1.bf16.msra.mxu0 0
        %3552 = vmatprep.subr.bf16.mxu0 0
        %3553 = vmatpush1.bf16.msra.mxu0 0
        %3554 = vmatprep.subr.bf16.mxu0 0
        %3555 = vmatpush1.bf16.msra.mxu0 0
        %3556 = vmatprep.subr.bf16.mxu0 0
        %3557 = vmatpush1.bf16.msra.mxu0 0
        %3558 = vmatprep.subr.bf16.mxu0 0
        %3559 = vmatpush1.bf16.msra.mxu0 0
        %3560 = vmatprep.mubr.bf16.mxu0 0
        %3561 = vmatmul.mubr.bf16.gmra.mrb[0].mxu0 %v3142
        %v3562 = vpop.f32.mrb[0].mxu0
        %v3563 = vadd.f32 %v3203, %v3562
        %v3564 = vpop.f32.mrb[0].mxu0
        %v3565 = vpop.f32.mrb[0].mxu0
        %v3566 = vadd.f32 %v3203, %v3565
        %v3567 = vpop.f32.mrb[0].mxu0
        %3568 = vmatprep.mubr.bf16.mxu0 0
        %3569 = vmatmul.mubr.bf16.gmra.mrb[0].mxu0 %v3143
        %v3570 = vpop.f32.mrb[0].mxu0
        %v3571 = vadd.f32 %v3203, %v3570
        %v3572 = vpop.f32.mrb[0].mxu0
        %v3573 = vpop.f32.mrb[0].mxu0
        %v3574 = vadd.f32 %v3203, %v3573
        %v3575 = vpop.f32.mrb[0].mxu0
        %3576 = vmatprep.mubr.bf16.mxu0 0
        %3577 = vmatmul.mubr.bf16.gmra.mrb[0].mxu0 %v3144
        %v3578 = vpop.f32.mrb[0].mxu0
        %v3579 = vadd.f32 %v3203, %v3578
        %v3580 = vpop.f32.mrb[0].mxu0
        %v3581 = vpop.f32.mrb[0].mxu0
        %v3582 = vadd.f32 %v3203, %v3581
        %v3583 = vpop.f32.mrb[0].mxu0
        %3584 = vmatprep.mubr.bf16.mxu0 0
        %3585 = vmatmul.mubr.bf16.gmra.mrb[0].mxu0 %v3145
        %v3586 = vpop.f32.mrb[0].mxu0
        %v3587 = vadd.f32 %v3203, %v3586
        %v3588 = vpop.f32.mrb[0].mxu0
        %v3589 = vpop.f32.mrb[0].mxu0
        %v3590 = vadd.f32 %v3203, %v3589
        %v3591 = vpop.f32.mrb[0].mxu0
        %3592 = vmatprep.mubr.bf16.mxu0 0
        %3593 = vmatmul.mubr.bf16.gmra.mrb[0].mxu0 %v3146
        %v3594 = vpop.f32.mrb[0].mxu0
        %v3595 = vadd.f32 %v3203, %v3594
        %v3596 = vpop.f32.mrb[0].mxu0
        %v3597 = vpop.f32.mrb[0].mxu0
        %v3598 = vadd.f32 %v3203, %v3597
        %v3599 = vpop.f32.mrb[0].mxu0
        %3600 = vmatprep.mubr.bf16.mxu0 0
        %3601 = vmatmul.mubr.bf16.gmra.mrb[0].mxu0 %v3147
        %v3602 = vpop.f32.mrb[0].mxu0
        %v3603 = vadd.f32 %v3203, %v3602
        %v3604 = vpop.f32.mrb[0].mxu0
        %v3605 = vpop.f32.mrb[0].mxu0
        %v3606 = vadd.f32 %v3203, %v3605
        %v3607 = vpop.f32.mrb[0].mxu0
        %3608 = vmatprep.mubr.bf16.mxu0 0
        %3609 = vmatmul.mubr.bf16.gmra.mrb[0].mxu0 %v3148
        %v3610 = vpop.f32.mrb[0].mxu0
        %v3611 = vadd.f32 %v3203, %v3610
        %v3612 = vpop.f32.mrb[0].mxu0
        %v3613 = vpop.f32.mrb[0].mxu0
        %v3614 = vadd.f32 %v3203, %v3613
        %v3615 = vpop.f32.mrb[0].mxu0
        %3616 = vmatprep.mubr.bf16.mxu0 0
        %3617 = vmatmul.mubr.bf16.gmra.mrb[0].mxu0 %v3149
        %v3618 = vpop.f32.mrb[0].mxu0
        %v3619 = vadd.f32 %v3203, %v3618
        %v3620 = vpop.f32.mrb[0].mxu0
        %v3621 = vpop.f32.mrb[0].mxu0
        %v3622 = vadd.f32 %v3203, %v3621
        %v3623 = vpop.f32.mrb[0].mxu0
        %3624 = vmatprep.mubr.bf16.mxu0 0
        %3625 = vmatmul.mubr.bf16.gmra.mrb[0].mxu0 %v3150
        %v3626 = vpop.f32.mrb[0].mxu0
        %v3627 = vadd.f32 %v3203, %v3626
        %v3628 = vpop.f32.mrb[0].mxu0
        %v3629 = vpop.f32.mrb[0].mxu0
        %v3630 = vadd.f32 %v3203, %v3629
        %v3631 = vpop.f32.mrb[0].mxu0
        %3632 = vmatprep.mubr.bf16.mxu0 0
        %3633 = vmatmul.mubr.bf16.gmra.mrb[0].mxu0 %v3151
        %v3634 = vpop.f32.mrb[0].mxu0
        %v3635 = vadd.f32 %v3203, %v3634
        %v3636 = vpop.f32.mrb[0].mxu0
        %v3637 = vpop.f32.mrb[0].mxu0
        %v3638 = vadd.f32 %v3203, %v3637
        %v3639 = vpop.f32.mrb[0].mxu0
        %3640 = vmatprep.mubr.bf16.mxu0 0
        %3641 = vmatmul.mubr.bf16.gmra.mrb[0].mxu0 %v3152
        %v3642 = vpop.f32.mrb[0].mxu0
        %v3643 = vadd.f32 %v3203, %v3642
        %v3644 = vpop.f32.mrb[0].mxu0
        %v3645 = vpop.f32.mrb[0].mxu0
        %v3646 = vadd.f32 %v3203, %v3645
        %v3647 = vpop.f32.mrb[0].mxu0
        %3648 = vmatprep.mubr.bf16.mxu0 0
        %3649 = vmatmul.mubr.bf16.gmra.mrb[0].mxu0 %v3153
        %v3650 = vpop.f32.mrb[0].mxu0
        %v3651 = vadd.f32 %v3203, %v3650
        %v3652 = vpop.f32.mrb[0].mxu0
        %v3653 = vpop.f32.mrb[0].mxu0
        %v3654 = vadd.f32 %v3203, %v3653
        %v3655 = vpop.f32.mrb[0].mxu0
        %3656 = vmatprep.mubr.bf16.mxu0 0
        %3657 = vmatmul.mubr.bf16.gmra.mrb[0].mxu0 %v3154
        %v3658 = vpop.f32.mrb[0].mxu0
        %v3659 = vadd.f32 %v3203, %v3658
        %v3660 = vpop.f32.mrb[0].mxu0
        %v3661 = vpop.f32.mrb[0].mxu0
        %v3662 = vadd.f32 %v3203, %v3661
        %v3663 = vpop.f32.mrb[0].mxu0
        %3664 = vmatprep.mubr.bf16.mxu0 0
        %3665 = vmatmul.mubr.bf16.gmra.mrb[0].mxu0 %v3155
        %v3666 = vpop.f32.mrb[0].mxu0
        %v3667 = vadd.f32 %v3203, %v3666
        %v3668 = vpop.f32.mrb[0].mxu0
        %v3669 = vpop.f32.mrb[0].mxu0
        %v3670 = vadd.f32 %v3203, %v3669
        %v3671 = vpop.f32.mrb[0].mxu0
        %3672 = vmatprep.mubr.bf16.mxu0 0
        %3673 = vmatmul.mubr.bf16.gmra.mrb[0].mxu0 %v3156
        %v3674 = vpop.f32.mrb[0].mxu0
        %v3675 = vadd.f32 %v3203, %v3674
        %v3676 = vpop.f32.mrb[0].mxu0
        %v3677 = vpop.f32.mrb[0].mxu0
        %v3678 = vadd.f32 %v3203, %v3677
        %v3679 = vpop.f32.mrb[0].mxu0
        %3680 = vmatprep.mubr.bf16.mxu0 0
        %3681 = vmatmul.mubr.bf16.gmra.mrb[0].mxu0 %v3157
        %v3682 = vpop.f32.mrb[0].mxu0
        %v3683 = vadd.f32 %v3203, %v3682
        %v3684 = vpop.f32.mrb[0].mxu0
        %v3685 = vpop.f32.mrb[0].mxu0
        %v3686 = vadd.f32 %v3203, %v3685
        %v3687 = vpop.f32.mrb[0].mxu0
        %3688 = vdwg.mxu0
        %v3689 = vpack.c.bf16 %v3374, %v3370
        %v3690 = vpack.c.bf16 %v3384, %v3380
        %v3691 = vpack.c.bf16 %v3394, %v3390
        %v3692 = vpack.c.bf16 %v3404, %v3400
        %v3693 = vpack.c.bf16 %v3414, %v3410
        %v3694 = vpack.c.bf16 %v3424, %v3420
        %v3695 = vpack.c.bf16 %v3434, %v3430
        %v3696 = vpack.c.bf16 %v3444, %v3440
        %v3697 = vpack.c.bf16 %v3454, %v3450
        %v3698 = vpack.c.bf16 %v3464, %v3460
        %v3699 = vpack.c.bf16 %v3474, %v3470
        %v3700 = vpack.c.bf16 %v3484, %v3480
        %v3701 = vpack.c.bf16 %v3494, %v3490
        %v3702 = vpack.c.bf16 %v3504, %v3500
        %v3703 = vpack.c.bf16 %v3514, %v3510
        %v3704 = vpack.c.bf16 %v3524, %v3520
        %v3705 = vpack.c.bf16 %v3376, %v3372
        %v3706 = vpack.c.bf16 %v3386, %v3382
        %v3707 = vpack.c.bf16 %v3396, %v3392
        %v3708 = vpack.c.bf16 %v3406, %v3402
        %v3709 = vpack.c.bf16 %v3416, %v3412
        %v3710 = vpack.c.bf16 %v3426, %v3422
        %v3711 = vpack.c.bf16 %v3436, %v3432
        %v3712 = vpack.c.bf16 %v3446, %v3442
        %v3713 = vpack.c.bf16 %v3456, %v3452
        %v3714 = vpack.c.bf16 %v3466, %v3462
        %v3715 = vpack.c.bf16 %v3476, %v3472
        %v3716 = vpack.c.bf16 %v3486, %v3482
        %v3717 = vpack.c.bf16 %v3496, %v3492
        %v3718 = vpack.c.bf16 %v3506, %v3502
        %v3719 = vpack.c.bf16 %v3516, %v3512
        %v3720 = vpack.c.bf16 %v3526, %v3522
        %3721 = vmatprep.subr.bf16.mxu0 0
        %3722 = vmatpush1.bf16.xpose.msra.mxu0 %v3705
        %3723 = vmatprep.subr.bf16.mxu0 0
        %3724 = vmatpush1.bf16.xpose.msra.mxu0 %v3706
        %3725 = vmatprep.subr.bf16.mxu0 0
        %3726 = vmatpush1.bf16.xpose.msra.mxu0 %v3707
        %3727 = vmatprep.subr.bf16.mxu0 0
        %3728 = vmatpush1.bf16.xpose.msra.mxu0 %v3708
        %3729 = vmatprep.subr.bf16.mxu0 0
        %3730 = vmatpush1.bf16.xpose.msra.mxu0 %v3709
        %3731 = vmatprep.subr.bf16.mxu0 0
        %3732 = vmatpush1.bf16.xpose.msra.mxu0 %v3710
        %3733 = vmatprep.subr.bf16.mxu0 0
        %3734 = vmatpush1.bf16.xpose.msra.mxu0 %v3711
        %3735 = vmatprep.subr.bf16.mxu0 0
        %3736 = vmatpush1.bf16.xpose.msra.mxu0 %v3712
        %3737 = vmatprep.subr.bf16.mxu0 0
        %3738 = vmatpush1.bf16.xpose.msra.mxu0 %v3713
        %3739 = vmatprep.subr.bf16.mxu0 0
        %3740 = vmatpush1.bf16.xpose.msra.mxu0 %v3714
        %3741 = vmatprep.subr.bf16.mxu0 0
        %3742 = vmatpush1.bf16.xpose.msra.mxu0 %v3715
        %3743 = vmatprep.subr.bf16.mxu0 0
        %3744 = vmatpush1.bf16.xpose.msra.mxu0 %v3716
        %3745 = vmatprep.subr.bf16.mxu0 0
        %3746 = vmatpush1.bf16.xpose.msra.mxu0 %v3717
        %3747 = vmatprep.subr.bf16.mxu0 0
        %3748 = vmatpush1.bf16.xpose.msra.mxu0 %v3718
        %3749 = vmatprep.subr.bf16.mxu0 0
        %3750 = vmatpush1.bf16.xpose.msra.mxu0 %v3719
        %3751 = vmatprep.subr.bf16.mxu0 0
        %3752 = vmatpush1.bf16.xpose.msra.mxu0 %v3720
        %3753 = vmatprep.mubr.bf16.mxu0 0
        %3754 = vmatmul.mubr.bf16.gmra.mrb[0].mxu0 %v3689
        %v3755 = vpop.f32.mrb[0].mxu0
        %v3756 = vadd.f32 0.0, %v3755
        %v3757 = vpop.f32.mrb[0].mxu0
        %v3758 = vadd.f32 0.0, %v3757
        %v3759 = vpop.f32.mrb[0].mxu0
        %v3760 = vadd.f32 0.0, %v3759
        %v3761 = vpop.f32.mrb[0].mxu0
        %v3762 = vadd.f32 0.0, %v3761
        %3763 = vmatprep.mubr.bf16.mxu0 0
        %3764 = vmatmul.mubr.bf16.gmra.mrb[0].mxu0 %v3690
        %v3765 = vpop.f32.mrb[0].mxu0
        %v3766 = vadd.f32 0.0, %v3765
        %v3767 = vpop.f32.mrb[0].mxu0
        %v3768 = vadd.f32 0.0, %v3767
        %v3769 = vpop.f32.mrb[0].mxu0
        %v3770 = vadd.f32 0.0, %v3769
        %v3771 = vpop.f32.mrb[0].mxu0
        %v3772 = vadd.f32 0.0, %v3771
        %3773 = vmatprep.mubr.bf16.mxu0 0
        %3774 = vmatmul.mubr.bf16.gmra.mrb[0].mxu0 %v3691
        %v3775 = vpop.f32.mrb[0].mxu0
        %v3776 = vadd.f32 0.0, %v3775
        %v3777 = vpop.f32.mrb[0].mxu0
        %v3778 = vadd.f32 0.0, %v3777
        %v3779 = vpop.f32.mrb[0].mxu0
        %v3780 = vadd.f32 0.0, %v3779
        %v3781 = vpop.f32.mrb[0].mxu0
        %v3782 = vadd.f32 0.0, %v3781
        %3783 = vmatprep.mubr.bf16.mxu0 0
        %3784 = vmatmul.mubr.bf16.gmra.mrb[0].mxu0 %v3692
        %v3785 = vpop.f32.mrb[0].mxu0
        %v3786 = vadd.f32 0.0, %v3785
        %v3787 = vpop.f32.mrb[0].mxu0
        %v3788 = vadd.f32 0.0, %v3787
        %v3789 = vpop.f32.mrb[0].mxu0
        %v3790 = vadd.f32 0.0, %v3789
        %v3791 = vpop.f32.mrb[0].mxu0
        %v3792 = vadd.f32 0.0, %v3791
        %3793 = vmatprep.mubr.bf16.mxu0 0
        %3794 = vmatmul.mubr.bf16.gmra.mrb[0].mxu0 %v3693
        %v3795 = vpop.f32.mrb[0].mxu0
        %v3796 = vadd.f32 0.0, %v3795
        %v3797 = vpop.f32.mrb[0].mxu0
        %v3798 = vadd.f32 0.0, %v3797
        %v3799 = vpop.f32.mrb[0].mxu0
        %v3800 = vadd.f32 0.0, %v3799
        %v3801 = vpop.f32.mrb[0].mxu0
        %v3802 = vadd.f32 0.0, %v3801
        %3803 = vmatprep.mubr.bf16.mxu0 0
        %3804 = vmatmul.mubr.bf16.gmra.mrb[0].mxu0 %v3694
        %v3805 = vpop.f32.mrb[0].mxu0
        %v3806 = vadd.f32 0.0, %v3805
        %v3807 = vpop.f32.mrb[0].mxu0
        %v3808 = vadd.f32 0.0, %v3807
        %v3809 = vpop.f32.mrb[0].mxu0
        %v3810 = vadd.f32 0.0, %v3809
        %v3811 = vpop.f32.mrb[0].mxu0
        %v3812 = vadd.f32 0.0, %v3811
        %3813 = vmatprep.mubr.bf16.mxu0 0
        %3814 = vmatmul.mubr.bf16.gmra.mrb[0].mxu0 %v3695
        %v3815 = vpop.f32.mrb[0].mxu0
        %v3816 = vadd.f32 0.0, %v3815
        %v3817 = vpop.f32.mrb[0].mxu0
        %v3818 = vadd.f32 0.0, %v3817
        %v3819 = vpop.f32.mrb[0].mxu0
        %v3820 = vadd.f32 0.0, %v3819
        %v3821 = vpop.f32.mrb[0].mxu0
        %v3822 = vadd.f32 0.0, %v3821
        %3823 = vmatprep.mubr.bf16.mxu0 0
        %3824 = vmatmul.mubr.bf16.gmra.mrb[0].mxu0 %v3696
        %v3825 = vpop.f32.mrb[0].mxu0
        %v3826 = vadd.f32 0.0, %v3825
        %v3827 = vpop.f32.mrb[0].mxu0
        %v3828 = vadd.f32 0.0, %v3827
        %v3829 = vpop.f32.mrb[0].mxu0
        %v3830 = vadd.f32 0.0, %v3829
        %v3831 = vpop.f32.mrb[0].mxu0
        %v3832 = vadd.f32 0.0, %v3831
        %3833 = vmatprep.mubr.bf16.mxu0 0
        %3834 = vmatmul.mubr.bf16.gmra.mrb[0].mxu0 %v3697
        %v3835 = vpop.f32.mrb[0].mxu0
        %v3836 = vadd.f32 0.0, %v3835
        %v3837 = vpop.f32.mrb[0].mxu0
        %v3838 = vadd.f32 0.0, %v3837
        %v3839 = vpop.f32.mrb[0].mxu0
        %v3840 = vadd.f32 0.0, %v3839
        %v3841 = vpop.f32.mrb[0].mxu0
        %v3842 = vadd.f32 0.0, %v3841
        %3843 = vmatprep.mubr.bf16.mxu0 0
        %3844 = vmatmul.mubr.bf16.gmra.mrb[0].mxu0 %v3698
        %v3845 = vpop.f32.mrb[0].mxu0
        %v3846 = vadd.f32 0.0, %v3845
        %v3847 = vpop.f32.mrb[0].mxu0
        %v3848 = vadd.f32 0.0, %v3847
        %v3849 = vpop.f32.mrb[0].mxu0
        %v3850 = vadd.f32 0.0, %v3849
        %v3851 = vpop.f32.mrb[0].mxu0
        %v3852 = vadd.f32 0.0, %v3851
        %3853 = vmatprep.mubr.bf16.mxu0 0
        %3854 = vmatmul.mubr.bf16.gmra.mrb[0].mxu0 %v3699
        %v3855 = vpop.f32.mrb[0].mxu0
        %v3856 = vadd.f32 0.0, %v3855
        %v3857 = vpop.f32.mrb[0].mxu0
        %v3858 = vadd.f32 0.0, %v3857
        %v3859 = vpop.f32.mrb[0].mxu0
        %v3860 = vadd.f32 0.0, %v3859
        %v3861 = vpop.f32.mrb[0].mxu0
        %v3862 = vadd.f32 0.0, %v3861
        %3863 = vmatprep.mubr.bf16.mxu0 0
        %3864 = vmatmul.mubr.bf16.gmra.mrb[0].mxu0 %v3700
        %v3865 = vpop.f32.mrb[0].mxu0
        %v3866 = vadd.f32 0.0, %v3865
        %v3867 = vpop.f32.mrb[0].mxu0
        %v3868 = vadd.f32 0.0, %v3867
        %v3869 = vpop.f32.mrb[0].mxu0
        %v3870 = vadd.f32 0.0, %v3869
        %v3871 = vpop.f32.mrb[0].mxu0
        %v3872 = vadd.f32 0.0, %v3871
        %3873 = vmatprep.mubr.bf16.mxu0 0
        %3874 = vmatmul.mubr.bf16.gmra.mrb[0].mxu0 %v3701
        %v3875 = vpop.f32.mrb[0].mxu0
        %v3876 = vadd.f32 0.0, %v3875
        %v3877 = vpop.f32.mrb[0].mxu0
        %v3878 = vadd.f32 0.0, %v3877
        %v3879 = vpop.f32.mrb[0].mxu0
        %v3880 = vadd.f32 0.0, %v3879
        %v3881 = vpop.f32.mrb[0].mxu0
        %v3882 = vadd.f32 0.0, %v3881
        %3883 = vmatprep.mubr.bf16.mxu0 0
        %3884 = vmatmul.mubr.bf16.gmra.mrb[0].mxu0 %v3702
        %v3885 = vpop.f32.mrb[0].mxu0
        %v3886 = vadd.f32 0.0, %v3885
        %v3887 = vpop.f32.mrb[0].mxu0
        %v3888 = vadd.f32 0.0, %v3887
        %v3889 = vpop.f32.mrb[0].mxu0
        %v3890 = vadd.f32 0.0, %v3889
        %v3891 = vpop.f32.mrb[0].mxu0
        %v3892 = vadd.f32 0.0, %v3891
        %3893 = vmatprep.mubr.bf16.mxu0 0
        %3894 = vmatmul.mubr.bf16.gmra.mrb[0].mxu0 %v3703
        %v3895 = vpop.f32.mrb[0].mxu0
        %v3896 = vadd.f32 0.0, %v3895
        %v3897 = vpop.f32.mrb[0].mxu0
        %v3898 = vadd.f32 0.0, %v3897
        %v3899 = vpop.f32.mrb[0].mxu0
        %v3900 = vadd.f32 0.0, %v3899
        %v3901 = vpop.f32.mrb[0].mxu0
        %v3902 = vadd.f32 0.0, %v3901
        %3903 = vmatprep.mubr.bf16.mxu0 0
        %3904 = vmatmul.mubr.bf16.gmra.mrb[0].mxu0 %v3704
        %v3905 = vpop.f32.mrb[0].mxu0
        %v3906 = vadd.f32 0.0, %v3905
        %v3907 = vpop.f32.mrb[0].mxu0
        %v3908 = vadd.f32 0.0, %v3907
        %v3909 = vpop.f32.mrb[0].mxu0
        %v3910 = vadd.f32 0.0, %v3909
        %v3911 = vpop.f32.mrb[0].mxu0
        %v3912 = vadd.f32 0.0, %v3911
        %3913 = vdwg.mxu0
        %v3914 = vmax.f32 %v3756, %v3758
        %3915 = vmax.xlane.f32.xlu0 %v3914
        %v3916 = vpop.xlane.xlu0 %3915
        %v3917 = vmax.f32 %v3760, %v3762
        %3918 = vmax.xlane.f32.xlu0 %v3917
        %v3919 = vpop.xlane.xlu0 %3918
        %v3920 = vmax.f32 %v3766, %v3768
        %3921 = vmax.xlane.f32.xlu0 %v3920
        %v3922 = vpop.xlane.xlu0 %3921
        %v3923 = vmax.f32 %v3770, %v3772
        %3924 = vmax.xlane.f32.xlu0 %v3923
        %v3925 = vpop.xlane.xlu0 %3924
        %v3926 = vmax.f32 %v3776, %v3778
        %3927 = vmax.xlane.f32.xlu0 %v3926
        %v3928 = vpop.xlane.xlu0 %3927
        %v3929 = vmax.f32 %v3780, %v3782
        %3930 = vmax.xlane.f32.xlu0 %v3929
        %v3931 = vpop.xlane.xlu0 %3930
        %v3932 = vmax.f32 %v3786, %v3788
        %3933 = vmax.xlane.f32.xlu0 %v3932
        %v3934 = vpop.xlane.xlu0 %3933
        %v3935 = vmax.f32 %v3790, %v3792
        %3936 = vmax.xlane.f32.xlu0 %v3935
        %v3937 = vpop.xlane.xlu0 %3936
        %v3938 = vmax.f32 %v3796, %v3798
        %3939 = vmax.xlane.f32.xlu0 %v3938
        %v3940 = vpop.xlane.xlu0 %3939
        %v3941 = vmax.f32 %v3800, %v3802
        %3942 = vmax.xlane.f32.xlu0 %v3941
        %v3943 = vpop.xlane.xlu0 %3942
        %v3944 = vmax.f32 %v3806, %v3808
        %3945 = vmax.xlane.f32.xlu0 %v3944
        %v3946 = vpop.xlane.xlu0 %3945
        %v3947 = vmax.f32 %v3810, %v3812
        %3948 = vmax.xlane.f32.xlu0 %v3947
        %v3949 = vpop.xlane.xlu0 %3948
        %v3950 = vmax.f32 %v3816, %v3818
        %3951 = vmax.xlane.f32.xlu0 %v3950
        %v3952 = vpop.xlane.xlu0 %3951
        %v3953 = vmax.f32 %v3820, %v3822
        %3954 = vmax.xlane.f32.xlu0 %v3953
        %v3955 = vpop.xlane.xlu0 %3954
        %v3956 = vmax.f32 %v3826, %v3828
        %3957 = vmax.xlane.f32.xlu0 %v3956
        %v3958 = vpop.xlane.xlu0 %3957
        %v3959 = vmax.f32 %v3830, %v3832
        %3960 = vmax.xlane.f32.xlu0 %v3959
        %v3961 = vpop.xlane.xlu0 %3960
        %v3962 = vmax.f32 %v3836, %v3838
        %3963 = vmax.xlane.f32.xlu0 %v3962
        %v3964 = vpop.xlane.xlu0 %3963
        %v3965 = vmax.f32 %v3840, %v3842
        %3966 = vmax.xlane.f32.xlu0 %v3965
        %v3967 = vpop.xlane.xlu0 %3966
        %v3968 = vmax.f32 %v3846, %v3848
        %3969 = vmax.xlane.f32.xlu0 %v3968
        %v3970 = vpop.xlane.xlu0 %3969
        %v3971 = vmax.f32 %v3850, %v3852
        %3972 = vmax.xlane.f32.xlu0 %v3971
        %v3973 = vpop.xlane.xlu0 %3972
        %v3974 = vmax.f32 %v3856, %v3858
        %3975 = vmax.xlane.f32.xlu0 %v3974
        %v3976 = vpop.xlane.xlu0 %3975
        %v3977 = vmax.f32 %v3860, %v3862
        %3978 = vmax.xlane.f32.xlu0 %v3977
        %v3979 = vpop.xlane.xlu0 %3978
        %v3980 = vmax.f32 %v3866, %v3868
        %3981 = vmax.xlane.f32.xlu0 %v3980
        %v3982 = vpop.xlane.xlu0 %3981
        %v3983 = vmax.f32 %v3870, %v3872
        %3984 = vmax.xlane.f32.xlu0 %v3983
        %v3985 = vpop.xlane.xlu0 %3984
        %v3986 = vmax.f32 %v3876, %v3878
        %3987 = vmax.xlane.f32.xlu0 %v3986
        %v3988 = vpop.xlane.xlu0 %3987
        %v3989 = vmax.f32 %v3880, %v3882
        %3990 = vmax.xlane.f32.xlu0 %v3989
        %v3991 = vpop.xlane.xlu0 %3990
        %v3992 = vmax.f32 %v3886, %v3888
        %3993 = vmax.xlane.f32.xlu0 %v3992
        %v3994 = vpop.xlane.xlu0 %3993
        %v3995 = vmax.f32 %v3890, %v3892
        %3996 = vmax.xlane.f32.xlu0 %v3995
        %v3997 = vpop.xlane.xlu0 %3996
        %v3998 = vmax.f32 %v3896, %v3898
        %3999 = vmax.xlane.f32.xlu0 %v3998
        %v4000 = vpop.xlane.xlu0 %3999
        %v4001 = vmax.f32 %v3900, %v3902
        %4002 = vmax.xlane.f32.xlu0 %v4001
        %v4003 = vpop.xlane.xlu0 %4002
        %v4004 = vmax.f32 %v3906, %v3908
        %4005 = vmax.xlane.f32.xlu0 %v4004
        %v4006 = vpop.xlane.xlu0 %4005
        %v4007 = vmax.f32 %v3910, %v3912
        %4008 = vmax.xlane.f32.xlu0 %v4007
        %v4009 = vpop.xlane.xlu0 %4008
        %v4010 = vsub.f32 %v3756, %v3916
        %v4011 = vsub.f32 %v3758, %v3916
        %v4012 = vsub.f32 %v3760, %v3919
        %v4013 = vsub.f32 %v3762, %v3919
        %v4014 = vsub.f32 %v3766, %v3922
        %v4015 = vsub.f32 %v3768, %v3922
        %v4016 = vsub.f32 %v3770, %v3925
        %v4017 = vsub.f32 %v3772, %v3925
        %v4018 = vsub.f32 %v3776, %v3928
        %v4019 = vsub.f32 %v3778, %v3928
        %v4020 = vsub.f32 %v3780, %v3931
        %v4021 = vsub.f32 %v3782, %v3931
        %v4022 = vsub.f32 %v3786, %v3934
        %v4023 = vsub.f32 %v3788, %v3934
        %v4024 = vsub.f32 %v3790, %v3937
        %v4025 = vsub.f32 %v3792, %v3937
        %v4026 = vsub.f32 %v3796, %v3940
        %v4027 = vsub.f32 %v3798, %v3940
        %v4028 = vsub.f32 %v3800, %v3943
        %v4029 = vsub.f32 %v3802, %v3943
        %v4030 = vsub.f32 %v3806, %v3946
        %v4031 = vsub.f32 %v3808, %v3946
        %v4032 = vsub.f32 %v3810, %v3949
        %v4033 = vsub.f32 %v3812, %v3949
        %v4034 = vsub.f32 %v3816, %v3952
        %v4035 = vsub.f32 %v3818, %v3952
        %v4036 = vsub.f32 %v3820, %v3955
        %v4037 = vsub.f32 %v3822, %v3955
        %v4038 = vsub.f32 %v3826, %v3958
        %v4039 = vsub.f32 %v3828, %v3958
        %v4040 = vsub.f32 %v3830, %v3961
        %v4041 = vsub.f32 %v3832, %v3961
        %v4042 = vsub.f32 %v3836, %v3964
        %v4043 = vsub.f32 %v3838, %v3964
        %v4044 = vsub.f32 %v3840, %v3967
        %v4045 = vsub.f32 %v3842, %v3967
        %v4046 = vsub.f32 %v3846, %v3970
        %v4047 = vsub.f32 %v3848, %v3970
        %v4048 = vsub.f32 %v3850, %v3973
        %v4049 = vsub.f32 %v3852, %v3973
        %v4050 = vsub.f32 %v3856, %v3976
        %v4051 = vsub.f32 %v3858, %v3976
        %v4052 = vsub.f32 %v3860, %v3979
        %v4053 = vsub.f32 %v3862, %v3979
        %v4054 = vsub.f32 %v3866, %v3982
        %v4055 = vsub.f32 %v3868, %v3982
        %v4056 = vsub.f32 %v3870, %v3985
        %v4057 = vsub.f32 %v3872, %v3985
        %v4058 = vsub.f32 %v3876, %v3988
        %v4059 = vsub.f32 %v3878, %v3988
        %v4060 = vsub.f32 %v3880, %v3991
        %v4061 = vsub.f32 %v3882, %v3991
        %v4062 = vsub.f32 %v3886, %v3994
        %v4063 = vsub.f32 %v3888, %v3994
        %v4064 = vsub.f32 %v3890, %v3997
        %v4065 = vsub.f32 %v3892, %v3997
        %v4066 = vsub.f32 %v3896, %v4000
        %v4067 = vsub.f32 %v3898, %v4000
        %v4068 = vsub.f32 %v3900, %v4003
        %v4069 = vsub.f32 %v3902, %v4003
        %v4070 = vsub.f32 %v3906, %v4006
        %v4071 = vsub.f32 %v3908, %v4006
        %v4072 = vsub.f32 %v3910, %v4009
        %v4073 = vsub.f32 %v3912, %v4009
        %v4074 = vmul.f32 %v4010, 1.442695
        %v4075 = vpow.pop %v4074
        %v4076 = vmul.f32 %v4011, 1.442695
        %v4077 = vpow.pop %v4076
        %v4078 = vmul.f32 %v4012, 1.442695
        %v4079 = vpow.pop %v4078
        %v4080 = vmul.f32 %v4013, 1.442695
        %v4081 = vpow.pop %v4080
        %v4082 = vmul.f32 %v4014, 1.442695
        %v4083 = vpow.pop %v4082
        %v4084 = vmul.f32 %v4015, 1.442695
        %v4085 = vpow.pop %v4084
        %v4086 = vmul.f32 %v4016, 1.442695
        %v4087 = vpow.pop %v4086
        %v4088 = vmul.f32 %v4017, 1.442695
        %v4089 = vpow.pop %v4088
        %v4090 = vmul.f32 %v4018, 1.442695
        %v4091 = vpow.pop %v4090
        %v4092 = vmul.f32 %v4019, 1.442695
        %v4093 = vpow.pop %v4092
        %v4094 = vmul.f32 %v4020, 1.442695
        %v4095 = vpow.pop %v4094
        %v4096 = vmul.f32 %v4021, 1.442695
        %v4097 = vpow.pop %v4096
        %v4098 = vmul.f32 %v4022, 1.442695
        %v4099 = vpow.pop %v4098
        %v4100 = vmul.f32 %v4023, 1.442695
        %v4101 = vpow.pop %v4100
        %v4102 = vmul.f32 %v4024, 1.442695
        %v4103 = vpow.pop %v4102
        %v4104 = vmul.f32 %v4025, 1.442695
        %v4105 = vpow.pop %v4104
        %v4106 = vmul.f32 %v4026, 1.442695
        %v4107 = vpow.pop %v4106
        %v4108 = vmul.f32 %v4027, 1.442695
        %v4109 = vpow.pop %v4108
        %v4110 = vmul.f32 %v4028, 1.442695
        %v4111 = vpow.pop %v4110
        %v4112 = vmul.f32 %v4029, 1.442695
        %v4113 = vpow.pop %v4112
        %v4114 = vmul.f32 %v4030, 1.442695
        %v4115 = vpow.pop %v4114
        %v4116 = vmul.f32 %v4031, 1.442695
        %v4117 = vpow.pop %v4116
        %v4118 = vmul.f32 %v4032, 1.442695
        %v4119 = vpow.pop %v4118
        %v4120 = vmul.f32 %v4033, 1.442695
        %v4121 = vpow.pop %v4120
        %v4122 = vmul.f32 %v4034, 1.442695
        %v4123 = vpow.pop %v4122
        %v4124 = vmul.f32 %v4035, 1.442695
        %v4125 = vpow.pop %v4124
        %v4126 = vmul.f32 %v4036, 1.442695
        %v4127 = vpow.pop %v4126
        %v4128 = vmul.f32 %v4037, 1.442695
        %v4129 = vpow.pop %v4128
        %v4130 = vmul.f32 %v4038, 1.442695
        %v4131 = vpow.pop %v4130
        %v4132 = vmul.f32 %v4039, 1.442695
        %v4133 = vpow.pop %v4132
        %v4134 = vmul.f32 %v4040, 1.442695
        %v4135 = vpow.pop %v4134
        %v4136 = vmul.f32 %v4041, 1.442695
        %v4137 = vpow.pop %v4136
        %v4138 = vmul.f32 %v4042, 1.442695
        %v4139 = vpow.pop %v4138
        %v4140 = vmul.f32 %v4043, 1.442695
        %v4141 = vpow.pop %v4140
        %v4142 = vmul.f32 %v4044, 1.442695
        %v4143 = vpow.pop %v4142
        %v4144 = vmul.f32 %v4045, 1.442695
        %v4145 = vpow.pop %v4144
        %v4146 = vmul.f32 %v4046, 1.442695
        %v4147 = vpow.pop %v4146
        %v4148 = vmul.f32 %v4047, 1.442695
        %v4149 = vpow.pop %v4148
        %v4150 = vmul.f32 %v4048, 1.442695
        %v4151 = vpow.pop %v4150
        %v4152 = vmul.f32 %v4049, 1.442695
        %v4153 = vpow.pop %v4152
        %v4154 = vmul.f32 %v4050, 1.442695
        %v4155 = vpow.pop %v4154
        %v4156 = vmul.f32 %v4051, 1.442695
        %v4157 = vpow.pop %v4156
        %v4158 = vmul.f32 %v4052, 1.442695
        %v4159 = vpow.pop %v4158
        %v4160 = vmul.f32 %v4053, 1.442695
        %v4161 = vpow.pop %v4160
        %v4162 = vmul.f32 %v4054, 1.442695
        %v4163 = vpow.pop %v4162
        %v4164 = vmul.f32 %v4055, 1.442695
        %v4165 = vpow.pop %v4164
        %v4166 = vmul.f32 %v4056, 1.442695
        %v4167 = vpow.pop %v4166
        %v4168 = vmul.f32 %v4057, 1.442695
        %v4169 = vpow.pop %v4168
        %v4170 = vmul.f32 %v4058, 1.442695
        %v4171 = vpow.pop %v4170
        %v4172 = vmul.f32 %v4059, 1.442695
        %v4173 = vpow.pop %v4172
        %v4174 = vmul.f32 %v4060, 1.442695
        %v4175 = vpow.pop %v4174
        %v4176 = vmul.f32 %v4061, 1.442695
        %v4177 = vpow.pop %v4176
        %v4178 = vmul.f32 %v4062, 1.442695
        %v4179 = vpow.pop %v4178
        %v4180 = vmul.f32 %v4063, 1.442695
        %v4181 = vpow.pop %v4180
        %v4182 = vmul.f32 %v4064, 1.442695
        %v4183 = vpow.pop %v4182
        %v4184 = vmul.f32 %v4065, 1.442695
        %v4185 = vpow.pop %v4184
        %v4186 = vmul.f32 %v4066, 1.442695
        %v4187 = vpow.pop %v4186
        %v4188 = vmul.f32 %v4067, 1.442695
        %v4189 = vpow.pop %v4188
        %v4190 = vmul.f32 %v4068, 1.442695
        %v4191 = vpow.pop %v4190
        %v4192 = vmul.f32 %v4069, 1.442695
        %v4193 = vpow.pop %v4192
        %v4194 = vmul.f32 %v4070, 1.442695
        %v4195 = vpow.pop %v4194
        %v4196 = vmul.f32 %v4071, 1.442695
        %v4197 = vpow.pop %v4196
        %v4198 = vmul.f32 %v4072, 1.442695
        %v4199 = vpow.pop %v4198
        %v4200 = vmul.f32 %v4073, 1.442695
        %v4201 = vpow.pop %v4200
        %v4202 = vadd.f32 %v4075, %v4077
        %4203 = vadd.xlane.f32.xlu0 %v4202
        %v4204 = vpop.xlane.xlu0 %4203
        %v4205 = vadd.f32 %v4079, %v4081
        %4206 = vadd.xlane.f32.xlu0 %v4205
        %v4207 = vpop.xlane.xlu0 %4206
        %v4208 = vadd.f32 %v4083, %v4085
        %4209 = vadd.xlane.f32.xlu0 %v4208
        %v4210 = vpop.xlane.xlu0 %4209
        %v4211 = vadd.f32 %v4087, %v4089
        %4212 = vadd.xlane.f32.xlu0 %v4211
        %v4213 = vpop.xlane.xlu0 %4212
        %v4214 = vadd.f32 %v4091, %v4093
        %4215 = vadd.xlane.f32.xlu0 %v4214
        %v4216 = vpop.xlane.xlu0 %4215
        %v4217 = vadd.f32 %v4095, %v4097
        %4218 = vadd.xlane.f32.xlu0 %v4217
        %v4219 = vpop.xlane.xlu0 %4218
        %v4220 = vadd.f32 %v4099, %v4101
        %4221 = vadd.xlane.f32.xlu0 %v4220
        %v4222 = vpop.xlane.xlu0 %4221
        %v4223 = vadd.f32 %v4103, %v4105
        %4224 = vadd.xlane.f32.xlu0 %v4223
        %v4225 = vpop.xlane.xlu0 %4224
        %v4226 = vadd.f32 %v4107, %v4109
        %4227 = vadd.xlane.f32.xlu0 %v4226
        %v4228 = vpop.xlane.xlu0 %4227
        %v4229 = vadd.f32 %v4111, %v4113
        %4230 = vadd.xlane.f32.xlu0 %v4229
        %v4231 = vpop.xlane.xlu0 %4230
        %v4232 = vadd.f32 %v4115, %v4117
        %4233 = vadd.xlane.f32.xlu0 %v4232
        %v4234 = vpop.xlane.xlu0 %4233
        %v4235 = vadd.f32 %v4119, %v4121
        %4236 = vadd.xlane.f32.xlu0 %v4235
        %v4237 = vpop.xlane.xlu0 %4236
        %v4238 = vadd.f32 %v4123, %v4125
        %4239 = vadd.xlane.f32.xlu0 %v4238
        %v4240 = vpop.xlane.xlu0 %4239
        %v4241 = vadd.f32 %v4127, %v4129
        %4242 = vadd.xlane.f32.xlu0 %v4241
        %v4243 = vpop.xlane.xlu0 %4242
        %v4244 = vadd.f32 %v4131, %v4133
        %4245 = vadd.xlane.f32.xlu0 %v4244
        %v4246 = vpop.xlane.xlu0 %4245
        %v4247 = vadd.f32 %v4135, %v4137
        %4248 = vadd.xlane.f32.xlu0 %v4247
        %v4249 = vpop.xlane.xlu0 %4248
        %v4250 = vadd.f32 %v4139, %v4141
        %4251 = vadd.xlane.f32.xlu0 %v4250
        %v4252 = vpop.xlane.xlu0 %4251
        %v4253 = vadd.f32 %v4143, %v4145
        %4254 = vadd.xlane.f32.xlu0 %v4253
        %v4255 = vpop.xlane.xlu0 %4254
        %v4256 = vadd.f32 %v4147, %v4149
        %4257 = vadd.xlane.f32.xlu0 %v4256
        %v4258 = vpop.xlane.xlu0 %4257
        %v4259 = vadd.f32 %v4151, %v4153
        %4260 = vadd.xlane.f32.xlu0 %v4259
        %v4261 = vpop.xlane.xlu0 %4260
        %v4262 = vadd.f32 %v4155, %v4157
        %4263 = vadd.xlane.f32.xlu0 %v4262
        %v4264 = vpop.xlane.xlu0 %4263
        %v4265 = vadd.f32 %v4159, %v4161
        %4266 = vadd.xlane.f32.xlu0 %v4265
        %v4267 = vpop.xlane.xlu0 %4266
        %v4268 = vadd.f32 %v4163, %v4165
        %4269 = vadd.xlane.f32.xlu0 %v4268
        %v4270 = vpop.xlane.xlu0 %4269
        %v4271 = vadd.f32 %v4167, %v4169
        %4272 = vadd.xlane.f32.xlu0 %v4271
        %v4273 = vpop.xlane.xlu0 %4272
        %v4274 = vadd.f32 %v4171, %v4173
        %4275 = vadd.xlane.f32.xlu0 %v4274
        %v4276 = vpop.xlane.xlu0 %4275
        %v4277 = vadd.f32 %v4175, %v4177
        %4278 = vadd.xlane.f32.xlu0 %v4277
        %v4279 = vpop.xlane.xlu0 %4278
        %v4280 = vadd.f32 %v4179, %v4181
        %4281 = vadd.xlane.f32.xlu0 %v4280
        %v4282 = vpop.xlane.xlu0 %4281
        %v4283 = vadd.f32 %v4183, %v4185
        %4284 = vadd.xlane.f32.xlu0 %v4283
        %v4285 = vpop.xlane.xlu0 %4284
        %v4286 = vadd.f32 %v4187, %v4189
        %4287 = vadd.xlane.f32.xlu0 %v4286
        %v4288 = vpop.xlane.xlu0 %4287
        %v4289 = vadd.f32 %v4191, %v4193
        %4290 = vadd.xlane.f32.xlu0 %v4289
        %v4291 = vpop.xlane.xlu0 %4290
        %v4292 = vadd.f32 %v4195, %v4197
        %4293 = vadd.xlane.f32.xlu0 %v4292
        %v4294 = vpop.xlane.xlu0 %4293
        %v4295 = vadd.f32 %v4199, %v4201
        %4296 = vadd.xlane.f32.xlu0 %v4295
        %v4297 = vpop.xlane.xlu0 %4296
        %v4298 = vrcp.pop %v4204
        %v4299 = vrcp.pop %v4207
        %v4300 = vrcp.pop %v4210
        %v4301 = vrcp.pop %v4213
        %v4302 = vrcp.pop %v4216
        %v4303 = vrcp.pop %v4219
        %v4304 = vrcp.pop %v4222
        %v4305 = vrcp.pop %v4225
        %v4306 = vrcp.pop %v4228
        %v4307 = vrcp.pop %v4231
        %v4308 = vrcp.pop %v4234
        %v4309 = vrcp.pop %v4237
        %v4310 = vrcp.pop %v4240
        %v4311 = vrcp.pop %v4243
        %v4312 = vrcp.pop %v4246
        %v4313 = vrcp.pop %v4249
        %v4314 = vrcp.pop %v4252
        %v4315 = vrcp.pop %v4255
        %v4316 = vrcp.pop %v4258
        %v4317 = vrcp.pop %v4261
        %v4318 = vrcp.pop %v4264
        %v4319 = vrcp.pop %v4267
        %v4320 = vrcp.pop %v4270
        %v4321 = vrcp.pop %v4273
        %v4322 = vrcp.pop %v4276
        %v4323 = vrcp.pop %v4279
        %v4324 = vrcp.pop %v4282
        %v4325 = vrcp.pop %v4285
        %v4326 = vrcp.pop %v4288
        %v4327 = vrcp.pop %v4291
        %v4328 = vrcp.pop %v4294
        %v4329 = vrcp.pop %v4297
        %v4330 = vmul.f32 %v4075, %v4298
        %v4331 = vmul.f32 %v4077, %v4298
        %v4332 = vmul.f32 %v4079, %v4299
        %v4333 = vmul.f32 %v4081, %v4299
        %v4334 = vmul.f32 %v4083, %v4300
        %v4335 = vmul.f32 %v4085, %v4300
        %v4336 = vmul.f32 %v4087, %v4301
        %v4337 = vmul.f32 %v4089, %v4301
        %v4338 = vmul.f32 %v4091, %v4302
        %v4339 = vmul.f32 %v4093, %v4302
        %v4340 = vmul.f32 %v4095, %v4303
        %v4341 = vmul.f32 %v4097, %v4303
        %v4342 = vmul.f32 %v4099, %v4304
        %v4343 = vmul.f32 %v4101, %v4304
        %v4344 = vmul.f32 %v4103, %v4305
        %v4345 = vmul.f32 %v4105, %v4305
        %v4346 = vmul.f32 %v4107, %v4306
        %v4347 = vmul.f32 %v4109, %v4306
        %v4348 = vmul.f32 %v4111, %v4307
        %v4349 = vmul.f32 %v4113, %v4307
        %v4350 = vmul.f32 %v4115, %v4308
        %v4351 = vmul.f32 %v4117, %v4308
        %v4352 = vmul.f32 %v4119, %v4309
        %v4353 = vmul.f32 %v4121, %v4309
        %v4354 = vmul.f32 %v4123, %v4310
        %v4355 = vmul.f32 %v4125, %v4310
        %v4356 = vmul.f32 %v4127, %v4311
        %v4357 = vmul.f32 %v4129, %v4311
        %v4358 = vmul.f32 %v4131, %v4312
        %v4359 = vmul.f32 %v4133, %v4312
        %v4360 = vmul.f32 %v4135, %v4313
        %v4361 = vmul.f32 %v4137, %v4313
        %v4362 = vmul.f32 %v4139, %v4314
        %v4363 = vmul.f32 %v4141, %v4314
        %v4364 = vmul.f32 %v4143, %v4315
        %v4365 = vmul.f32 %v4145, %v4315
        %v4366 = vmul.f32 %v4147, %v4316
        %v4367 = vmul.f32 %v4149, %v4316
        %v4368 = vmul.f32 %v4151, %v4317
        %v4369 = vmul.f32 %v4153, %v4317
        %v4370 = vmul.f32 %v4155, %v4318
        %v4371 = vmul.f32 %v4157, %v4318
        %v4372 = vmul.f32 %v4159, %v4319
        %v4373 = vmul.f32 %v4161, %v4319
        %v4374 = vmul.f32 %v4163, %v4320
        %v4375 = vmul.f32 %v4165, %v4320
        %v4376 = vmul.f32 %v4167, %v4321
        %v4377 = vmul.f32 %v4169, %v4321
        %v4378 = vmul.f32 %v4171, %v4322
        %v4379 = vmul.f32 %v4173, %v4322
        %v4380 = vmul.f32 %v4175, %v4323
        %v4381 = vmul.f32 %v4177, %v4323
        %v4382 = vmul.f32 %v4179, %v4324
        %v4383 = vmul.f32 %v4181, %v4324
        %v4384 = vmul.f32 %v4183, %v4325
        %v4385 = vmul.f32 %v4185, %v4325
        %v4386 = vmul.f32 %v4187, %v4326
        %v4387 = vmul.f32 %v4189, %v4326
        %v4388 = vmul.f32 %v4191, %v4327
        %v4389 = vmul.f32 %v4193, %v4327
        %v4390 = vmul.f32 %v4195, %v4328
        %v4391 = vmul.f32 %v4197, %v4328
        %v4392 = vmul.f32 %v4199, %v4329
        %v4393 = vmul.f32 %v4201, %v4329
        %v4394 = vpack.c.bf16 %v4332, %v4330
        %v4395 = vpack.c.bf16 %v4333, %v4331
        %v4396 = vpack.c.bf16 %v4336, %v4334
        %v4397 = vpack.c.bf16 %v4337, %v4335
        %v4398 = vpack.c.bf16 %v4340, %v4338
        %v4399 = vpack.c.bf16 %v4341, %v4339
        %v4400 = vpack.c.bf16 %v4344, %v4342
        %v4401 = vpack.c.bf16 %v4345, %v4343
        %v4402 = vpack.c.bf16 %v4348, %v4346
        %v4403 = vpack.c.bf16 %v4349, %v4347
        %v4404 = vpack.c.bf16 %v4352, %v4350
        %v4405 = vpack.c.bf16 %v4353, %v4351
        %v4406 = vpack.c.bf16 %v4356, %v4354
        %v4407 = vpack.c.bf16 %v4357, %v4355
        %v4408 = vpack.c.bf16 %v4360, %v4358
        %v4409 = vpack.c.bf16 %v4361, %v4359
        %v4410 = vpack.c.bf16 %v4364, %v4362
        %v4411 = vpack.c.bf16 %v4365, %v4363
        %v4412 = vpack.c.bf16 %v4368, %v4366
        %v4413 = vpack.c.bf16 %v4369, %v4367
        %v4414 = vpack.c.bf16 %v4372, %v4370
        %v4415 = vpack.c.bf16 %v4373, %v4371
        %v4416 = vpack.c.bf16 %v4376, %v4374
        %v4417 = vpack.c.bf16 %v4377, %v4375
        %v4418 = vpack.c.bf16 %v4380, %v4378
        %v4419 = vpack.c.bf16 %v4381, %v4379
        %v4420 = vpack.c.bf16 %v4384, %v4382
        %v4421 = vpack.c.bf16 %v4385, %v4383
        %v4422 = vpack.c.bf16 %v4388, %v4386
        %v4423 = vpack.c.bf16 %v4389, %v4387
        %v4424 = vpack.c.bf16 %v4392, %v4390
        %v4425 = vpack.c.bf16 %v4393, %v4391
        %v4426 = vpack.c.bf16 %v3566, %v3563
        %v4427 = vpack.c.bf16 %v3574, %v3571
        %v4428 = vpack.c.bf16 %v3582, %v3579
        %v4429 = vpack.c.bf16 %v3590, %v3587
        %v4430 = vpack.c.bf16 %v3598, %v3595
        %v4431 = vpack.c.bf16 %v3606, %v3603
        %v4432 = vpack.c.bf16 %v3614, %v3611
        %v4433 = vpack.c.bf16 %v3622, %v3619
        %v4434 = vpack.c.bf16 %v3630, %v3627
        %v4435 = vpack.c.bf16 %v3638, %v3635
        %v4436 = vpack.c.bf16 %v3646, %v3643
        %v4437 = vpack.c.bf16 %v3654, %v3651
        %v4438 = vpack.c.bf16 %v3662, %v3659
        %v4439 = vpack.c.bf16 %v3670, %v3667
        %v4440 = vpack.c.bf16 %v3678, %v3675
        %v4441 = vpack.c.bf16 %v3686, %v3683
        %4442 = vmatprep.subr.bf16.mxu0 0
        %4443 = vmatpush1.bf16.msra.mxu0 %v4426
        %4444 = vmatprep.subr.bf16.mxu0 0
        %4445 = vmatpush1.bf16.msra.mxu0 %v4427
        %4446 = vmatprep.subr.bf16.mxu0 0
        %4447 = vmatpush1.bf16.msra.mxu0 %v4428
        %4448 = vmatprep.subr.bf16.mxu0 0
        %4449 = vmatpush1.bf16.msra.mxu0 %v4429
        %4450 = vmatprep.subr.bf16.mxu0 0
        %4451 = vmatpush1.bf16.msra.mxu0 %v4430
        %4452 = vmatprep.subr.bf16.mxu0 0
        %4453 = vmatpush1.bf16.msra.mxu0 %v4431
        %4454 = vmatprep.subr.bf16.mxu0 0
        %4455 = vmatpush1.bf16.msra.mxu0 %v4432
        %4456 = vmatprep.subr.bf16.mxu0 0
        %4457 = vmatpush1.bf16.msra.mxu0 %v4433
        %4458 = vmatprep.subr.bf16.mxu0 0
        %4459 = vmatpush1.bf16.msra.mxu0 %v4434
        %4460 = vmatprep.subr.bf16.mxu0 0
        %4461 = vmatpush1.bf16.msra.mxu0 %v4435
        %4462 = vmatprep.subr.bf16.mxu0 0
        %4463 = vmatpush1.bf16.msra.mxu0 %v4436
        %4464 = vmatprep.subr.bf16.mxu0 0
        %4465 = vmatpush1.bf16.msra.mxu0 %v4437
        %4466 = vmatprep.subr.bf16.mxu0 0
        %4467 = vmatpush1.bf16.msra.mxu0 %v4438
        %4468 = vmatprep.subr.bf16.mxu0 0
        %4469 = vmatpush1.bf16.msra.mxu0 %v4439
        %4470 = vmatprep.subr.bf16.mxu0 0
        %4471 = vmatpush1.bf16.msra.mxu0 %v4440
        %4472 = vmatprep.subr.bf16.mxu0 0
        %4473 = vmatpush1.bf16.msra.mxu0 %v4441
        %4474 = vmatprep.mubr.bf16.mxu0 %v4395
        %4475 = vmatmul.mubr.bf16.gmra.mrb[0].mxu0 %v4394
        %v4476 = vpop.f32.mrb[0].mxu0
        %v4477 = vadd.f32 0.0, %v4476
        %v4478 = vpop.f32.mrb[0].mxu0
        %v4479 = vpop.f32.mrb[0].mxu0
        %v4480 = vadd.f32 0.0, %v4479
        %v4481 = vpop.f32.mrb[0].mxu0
        %4482 = vmatprep.mubr.bf16.mxu0 %v4397
        %4483 = vmatmul.mubr.bf16.gmra.mrb[0].mxu0 %v4396
        %v4484 = vpop.f32.mrb[0].mxu0
        %v4485 = vadd.f32 0.0, %v4484
        %v4486 = vpop.f32.mrb[0].mxu0
        %v4487 = vpop.f32.mrb[0].mxu0
        %v4488 = vadd.f32 0.0, %v4487
        %v4489 = vpop.f32.mrb[0].mxu0
        %4490 = vmatprep.mubr.bf16.mxu0 %v4399
        %4491 = vmatmul.mubr.bf16.gmra.mrb[0].mxu0 %v4398
        %v4492 = vpop.f32.mrb[0].mxu0
        %v4493 = vadd.f32 0.0, %v4492
        %v4494 = vpop.f32.mrb[0].mxu0
        %v4495 = vpop.f32.mrb[0].mxu0
        %v4496 = vadd.f32 0.0, %v4495
        %v4497 = vpop.f32.mrb[0].mxu0
        %4498 = vmatprep.mubr.bf16.mxu0 %v4401
        %4499 = vmatmul.mubr.bf16.gmra.mrb[0].mxu0 %v4400
        %v4500 = vpop.f32.mrb[0].mxu0
        %v4501 = vadd.f32 0.0, %v4500
        %v4502 = vpop.f32.mrb[0].mxu0
        %v4503 = vpop.f32.mrb[0].mxu0
        %v4504 = vadd.f32 0.0, %v4503
        %v4505 = vpop.f32.mrb[0].mxu0
        %4506 = vmatprep.mubr.bf16.mxu0 %v4403
        %4507 = vmatmul.mubr.bf16.gmra.mrb[0].mxu0 %v4402
        %v4508 = vpop.f32.mrb[0].mxu0
        %v4509 = vadd.f32 0.0, %v4508
        %v4510 = vpop.f32.mrb[0].mxu0
        %v4511 = vpop.f32.mrb[0].mxu0
        %v4512 = vadd.f32 0.0, %v4511
        %v4513 = vpop.f32.mrb[0].mxu0
        %4514 = vmatprep.mubr.bf16.mxu0 %v4405
        %4515 = vmatmul.mubr.bf16.gmra.mrb[0].mxu0 %v4404
        %v4516 = vpop.f32.mrb[0].mxu0
        %v4517 = vadd.f32 0.0, %v4516
        %v4518 = vpop.f32.mrb[0].mxu0
        %v4519 = vpop.f32.mrb[0].mxu0
        %v4520 = vadd.f32 0.0, %v4519
        %v4521 = vpop.f32.mrb[0].mxu0
        %4522 = vmatprep.mubr.bf16.mxu0 %v4407
        %4523 = vmatmul.mubr.bf16.gmra.mrb[0].mxu0 %v4406
        %v4524 = vpop.f32.mrb[0].mxu0
        %v4525 = vadd.f32 0.0, %v4524
        %v4526 = vpop.f32.mrb[0].mxu0
        %v4527 = vpop.f32.mrb[0].mxu0
        %v4528 = vadd.f32 0.0, %v4527
        %v4529 = vpop.f32.mrb[0].mxu0
        %4530 = vmatprep.mubr.bf16.mxu0 %v4409
        %4531 = vmatmul.mubr.bf16.gmra.mrb[0].mxu0 %v4408
        %v4532 = vpop.f32.mrb[0].mxu0
        %v4533 = vadd.f32 0.0, %v4532
        %v4534 = vpop.f32.mrb[0].mxu0
        %v4535 = vpop.f32.mrb[0].mxu0
        %v4536 = vadd.f32 0.0, %v4535
        %v4537 = vpop.f32.mrb[0].mxu0
        %4538 = vmatprep.mubr.bf16.mxu0 %v4411
        %4539 = vmatmul.mubr.bf16.gmra.mrb[0].mxu0 %v4410
        %v4540 = vpop.f32.mrb[0].mxu0
        %v4541 = vadd.f32 0.0, %v4540
        %v4542 = vpop.f32.mrb[0].mxu0
        %v4543 = vpop.f32.mrb[0].mxu0
        %v4544 = vadd.f32 0.0, %v4543
        %v4545 = vpop.f32.mrb[0].mxu0
        %4546 = vmatprep.mubr.bf16.mxu0 %v4413
        %4547 = vmatmul.mubr.bf16.gmra.mrb[0].mxu0 %v4412
        %v4548 = vpop.f32.mrb[0].mxu0
        %v4549 = vadd.f32 0.0, %v4548
        %v4550 = vpop.f32.mrb[0].mxu0
        %v4551 = vpop.f32.mrb[0].mxu0
        %v4552 = vadd.f32 0.0, %v4551
        %v4553 = vpop.f32.mrb[0].mxu0
        %4554 = vmatprep.mubr.bf16.mxu0 %v4415
        %4555 = vmatmul.mubr.bf16.gmra.mrb[0].mxu0 %v4414
        %v4556 = vpop.f32.mrb[0].mxu0
        %v4557 = vadd.f32 0.0, %v4556
        %v4558 = vpop.f32.mrb[0].mxu0
        %v4559 = vpop.f32.mrb[0].mxu0
        %v4560 = vadd.f32 0.0, %v4559
        %v4561 = vpop.f32.mrb[0].mxu0
        %4562 = vmatprep.mubr.bf16.mxu0 %v4417
        %4563 = vmatmul.mubr.bf16.gmra.mrb[0].mxu0 %v4416
        %v4564 = vpop.f32.mrb[0].mxu0
        %v4565 = vadd.f32 0.0, %v4564
        %v4566 = vpop.f32.mrb[0].mxu0
        %v4567 = vpop.f32.mrb[0].mxu0
        %v4568 = vadd.f32 0.0, %v4567
        %v4569 = vpop.f32.mrb[0].mxu0
        %4570 = vmatprep.mubr.bf16.mxu0 %v4419
        %4571 = vmatmul.mubr.bf16.gmra.mrb[0].mxu0 %v4418
        %v4572 = vpop.f32.mrb[0].mxu0
        %v4573 = vadd.f32 0.0, %v4572
        %v4574 = vpop.f32.mrb[0].mxu0
        %v4575 = vpop.f32.mrb[0].mxu0
        %v4576 = vadd.f32 0.0, %v4575
        %v4577 = vpop.f32.mrb[0].mxu0
        %4578 = vmatprep.mubr.bf16.mxu0 %v4421
        %4579 = vmatmul.mubr.bf16.gmra.mrb[0].mxu0 %v4420
        %v4580 = vpop.f32.mrb[0].mxu0
        %v4581 = vadd.f32 0.0, %v4580
        %v4582 = vpop.f32.mrb[0].mxu0
        %v4583 = vpop.f32.mrb[0].mxu0
        %v4584 = vadd.f32 0.0, %v4583
        %v4585 = vpop.f32.mrb[0].mxu0
        %4586 = vmatprep.mubr.bf16.mxu0 %v4423
        %4587 = vmatmul.mubr.bf16.gmra.mrb[0].mxu0 %v4422
        %v4588 = vpop.f32.mrb[0].mxu0
        %v4589 = vadd.f32 0.0, %v4588
        %v4590 = vpop.f32.mrb[0].mxu0
        %v4591 = vpop.f32.mrb[0].mxu0
        %v4592 = vadd.f32 0.0, %v4591
        %v4593 = vpop.f32.mrb[0].mxu0
        %4594 = vmatprep.mubr.bf16.mxu0 %v4425
        %4595 = vmatmul.mubr.bf16.gmra.mrb[0].mxu0 %v4424
        %v4596 = vpop.f32.mrb[0].mxu0
        %v4597 = vadd.f32 0.0, %v4596
        %v4598 = vpop.f32.mrb[0].mxu0
        %v4599 = vpop.f32.mrb[0].mxu0
        %v4600 = vadd.f32 0.0, %v4599
        %v4601 = vpop.f32.mrb[0].mxu0
        %4602 = vdwg.mxu0
        %v4603 = vstv %s3141
        %v4604 = vmul.f32 %v4603, %v4477
        %v4605 = vmul.f32 %v4603, %v4480
        %v4606 = vmul.f32 %v4603, %v4485
        %v4607 = vmul.f32 %v4603, %v4488
        %v4608 = vmul.f32 %v4603, %v4493
        %v4609 = vmul.f32 %v4603, %v4496
        %v4610 = vmul.f32 %v4603, %v4501
        %v4611 = vmul.f32 %v4603, %v4504
        %v4612 = vmul.f32 %v4603, %v4509
        %v4613 = vmul.f32 %v4603, %v4512
        %v4614 = vmul.f32 %v4603, %v4517
        %v4615 = vmul.f32 %v4603, %v4520
        %v4616 = vmul.f32 %v4603, %v4525
        %v4617 = vmul.f32 %v4603, %v4528
        %v4618 = vmul.f32 %v4603, %v4533
        %v4619 = vmul.f32 %v4603, %v4536
        %v4620 = vmul.f32 %v4603, %v4541
        %v4621 = vmul.f32 %v4603, %v4544
        %v4622 = vmul.f32 %v4603, %v4549
        %v4623 = vmul.f32 %v4603, %v4552
        %v4624 = vmul.f32 %v4603, %v4557
        %v4625 = vmul.f32 %v4603, %v4560
        %v4626 = vmul.f32 %v4603, %v4565
        %v4627 = vmul.f32 %v4603, %v4568
        %v4628 = vmul.f32 %v4603, %v4573
        %v4629 = vmul.f32 %v4603, %v4576
        %v4630 = vmul.f32 %v4603, %v4581
        %v4631 = vmul.f32 %v4603, %v4584
        %v4632 = vmul.f32 %v4603, %v4589
        %v4633 = vmul.f32 %v4603, %v4592
        %v4634 = vmul.f32 %v4603, %v4597
        %v4635 = vmul.f32 %v4603, %v4600
        %v4636 = vadd.f32 %v4604, %v3109
        %v4637 = vadd.f32 %v4605, %v3110
        %v4638 = vadd.f32 %v4606, %v3111
        %v4639 = vadd.f32 %v4607, %v3112
        %v4640 = vadd.f32 %v4608, %v3113
        %v4641 = vadd.f32 %v4609, %v3114
        %v4642 = vadd.f32 %v4610, %v3115
        %v4643 = vadd.f32 %v4611, %v3116
        %v4644 = vadd.f32 %v4612, %v3117
        %v4645 = vadd.f32 %v4613, %v3118
        %v4646 = vadd.f32 %v4614, %v3119
        %v4647 = vadd.f32 %v4615, %v3120
        %v4648 = vadd.f32 %v4616, %v3121
        %v4649 = vadd.f32 %v4617, %v3122
        %v4650 = vadd.f32 %v4618, %v3123
        %v4651 = vadd.f32 %v4619, %v3124
        %v4652 = vadd.f32 %v4620, %v3125
        %v4653 = vadd.f32 %v4621, %v3126
        %v4654 = vadd.f32 %v4622, %v3127
        %v4655 = vadd.f32 %v4623, %v3128
        %v4656 = vadd.f32 %v4624, %v3129
        %v4657 = vadd.f32 %v4625, %v3130
        %v4658 = vadd.f32 %v4626, %v3131
        %v4659 = vadd.f32 %v4627, %v3132
        %v4660 = vadd.f32 %v4628, %v3133
        %v4661 = vadd.f32 %v4629, %v3134
        %v4662 = vadd.f32 %v4630, %v3135
        %v4663 = vadd.f32 %v4631, %v3136
        %v4664 = vadd.f32 %v4632, %v3137
        %v4665 = vadd.f32 %v4633, %v3138
        %v4666 = vadd.f32 %v4634, %v3139
        %v4667 = vadd.f32 %v4635, %v3140
        %v4668 = vpack.c.bf16 %v4637, %v4636
        %v4669 = vpack.c.bf16 %v4639, %v4638
        %v4670 = vpack.c.bf16 %v4641, %v4640
        %v4671 = vpack.c.bf16 %v4643, %v4642
        %v4672 = vpack.c.bf16 %v4645, %v4644
        %v4673 = vpack.c.bf16 %v4647, %v4646
        %v4674 = vpack.c.bf16 %v4649, %v4648
        %v4675 = vpack.c.bf16 %v4651, %v4650
        %v4676 = vpack.c.bf16 %v4653, %v4652
        %v4677 = vpack.c.bf16 %v4655, %v4654
        %v4678 = vpack.c.bf16 %v4657, %v4656
        %v4679 = vpack.c.bf16 %v4659, %v4658
        %v4680 = vpack.c.bf16 %v4661, %v4660
        %v4681 = vpack.c.bf16 %v4663, %v4662
        %v4682 = vpack.c.bf16 %v4665, %v4664
        %v4683 = vpack.c.bf16 %v4667, %v4666
        %v4684 = vld [vmem:[#allocation19] sm:$0xf]
        %v4685 = vld [vmem:[#allocation19 + $0x4] sm:$0xf]
        %v4686 = vld [vmem:[#allocation19 + $0x8] sm:$0xf]
        %v4687 = vld [vmem:[#allocation19 + $0xc] sm:$0xf]
        %v4688 = vld [vmem:[#allocation19 + $0x10] sm:$0xf]
        %v4689 = vld [vmem:[#allocation19 + $0x14] sm:$0xf]
        %v4690 = vld [vmem:[#allocation19 + $0x18] sm:$0xf]
        %v4691 = vld [vmem:[#allocation19 + $0x1c] sm:$0xf]
        %v4692 = vld [vmem:[#allocation19 + $0x20] sm:$0xf]
        %v4693 = vld [vmem:[#allocation19 + $0x24] sm:$0xf]
        %v4694 = vld [vmem:[#allocation19 + $0x28] sm:$0xf]
        %v4695 = vld [vmem:[#allocation19 + $0x2c] sm:$0xf]
        %v4696 = vld [vmem:[#allocation19 + $0x30] sm:$0xf]
        %v4697 = vld [vmem:[#allocation19 + $0x34] sm:$0xf]
        %v4698 = vld [vmem:[#allocation19 + $0x38] sm:$0xf]
        %v4699 = vld [vmem:[#allocation19 + $0x3c] sm:$0xf]
        %v4716 = vunpack.c.l.b16 %v4684
        %v4717 = vunpack.c.l.b16 %v4685
        %v4718 = vunpack.c.l.b16 %v4686
        %v4719 = vunpack.c.l.b16 %v4687
        %v4720 = vunpack.c.l.b16 %v4688
        %v4721 = vunpack.c.l.b16 %v4689
        %v4722 = vunpack.c.l.b16 %v4690
        %v4723 = vunpack.c.l.b16 %v4691
        %v4724 = vunpack.c.l.b16 %v4692
        %v4725 = vunpack.c.l.b16 %v4693
        %v4726 = vunpack.c.l.b16 %v4694
        %v4727 = vunpack.c.l.b16 %v4695
        %v4728 = vunpack.c.l.b16 %v4696
        %v4729 = vunpack.c.l.b16 %v4697
        %v4730 = vunpack.c.l.b16 %v4698
        %v4731 = vunpack.c.l.b16 %v4699
        %v4732 = vpack.c.b16 %v4717, %v4716
        %v4733 = vpack.c.b16 %v4719, %v4718
        %v4734 = vpack.c.b16 %v4721, %v4720
        %v4735 = vpack.c.b16 %v4723, %v4722
        %v4736 = vpack.c.b16 %v4725, %v4724
        %v4737 = vpack.c.b16 %v4727, %v4726
        %v4738 = vpack.c.b16 %v4729, %v4728
        %v4739 = vpack.c.b16 %v4731, %v4730
        %4748 = vmatprep.subr.bf16.mxu0 0
        %4749 = vmatpush1.bf16.msra.mxu0 %v4732
        %4750 = vmatprep.subr.bf16.mxu0 0
        %4751 = vmatpush1.bf16.msra.mxu0 %v4733
        %4752 = vmatprep.subr.bf16.mxu0 0
        %4753 = vmatpush1.bf16.msra.mxu0 %v4734
        %4754 = vmatprep.subr.bf16.mxu0 0
        %4755 = vmatpush1.bf16.msra.mxu0 %v4735
        %4756 = vmatprep.subr.bf16.mxu0 0
        %4757 = vmatpush1.bf16.msra.mxu0 %v4736
        %4758 = vmatprep.subr.bf16.mxu0 0
        %4759 = vmatpush1.bf16.msra.mxu0 %v4737
        %4760 = vmatprep.subr.bf16.mxu0 0
        %4761 = vmatpush1.bf16.msra.mxu0 %v4738
        %4762 = vmatprep.subr.bf16.mxu0 0
        %4763 = vmatpush1.bf16.msra.mxu0 %v4739
        %4764 = vmatprep.subr.bf16.mxu0 0
        %4765 = vmatpush1.bf16.msra.mxu0 0
        %4766 = vmatprep.subr.bf16.mxu0 0
        %4767 = vmatpush1.bf16.msra.mxu0 0
        %4768 = vmatprep.subr.bf16.mxu0 0
        %4769 = vmatpush1.bf16.msra.mxu0 0
        %4770 = vmatprep.subr.bf16.mxu0 0
        %4771 = vmatpush1.bf16.msra.mxu0 0
        %4772 = vmatprep.subr.bf16.mxu0 0
        %4773 = vmatpush1.bf16.msra.mxu0 0
        %4774 = vmatprep.subr.bf16.mxu0 0
        %4775 = vmatpush1.bf16.msra.mxu0 0
        %4776 = vmatprep.subr.bf16.mxu0 0
        %4777 = vmatpush1.bf16.msra.mxu0 0
        %4778 = vmatprep.subr.bf16.mxu0 0
        %4779 = vmatpush1.bf16.msra.mxu0 0
        %4780 = vmatprep.mubr.bf16.mxu0 0
        %4781 = vmatmul.mubr.bf16.gmra.mrb[0].mxu0 %v4668
        %v4782 = vpop.f32.mrb[0].mxu0
        %v4783 = vadd.f32 0.0, %v4782
        %v4784 = vpop.f32.mrb[0].mxu0
        %v4785 = vpop.f32.mrb[0].mxu0
        %v4786 = vadd.f32 0.0, %v4785
        %v4787 = vpop.f32.mrb[0].mxu0
        %4788 = vmatprep.mubr.bf16.mxu0 0
        %4789 = vmatmul.mubr.bf16.gmra.mrb[0].mxu0 %v4669
        %v4790 = vpop.f32.mrb[0].mxu0
        %v4791 = vadd.f32 0.0, %v4790
        %v4792 = vpop.f32.mrb[0].mxu0
        %v4793 = vpop.f32.mrb[0].mxu0
        %v4794 = vadd.f32 0.0, %v4793
        %v4795 = vpop.f32.mrb[0].mxu0
        %4796 = vmatprep.mubr.bf16.mxu0 0
        %4797 = vmatmul.mubr.bf16.gmra.mrb[0].mxu0 %v4670
        %v4798 = vpop.f32.mrb[0].mxu0
        %v4799 = vadd.f32 0.0, %v4798
        %v4800 = vpop.f32.mrb[0].mxu0
        %v4801 = vpop.f32.mrb[0].mxu0
        %v4802 = vadd.f32 0.0, %v4801
        %v4803 = vpop.f32.mrb[0].mxu0
        %4804 = vmatprep.mubr.bf16.mxu0 0
        %4805 = vmatmul.mubr.bf16.gmra.mrb[0].mxu0 %v4671
        %v4806 = vpop.f32.mrb[0].mxu0
        %v4807 = vadd.f32 0.0, %v4806
        %v4808 = vpop.f32.mrb[0].mxu0
        %v4809 = vpop.f32.mrb[0].mxu0
        %v4810 = vadd.f32 0.0, %v4809
        %v4811 = vpop.f32.mrb[0].mxu0
        %4812 = vmatprep.mubr.bf16.mxu0 0
        %4813 = vmatmul.mubr.bf16.gmra.mrb[0].mxu0 %v4672
        %v4814 = vpop.f32.mrb[0].mxu0
        %v4815 = vadd.f32 0.0, %v4814
        %v4816 = vpop.f32.mrb[0].mxu0
        %v4817 = vpop.f32.mrb[0].mxu0
        %v4818 = vadd.f32 0.0, %v4817
        %v4819 = vpop.f32.mrb[0].mxu0
        %4820 = vmatprep.mubr.bf16.mxu0 0
        %4821 = vmatmul.mubr.bf16.gmra.mrb[0].mxu0 %v4673
        %v4822 = vpop.f32.mrb[0].mxu0
        %v4823 = vadd.f32 0.0, %v4822
        %v4824 = vpop.f32.mrb[0].mxu0
        %v4825 = vpop.f32.mrb[0].mxu0
        %v4826 = vadd.f32 0.0, %v4825
        %v4827 = vpop.f32.mrb[0].mxu0
        %4828 = vmatprep.mubr.bf16.mxu0 0
        %4829 = vmatmul.mubr.bf16.gmra.mrb[0].mxu0 %v4674
        %v4830 = vpop.f32.mrb[0].mxu0
        %v4831 = vadd.f32 0.0, %v4830
        %v4832 = vpop.f32.mrb[0].mxu0
        %v4833 = vpop.f32.mrb[0].mxu0
        %v4834 = vadd.f32 0.0, %v4833
        %v4835 = vpop.f32.mrb[0].mxu0
        %4836 = vmatprep.mubr.bf16.mxu0 0
        %4837 = vmatmul.mubr.bf16.gmra.mrb[0].mxu0 %v4675
        %v4838 = vpop.f32.mrb[0].mxu0
        %v4839 = vadd.f32 0.0, %v4838
        %v4840 = vpop.f32.mrb[0].mxu0
        %v4841 = vpop.f32.mrb[0].mxu0
        %v4842 = vadd.f32 0.0, %v4841
        %v4843 = vpop.f32.mrb[0].mxu0
        %4844 = vmatprep.mubr.bf16.mxu0 0
        %4845 = vmatmul.mubr.bf16.gmra.mrb[0].mxu0 %v4676
        %v4846 = vpop.f32.mrb[0].mxu0
        %v4847 = vadd.f32 0.0, %v4846
        %v4848 = vpop.f32.mrb[0].mxu0
        %v4849 = vpop.f32.mrb[0].mxu0
        %v4850 = vadd.f32 0.0, %v4849
        %v4851 = vpop.f32.mrb[0].mxu0
        %4852 = vmatprep.mubr.bf16.mxu0 0
        %4853 = vmatmul.mubr.bf16.gmra.mrb[0].mxu0 %v4677
        %v4854 = vpop.f32.mrb[0].mxu0
        %v4855 = vadd.f32 0.0, %v4854
        %v4856 = vpop.f32.mrb[0].mxu0
        %v4857 = vpop.f32.mrb[0].mxu0
        %v4858 = vadd.f32 0.0, %v4857
        %v4859 = vpop.f32.mrb[0].mxu0
        %4860 = vmatprep.mubr.bf16.mxu0 0
        %4861 = vmatmul.mubr.bf16.gmra.mrb[0].mxu0 %v4678
        %v4862 = vpop.f32.mrb[0].mxu0
        %v4863 = vadd.f32 0.0, %v4862
        %v4864 = vpop.f32.mrb[0].mxu0
        %v4865 = vpop.f32.mrb[0].mxu0
        %v4866 = vadd.f32 0.0, %v4865
        %v4867 = vpop.f32.mrb[0].mxu0
        %4868 = vmatprep.mubr.bf16.mxu0 0
        %4869 = vmatmul.mubr.bf16.gmra.mrb[0].mxu0 %v4679
        %v4870 = vpop.f32.mrb[0].mxu0
        %v4871 = vadd.f32 0.0, %v4870
        %v4872 = vpop.f32.mrb[0].mxu0
        %v4873 = vpop.f32.mrb[0].mxu0
        %v4874 = vadd.f32 0.0, %v4873
        %v4875 = vpop.f32.mrb[0].mxu0
        %4876 = vmatprep.mubr.bf16.mxu0 0
        %4877 = vmatmul.mubr.bf16.gmra.mrb[0].mxu0 %v4680
        %v4878 = vpop.f32.mrb[0].mxu0
        %v4879 = vadd.f32 0.0, %v4878
        %v4880 = vpop.f32.mrb[0].mxu0
        %v4881 = vpop.f32.mrb[0].mxu0
        %v4882 = vadd.f32 0.0, %v4881
        %v4883 = vpop.f32.mrb[0].mxu0
        %4884 = vmatprep.mubr.bf16.mxu0 0
        %4885 = vmatmul.mubr.bf16.gmra.mrb[0].mxu0 %v4681
        %v4886 = vpop.f32.mrb[0].mxu0
        %v4887 = vadd.f32 0.0, %v4886
        %v4888 = vpop.f32.mrb[0].mxu0
        %v4889 = vpop.f32.mrb[0].mxu0
        %v4890 = vadd.f32 0.0, %v4889
        %v4891 = vpop.f32.mrb[0].mxu0
        %4892 = vmatprep.mubr.bf16.mxu0 0
        %4893 = vmatmul.mubr.bf16.gmra.mrb[0].mxu0 %v4682
        %v4894 = vpop.f32.mrb[0].mxu0
        %v4895 = vadd.f32 0.0, %v4894
        %v4896 = vpop.f32.mrb[0].mxu0
        %v4897 = vpop.f32.mrb[0].mxu0
        %v4898 = vadd.f32 0.0, %v4897
        %v4899 = vpop.f32.mrb[0].mxu0
        %4900 = vmatprep.mubr.bf16.mxu0 0
        %4901 = vmatmul.mubr.bf16.gmra.mrb[0].mxu0 %v4683
        %v4902 = vpop.f32.mrb[0].mxu0
        %v4903 = vadd.f32 0.0, %v4902
        %v4904 = vpop.f32.mrb[0].mxu0
        %v4905 = vpop.f32.mrb[0].mxu0
        %v4906 = vadd.f32 0.0, %v4905
        %v4907 = vpop.f32.mrb[0].mxu0
        %4908 = vdwg.mxu0
        %v4909 = vld [vmem:[#allocation21] sm:$0x1]
        %v4911 = vlaneseq
        %v4912 = vshrl.u32 %v4911, 7
        %v4913 = vsub.s32 0, %v4912
        %v4914 = vrot.slane %v4909, %v4913
        %v4916 = vmul.f32 %v4783, %v4914
        %v4917 = vmul.f32 %v4786, %v4914
        %v4918 = vmul.f32 %v4791, %v4914
        %v4919 = vmul.f32 %v4794, %v4914
        %v4920 = vmul.f32 %v4799, %v4914
        %v4921 = vmul.f32 %v4802, %v4914
        %v4922 = vmul.f32 %v4807, %v4914
        %v4923 = vmul.f32 %v4810, %v4914
        %v4924 = vmul.f32 %v4815, %v4914
        %v4925 = vmul.f32 %v4818, %v4914
        %v4926 = vmul.f32 %v4823, %v4914
        %v4927 = vmul.f32 %v4826, %v4914
        %v4928 = vmul.f32 %v4831, %v4914
        %v4929 = vmul.f32 %v4834, %v4914
        %v4930 = vmul.f32 %v4839, %v4914
        %v4931 = vmul.f32 %v4842, %v4914
        %v4932 = vmul.f32 %v4847, %v4914
        %v4933 = vmul.f32 %v4850, %v4914
        %v4934 = vmul.f32 %v4855, %v4914
        %v4935 = vmul.f32 %v4858, %v4914
        %v4936 = vmul.f32 %v4863, %v4914
        %v4937 = vmul.f32 %v4866, %v4914
        %v4938 = vmul.f32 %v4871, %v4914
        %v4939 = vmul.f32 %v4874, %v4914
        %v4940 = vmul.f32 %v4879, %v4914
        %v4941 = vmul.f32 %v4882, %v4914
        %v4942 = vmul.f32 %v4887, %v4914
        %v4943 = vmul.f32 %v4890, %v4914
        %v4944 = vmul.f32 %v4895, %v4914
        %v4945 = vmul.f32 %v4898, %v4914
        %v4946 = vmul.f32 %v4903, %v4914
        %v4947 = vmul.f32 %v4906, %v4914
        %v4948 = vld [vmem:[#allocation22] sm:$0x1]
        %v4950 = vlaneseq
        %v4951 = vshrl.u32 %v4950, 7
        %v4952 = vsub.s32 0, %v4951
        %v4953 = vrot.slane %v4948, %v4952
        %v4955 = vadd.f32 %v4916, %v4953
        %v4956 = vadd.f32 %v4917, %v4953
        %v4957 = vadd.f32 %v4918, %v4953
        %v4958 = vadd.f32 %v4919, %v4953
        %v4959 = vadd.f32 %v4920, %v4953
        %v4960 = vadd.f32 %v4921, %v4953
        %v4961 = vadd.f32 %v4922, %v4953
        %v4962 = vadd.f32 %v4923, %v4953
        %v4963 = vadd.f32 %v4924, %v4953
        %v4964 = vadd.f32 %v4925, %v4953
        %v4965 = vadd.f32 %v4926, %v4953
        %v4966 = vadd.f32 %v4927, %v4953
        %v4967 = vadd.f32 %v4928, %v4953
        %v4968 = vadd.f32 %v4929, %v4953
        %v4969 = vadd.f32 %v4930, %v4953
        %v4970 = vadd.f32 %v4931, %v4953
        %v4971 = vadd.f32 %v4932, %v4953
        %v4972 = vadd.f32 %v4933, %v4953
        %v4973 = vadd.f32 %v4934, %v4953
        %v4974 = vadd.f32 %v4935, %v4953
        %v4975 = vadd.f32 %v4936, %v4953
        %v4976 = vadd.f32 %v4937, %v4953
        %v4977 = vadd.f32 %v4938, %v4953
        %v4978 = vadd.f32 %v4939, %v4953
        %v4979 = vadd.f32 %v4940, %v4953
        %v4980 = vadd.f32 %v4941, %v4953
        %v4981 = vadd.f32 %v4942, %v4953
        %v4982 = vadd.f32 %v4943, %v4953
        %v4983 = vadd.f32 %v4944, %v4953
        %v4984 = vadd.f32 %v4945, %v4953
        %v4985 = vadd.f32 %v4946, %v4953
        %v4986 = vadd.f32 %v4947, %v4953
        %v4987 = vmax.f32 %v4955, 0.0
        %v4988 = vmax.f32 %v4956, 0.0
        %v4989 = vmax.f32 %v4957, 0.0
        %v4990 = vmax.f32 %v4958, 0.0
        %v4991 = vmax.f32 %v4959, 0.0
        %v4992 = vmax.f32 %v4960, 0.0
        %v4993 = vmax.f32 %v4961, 0.0
        %v4994 = vmax.f32 %v4962, 0.0
        %v4995 = vmax.f32 %v4963, 0.0
        %v4996 = vmax.f32 %v4964, 0.0
        %v4997 = vmax.f32 %v4965, 0.0
        %v4998 = vmax.f32 %v4966, 0.0
        %v4999 = vmax.f32 %v4967, 0.0
        %v5000 = vmax.f32 %v4968, 0.0
        %v5001 = vmax.f32 %v4969, 0.0
        %v5002 = vmax.f32 %v4970, 0.0
        %v5003 = vmax.f32 %v4971, 0.0
        %v5004 = vmax.f32 %v4972, 0.0
        %v5005 = vmax.f32 %v4973, 0.0
        %v5006 = vmax.f32 %v4974, 0.0
        %v5007 = vmax.f32 %v4975, 0.0
        %v5008 = vmax.f32 %v4976, 0.0
        %v5009 = vmax.f32 %v4977, 0.0
        %v5010 = vmax.f32 %v4978, 0.0
        %v5011 = vmax.f32 %v4979, 0.0
        %v5012 = vmax.f32 %v4980, 0.0
        %v5013 = vmax.f32 %v4981, 0.0
        %v5014 = vmax.f32 %v4982, 0.0
        %v5015 = vmax.f32 %v4983, 0.0
        %v5016 = vmax.f32 %v4984, 0.0
        %v5017 = vmax.f32 %v4985, 0.0
        %v5018 = vmax.f32 %v4986, 0.0
        %s5019 = sld [smem:[#allocation2 + $0x2]]
        %v5020 = vpack.c.bf16 %v4988, %v4987
        %v5021 = vpack.c.bf16 %v4990, %v4989
        %v5022 = vpack.c.bf16 %v4992, %v4991
        %v5023 = vpack.c.bf16 %v4994, %v4993
        %v5024 = vpack.c.bf16 %v4996, %v4995
        %v5025 = vpack.c.bf16 %v4998, %v4997
        %v5026 = vpack.c.bf16 %v5000, %v4999
        %v5027 = vpack.c.bf16 %v5002, %v5001
        %v5028 = vpack.c.bf16 %v5004, %v5003
        %v5029 = vpack.c.bf16 %v5006, %v5005
        %v5030 = vpack.c.bf16 %v5008, %v5007
        %v5031 = vpack.c.bf16 %v5010, %v5009
        %v5032 = vpack.c.bf16 %v5012, %v5011
        %v5033 = vpack.c.bf16 %v5014, %v5013
        %v5034 = vpack.c.bf16 %v5016, %v5015
        %v5035 = vpack.c.bf16 %v5018, %v5017
        %v5036 = vld [vmem:[#allocation24] sm:$0xff]
        %v5037 = vld [vmem:[#allocation24 + $0x8] sm:$0xf]
        %v5038 = vld [vmem:[#allocation24 + $0xc] sm:$0xff]
        %v5039 = vld [vmem:[#allocation24 + $0x14] sm:$0xf]
        %v5040 = vld [vmem:[#allocation24 + $0x18] sm:$0xff]
        %v5041 = vld [vmem:[#allocation24 + $0x20] sm:$0xf]
        %v5042 = vld [vmem:[#allocation24 + $0x24] sm:$0xff]
        %v5043 = vld [vmem:[#allocation24 + $0x2c] sm:$0xf]
        %v5044 = vld [vmem:[#allocation24 + $0x30] sm:$0xff]
        %v5045 = vld [vmem:[#allocation24 + $0x38] sm:$0xf]
        %v5046 = vld [vmem:[#allocation24 + $0x3c] sm:$0xff]
        %v5047 = vld [vmem:[#allocation24 + $0x44] sm:$0xf]
        %v5048 = vld [vmem:[#allocation24 + $0x48] sm:$0xff]
        %v5049 = vld [vmem:[#allocation24 + $0x50] sm:$0xf]
        %v5050 = vld [vmem:[#allocation24 + $0x54] sm:$0xff]
        %v5051 = vld [vmem:[#allocation24 + $0x5c] sm:$0xf]
        %v5052 = vld [vmem:[#allocation24 + $0x60] sm:$0xff]
        %v5053 = vld [vmem:[#allocation24 + $0x68] sm:$0xf]
        %v5054 = vld [vmem:[#allocation24 + $0x6c] sm:$0xff]
        %v5055 = vld [vmem:[#allocation24 + $0x74] sm:$0xf]
        %v5056 = vld [vmem:[#allocation24 + $0x78] sm:$0xff]
        %v5057 = vld [vmem:[#allocation24 + $0x80] sm:$0xf]
        %v5058 = vld [vmem:[#allocation24 + $0x84] sm:$0xff]
        %v5059 = vld [vmem:[#allocation24 + $0x8c] sm:$0xf]
        %v5060 = vld [vmem:[#allocation24 + $0x90] sm:$0xff]
        %v5061 = vld [vmem:[#allocation24 + $0x98] sm:$0xf]
        %v5062 = vld [vmem:[#allocation24 + $0x9c] sm:$0xff]
        %v5063 = vld [vmem:[#allocation24 + $0xa4] sm:$0xf]
        %v5064 = vld [vmem:[#allocation24 + $0xa8] sm:$0xff]
        %v5065 = vld [vmem:[#allocation24 + $0xb0] sm:$0xf]
        %v5066 = vld [vmem:[#allocation24 + $0xb4] sm:$0xff]
        %v5067 = vld [vmem:[#allocation24 + $0xbc] sm:$0xf]
        %v5068 = vld [vmem:[#allocation25] sm:$0x7]
        %v5070 = vlaneseq
        %v5071 = vshrl.u32 %v5070, 7
        %v5072 = vsub.s32 0, %v5071
        %v5073 = vrot.slane %v5068, %v5072
        %v5074 = vlaneseq
        %v5075 = vshrl.u32 %v5074, 7
        %v5076 = vsub.s32 1, %v5075
        %v5077 = vrot.slane %v5068, %v5076
        %v5078 = vlaneseq
        %v5079 = vshrl.u32 %v5078, 7
        %v5080 = vsub.s32 2, %v5079
        %v5081 = vrot.slane %v5068, %v5080
        %v5117 = vunpack.c.l.b16 %v5036
        %v5118 = vunpack.c.h.b16 %v5036
        %v5119 = vunpack.c.l.b16 %v5037
        %v5120 = vunpack.c.l.b16 %v5038
        %v5121 = vunpack.c.h.b16 %v5038
        %v5122 = vunpack.c.l.b16 %v5039
        %v5123 = vunpack.c.l.b16 %v5040
        %v5124 = vunpack.c.h.b16 %v5040
        %v5125 = vunpack.c.l.b16 %v5041
        %v5126 = vunpack.c.l.b16 %v5042
        %v5127 = vunpack.c.h.b16 %v5042
        %v5128 = vunpack.c.l.b16 %v5043
        %v5129 = vunpack.c.l.b16 %v5044
        %v5130 = vunpack.c.h.b16 %v5044
        %v5131 = vunpack.c.l.b16 %v5045
        %v5132 = vunpack.c.l.b16 %v5046
        %v5133 = vunpack.c.h.b16 %v5046
        %v5134 = vunpack.c.l.b16 %v5047
        %v5135 = vunpack.c.l.b16 %v5048
        %v5136 = vunpack.c.h.b16 %v5048
        %v5137 = vunpack.c.l.b16 %v5049
        %v5138 = vunpack.c.l.b16 %v5050
        %v5139 = vunpack.c.h.b16 %v5050
        %v5140 = vunpack.c.l.b16 %v5051
        %v5141 = vunpack.c.l.b16 %v5052
        %v5142 = vunpack.c.h.b16 %v5052
        %v5143 = vunpack.c.l.b16 %v5053
        %v5144 = vunpack.c.l.b16 %v5054
        %v5145 = vunpack.c.h.b16 %v5054
        %v5146 = vunpack.c.l.b16 %v5055
        %v5147 = vunpack.c.l.b16 %v5056
        %v5148 = vunpack.c.h.b16 %v5056
        %v5149 = vunpack.c.l.b16 %v5057
        %v5150 = vunpack.c.l.b16 %v5058
        %v5151 = vunpack.c.h.b16 %v5058
        %v5152 = vunpack.c.l.b16 %v5059
        %v5153 = vunpack.c.l.b16 %v5060
        %v5154 = vunpack.c.h.b16 %v5060
        %v5155 = vunpack.c.l.b16 %v5061
        %v5156 = vunpack.c.l.b16 %v5062
        %v5157 = vunpack.c.h.b16 %v5062
        %v5158 = vunpack.c.l.b16 %v5063
        %v5159 = vunpack.c.l.b16 %v5064
        %v5160 = vunpack.c.h.b16 %v5064
        %v5161 = vunpack.c.l.b16 %v5065
        %v5162 = vunpack.c.l.b16 %v5066
        %v5163 = vunpack.c.h.b16 %v5066
        %v5164 = vunpack.c.l.b16 %v5067
        %v5165 = vpack.c.b16 %v5120, %v5117
        %v5166 = vpack.c.b16 %v5121, %v5118
        %v5167 = vpack.c.b16 %v5122, %v5119
        %v5168 = vpack.c.b16 %v5126, %v5123
        %v5169 = vpack.c.b16 %v5127, %v5124
        %v5170 = vpack.c.b16 %v5128, %v5125
        %v5171 = vpack.c.b16 %v5132, %v5129
        %v5172 = vpack.c.b16 %v5133, %v5130
        %v5173 = vpack.c.b16 %v5134, %v5131
        %v5174 = vpack.c.b16 %v5138, %v5135
        %v5175 = vpack.c.b16 %v5139, %v5136
        %v5176 = vpack.c.b16 %v5140, %v5137
        %v5177 = vpack.c.b16 %v5144, %v5141
        %v5178 = vpack.c.b16 %v5145, %v5142
        %v5179 = vpack.c.b16 %v5146, %v5143
        %v5180 = vpack.c.b16 %v5150, %v5147
        %v5181 = vpack.c.b16 %v5151, %v5148
        %v5182 = vpack.c.b16 %v5152, %v5149
        %v5183 = vpack.c.b16 %v5156, %v5153
        %v5184 = vpack.c.b16 %v5157, %v5154
        %v5185 = vpack.c.b16 %v5158, %v5155
        %v5186 = vpack.c.b16 %v5162, %v5159
        %v5187 = vpack.c.b16 %v5163, %v5160
        %v5188 = vpack.c.b16 %v5164, %v5161
        %5213 = vmatprep.subr.bf16.mxu0 %v5166
        %5214 = vmatpush1.bf16.msra.mxu0 %v5165
        %5215 = vmatprep.subr.bf16.mxu0 %v5169
        %5216 = vmatpush1.bf16.msra.mxu0 %v5168
        %5217 = vmatprep.subr.bf16.mxu0 %v5172
        %5218 = vmatpush1.bf16.msra.mxu0 %v5171
        %5219 = vmatprep.subr.bf16.mxu0 %v5175
        %5220 = vmatpush1.bf16.msra.mxu0 %v5174
        %5221 = vmatprep.subr.bf16.mxu0 %v5178
        %5222 = vmatpush1.bf16.msra.mxu0 %v5177
        %5223 = vmatprep.subr.bf16.mxu0 %v5181
        %5224 = vmatpush1.bf16.msra.mxu0 %v5180
        %5225 = vmatprep.subr.bf16.mxu0 %v5184
        %5226 = vmatpush1.bf16.msra.mxu0 %v5183
        %5227 = vmatprep.subr.bf16.mxu0 %v5187
        %5228 = vmatpush1.bf16.msra.mxu0 %v5186
        %5229 = vmatprep.subr.bf16.mxu0 0
        %5230 = vmatpush1.bf16.msra.mxu0 0
        %5231 = vmatprep.subr.bf16.mxu0 0
        %5232 = vmatpush1.bf16.msra.mxu0 0
        %5233 = vmatprep.subr.bf16.mxu0 0
        %5234 = vmatpush1.bf16.msra.mxu0 0
        %5235 = vmatprep.subr.bf16.mxu0 0
        %5236 = vmatpush1.bf16.msra.mxu0 0
        %5237 = vmatprep.subr.bf16.mxu0 0
        %5238 = vmatpush1.bf16.msra.mxu0 0
        %5239 = vmatprep.subr.bf16.mxu0 0
        %5240 = vmatpush1.bf16.msra.mxu0 0
        %5241 = vmatprep.subr.bf16.mxu0 0
        %5242 = vmatpush1.bf16.msra.mxu0 0
        %5243 = vmatprep.subr.bf16.mxu0 0
        %5244 = vmatpush1.bf16.msra.mxu0 0
        %5245 = vmatprep.mubr.bf16.mxu0 0
        %5246 = vmatmul.mubr.bf16.gmra.mrb[0].mxu0 %v5020
        %v5247 = vpop.f32.mrb[0].mxu0
        %v5248 = vadd.f32 %v5073, %v5247
        %v5249 = vpop.f32.mrb[0].mxu0
        %v5250 = vadd.f32 %v5077, %v5249
        %v5251 = vpop.f32.mrb[0].mxu0
        %v5252 = vadd.f32 %v5073, %v5251
        %v5253 = vpop.f32.mrb[0].mxu0
        %v5254 = vadd.f32 %v5077, %v5253
        %5255 = vmatprep.mubr.bf16.mxu0 0
        %5256 = vmatmul.mubr.bf16.gmra.mrb[0].mxu0 %v5021
        %v5257 = vpop.f32.mrb[0].mxu0
        %v5258 = vadd.f32 %v5073, %v5257
        %v5259 = vpop.f32.mrb[0].mxu0
        %v5260 = vadd.f32 %v5077, %v5259
        %v5261 = vpop.f32.mrb[0].mxu0
        %v5262 = vadd.f32 %v5073, %v5261
        %v5263 = vpop.f32.mrb[0].mxu0
        %v5264 = vadd.f32 %v5077, %v5263
        %5265 = vmatprep.mubr.bf16.mxu0 0
        %5266 = vmatmul.mubr.bf16.gmra.mrb[0].mxu0 %v5022
        %v5267 = vpop.f32.mrb[0].mxu0
        %v5268 = vadd.f32 %v5073, %v5267
        %v5269 = vpop.f32.mrb[0].mxu0
        %v5270 = vadd.f32 %v5077, %v5269
        %v5271 = vpop.f32.mrb[0].mxu0
        %v5272 = vadd.f32 %v5073, %v5271
        %v5273 = vpop.f32.mrb[0].mxu0
        %v5274 = vadd.f32 %v5077, %v5273
        %5275 = vmatprep.mubr.bf16.mxu0 0
        %5276 = vmatmul.mubr.bf16.gmra.mrb[0].mxu0 %v5023
        %v5277 = vpop.f32.mrb[0].mxu0
        %v5278 = vadd.f32 %v5073, %v5277
        %v5279 = vpop.f32.mrb[0].mxu0
        %v5280 = vadd.f32 %v5077, %v5279
        %v5281 = vpop.f32.mrb[0].mxu0
        %v5282 = vadd.f32 %v5073, %v5281
        %v5283 = vpop.f32.mrb[0].mxu0
        %v5284 = vadd.f32 %v5077, %v5283
        %5285 = vmatprep.mubr.bf16.mxu0 0
        %5286 = vmatmul.mubr.bf16.gmra.mrb[0].mxu0 %v5024
        %v5287 = vpop.f32.mrb[0].mxu0
        %v5288 = vadd.f32 %v5073, %v5287
        %v5289 = vpop.f32.mrb[0].mxu0
        %v5290 = vadd.f32 %v5077, %v5289
        %v5291 = vpop.f32.mrb[0].mxu0
        %v5292 = vadd.f32 %v5073, %v5291
        %v5293 = vpop.f32.mrb[0].mxu0
        %v5294 = vadd.f32 %v5077, %v5293
        %5295 = vmatprep.mubr.bf16.mxu0 0
        %5296 = vmatmul.mubr.bf16.gmra.mrb[0].mxu0 %v5025
        %v5297 = vpop.f32.mrb[0].mxu0
        %v5298 = vadd.f32 %v5073, %v5297
        %v5299 = vpop.f32.mrb[0].mxu0
        %v5300 = vadd.f32 %v5077, %v5299
        %v5301 = vpop.f32.mrb[0].mxu0
        %v5302 = vadd.f32 %v5073, %v5301
        %v5303 = vpop.f32.mrb[0].mxu0
        %v5304 = vadd.f32 %v5077, %v5303
        %5305 = vmatprep.mubr.bf16.mxu0 0
        %5306 = vmatmul.mubr.bf16.gmra.mrb[0].mxu0 %v5026
        %v5307 = vpop.f32.mrb[0].mxu0
        %v5308 = vadd.f32 %v5073, %v5307
        %v5309 = vpop.f32.mrb[0].mxu0
        %v5310 = vadd.f32 %v5077, %v5309
        %v5311 = vpop.f32.mrb[0].mxu0
        %v5312 = vadd.f32 %v5073, %v5311
        %v5313 = vpop.f32.mrb[0].mxu0
        %v5314 = vadd.f32 %v5077, %v5313
        %5315 = vmatprep.mubr.bf16.mxu0 0
        %5316 = vmatmul.mubr.bf16.gmra.mrb[0].mxu0 %v5027
        %v5317 = vpop.f32.mrb[0].mxu0
        %v5318 = vadd.f32 %v5073, %v5317
        %v5319 = vpop.f32.mrb[0].mxu0
        %v5320 = vadd.f32 %v5077, %v5319
        %v5321 = vpop.f32.mrb[0].mxu0
        %v5322 = vadd.f32 %v5073, %v5321
        %v5323 = vpop.f32.mrb[0].mxu0
        %v5324 = vadd.f32 %v5077, %v5323
        %5325 = vmatprep.mubr.bf16.mxu0 0
        %5326 = vmatmul.mubr.bf16.gmra.mrb[0].mxu0 %v5028
        %v5327 = vpop.f32.mrb[0].mxu0
        %v5328 = vadd.f32 %v5073, %v5327
        %v5329 = vpop.f32.mrb[0].mxu0
        %v5330 = vadd.f32 %v5077, %v5329
        %v5331 = vpop.f32.mrb[0].mxu0
        %v5332 = vadd.f32 %v5073, %v5331
        %v5333 = vpop.f32.mrb[0].mxu0
        %v5334 = vadd.f32 %v5077, %v5333
        %5335 = vmatprep.mubr.bf16.mxu0 0
        %5336 = vmatmul.mubr.bf16.gmra.mrb[0].mxu0 %v5029
        %v5337 = vpop.f32.mrb[0].mxu0
        %v5338 = vadd.f32 %v5073, %v5337
        %v5339 = vpop.f32.mrb[0].mxu0
        %v5340 = vadd.f32 %v5077, %v5339
        %v5341 = vpop.f32.mrb[0].mxu0
        %v5342 = vadd.f32 %v5073, %v5341
        %v5343 = vpop.f32.mrb[0].mxu0
        %v5344 = vadd.f32 %v5077, %v5343
        %5345 = vmatprep.mubr.bf16.mxu0 0
        %5346 = vmatmul.mubr.bf16.gmra.mrb[0].mxu0 %v5030
        %v5347 = vpop.f32.mrb[0].mxu0
        %v5348 = vadd.f32 %v5073, %v5347
        %v5349 = vpop.f32.mrb[0].mxu0
        %v5350 = vadd.f32 %v5077, %v5349
        %v5351 = vpop.f32.mrb[0].mxu0
        %v5352 = vadd.f32 %v5073, %v5351
        %v5353 = vpop.f32.mrb[0].mxu0
        %v5354 = vadd.f32 %v5077, %v5353
        %5355 = vmatprep.mubr.bf16.mxu0 0
        %5356 = vmatmul.mubr.bf16.gmra.mrb[0].mxu0 %v5031
        %v5357 = vpop.f32.mrb[0].mxu0
        %v5358 = vadd.f32 %v5073, %v5357
        %v5359 = vpop.f32.mrb[0].mxu0
        %v5360 = vadd.f32 %v5077, %v5359
        %v5361 = vpop.f32.mrb[0].mxu0
        %v5362 = vadd.f32 %v5073, %v5361
        %v5363 = vpop.f32.mrb[0].mxu0
        %v5364 = vadd.f32 %v5077, %v5363
        %5365 = vmatprep.mubr.bf16.mxu0 0
        %5366 = vmatmul.mubr.bf16.gmra.mrb[0].mxu0 %v5032
        %v5367 = vpop.f32.mrb[0].mxu0
        %v5368 = vadd.f32 %v5073, %v5367
        %v5369 = vpop.f32.mrb[0].mxu0
        %v5370 = vadd.f32 %v5077, %v5369
        %v5371 = vpop.f32.mrb[0].mxu0
        %v5372 = vadd.f32 %v5073, %v5371
        %v5373 = vpop.f32.mrb[0].mxu0
        %v5374 = vadd.f32 %v5077, %v5373
        %5375 = vmatprep.mubr.bf16.mxu0 0
        %5376 = vmatmul.mubr.bf16.gmra.mrb[0].mxu0 %v5033
        %v5377 = vpop.f32.mrb[0].mxu0
        %v5378 = vadd.f32 %v5073, %v5377
        %v5379 = vpop.f32.mrb[0].mxu0
        %v5380 = vadd.f32 %v5077, %v5379
        %v5381 = vpop.f32.mrb[0].mxu0
        %v5382 = vadd.f32 %v5073, %v5381
        %v5383 = vpop.f32.mrb[0].mxu0
        %v5384 = vadd.f32 %v5077, %v5383
        %5385 = vmatprep.mubr.bf16.mxu0 0
        %5386 = vmatmul.mubr.bf16.gmra.mrb[0].mxu0 %v5034
        %v5387 = vpop.f32.mrb[0].mxu0
        %v5388 = vadd.f32 %v5073, %v5387
        %v5389 = vpop.f32.mrb[0].mxu0
        %v5390 = vadd.f32 %v5077, %v5389
        %v5391 = vpop.f32.mrb[0].mxu0
        %v5392 = vadd.f32 %v5073, %v5391
        %v5393 = vpop.f32.mrb[0].mxu0
        %v5394 = vadd.f32 %v5077, %v5393
        %5395 = vmatprep.mubr.bf16.mxu0 0
        %5396 = vmatmul.mubr.bf16.gmra.mrb[0].mxu0 %v5035
        %v5397 = vpop.f32.mrb[0].mxu0
        %v5398 = vadd.f32 %v5073, %v5397
        %v5399 = vpop.f32.mrb[0].mxu0
        %v5400 = vadd.f32 %v5077, %v5399
        %v5401 = vpop.f32.mrb[0].mxu0
        %v5402 = vadd.f32 %v5073, %v5401
        %v5403 = vpop.f32.mrb[0].mxu0
        %v5404 = vadd.f32 %v5077, %v5403
        %5405 = vdwg.mxu0
        %5406 = vmatprep.subr.bf16.mxu0 0
        %5407 = vmatpush1.bf16.msra.mxu0 %v5167
        %5408 = vmatprep.subr.bf16.mxu0 0
        %5409 = vmatpush1.bf16.msra.mxu0 %v5170
        %5410 = vmatprep.subr.bf16.mxu0 0
        %5411 = vmatpush1.bf16.msra.mxu0 %v5173
        %5412 = vmatprep.subr.bf16.mxu0 0
        %5413 = vmatpush1.bf16.msra.mxu0 %v5176
        %5414 = vmatprep.subr.bf16.mxu0 0
        %5415 = vmatpush1.bf16.msra.mxu0 %v5179
        %5416 = vmatprep.subr.bf16.mxu0 0
        %5417 = vmatpush1.bf16.msra.mxu0 %v5182
        %5418 = vmatprep.subr.bf16.mxu0 0
        %5419 = vmatpush1.bf16.msra.mxu0 %v5185
        %5420 = vmatprep.subr.bf16.mxu0 0
        %5421 = vmatpush1.bf16.msra.mxu0 %v5188
        %5422 = vmatprep.subr.bf16.mxu0 0
        %5423 = vmatpush1.bf16.msra.mxu0 0
        %5424 = vmatprep.subr.bf16.mxu0 0
        %5425 = vmatpush1.bf16.msra.mxu0 0
        %5426 = vmatprep.subr.bf16.mxu0 0
        %5427 = vmatpush1.bf16.msra.mxu0 0
        %5428 = vmatprep.subr.bf16.mxu0 0
        %5429 = vmatpush1.bf16.msra.mxu0 0
        %5430 = vmatprep.subr.bf16.mxu0 0
        %5431 = vmatpush1.bf16.msra.mxu0 0
        %5432 = vmatprep.subr.bf16.mxu0 0
        %5433 = vmatpush1.bf16.msra.mxu0 0
        %5434 = vmatprep.subr.bf16.mxu0 0
        %5435 = vmatpush1.bf16.msra.mxu0 0
        %5436 = vmatprep.subr.bf16.mxu0 0
        %5437 = vmatpush1.bf16.msra.mxu0 0
        %5438 = vmatprep.mubr.bf16.mxu0 0
        %5439 = vmatmul.mubr.bf16.gmra.mrb[0].mxu0 %v5020
        %v5440 = vpop.f32.mrb[0].mxu0
        %v5441 = vadd.f32 %v5081, %v5440
        %v5442 = vpop.f32.mrb[0].mxu0
        %v5443 = vpop.f32.mrb[0].mxu0
        %v5444 = vadd.f32 %v5081, %v5443
        %v5445 = vpop.f32.mrb[0].mxu0
        %5446 = vmatprep.mubr.bf16.mxu0 0
        %5447 = vmatmul.mubr.bf16.gmra.mrb[0].mxu0 %v5021
        %v5448 = vpop.f32.mrb[0].mxu0
        %v5449 = vadd.f32 %v5081, %v5448
        %v5450 = vpop.f32.mrb[0].mxu0
        %v5451 = vpop.f32.mrb[0].mxu0
        %v5452 = vadd.f32 %v5081, %v5451
        %v5453 = vpop.f32.mrb[0].mxu0
        %5454 = vmatprep.mubr.bf16.mxu0 0
        %5455 = vmatmul.mubr.bf16.gmra.mrb[0].mxu0 %v5022
        %v5456 = vpop.f32.mrb[0].mxu0
        %v5457 = vadd.f32 %v5081, %v5456
        %v5458 = vpop.f32.mrb[0].mxu0
        %v5459 = vpop.f32.mrb[0].mxu0
        %v5460 = vadd.f32 %v5081, %v5459
        %v5461 = vpop.f32.mrb[0].mxu0
        %5462 = vmatprep.mubr.bf16.mxu0 0
        %5463 = vmatmul.mubr.bf16.gmra.mrb[0].mxu0 %v5023
        %v5464 = vpop.f32.mrb[0].mxu0
        %v5465 = vadd.f32 %v5081, %v5464
        %v5466 = vpop.f32.mrb[0].mxu0
        %v5467 = vpop.f32.mrb[0].mxu0
        %v5468 = vadd.f32 %v5081, %v5467
        %v5469 = vpop.f32.mrb[0].mxu0
        %5470 = vmatprep.mubr.bf16.mxu0 0
        %5471 = vmatmul.mubr.bf16.gmra.mrb[0].mxu0 %v5024
        %v5472 = vpop.f32.mrb[0].mxu0
        %v5473 = vadd.f32 %v5081, %v5472
        %v5474 = vpop.f32.mrb[0].mxu0
        %v5475 = vpop.f32.mrb[0].mxu0
        %v5476 = vadd.f32 %v5081, %v5475
        %v5477 = vpop.f32.mrb[0].mxu0
        %5478 = vmatprep.mubr.bf16.mxu0 0
        %5479 = vmatmul.mubr.bf16.gmra.mrb[0].mxu0 %v5025
        %v5480 = vpop.f32.mrb[0].mxu0
        %v5481 = vadd.f32 %v5081, %v5480
        %v5482 = vpop.f32.mrb[0].mxu0
        %v5483 = vpop.f32.mrb[0].mxu0
        %v5484 = vadd.f32 %v5081, %v5483
        %v5485 = vpop.f32.mrb[0].mxu0
        %5486 = vmatprep.mubr.bf16.mxu0 0
        %5487 = vmatmul.mubr.bf16.gmra.mrb[0].mxu0 %v5026
        %v5488 = vpop.f32.mrb[0].mxu0
        %v5489 = vadd.f32 %v5081, %v5488
        %v5490 = vpop.f32.mrb[0].mxu0
        %v5491 = vpop.f32.mrb[0].mxu0
        %v5492 = vadd.f32 %v5081, %v5491
        %v5493 = vpop.f32.mrb[0].mxu0
        %5494 = vmatprep.mubr.bf16.mxu0 0
        %5495 = vmatmul.mubr.bf16.gmra.mrb[0].mxu0 %v5027
        %v5496 = vpop.f32.mrb[0].mxu0
        %v5497 = vadd.f32 %v5081, %v5496
        %v5498 = vpop.f32.mrb[0].mxu0
        %v5499 = vpop.f32.mrb[0].mxu0
        %v5500 = vadd.f32 %v5081, %v5499
        %v5501 = vpop.f32.mrb[0].mxu0
        %5502 = vmatprep.mubr.bf16.mxu0 0
        %5503 = vmatmul.mubr.bf16.gmra.mrb[0].mxu0 %v5028
        %v5504 = vpop.f32.mrb[0].mxu0
        %v5505 = vadd.f32 %v5081, %v5504
        %v5506 = vpop.f32.mrb[0].mxu0
        %v5507 = vpop.f32.mrb[0].mxu0
        %v5508 = vadd.f32 %v5081, %v5507
        %v5509 = vpop.f32.mrb[0].mxu0
        %5510 = vmatprep.mubr.bf16.mxu0 0
        %5511 = vmatmul.mubr.bf16.gmra.mrb[0].mxu0 %v5029
        %v5512 = vpop.f32.mrb[0].mxu0
        %v5513 = vadd.f32 %v5081, %v5512
        %v5514 = vpop.f32.mrb[0].mxu0
        %v5515 = vpop.f32.mrb[0].mxu0
        %v5516 = vadd.f32 %v5081, %v5515
        %v5517 = vpop.f32.mrb[0].mxu0
        %5518 = vmatprep.mubr.bf16.mxu0 0
        %5519 = vmatmul.mubr.bf16.gmra.mrb[0].mxu0 %v5030
        %v5520 = vpop.f32.mrb[0].mxu0
        %v5521 = vadd.f32 %v5081, %v5520
        %v5522 = vpop.f32.mrb[0].mxu0
        %v5523 = vpop.f32.mrb[0].mxu0
        %v5524 = vadd.f32 %v5081, %v5523
        %v5525 = vpop.f32.mrb[0].mxu0
        %5526 = vmatprep.mubr.bf16.mxu0 0
        %5527 = vmatmul.mubr.bf16.gmra.mrb[0].mxu0 %v5031
        %v5528 = vpop.f32.mrb[0].mxu0
        %v5529 = vadd.f32 %v5081, %v5528
        %v5530 = vpop.f32.mrb[0].mxu0
        %v5531 = vpop.f32.mrb[0].mxu0
        %v5532 = vadd.f32 %v5081, %v5531
        %v5533 = vpop.f32.mrb[0].mxu0
        %5534 = vmatprep.mubr.bf16.mxu0 0
        %5535 = vmatmul.mubr.bf16.gmra.mrb[0].mxu0 %v5032
        %v5536 = vpop.f32.mrb[0].mxu0
        %v5537 = vadd.f32 %v5081, %v5536
        %v5538 = vpop.f32.mrb[0].mxu0
        %v5539 = vpop.f32.mrb[0].mxu0
        %v5540 = vadd.f32 %v5081, %v5539
        %v5541 = vpop.f32.mrb[0].mxu0
        %5542 = vmatprep.mubr.bf16.mxu0 0
        %5543 = vmatmul.mubr.bf16.gmra.mrb[0].mxu0 %v5033
        %v5544 = vpop.f32.mrb[0].mxu0
        %v5545 = vadd.f32 %v5081, %v5544
        %v5546 = vpop.f32.mrb[0].mxu0
        %v5547 = vpop.f32.mrb[0].mxu0
        %v5548 = vadd.f32 %v5081, %v5547
        %v5549 = vpop.f32.mrb[0].mxu0
        %5550 = vmatprep.mubr.bf16.mxu0 0
        %5551 = vmatmul.mubr.bf16.gmra.mrb[0].mxu0 %v5034
        %v5552 = vpop.f32.mrb[0].mxu0
        %v5553 = vadd.f32 %v5081, %v5552
        %v5554 = vpop.f32.mrb[0].mxu0
        %v5555 = vpop.f32.mrb[0].mxu0
        %v5556 = vadd.f32 %v5081, %v5555
        %v5557 = vpop.f32.mrb[0].mxu0
        %5558 = vmatprep.mubr.bf16.mxu0 0
        %5559 = vmatmul.mubr.bf16.gmra.mrb[0].mxu0 %v5035
        %v5560 = vpop.f32.mrb[0].mxu0
        %v5561 = vadd.f32 %v5081, %v5560
        %v5562 = vpop.f32.mrb[0].mxu0
        %v5563 = vpop.f32.mrb[0].mxu0
        %v5564 = vadd.f32 %v5081, %v5563
        %v5565 = vpop.f32.mrb[0].mxu0
        %5566 = vdwg.mxu0
        %v5567 = vpack.c.bf16 %v5252, %v5248
        %v5568 = vpack.c.bf16 %v5262, %v5258
        %v5569 = vpack.c.bf16 %v5272, %v5268
        %v5570 = vpack.c.bf16 %v5282, %v5278
        %v5571 = vpack.c.bf16 %v5292, %v5288
        %v5572 = vpack.c.bf16 %v5302, %v5298
        %v5573 = vpack.c.bf16 %v5312, %v5308
        %v5574 = vpack.c.bf16 %v5322, %v5318
        %v5575 = vpack.c.bf16 %v5332, %v5328
        %v5576 = vpack.c.bf16 %v5342, %v5338
        %v5577 = vpack.c.bf16 %v5352, %v5348
        %v5578 = vpack.c.bf16 %v5362, %v5358
        %v5579 = vpack.c.bf16 %v5372, %v5368
        %v5580 = vpack.c.bf16 %v5382, %v5378
        %v5581 = vpack.c.bf16 %v5392, %v5388
        %v5582 = vpack.c.bf16 %v5402, %v5398
        %v5583 = vpack.c.bf16 %v5254, %v5250
        %v5584 = vpack.c.bf16 %v5264, %v5260
        %v5585 = vpack.c.bf16 %v5274, %v5270
        %v5586 = vpack.c.bf16 %v5284, %v5280
        %v5587 = vpack.c.bf16 %v5294, %v5290
        %v5588 = vpack.c.bf16 %v5304, %v5300
        %v5589 = vpack.c.bf16 %v5314, %v5310
        %v5590 = vpack.c.bf16 %v5324, %v5320
        %v5591 = vpack.c.bf16 %v5334, %v5330
        %v5592 = vpack.c.bf16 %v5344, %v5340
        %v5593 = vpack.c.bf16 %v5354, %v5350
        %v5594 = vpack.c.bf16 %v5364, %v5360
        %v5595 = vpack.c.bf16 %v5374, %v5370
        %v5596 = vpack.c.bf16 %v5384, %v5380
        %v5597 = vpack.c.bf16 %v5394, %v5390
        %v5598 = vpack.c.bf16 %v5404, %v5400
        %5599 = vmatprep.subr.bf16.mxu0 0
        %5600 = vmatpush1.bf16.xpose.msra.mxu0 %v5583
        %5601 = vmatprep.subr.bf16.mxu0 0
        %5602 = vmatpush1.bf16.xpose.msra.mxu0 %v5584
        %5603 = vmatprep.subr.bf16.mxu0 0
        %5604 = vmatpush1.bf16.xpose.msra.mxu0 %v5585
        %5605 = vmatprep.subr.bf16.mxu0 0
        %5606 = vmatpush1.bf16.xpose.msra.mxu0 %v5586
        %5607 = vmatprep.subr.bf16.mxu0 0
        %5608 = vmatpush1.bf16.xpose.msra.mxu0 %v5587
        %5609 = vmatprep.subr.bf16.mxu0 0
        %5610 = vmatpush1.bf16.xpose.msra.mxu0 %v5588
        %5611 = vmatprep.subr.bf16.mxu0 0
        %5612 = vmatpush1.bf16.xpose.msra.mxu0 %v5589
        %5613 = vmatprep.subr.bf16.mxu0 0
        %5614 = vmatpush1.bf16.xpose.msra.mxu0 %v5590
        %5615 = vmatprep.subr.bf16.mxu0 0
        %5616 = vmatpush1.bf16.xpose.msra.mxu0 %v5591
        %5617 = vmatprep.subr.bf16.mxu0 0
        %5618 = vmatpush1.bf16.xpose.msra.mxu0 %v5592
        %5619 = vmatprep.subr.bf16.mxu0 0
        %5620 = vmatpush1.bf16.xpose.msra.mxu0 %v5593
        %5621 = vmatprep.subr.bf16.mxu0 0
        %5622 = vmatpush1.bf16.xpose.msra.mxu0 %v5594
        %5623 = vmatprep.subr.bf16.mxu0 0
        %5624 = vmatpush1.bf16.xpose.msra.mxu0 %v5595
        %5625 = vmatprep.subr.bf16.mxu0 0
        %5626 = vmatpush1.bf16.xpose.msra.mxu0 %v5596
        %5627 = vmatprep.subr.bf16.mxu0 0
        %5628 = vmatpush1.bf16.xpose.msra.mxu0 %v5597
        %5629 = vmatprep.subr.bf16.mxu0 0
        %5630 = vmatpush1.bf16.xpose.msra.mxu0 %v5598
        %5631 = vmatprep.mubr.bf16.mxu0 0
        %5632 = vmatmul.mubr.bf16.gmra.mrb[0].mxu0 %v5567
        %v5633 = vpop.f32.mrb[0].mxu0
        %v5634 = vadd.f32 0.0, %v5633
        %v5635 = vpop.f32.mrb[0].mxu0
        %v5636 = vadd.f32 0.0, %v5635
        %v5637 = vpop.f32.mrb[0].mxu0
        %v5638 = vadd.f32 0.0, %v5637
        %v5639 = vpop.f32.mrb[0].mxu0
        %v5640 = vadd.f32 0.0, %v5639
        %5641 = vmatprep.mubr.bf16.mxu0 0
        %5642 = vmatmul.mubr.bf16.gmra.mrb[0].mxu0 %v5568
        %v5643 = vpop.f32.mrb[0].mxu0
        %v5644 = vadd.f32 0.0, %v5643
        %v5645 = vpop.f32.mrb[0].mxu0
        %v5646 = vadd.f32 0.0, %v5645
        %v5647 = vpop.f32.mrb[0].mxu0
        %v5648 = vadd.f32 0.0, %v5647
        %v5649 = vpop.f32.mrb[0].mxu0
        %v5650 = vadd.f32 0.0, %v5649
        %5651 = vmatprep.mubr.bf16.mxu0 0
        %5652 = vmatmul.mubr.bf16.gmra.mrb[0].mxu0 %v5569
        %v5653 = vpop.f32.mrb[0].mxu0
        %v5654 = vadd.f32 0.0, %v5653
        %v5655 = vpop.f32.mrb[0].mxu0
        %v5656 = vadd.f32 0.0, %v5655
        %v5657 = vpop.f32.mrb[0].mxu0
        %v5658 = vadd.f32 0.0, %v5657
        %v5659 = vpop.f32.mrb[0].mxu0
        %v5660 = vadd.f32 0.0, %v5659
        %5661 = vmatprep.mubr.bf16.mxu0 0
        %5662 = vmatmul.mubr.bf16.gmra.mrb[0].mxu0 %v5570
        %v5663 = vpop.f32.mrb[0].mxu0
        %v5664 = vadd.f32 0.0, %v5663
        %v5665 = vpop.f32.mrb[0].mxu0
        %v5666 = vadd.f32 0.0, %v5665
        %v5667 = vpop.f32.mrb[0].mxu0
        %v5668 = vadd.f32 0.0, %v5667
        %v5669 = vpop.f32.mrb[0].mxu0
        %v5670 = vadd.f32 0.0, %v5669
        %5671 = vmatprep.mubr.bf16.mxu0 0
        %5672 = vmatmul.mubr.bf16.gmra.mrb[0].mxu0 %v5571
        %v5673 = vpop.f32.mrb[0].mxu0
        %v5674 = vadd.f32 0.0, %v5673
        %v5675 = vpop.f32.mrb[0].mxu0
        %v5676 = vadd.f32 0.0, %v5675
        %v5677 = vpop.f32.mrb[0].mxu0
        %v5678 = vadd.f32 0.0, %v5677
        %v5679 = vpop.f32.mrb[0].mxu0
        %v5680 = vadd.f32 0.0, %v5679
        %5681 = vmatprep.mubr.bf16.mxu0 0
        %5682 = vmatmul.mubr.bf16.gmra.mrb[0].mxu0 %v5572
        %v5683 = vpop.f32.mrb[0].mxu0
        %v5684 = vadd.f32 0.0, %v5683
        %v5685 = vpop.f32.mrb[0].mxu0
        %v5686 = vadd.f32 0.0, %v5685
        %v5687 = vpop.f32.mrb[0].mxu0
        %v5688 = vadd.f32 0.0, %v5687
        %v5689 = vpop.f32.mrb[0].mxu0
        %v5690 = vadd.f32 0.0, %v5689
        %5691 = vmatprep.mubr.bf16.mxu0 0
        %5692 = vmatmul.mubr.bf16.gmra.mrb[0].mxu0 %v5573
        %v5693 = vpop.f32.mrb[0].mxu0
        %v5694 = vadd.f32 0.0, %v5693
        %v5695 = vpop.f32.mrb[0].mxu0
        %v5696 = vadd.f32 0.0, %v5695
        %v5697 = vpop.f32.mrb[0].mxu0
        %v5698 = vadd.f32 0.0, %v5697
        %v5699 = vpop.f32.mrb[0].mxu0
        %v5700 = vadd.f32 0.0, %v5699
        %5701 = vmatprep.mubr.bf16.mxu0 0
        %5702 = vmatmul.mubr.bf16.gmra.mrb[0].mxu0 %v5574
        %v5703 = vpop.f32.mrb[0].mxu0
        %v5704 = vadd.f32 0.0, %v5703
        %v5705 = vpop.f32.mrb[0].mxu0
        %v5706 = vadd.f32 0.0, %v5705
        %v5707 = vpop.f32.mrb[0].mxu0
        %v5708 = vadd.f32 0.0, %v5707
        %v5709 = vpop.f32.mrb[0].mxu0
        %v5710 = vadd.f32 0.0, %v5709
        %5711 = vmatprep.mubr.bf16.mxu0 0
        %5712 = vmatmul.mubr.bf16.gmra.mrb[0].mxu0 %v5575
        %v5713 = vpop.f32.mrb[0].mxu0
        %v5714 = vadd.f32 0.0, %v5713
        %v5715 = vpop.f32.mrb[0].mxu0
        %v5716 = vadd.f32 0.0, %v5715
        %v5717 = vpop.f32.mrb[0].mxu0
        %v5718 = vadd.f32 0.0, %v5717
        %v5719 = vpop.f32.mrb[0].mxu0
        %v5720 = vadd.f32 0.0, %v5719
        %5721 = vmatprep.mubr.bf16.mxu0 0
        %5722 = vmatmul.mubr.bf16.gmra.mrb[0].mxu0 %v5576
        %v5723 = vpop.f32.mrb[0].mxu0
        %v5724 = vadd.f32 0.0, %v5723
        %v5725 = vpop.f32.mrb[0].mxu0
        %v5726 = vadd.f32 0.0, %v5725
        %v5727 = vpop.f32.mrb[0].mxu0
        %v5728 = vadd.f32 0.0, %v5727
        %v5729 = vpop.f32.mrb[0].mxu0
        %v5730 = vadd.f32 0.0, %v5729
        %5731 = vmatprep.mubr.bf16.mxu0 0
        %5732 = vmatmul.mubr.bf16.gmra.mrb[0].mxu0 %v5577
        %v5733 = vpop.f32.mrb[0].mxu0
        %v5734 = vadd.f32 0.0, %v5733
        %v5735 = vpop.f32.mrb[0].mxu0
        %v5736 = vadd.f32 0.0, %v5735
        %v5737 = vpop.f32.mrb[0].mxu0
        %v5738 = vadd.f32 0.0, %v5737
        %v5739 = vpop.f32.mrb[0].mxu0
        %v5740 = vadd.f32 0.0, %v5739
        %5741 = vmatprep.mubr.bf16.mxu0 0
        %5742 = vmatmul.mubr.bf16.gmra.mrb[0].mxu0 %v5578
        %v5743 = vpop.f32.mrb[0].mxu0
        %v5744 = vadd.f32 0.0, %v5743
        %v5745 = vpop.f32.mrb[0].mxu0
        %v5746 = vadd.f32 0.0, %v5745
        %v5747 = vpop.f32.mrb[0].mxu0
        %v5748 = vadd.f32 0.0, %v5747
        %v5749 = vpop.f32.mrb[0].mxu0
        %v5750 = vadd.f32 0.0, %v5749
        %5751 = vmatprep.mubr.bf16.mxu0 0
        %5752 = vmatmul.mubr.bf16.gmra.mrb[0].mxu0 %v5579
        %v5753 = vpop.f32.mrb[0].mxu0
        %v5754 = vadd.f32 0.0, %v5753
        %v5755 = vpop.f32.mrb[0].mxu0
        %v5756 = vadd.f32 0.0, %v5755
        %v5757 = vpop.f32.mrb[0].mxu0
        %v5758 = vadd.f32 0.0, %v5757
        %v5759 = vpop.f32.mrb[0].mxu0
        %v5760 = vadd.f32 0.0, %v5759
        %5761 = vmatprep.mubr.bf16.mxu0 0
        %5762 = vmatmul.mubr.bf16.gmra.mrb[0].mxu0 %v5580
        %v5763 = vpop.f32.mrb[0].mxu0
        %v5764 = vadd.f32 0.0, %v5763
        %v5765 = vpop.f32.mrb[0].mxu0
        %v5766 = vadd.f32 0.0, %v5765
        %v5767 = vpop.f32.mrb[0].mxu0
        %v5768 = vadd.f32 0.0, %v5767
        %v5769 = vpop.f32.mrb[0].mxu0
        %v5770 = vadd.f32 0.0, %v5769
        %5771 = vmatprep.mubr.bf16.mxu0 0
        %5772 = vmatmul.mubr.bf16.gmra.mrb[0].mxu0 %v5581
        %v5773 = vpop.f32.mrb[0].mxu0
        %v5774 = vadd.f32 0.0, %v5773
        %v5775 = vpop.f32.mrb[0].mxu0
        %v5776 = vadd.f32 0.0, %v5775
        %v5777 = vpop.f32.mrb[0].mxu0
        %v5778 = vadd.f32 0.0, %v5777
        %v5779 = vpop.f32.mrb[0].mxu0
        %v5780 = vadd.f32 0.0, %v5779
        %5781 = vmatprep.mubr.bf16.mxu0 0
        %5782 = vmatmul.mubr.bf16.gmra.mrb[0].mxu0 %v5582
        %v5783 = vpop.f32.mrb[0].mxu0
        %v5784 = vadd.f32 0.0, %v5783
        %v5785 = vpop.f32.mrb[0].mxu0
        %v5786 = vadd.f32 0.0, %v5785
        %v5787 = vpop.f32.mrb[0].mxu0
        %v5788 = vadd.f32 0.0, %v5787
        %v5789 = vpop.f32.mrb[0].mxu0
        %v5790 = vadd.f32 0.0, %v5789
        %5791 = vdwg.mxu0
        %v5792 = vmax.f32 %v5634, %v5636
        %5793 = vmax.xlane.f32.xlu0 %v5792
        %v5794 = vpop.xlane.xlu0 %5793
        %v5795 = vmax.f32 %v5638, %v5640
        %5796 = vmax.xlane.f32.xlu0 %v5795
        %v5797 = vpop.xlane.xlu0 %5796
        %v5798 = vmax.f32 %v5644, %v5646
        %5799 = vmax.xlane.f32.xlu0 %v5798
        %v5800 = vpop.xlane.xlu0 %5799
        %v5801 = vmax.f32 %v5648, %v5650
        %5802 = vmax.xlane.f32.xlu0 %v5801
        %v5803 = vpop.xlane.xlu0 %5802
        %v5804 = vmax.f32 %v5654, %v5656
        %5805 = vmax.xlane.f32.xlu0 %v5804
        %v5806 = vpop.xlane.xlu0 %5805
        %v5807 = vmax.f32 %v5658, %v5660
        %5808 = vmax.xlane.f32.xlu0 %v5807
        %v5809 = vpop.xlane.xlu0 %5808
        %v5810 = vmax.f32 %v5664, %v5666
        %5811 = vmax.xlane.f32.xlu0 %v5810
        %v5812 = vpop.xlane.xlu0 %5811
        %v5813 = vmax.f32 %v5668, %v5670
        %5814 = vmax.xlane.f32.xlu0 %v5813
        %v5815 = vpop.xlane.xlu0 %5814
        %v5816 = vmax.f32 %v5674, %v5676
        %5817 = vmax.xlane.f32.xlu0 %v5816
        %v5818 = vpop.xlane.xlu0 %5817
        %v5819 = vmax.f32 %v5678, %v5680
        %5820 = vmax.xlane.f32.xlu0 %v5819
        %v5821 = vpop.xlane.xlu0 %5820
        %v5822 = vmax.f32 %v5684, %v5686
        %5823 = vmax.xlane.f32.xlu0 %v5822
        %v5824 = vpop.xlane.xlu0 %5823
        %v5825 = vmax.f32 %v5688, %v5690
        %5826 = vmax.xlane.f32.xlu0 %v5825
        %v5827 = vpop.xlane.xlu0 %5826
        %v5828 = vmax.f32 %v5694, %v5696
        %5829 = vmax.xlane.f32.xlu0 %v5828
        %v5830 = vpop.xlane.xlu0 %5829
        %v5831 = vmax.f32 %v5698, %v5700
        %5832 = vmax.xlane.f32.xlu0 %v5831
        %v5833 = vpop.xlane.xlu0 %5832
        %v5834 = vmax.f32 %v5704, %v5706
        %5835 = vmax.xlane.f32.xlu0 %v5834
        %v5836 = vpop.xlane.xlu0 %5835
        %v5837 = vmax.f32 %v5708, %v5710
        %5838 = vmax.xlane.f32.xlu0 %v5837
        %v5839 = vpop.xlane.xlu0 %5838
        %v5840 = vmax.f32 %v5714, %v5716
        %5841 = vmax.xlane.f32.xlu0 %v5840
        %v5842 = vpop.xlane.xlu0 %5841
        %v5843 = vmax.f32 %v5718, %v5720
        %5844 = vmax.xlane.f32.xlu0 %v5843
        %v5845 = vpop.xlane.xlu0 %5844
        %v5846 = vmax.f32 %v5724, %v5726
        %5847 = vmax.xlane.f32.xlu0 %v5846
        %v5848 = vpop.xlane.xlu0 %5847
        %v5849 = vmax.f32 %v5728, %v5730
        %5850 = vmax.xlane.f32.xlu0 %v5849
        %v5851 = vpop.xlane.xlu0 %5850
        %v5852 = vmax.f32 %v5734, %v5736
        %5853 = vmax.xlane.f32.xlu0 %v5852
        %v5854 = vpop.xlane.xlu0 %5853
        %v5855 = vmax.f32 %v5738, %v5740
        %5856 = vmax.xlane.f32.xlu0 %v5855
        %v5857 = vpop.xlane.xlu0 %5856
        %v5858 = vmax.f32 %v5744, %v5746
        %5859 = vmax.xlane.f32.xlu0 %v5858
        %v5860 = vpop.xlane.xlu0 %5859
        %v5861 = vmax.f32 %v5748, %v5750
        %5862 = vmax.xlane.f32.xlu0 %v5861
        %v5863 = vpop.xlane.xlu0 %5862
        %v5864 = vmax.f32 %v5754, %v5756
        %5865 = vmax.xlane.f32.xlu0 %v5864
        %v5866 = vpop.xlane.xlu0 %5865
        %v5867 = vmax.f32 %v5758, %v5760
        %5868 = vmax.xlane.f32.xlu0 %v5867
        %v5869 = vpop.xlane.xlu0 %5868
        %v5870 = vmax.f32 %v5764, %v5766
        %5871 = vmax.xlane.f32.xlu0 %v5870
        %v5872 = vpop.xlane.xlu0 %5871
        %v5873 = vmax.f32 %v5768, %v5770
        %5874 = vmax.xlane.f32.xlu0 %v5873
        %v5875 = vpop.xlane.xlu0 %5874
        %v5876 = vmax.f32 %v5774, %v5776
        %5877 = vmax.xlane.f32.xlu0 %v5876
        %v5878 = vpop.xlane.xlu0 %5877
        %v5879 = vmax.f32 %v5778, %v5780
        %5880 = vmax.xlane.f32.xlu0 %v5879
        %v5881 = vpop.xlane.xlu0 %5880
        %v5882 = vmax.f32 %v5784, %v5786
        %5883 = vmax.xlane.f32.xlu0 %v5882
        %v5884 = vpop.xlane.xlu0 %5883
        %v5885 = vmax.f32 %v5788, %v5790
        %5886 = vmax.xlane.f32.xlu0 %v5885
        %v5887 = vpop.xlane.xlu0 %5886
        %v5888 = vsub.f32 %v5634, %v5794
        %v5889 = vsub.f32 %v5636, %v5794
        %v5890 = vsub.f32 %v5638, %v5797
        %v5891 = vsub.f32 %v5640, %v5797
        %v5892 = vsub.f32 %v5644, %v5800
        %v5893 = vsub.f32 %v5646, %v5800
        %v5894 = vsub.f32 %v5648, %v5803
        %v5895 = vsub.f32 %v5650, %v5803
        %v5896 = vsub.f32 %v5654, %v5806
        %v5897 = vsub.f32 %v5656, %v5806
        %v5898 = vsub.f32 %v5658, %v5809
        %v5899 = vsub.f32 %v5660, %v5809
        %v5900 = vsub.f32 %v5664, %v5812
        %v5901 = vsub.f32 %v5666, %v5812
        %v5902 = vsub.f32 %v5668, %v5815
        %v5903 = vsub.f32 %v5670, %v5815
        %v5904 = vsub.f32 %v5674, %v5818
        %v5905 = vsub.f32 %v5676, %v5818
        %v5906 = vsub.f32 %v5678, %v5821
        %v5907 = vsub.f32 %v5680, %v5821
        %v5908 = vsub.f32 %v5684, %v5824
        %v5909 = vsub.f32 %v5686, %v5824
        %v5910 = vsub.f32 %v5688, %v5827
        %v5911 = vsub.f32 %v5690, %v5827
        %v5912 = vsub.f32 %v5694, %v5830
        %v5913 = vsub.f32 %v5696, %v5830
        %v5914 = vsub.f32 %v5698, %v5833
        %v5915 = vsub.f32 %v5700, %v5833
        %v5916 = vsub.f32 %v5704, %v5836
        %v5917 = vsub.f32 %v5706, %v5836
        %v5918 = vsub.f32 %v5708, %v5839
        %v5919 = vsub.f32 %v5710, %v5839
        %v5920 = vsub.f32 %v5714, %v5842
        %v5921 = vsub.f32 %v5716, %v5842
        %v5922 = vsub.f32 %v5718, %v5845
        %v5923 = vsub.f32 %v5720, %v5845
        %v5924 = vsub.f32 %v5724, %v5848
        %v5925 = vsub.f32 %v5726, %v5848
        %v5926 = vsub.f32 %v5728, %v5851
        %v5927 = vsub.f32 %v5730, %v5851
        %v5928 = vsub.f32 %v5734, %v5854
        %v5929 = vsub.f32 %v5736, %v5854
        %v5930 = vsub.f32 %v5738, %v5857
        %v5931 = vsub.f32 %v5740, %v5857
        %v5932 = vsub.f32 %v5744, %v5860
        %v5933 = vsub.f32 %v5746, %v5860
        %v5934 = vsub.f32 %v5748, %v5863
        %v5935 = vsub.f32 %v5750, %v5863
        %v5936 = vsub.f32 %v5754, %v5866
        %v5937 = vsub.f32 %v5756, %v5866
        %v5938 = vsub.f32 %v5758, %v5869
        %v5939 = vsub.f32 %v5760, %v5869
        %v5940 = vsub.f32 %v5764, %v5872
        %v5941 = vsub.f32 %v5766, %v5872
        %v5942 = vsub.f32 %v5768, %v5875
        %v5943 = vsub.f32 %v5770, %v5875
        %v5944 = vsub.f32 %v5774, %v5878
        %v5945 = vsub.f32 %v5776, %v5878
        %v5946 = vsub.f32 %v5778, %v5881
        %v5947 = vsub.f32 %v5780, %v5881
        %v5948 = vsub.f32 %v5784, %v5884
        %v5949 = vsub.f32 %v5786, %v5884
        %v5950 = vsub.f32 %v5788, %v5887
        %v5951 = vsub.f32 %v5790, %v5887
        %v5952 = vmul.f32 %v5888, 1.442695
        %v5953 = vpow.pop %v5952
        %v5954 = vmul.f32 %v5889, 1.442695
        %v5955 = vpow.pop %v5954
        %v5956 = vmul.f32 %v5890, 1.442695
        %v5957 = vpow.pop %v5956
        %v5958 = vmul.f32 %v5891, 1.442695
        %v5959 = vpow.pop %v5958
        %v5960 = vmul.f32 %v5892, 1.442695
        %v5961 = vpow.pop %v5960
        %v5962 = vmul.f32 %v5893, 1.442695
        %v5963 = vpow.pop %v5962
        %v5964 = vmul.f32 %v5894, 1.442695
        %v5965 = vpow.pop %v5964
        %v5966 = vmul.f32 %v5895, 1.442695
        %v5967 = vpow.pop %v5966
        %v5968 = vmul.f32 %v5896, 1.442695
        %v5969 = vpow.pop %v5968
        %v5970 = vmul.f32 %v5897, 1.442695
        %v5971 = vpow.pop %v5970
        %v5972 = vmul.f32 %v5898, 1.442695
        %v5973 = vpow.pop %v5972
        %v5974 = vmul.f32 %v5899, 1.442695
        %v5975 = vpow.pop %v5974
        %v5976 = vmul.f32 %v5900, 1.442695
        %v5977 = vpow.pop %v5976
        %v5978 = vmul.f32 %v5901, 1.442695
        %v5979 = vpow.pop %v5978
        %v5980 = vmul.f32 %v5902, 1.442695
        %v5981 = vpow.pop %v5980
        %v5982 = vmul.f32 %v5903, 1.442695
        %v5983 = vpow.pop %v5982
        %v5984 = vmul.f32 %v5904, 1.442695
        %v5985 = vpow.pop %v5984
        %v5986 = vmul.f32 %v5905, 1.442695
        %v5987 = vpow.pop %v5986
        %v5988 = vmul.f32 %v5906, 1.442695
        %v5989 = vpow.pop %v5988
        %v5990 = vmul.f32 %v5907, 1.442695
        %v5991 = vpow.pop %v5990
        %v5992 = vmul.f32 %v5908, 1.442695
        %v5993 = vpow.pop %v5992
        %v5994 = vmul.f32 %v5909, 1.442695
        %v5995 = vpow.pop %v5994
        %v5996 = vmul.f32 %v5910, 1.442695
        %v5997 = vpow.pop %v5996
        %v5998 = vmul.f32 %v5911, 1.442695
        %v5999 = vpow.pop %v5998
        %v6000 = vmul.f32 %v5912, 1.442695
        %v6001 = vpow.pop %v6000
        %v6002 = vmul.f32 %v5913, 1.442695
        %v6003 = vpow.pop %v6002
        %v6004 = vmul.f32 %v5914, 1.442695
        %v6005 = vpow.pop %v6004
        %v6006 = vmul.f32 %v5915, 1.442695
        %v6007 = vpow.pop %v6006
        %v6008 = vmul.f32 %v5916, 1.442695
        %v6009 = vpow.pop %v6008
        %v6010 = vmul.f32 %v5917, 1.442695
        %v6011 = vpow.pop %v6010
        %v6012 = vmul.f32 %v5918, 1.442695
        %v6013 = vpow.pop %v6012
        %v6014 = vmul.f32 %v5919, 1.442695
        %v6015 = vpow.pop %v6014
        %v6016 = vmul.f32 %v5920, 1.442695
        %v6017 = vpow.pop %v6016
        %v6018 = vmul.f32 %v5921, 1.442695
        %v6019 = vpow.pop %v6018
        %v6020 = vmul.f32 %v5922, 1.442695
        %v6021 = vpow.pop %v6020
        %v6022 = vmul.f32 %v5923, 1.442695
        %v6023 = vpow.pop %v6022
        %v6024 = vmul.f32 %v5924, 1.442695
        %v6025 = vpow.pop %v6024
        %v6026 = vmul.f32 %v5925, 1.442695
        %v6027 = vpow.pop %v6026
        %v6028 = vmul.f32 %v5926, 1.442695
        %v6029 = vpow.pop %v6028
        %v6030 = vmul.f32 %v5927, 1.442695
        %v6031 = vpow.pop %v6030
        %v6032 = vmul.f32 %v5928, 1.442695
        %v6033 = vpow.pop %v6032
        %v6034 = vmul.f32 %v5929, 1.442695
        %v6035 = vpow.pop %v6034
        %v6036 = vmul.f32 %v5930, 1.442695
        %v6037 = vpow.pop %v6036
        %v6038 = vmul.f32 %v5931, 1.442695
        %v6039 = vpow.pop %v6038
        %v6040 = vmul.f32 %v5932, 1.442695
        %v6041 = vpow.pop %v6040
        %v6042 = vmul.f32 %v5933, 1.442695
        %v6043 = vpow.pop %v6042
        %v6044 = vmul.f32 %v5934, 1.442695
        %v6045 = vpow.pop %v6044
        %v6046 = vmul.f32 %v5935, 1.442695
        %v6047 = vpow.pop %v6046
        %v6048 = vmul.f32 %v5936, 1.442695
        %v6049 = vpow.pop %v6048
        %v6050 = vmul.f32 %v5937, 1.442695
        %v6051 = vpow.pop %v6050
        %v6052 = vmul.f32 %v5938, 1.442695
        %v6053 = vpow.pop %v6052
        %v6054 = vmul.f32 %v5939, 1.442695
        %v6055 = vpow.pop %v6054
        %v6056 = vmul.f32 %v5940, 1.442695
        %v6057 = vpow.pop %v6056
        %v6058 = vmul.f32 %v5941, 1.442695
        %v6059 = vpow.pop %v6058
        %v6060 = vmul.f32 %v5942, 1.442695
        %v6061 = vpow.pop %v6060
        %v6062 = vmul.f32 %v5943, 1.442695
        %v6063 = vpow.pop %v6062
        %v6064 = vmul.f32 %v5944, 1.442695
        %v6065 = vpow.pop %v6064
        %v6066 = vmul.f32 %v5945, 1.442695
        %v6067 = vpow.pop %v6066
        %v6068 = vmul.f32 %v5946, 1.442695
        %v6069 = vpow.pop %v6068
        %v6070 = vmul.f32 %v5947, 1.442695
        %v6071 = vpow.pop %v6070
        %v6072 = vmul.f32 %v5948, 1.442695
        %v6073 = vpow.pop %v6072
        %v6074 = vmul.f32 %v5949, 1.442695
        %v6075 = vpow.pop %v6074
        %v6076 = vmul.f32 %v5950, 1.442695
        %v6077 = vpow.pop %v6076
        %v6078 = vmul.f32 %v5951, 1.442695
        %v6079 = vpow.pop %v6078
        %v6080 = vadd.f32 %v5953, %v5955
        %6081 = vadd.xlane.f32.xlu0 %v6080
        %v6082 = vpop.xlane.xlu0 %6081
        %v6083 = vadd.f32 %v5957, %v5959
        %6084 = vadd.xlane.f32.xlu0 %v6083
        %v6085 = vpop.xlane.xlu0 %6084
        %v6086 = vadd.f32 %v5961, %v5963
        %6087 = vadd.xlane.f32.xlu0 %v6086
        %v6088 = vpop.xlane.xlu0 %6087
        %v6089 = vadd.f32 %v5965, %v5967
        %6090 = vadd.xlane.f32.xlu0 %v6089
        %v6091 = vpop.xlane.xlu0 %6090
        %v6092 = vadd.f32 %v5969, %v5971
        %6093 = vadd.xlane.f32.xlu0 %v6092
        %v6094 = vpop.xlane.xlu0 %6093
        %v6095 = vadd.f32 %v5973, %v5975
        %6096 = vadd.xlane.f32.xlu0 %v6095
        %v6097 = vpop.xlane.xlu0 %6096
        %v6098 = vadd.f32 %v5977, %v5979
        %6099 = vadd.xlane.f32.xlu0 %v6098
        %v6100 = vpop.xlane.xlu0 %6099
        %v6101 = vadd.f32 %v5981, %v5983
        %6102 = vadd.xlane.f32.xlu0 %v6101
        %v6103 = vpop.xlane.xlu0 %6102
        %v6104 = vadd.f32 %v5985, %v5987
        %6105 = vadd.xlane.f32.xlu0 %v6104
        %v6106 = vpop.xlane.xlu0 %6105
        %v6107 = vadd.f32 %v5989, %v5991
        %6108 = vadd.xlane.f32.xlu0 %v6107
        %v6109 = vpop.xlane.xlu0 %6108
        %v6110 = vadd.f32 %v5993, %v5995
        %6111 = vadd.xlane.f32.xlu0 %v6110
        %v6112 = vpop.xlane.xlu0 %6111
        %v6113 = vadd.f32 %v5997, %v5999
        %6114 = vadd.xlane.f32.xlu0 %v6113
        %v6115 = vpop.xlane.xlu0 %6114
        %v6116 = vadd.f32 %v6001, %v6003
        %6117 = vadd.xlane.f32.xlu0 %v6116
        %v6118 = vpop.xlane.xlu0 %6117
        %v6119 = vadd.f32 %v6005, %v6007
        %6120 = vadd.xlane.f32.xlu0 %v6119
        %v6121 = vpop.xlane.xlu0 %6120
        %v6122 = vadd.f32 %v6009, %v6011
        %6123 = vadd.xlane.f32.xlu0 %v6122
        %v6124 = vpop.xlane.xlu0 %6123
        %v6125 = vadd.f32 %v6013, %v6015
        %6126 = vadd.xlane.f32.xlu0 %v6125
        %v6127 = vpop.xlane.xlu0 %6126
        %v6128 = vadd.f32 %v6017, %v6019
        %6129 = vadd.xlane.f32.xlu0 %v6128
        %v6130 = vpop.xlane.xlu0 %6129
        %v6131 = vadd.f32 %v6021, %v6023
        %6132 = vadd.xlane.f32.xlu0 %v6131
        %v6133 = vpop.xlane.xlu0 %6132
        %v6134 = vadd.f32 %v6025, %v6027
        %6135 = vadd.xlane.f32.xlu0 %v6134
        %v6136 = vpop.xlane.xlu0 %6135
        %v6137 = vadd.f32 %v6029, %v6031
        %6138 = vadd.xlane.f32.xlu0 %v6137
        %v6139 = vpop.xlane.xlu0 %6138
        %v6140 = vadd.f32 %v6033, %v6035
        %6141 = vadd.xlane.f32.xlu0 %v6140
        %v6142 = vpop.xlane.xlu0 %6141
        %v6143 = vadd.f32 %v6037, %v6039
        %6144 = vadd.xlane.f32.xlu0 %v6143
        %v6145 = vpop.xlane.xlu0 %6144
        %v6146 = vadd.f32 %v6041, %v6043
        %6147 = vadd.xlane.f32.xlu0 %v6146
        %v6148 = vpop.xlane.xlu0 %6147
        %v6149 = vadd.f32 %v6045, %v6047
        %6150 = vadd.xlane.f32.xlu0 %v6149
        %v6151 = vpop.xlane.xlu0 %6150
        %v6152 = vadd.f32 %v6049, %v6051
        %6153 = vadd.xlane.f32.xlu0 %v6152
        %v6154 = vpop.xlane.xlu0 %6153
        %v6155 = vadd.f32 %v6053, %v6055
        %6156 = vadd.xlane.f32.xlu0 %v6155
        %v6157 = vpop.xlane.xlu0 %6156
        %v6158 = vadd.f32 %v6057, %v6059
        %6159 = vadd.xlane.f32.xlu0 %v6158
        %v6160 = vpop.xlane.xlu0 %6159
        %v6161 = vadd.f32 %v6061, %v6063
        %6162 = vadd.xlane.f32.xlu0 %v6161
        %v6163 = vpop.xlane.xlu0 %6162
        %v6164 = vadd.f32 %v6065, %v6067
        %6165 = vadd.xlane.f32.xlu0 %v6164
        %v6166 = vpop.xlane.xlu0 %6165
        %v6167 = vadd.f32 %v6069, %v6071
        %6168 = vadd.xlane.f32.xlu0 %v6167
        %v6169 = vpop.xlane.xlu0 %6168
        %v6170 = vadd.f32 %v6073, %v6075
        %6171 = vadd.xlane.f32.xlu0 %v6170
        %v6172 = vpop.xlane.xlu0 %6171
        %v6173 = vadd.f32 %v6077, %v6079
        %6174 = vadd.xlane.f32.xlu0 %v6173
        %v6175 = vpop.xlane.xlu0 %6174
        %v6176 = vrcp.pop %v6082
        %v6177 = vrcp.pop %v6085
        %v6178 = vrcp.pop %v6088
        %v6179 = vrcp.pop %v6091
        %v6180 = vrcp.pop %v6094
        %v6181 = vrcp.pop %v6097
        %v6182 = vrcp.pop %v6100
        %v6183 = vrcp.pop %v6103
        %v6184 = vrcp.pop %v6106
        %v6185 = vrcp.pop %v6109
        %v6186 = vrcp.pop %v6112
        %v6187 = vrcp.pop %v6115
        %v6188 = vrcp.pop %v6118
        %v6189 = vrcp.pop %v6121
        %v6190 = vrcp.pop %v6124
        %v6191 = vrcp.pop %v6127
        %v6192 = vrcp.pop %v6130
        %v6193 = vrcp.pop %v6133
        %v6194 = vrcp.pop %v6136
        %v6195 = vrcp.pop %v6139
        %v6196 = vrcp.pop %v6142
        %v6197 = vrcp.pop %v6145
        %v6198 = vrcp.pop %v6148
        %v6199 = vrcp.pop %v6151
        %v6200 = vrcp.pop %v6154
        %v6201 = vrcp.pop %v6157
        %v6202 = vrcp.pop %v6160
        %v6203 = vrcp.pop %v6163
        %v6204 = vrcp.pop %v6166
        %v6205 = vrcp.pop %v6169
        %v6206 = vrcp.pop %v6172
        %v6207 = vrcp.pop %v6175
        %v6208 = vmul.f32 %v5953, %v6176
        %v6209 = vmul.f32 %v5955, %v6176
        %v6210 = vmul.f32 %v5957, %v6177
        %v6211 = vmul.f32 %v5959, %v6177
        %v6212 = vmul.f32 %v5961, %v6178
        %v6213 = vmul.f32 %v5963, %v6178
        %v6214 = vmul.f32 %v5965, %v6179
        %v6215 = vmul.f32 %v5967, %v6179
        %v6216 = vmul.f32 %v5969, %v6180
        %v6217 = vmul.f32 %v5971, %v6180
        %v6218 = vmul.f32 %v5973, %v6181
        %v6219 = vmul.f32 %v5975, %v6181
        %v6220 = vmul.f32 %v5977, %v6182
        %v6221 = vmul.f32 %v5979, %v6182
        %v6222 = vmul.f32 %v5981, %v6183
        %v6223 = vmul.f32 %v5983, %v6183
        %v6224 = vmul.f32 %v5985, %v6184
        %v6225 = vmul.f32 %v5987, %v6184
        %v6226 = vmul.f32 %v5989, %v6185
        %v6227 = vmul.f32 %v5991, %v6185
        %v6228 = vmul.f32 %v5993, %v6186
        %v6229 = vmul.f32 %v5995, %v6186
        %v6230 = vmul.f32 %v5997, %v6187
        %v6231 = vmul.f32 %v5999, %v6187
        %v6232 = vmul.f32 %v6001, %v6188
        %v6233 = vmul.f32 %v6003, %v6188
        %v6234 = vmul.f32 %v6005, %v6189
        %v6235 = vmul.f32 %v6007, %v6189
        %v6236 = vmul.f32 %v6009, %v6190
        %v6237 = vmul.f32 %v6011, %v6190
        %v6238 = vmul.f32 %v6013, %v6191
        %v6239 = vmul.f32 %v6015, %v6191
        %v6240 = vmul.f32 %v6017, %v6192
        %v6241 = vmul.f32 %v6019, %v6192
        %v6242 = vmul.f32 %v6021, %v6193
        %v6243 = vmul.f32 %v6023, %v6193
        %v6244 = vmul.f32 %v6025, %v6194
        %v6245 = vmul.f32 %v6027, %v6194
        %v6246 = vmul.f32 %v6029, %v6195
        %v6247 = vmul.f32 %v6031, %v6195
        %v6248 = vmul.f32 %v6033, %v6196
        %v6249 = vmul.f32 %v6035, %v6196
        %v6250 = vmul.f32 %v6037, %v6197
        %v6251 = vmul.f32 %v6039, %v6197
        %v6252 = vmul.f32 %v6041, %v6198
        %v6253 = vmul.f32 %v6043, %v6198
        %v6254 = vmul.f32 %v6045, %v6199
        %v6255 = vmul.f32 %v6047, %v6199
        %v6256 = vmul.f32 %v6049, %v6200
        %v6257 = vmul.f32 %v6051, %v6200
        %v6258 = vmul.f32 %v6053, %v6201
        %v6259 = vmul.f32 %v6055, %v6201
        %v6260 = vmul.f32 %v6057, %v6202
        %v6261 = vmul.f32 %v6059, %v6202
        %v6262 = vmul.f32 %v6061, %v6203
        %v6263 = vmul.f32 %v6063, %v6203
        %v6264 = vmul.f32 %v6065, %v6204
        %v6265 = vmul.f32 %v6067, %v6204
        %v6266 = vmul.f32 %v6069, %v6205
        %v6267 = vmul.f32 %v6071, %v6205
        %v6268 = vmul.f32 %v6073, %v6206
        %v6269 = vmul.f32 %v6075, %v6206
        %v6270 = vmul.f32 %v6077, %v6207
        %v6271 = vmul.f32 %v6079, %v6207
        %v6272 = vpack.c.bf16 %v6210, %v6208
        %v6273 = vpack.c.bf16 %v6211, %v6209
        %v6274 = vpack.c.bf16 %v6214, %v6212
        %v6275 = vpack.c.bf16 %v6215, %v6213
        %v6276 = vpack.c.bf16 %v6218, %v6216
        %v6277 = vpack.c.bf16 %v6219, %v6217
        %v6278 = vpack.c.bf16 %v6222, %v6220
        %v6279 = vpack.c.bf16 %v6223, %v6221
        %v6280 = vpack.c.bf16 %v6226, %v6224
        %v6281 = vpack.c.bf16 %v6227, %v6225
        %v6282 = vpack.c.bf16 %v6230, %v6228
        %v6283 = vpack.c.bf16 %v6231, %v6229
        %v6284 = vpack.c.bf16 %v6234, %v6232
        %v6285 = vpack.c.bf16 %v6235, %v6233
        %v6286 = vpack.c.bf16 %v6238, %v6236
        %v6287 = vpack.c.bf16 %v6239, %v6237
        %v6288 = vpack.c.bf16 %v6242, %v6240
        %v6289 = vpack.c.bf16 %v6243, %v6241
        %v6290 = vpack.c.bf16 %v6246, %v6244
        %v6291 = vpack.c.bf16 %v6247, %v6245
        %v6292 = vpack.c.bf16 %v6250, %v6248
        %v6293 = vpack.c.bf16 %v6251, %v6249
        %v6294 = vpack.c.bf16 %v6254, %v6252
        %v6295 = vpack.c.bf16 %v6255, %v6253
        %v6296 = vpack.c.bf16 %v6258, %v6256
        %v6297 = vpack.c.bf16 %v6259, %v6257
        %v6298 = vpack.c.bf16 %v6262, %v6260
        %v6299 = vpack.c.bf16 %v6263, %v6261
        %v6300 = vpack.c.bf16 %v6266, %v6264
        %v6301 = vpack.c.bf16 %v6267, %v6265
        %v6302 = vpack.c.bf16 %v6270, %v6268
        %v6303 = vpack.c.bf16 %v6271, %v6269
        %v6304 = vpack.c.bf16 %v5444, %v5441
        %v6305 = vpack.c.bf16 %v5452, %v5449
        %v6306 = vpack.c.bf16 %v5460, %v5457
        %v6307 = vpack.c.bf16 %v5468, %v5465
        %v6308 = vpack.c.bf16 %v5476, %v5473
        %v6309 = vpack.c.bf16 %v5484, %v5481
        %v6310 = vpack.c.bf16 %v5492, %v5489
        %v6311 = vpack.c.bf16 %v5500, %v5497
        %v6312 = vpack.c.bf16 %v5508, %v5505
        %v6313 = vpack.c.bf16 %v5516, %v5513
        %v6314 = vpack.c.bf16 %v5524, %v5521
        %v6315 = vpack.c.bf16 %v5532, %v5529
        %v6316 = vpack.c.bf16 %v5540, %v5537
        %v6317 = vpack.c.bf16 %v5548, %v5545
        %v6318 = vpack.c.bf16 %v5556, %v5553
        %v6319 = vpack.c.bf16 %v5564, %v5561
        %6320 = vmatprep.subr.bf16.mxu0 0
        %6321 = vmatpush1.bf16.msra.mxu0 %v6304
        %6322 = vmatprep.subr.bf16.mxu0 0
        %6323 = vmatpush1.bf16.msra.mxu0 %v6305
        %6324 = vmatprep.subr.bf16.mxu0 0
        %6325 = vmatpush1.bf16.msra.mxu0 %v6306
        %6326 = vmatprep.subr.bf16.mxu0 0
        %6327 = vmatpush1.bf16.msra.mxu0 %v6307
        %6328 = vmatprep.subr.bf16.mxu0 0
        %6329 = vmatpush1.bf16.msra.mxu0 %v6308
        %6330 = vmatprep.subr.bf16.mxu0 0
        %6331 = vmatpush1.bf16.msra.mxu0 %v6309
        %6332 = vmatprep.subr.bf16.mxu0 0
        %6333 = vmatpush1.bf16.msra.mxu0 %v6310
        %6334 = vmatprep.subr.bf16.mxu0 0
        %6335 = vmatpush1.bf16.msra.mxu0 %v6311
        %6336 = vmatprep.subr.bf16.mxu0 0
        %6337 = vmatpush1.bf16.msra.mxu0 %v6312
        %6338 = vmatprep.subr.bf16.mxu0 0
        %6339 = vmatpush1.bf16.msra.mxu0 %v6313
        %6340 = vmatprep.subr.bf16.mxu0 0
        %6341 = vmatpush1.bf16.msra.mxu0 %v6314
        %6342 = vmatprep.subr.bf16.mxu0 0
        %6343 = vmatpush1.bf16.msra.mxu0 %v6315
        %6344 = vmatprep.subr.bf16.mxu0 0
        %6345 = vmatpush1.bf16.msra.mxu0 %v6316
        %6346 = vmatprep.subr.bf16.mxu0 0
        %6347 = vmatpush1.bf16.msra.mxu0 %v6317
        %6348 = vmatprep.subr.bf16.mxu0 0
        %6349 = vmatpush1.bf16.msra.mxu0 %v6318
        %6350 = vmatprep.subr.bf16.mxu0 0
        %6351 = vmatpush1.bf16.msra.mxu0 %v6319
        %6352 = vmatprep.mubr.bf16.mxu0 %v6273
        %6353 = vmatmul.mubr.bf16.gmra.mrb[0].mxu0 %v6272
        %v6354 = vpop.f32.mrb[0].mxu0
        %v6355 = vadd.f32 0.0, %v6354
        %v6356 = vpop.f32.mrb[0].mxu0
        %v6357 = vpop.f32.mrb[0].mxu0
        %v6358 = vadd.f32 0.0, %v6357
        %v6359 = vpop.f32.mrb[0].mxu0
        %6360 = vmatprep.mubr.bf16.mxu0 %v6275
        %6361 = vmatmul.mubr.bf16.gmra.mrb[0].mxu0 %v6274
        %v6362 = vpop.f32.mrb[0].mxu0
        %v6363 = vadd.f32 0.0, %v6362
        %v6364 = vpop.f32.mrb[0].mxu0
        %v6365 = vpop.f32.mrb[0].mxu0
        %v6366 = vadd.f32 0.0, %v6365
        %v6367 = vpop.f32.mrb[0].mxu0
        %6368 = vmatprep.mubr.bf16.mxu0 %v6277
        %6369 = vmatmul.mubr.bf16.gmra.mrb[0].mxu0 %v6276
        %v6370 = vpop.f32.mrb[0].mxu0
        %v6371 = vadd.f32 0.0, %v6370
        %v6372 = vpop.f32.mrb[0].mxu0
        %v6373 = vpop.f32.mrb[0].mxu0
        %v6374 = vadd.f32 0.0, %v6373
        %v6375 = vpop.f32.mrb[0].mxu0
        %6376 = vmatprep.mubr.bf16.mxu0 %v6279
        %6377 = vmatmul.mubr.bf16.gmra.mrb[0].mxu0 %v6278
        %v6378 = vpop.f32.mrb[0].mxu0
        %v6379 = vadd.f32 0.0, %v6378
        %v6380 = vpop.f32.mrb[0].mxu0
        %v6381 = vpop.f32.mrb[0].mxu0
        %v6382 = vadd.f32 0.0, %v6381
        %v6383 = vpop.f32.mrb[0].mxu0
        %6384 = vmatprep.mubr.bf16.mxu0 %v6281
        %6385 = vmatmul.mubr.bf16.gmra.mrb[0].mxu0 %v6280
        %v6386 = vpop.f32.mrb[0].mxu0
        %v6387 = vadd.f32 0.0, %v6386
        %v6388 = vpop.f32.mrb[0].mxu0
        %v6389 = vpop.f32.mrb[0].mxu0
        %v6390 = vadd.f32 0.0, %v6389
        %v6391 = vpop.f32.mrb[0].mxu0
        %6392 = vmatprep.mubr.bf16.mxu0 %v6283
        %6393 = vmatmul.mubr.bf16.gmra.mrb[0].mxu0 %v6282
        %v6394 = vpop.f32.mrb[0].mxu0
        %v6395 = vadd.f32 0.0, %v6394
        %v6396 = vpop.f32.mrb[0].mxu0
        %v6397 = vpop.f32.mrb[0].mxu0
        %v6398 = vadd.f32 0.0, %v6397
        %v6399 = vpop.f32.mrb[0].mxu0
        %6400 = vmatprep.mubr.bf16.mxu0 %v6285
        %6401 = vmatmul.mubr.bf16.gmra.mrb[0].mxu0 %v6284
        %v6402 = vpop.f32.mrb[0].mxu0
        %v6403 = vadd.f32 0.0, %v6402
        %v6404 = vpop.f32.mrb[0].mxu0
        %v6405 = vpop.f32.mrb[0].mxu0
        %v6406 = vadd.f32 0.0, %v6405
        %v6407 = vpop.f32.mrb[0].mxu0
        %6408 = vmatprep.mubr.bf16.mxu0 %v6287
        %6409 = vmatmul.mubr.bf16.gmra.mrb[0].mxu0 %v6286
        %v6410 = vpop.f32.mrb[0].mxu0
        %v6411 = vadd.f32 0.0, %v6410
        %v6412 = vpop.f32.mrb[0].mxu0
        %v6413 = vpop.f32.mrb[0].mxu0
        %v6414 = vadd.f32 0.0, %v6413
        %v6415 = vpop.f32.mrb[0].mxu0
        %6416 = vmatprep.mubr.bf16.mxu0 %v6289
        %6417 = vmatmul.mubr.bf16.gmra.mrb[0].mxu0 %v6288
        %v6418 = vpop.f32.mrb[0].mxu0
        %v6419 = vadd.f32 0.0, %v6418
        %v6420 = vpop.f32.mrb[0].mxu0
        %v6421 = vpop.f32.mrb[0].mxu0
        %v6422 = vadd.f32 0.0, %v6421
        %v6423 = vpop.f32.mrb[0].mxu0
        %6424 = vmatprep.mubr.bf16.mxu0 %v6291
        %6425 = vmatmul.mubr.bf16.gmra.mrb[0].mxu0 %v6290
        %v6426 = vpop.f32.mrb[0].mxu0
        %v6427 = vadd.f32 0.0, %v6426
        %v6428 = vpop.f32.mrb[0].mxu0
        %v6429 = vpop.f32.mrb[0].mxu0
        %v6430 = vadd.f32 0.0, %v6429
        %v6431 = vpop.f32.mrb[0].mxu0
        %6432 = vmatprep.mubr.bf16.mxu0 %v6293
        %6433 = vmatmul.mubr.bf16.gmra.mrb[0].mxu0 %v6292
        %v6434 = vpop.f32.mrb[0].mxu0
        %v6435 = vadd.f32 0.0, %v6434
        %v6436 = vpop.f32.mrb[0].mxu0
        %v6437 = vpop.f32.mrb[0].mxu0
        %v6438 = vadd.f32 0.0, %v6437
        %v6439 = vpop.f32.mrb[0].mxu0
        %6440 = vmatprep.mubr.bf16.mxu0 %v6295
        %6441 = vmatmul.mubr.bf16.gmra.mrb[0].mxu0 %v6294
        %v6442 = vpop.f32.mrb[0].mxu0
        %v6443 = vadd.f32 0.0, %v6442
        %v6444 = vpop.f32.mrb[0].mxu0
        %v6445 = vpop.f32.mrb[0].mxu0
        %v6446 = vadd.f32 0.0, %v6445
        %v6447 = vpop.f32.mrb[0].mxu0
        %6448 = vmatprep.mubr.bf16.mxu0 %v6297
        %6449 = vmatmul.mubr.bf16.gmra.mrb[0].mxu0 %v6296
        %v6450 = vpop.f32.mrb[0].mxu0
        %v6451 = vadd.f32 0.0, %v6450
        %v6452 = vpop.f32.mrb[0].mxu0
        %v6453 = vpop.f32.mrb[0].mxu0
        %v6454 = vadd.f32 0.0, %v6453
        %v6455 = vpop.f32.mrb[0].mxu0
        %6456 = vmatprep.mubr.bf16.mxu0 %v6299
        %6457 = vmatmul.mubr.bf16.gmra.mrb[0].mxu0 %v6298
        %v6458 = vpop.f32.mrb[0].mxu0
        %v6459 = vadd.f32 0.0, %v6458
        %v6460 = vpop.f32.mrb[0].mxu0
        %v6461 = vpop.f32.mrb[0].mxu0
        %v6462 = vadd.f32 0.0, %v6461
        %v6463 = vpop.f32.mrb[0].mxu0
        %6464 = vmatprep.mubr.bf16.mxu0 %v6301
        %6465 = vmatmul.mubr.bf16.gmra.mrb[0].mxu0 %v6300
        %v6466 = vpop.f32.mrb[0].mxu0
        %v6467 = vadd.f32 0.0, %v6466
        %v6468 = vpop.f32.mrb[0].mxu0
        %v6469 = vpop.f32.mrb[0].mxu0
        %v6470 = vadd.f32 0.0, %v6469
        %v6471 = vpop.f32.mrb[0].mxu0
        %6472 = vmatprep.mubr.bf16.mxu0 %v6303
        %6473 = vmatmul.mubr.bf16.gmra.mrb[0].mxu0 %v6302
        %v6474 = vpop.f32.mrb[0].mxu0
        %v6475 = vadd.f32 0.0, %v6474
        %v6476 = vpop.f32.mrb[0].mxu0
        %v6477 = vpop.f32.mrb[0].mxu0
        %v6478 = vadd.f32 0.0, %v6477
        %v6479 = vpop.f32.mrb[0].mxu0
        %6480 = vdwg.mxu0
        %v6481 = vstv %s5019
        %v6482 = vmul.f32 %v6481, %v6355
        %v6483 = vmul.f32 %v6481, %v6358
        %v6484 = vmul.f32 %v6481, %v6363
        %v6485 = vmul.f32 %v6481, %v6366
        %v6486 = vmul.f32 %v6481, %v6371
        %v6487 = vmul.f32 %v6481, %v6374
        %v6488 = vmul.f32 %v6481, %v6379
        %v6489 = vmul.f32 %v6481, %v6382
        %v6490 = vmul.f32 %v6481, %v6387
        %v6491 = vmul.f32 %v6481, %v6390
        %v6492 = vmul.f32 %v6481, %v6395
        %v6493 = vmul.f32 %v6481, %v6398
        %v6494 = vmul.f32 %v6481, %v6403
        %v6495 = vmul.f32 %v6481, %v6406
        %v6496 = vmul.f32 %v6481, %v6411
        %v6497 = vmul.f32 %v6481, %v6414
        %v6498 = vmul.f32 %v6481, %v6419
        %v6499 = vmul.f32 %v6481, %v6422
        %v6500 = vmul.f32 %v6481, %v6427
        %v6501 = vmul.f32 %v6481, %v6430
        %v6502 = vmul.f32 %v6481, %v6435
        %v6503 = vmul.f32 %v6481, %v6438
        %v6504 = vmul.f32 %v6481, %v6443
        %v6505 = vmul.f32 %v6481, %v6446
        %v6506 = vmul.f32 %v6481, %v6451
        %v6507 = vmul.f32 %v6481, %v6454
        %v6508 = vmul.f32 %v6481, %v6459
        %v6509 = vmul.f32 %v6481, %v6462
        %v6510 = vmul.f32 %v6481, %v6467
        %v6511 = vmul.f32 %v6481, %v6470
        %v6512 = vmul.f32 %v6481, %v6475
        %v6513 = vmul.f32 %v6481, %v6478
        %v6514 = vadd.f32 %v6482, %v4987
        %v6515 = vadd.f32 %v6483, %v4988
        %v6516 = vadd.f32 %v6484, %v4989
        %v6517 = vadd.f32 %v6485, %v4990
        %v6518 = vadd.f32 %v6486, %v4991
        %v6519 = vadd.f32 %v6487, %v4992
        %v6520 = vadd.f32 %v6488, %v4993
        %v6521 = vadd.f32 %v6489, %v4994
        %v6522 = vadd.f32 %v6490, %v4995
        %v6523 = vadd.f32 %v6491, %v4996
        %v6524 = vadd.f32 %v6492, %v4997
        %v6525 = vadd.f32 %v6493, %v4998
        %v6526 = vadd.f32 %v6494, %v4999
        %v6527 = vadd.f32 %v6495, %v5000
        %v6528 = vadd.f32 %v6496, %v5001
        %v6529 = vadd.f32 %v6497, %v5002
        %v6530 = vadd.f32 %v6498, %v5003
        %v6531 = vadd.f32 %v6499, %v5004
        %v6532 = vadd.f32 %v6500, %v5005
        %v6533 = vadd.f32 %v6501, %v5006
        %v6534 = vadd.f32 %v6502, %v5007
        %v6535 = vadd.f32 %v6503, %v5008
        %v6536 = vadd.f32 %v6504, %v5009
        %v6537 = vadd.f32 %v6505, %v5010
        %v6538 = vadd.f32 %v6506, %v5011
        %v6539 = vadd.f32 %v6507, %v5012
        %v6540 = vadd.f32 %v6508, %v5013
        %v6541 = vadd.f32 %v6509, %v5014
        %v6542 = vadd.f32 %v6510, %v5015
        %v6543 = vadd.f32 %v6511, %v5016
        %v6544 = vadd.f32 %v6512, %v5017
        %v6545 = vadd.f32 %v6513, %v5018
        %v6546 = vpack.c.bf16 %v6515, %v6514
        %v6547 = vpack.c.bf16 %v6517, %v6516
        %v6548 = vpack.c.bf16 %v6519, %v6518
        %v6549 = vpack.c.bf16 %v6521, %v6520
        %v6550 = vpack.c.bf16 %v6523, %v6522
        %v6551 = vpack.c.bf16 %v6525, %v6524
        %v6552 = vpack.c.bf16 %v6527, %v6526
        %v6553 = vpack.c.bf16 %v6529, %v6528
        %v6554 = vpack.c.bf16 %v6531, %v6530
        %v6555 = vpack.c.bf16 %v6533, %v6532
        %v6556 = vpack.c.bf16 %v6535, %v6534
        %v6557 = vpack.c.bf16 %v6537, %v6536
        %v6558 = vpack.c.bf16 %v6539, %v6538
        %v6559 = vpack.c.bf16 %v6541, %v6540
        %v6560 = vpack.c.bf16 %v6543, %v6542
        %v6561 = vpack.c.bf16 %v6545, %v6544
        %v6562 = vld [vmem:[%s17] sm:$0xff]
        %v6563 = vld [vmem:[%s17 + $0x8] sm:$0xff]
        %v6564 = vld [vmem:[%s17 + $0x10] sm:$0xff]
        %v6565 = vld [vmem:[%s17 + $0x18] sm:$0xff]
        %v6566 = vld [vmem:[%s17 + $0x20] sm:$0xff]
        %v6567 = vld [vmem:[%s17 + $0x28] sm:$0xff]
        %v6568 = vld [vmem:[%s17 + $0x30] sm:$0xff]
        %v6569 = vld [vmem:[%s17 + $0x38] sm:$0xff]
        %v6570 = vld [vmem:[%s17 + $0x40] sm:$0xff]
        %v6571 = vld [vmem:[%s17 + $0x48] sm:$0xff]
        %v6572 = vld [vmem:[%s17 + $0x50] sm:$0xff]
        %v6573 = vld [vmem:[%s17 + $0x58] sm:$0xff]
        %v6574 = vld [vmem:[%s17 + $0x60] sm:$0xff]
        %v6575 = vld [vmem:[%s17 + $0x68] sm:$0xff]
        %v6576 = vld [vmem:[%s17 + $0x70] sm:$0xff]
        %v6577 = vld [vmem:[%s17 + $0x78] sm:$0xff]
        %v6578 = vld [vmem:[%s17 + $0x80] sm:$0xff]
        %v6579 = vld [vmem:[%s17 + $0x88] sm:$0xff]
        %v6580 = vld [vmem:[%s17 + $0x90] sm:$0xff]
        %v6581 = vld [vmem:[%s17 + $0x98] sm:$0xff]
        %v6582 = vld [vmem:[%s17 + $0xa0] sm:$0xff]
        %v6583 = vld [vmem:[%s17 + $0xa8] sm:$0xff]
        %v6584 = vld [vmem:[%s17 + $0xb0] sm:$0xff]
        %v6585 = vld [vmem:[%s17 + $0xb8] sm:$0xff]
        %v6586 = vld [vmem:[%s17 + $0xc0] sm:$0xff]
        %v6587 = vld [vmem:[%s17 + $0xc8] sm:$0xff]
        %v6588 = vld [vmem:[%s17 + $0xd0] sm:$0xff]
        %v6589 = vld [vmem:[%s17 + $0xd8] sm:$0xff]
        %v6590 = vld [vmem:[%s17 + $0xe0] sm:$0xff]
        %v6591 = vld [vmem:[%s17 + $0xe8] sm:$0xff]
        %v6592 = vld [vmem:[%s17 + $0xf0] sm:$0xff]
        %v6593 = vld [vmem:[%s17 + $0xf8] sm:$0xff]
        %v6626 = vunpack.c.l.b16 %v6562
        %v6627 = vunpack.c.h.b16 %v6562
        %v6628 = vunpack.c.l.b16 %v6563
        %v6629 = vunpack.c.h.b16 %v6563
        %v6630 = vunpack.c.l.b16 %v6564
        %v6631 = vunpack.c.h.b16 %v6564
        %v6632 = vunpack.c.l.b16 %v6565
        %v6633 = vunpack.c.h.b16 %v6565
        %v6634 = vunpack.c.l.b16 %v6566
        %v6635 = vunpack.c.h.b16 %v6566
        %v6636 = vunpack.c.l.b16 %v6567
        %v6637 = vunpack.c.h.b16 %v6567
        %v6638 = vunpack.c.l.b16 %v6568
        %v6639 = vunpack.c.h.b16 %v6568
        %v6640 = vunpack.c.l.b16 %v6569
        %v6641 = vunpack.c.h.b16 %v6569
        %v6642 = vunpack.c.l.b16 %v6570
        %v6643 = vunpack.c.h.b16 %v6570
        %v6644 = vunpack.c.l.b16 %v6571
        %v6645 = vunpack.c.h.b16 %v6571
        %v6646 = vunpack.c.l.b16 %v6572
        %v6647 = vunpack.c.h.b16 %v6572
        %v6648 = vunpack.c.l.b16 %v6573
        %v6649 = vunpack.c.h.b16 %v6573
        %v6650 = vunpack.c.l.b16 %v6574
        %v6651 = vunpack.c.h.b16 %v6574
        %v6652 = vunpack.c.l.b16 %v6575
        %v6653 = vunpack.c.h.b16 %v6575
        %v6654 = vunpack.c.l.b16 %v6576
        %v6655 = vunpack.c.h.b16 %v6576
        %v6656 = vunpack.c.l.b16 %v6577
        %v6657 = vunpack.c.h.b16 %v6577
        %v6658 = vunpack.c.l.b16 %v6578
        %v6659 = vunpack.c.h.b16 %v6578
        %v6660 = vunpack.c.l.b16 %v6579
        %v6661 = vunpack.c.h.b16 %v6579
        %v6662 = vunpack.c.l.b16 %v6580
        %v6663 = vunpack.c.h.b16 %v6580
        %v6664 = vunpack.c.l.b16 %v6581
        %v6665 = vunpack.c.h.b16 %v6581
        %v6666 = vunpack.c.l.b16 %v6582
        %v6667 = vunpack.c.h.b16 %v6582
        %v6668 = vunpack.c.l.b16 %v6583
        %v6669 = vunpack.c.h.b16 %v6583
        %v6670 = vunpack.c.l.b16 %v6584
        %v6671 = vunpack.c.h.b16 %v6584
        %v6672 = vunpack.c.l.b16 %v6585
        %v6673 = vunpack.c.h.b16 %v6585
        %v6674 = vunpack.c.l.b16 %v6586
        %v6675 = vunpack.c.h.b16 %v6586
        %v6676 = vunpack.c.l.b16 %v6587
        %v6677 = vunpack.c.h.b16 %v6587
        %v6678 = vunpack.c.l.b16 %v6588
        %v6679 = vunpack.c.h.b16 %v6588
        %v6680 = vunpack.c.l.b16 %v6589
        %v6681 = vunpack.c.h.b16 %v6589
        %v6682 = vunpack.c.l.b16 %v6590
        %v6683 = vunpack.c.h.b16 %v6590
        %v6684 = vunpack.c.l.b16 %v6591
        %v6685 = vunpack.c.h.b16 %v6591
        %v6686 = vunpack.c.l.b16 %v6592
        %v6687 = vunpack.c.h.b16 %v6592
        %v6688 = vunpack.c.l.b16 %v6593
        %v6689 = vunpack.c.h.b16 %v6593
        %v6690 = vpack.c.b16 %v6630, %v6626
        %v6691 = vpack.c.b16 %v6631, %v6627
        %v6692 = vpack.c.b16 %v6632, %v6628
        %v6693 = vpack.c.b16 %v6633, %v6629
        %v6694 = vpack.c.b16 %v6638, %v6634
        %v6695 = vpack.c.b16 %v6639, %v6635
        %v6696 = vpack.c.b16 %v6640, %v6636
        %v6697 = vpack.c.b16 %v6641, %v6637
        %v6698 = vpack.c.b16 %v6646, %v6642
        %v6699 = vpack.c.b16 %v6647, %v6643
        %v6700 = vpack.c.b16 %v6648, %v6644
        %v6701 = vpack.c.b16 %v6649, %v6645
        %v6702 = vpack.c.b16 %v6654, %v6650
        %v6703 = vpack.c.b16 %v6655, %v6651
        %v6704 = vpack.c.b16 %v6656, %v6652
        %v6705 = vpack.c.b16 %v6657, %v6653
        %v6706 = vpack.c.b16 %v6662, %v6658
        %v6707 = vpack.c.b16 %v6663, %v6659
        %v6708 = vpack.c.b16 %v6664, %v6660
        %v6709 = vpack.c.b16 %v6665, %v6661
        %v6710 = vpack.c.b16 %v6670, %v6666
        %v6711 = vpack.c.b16 %v6671, %v6667
        %v6712 = vpack.c.b16 %v6672, %v6668
        %v6713 = vpack.c.b16 %v6673, %v6669
        %v6714 = vpack.c.b16 %v6678, %v6674
        %v6715 = vpack.c.b16 %v6679, %v6675
        %v6716 = vpack.c.b16 %v6680, %v6676
        %v6717 = vpack.c.b16 %v6681, %v6677
        %v6718 = vpack.c.b16 %v6686, %v6682
        %v6719 = vpack.c.b16 %v6687, %v6683
        %v6720 = vpack.c.b16 %v6688, %v6684
        %v6721 = vpack.c.b16 %v6689, %v6685
        %6754 = vmatprep.subr.bf16.mxu0 %v6691
        %6755 = vmatpush1.bf16.msra.mxu0 %v6690
        %6756 = vmatprep.subr.bf16.mxu0 %v6695
        %6757 = vmatpush1.bf16.msra.mxu0 %v6694
        %6758 = vmatprep.subr.bf16.mxu0 %v6699
        %6759 = vmatpush1.bf16.msra.mxu0 %v6698
        %6760 = vmatprep.subr.bf16.mxu0 %v6703
        %6761 = vmatpush1.bf16.msra.mxu0 %v6702
        %6762 = vmatprep.subr.bf16.mxu0 %v6707
        %6763 = vmatpush1.bf16.msra.mxu0 %v6706
        %6764 = vmatprep.subr.bf16.mxu0 %v6711
        %6765 = vmatpush1.bf16.msra.mxu0 %v6710
        %6766 = vmatprep.subr.bf16.mxu0 %v6715
        %6767 = vmatpush1.bf16.msra.mxu0 %v6714
        %6768 = vmatprep.subr.bf16.mxu0 %v6719
        %6769 = vmatpush1.bf16.msra.mxu0 %v6718
        %6770 = vmatprep.subr.bf16.mxu0 0
        %6771 = vmatpush1.bf16.msra.mxu0 0
        %6772 = vmatprep.subr.bf16.mxu0 0
        %6773 = vmatpush1.bf16.msra.mxu0 0
        %6774 = vmatprep.subr.bf16.mxu0 0
        %6775 = vmatpush1.bf16.msra.mxu0 0
        %6776 = vmatprep.subr.bf16.mxu0 0
        %6777 = vmatpush1.bf16.msra.mxu0 0
        %6778 = vmatprep.subr.bf16.mxu0 0
        %6779 = vmatpush1.bf16.msra.mxu0 0
        %6780 = vmatprep.subr.bf16.mxu0 0
        %6781 = vmatpush1.bf16.msra.mxu0 0
        %6782 = vmatprep.subr.bf16.mxu0 0
        %6783 = vmatpush1.bf16.msra.mxu0 0
        %6784 = vmatprep.subr.bf16.mxu0 0
        %6785 = vmatpush1.bf16.msra.mxu0 0
        %6786 = vmatprep.mubr.bf16.mxu0 0
        %6787 = vmatmul.mubr.bf16.gmra.mrb[0].mxu0 %v6546
        %v6788 = vpop.f32.mrb[0].mxu0
        %v6789 = vadd.f32 0.0, %v6788
        %v6790 = vpop.f32.mrb[0].mxu0
        %v6791 = vadd.f32 0.0, %v6790
        %v6792 = vpop.f32.mrb[0].mxu0
        %v6793 = vadd.f32 0.0, %v6792
        %v6794 = vpop.f32.mrb[0].mxu0
        %v6795 = vadd.f32 0.0, %v6794
        %6796 = vmatprep.mubr.bf16.mxu0 0
        %6797 = vmatmul.mubr.bf16.gmra.mrb[0].mxu0 %v6547
        %v6798 = vpop.f32.mrb[0].mxu0
        %v6799 = vadd.f32 0.0, %v6798
        %v6800 = vpop.f32.mrb[0].mxu0
        %v6801 = vadd.f32 0.0, %v6800
        %v6802 = vpop.f32.mrb[0].mxu0
        %v6803 = vadd.f32 0.0, %v6802
        %v6804 = vpop.f32.mrb[0].mxu0
        %v6805 = vadd.f32 0.0, %v6804
        %6806 = vmatprep.mubr.bf16.mxu0 0
        %6807 = vmatmul.mubr.bf16.gmra.mrb[0].mxu0 %v6548
        %v6808 = vpop.f32.mrb[0].mxu0
        %v6809 = vadd.f32 0.0, %v6808
        %v6810 = vpop.f32.mrb[0].mxu0
        %v6811 = vadd.f32 0.0, %v6810
        %v6812 = vpop.f32.mrb[0].mxu0
        %v6813 = vadd.f32 0.0, %v6812
        %v6814 = vpop.f32.mrb[0].mxu0
        %v6815 = vadd.f32 0.0, %v6814
        %6816 = vmatprep.mubr.bf16.mxu0 0
        %6817 = vmatmul.mubr.bf16.gmra.mrb[0].mxu0 %v6549
        %v6818 = vpop.f32.mrb[0].mxu0
        %v6819 = vadd.f32 0.0, %v6818
        %v6820 = vpop.f32.mrb[0].mxu0
        %v6821 = vadd.f32 0.0, %v6820
        %v6822 = vpop.f32.mrb[0].mxu0
        %v6823 = vadd.f32 0.0, %v6822
        %v6824 = vpop.f32.mrb[0].mxu0
        %v6825 = vadd.f32 0.0, %v6824
        %6826 = vmatprep.mubr.bf16.mxu0 0
        %6827 = vmatmul.mubr.bf16.gmra.mrb[0].mxu0 %v6550
        %v6828 = vpop.f32.mrb[0].mxu0
        %v6829 = vadd.f32 0.0, %v6828
        %v6830 = vpop.f32.mrb[0].mxu0
        %v6831 = vadd.f32 0.0, %v6830
        %v6832 = vpop.f32.mrb[0].mxu0
        %v6833 = vadd.f32 0.0, %v6832
        %v6834 = vpop.f32.mrb[0].mxu0
        %v6835 = vadd.f32 0.0, %v6834
        %6836 = vmatprep.mubr.bf16.mxu0 0
        %6837 = vmatmul.mubr.bf16.gmra.mrb[0].mxu0 %v6551
        %v6838 = vpop.f32.mrb[0].mxu0
        %v6839 = vadd.f32 0.0, %v6838
        %v6840 = vpop.f32.mrb[0].mxu0
        %v6841 = vadd.f32 0.0, %v6840
        %v6842 = vpop.f32.mrb[0].mxu0
        %v6843 = vadd.f32 0.0, %v6842
        %v6844 = vpop.f32.mrb[0].mxu0
        %v6845 = vadd.f32 0.0, %v6844
        %6846 = vmatprep.mubr.bf16.mxu0 0
        %6847 = vmatmul.mubr.bf16.gmra.mrb[0].mxu0 %v6552
        %v6848 = vpop.f32.mrb[0].mxu0
        %v6849 = vadd.f32 0.0, %v6848
        %v6850 = vpop.f32.mrb[0].mxu0
        %v6851 = vadd.f32 0.0, %v6850
        %v6852 = vpop.f32.mrb[0].mxu0
        %v6853 = vadd.f32 0.0, %v6852
        %v6854 = vpop.f32.mrb[0].mxu0
        %v6855 = vadd.f32 0.0, %v6854
        %6856 = vmatprep.mubr.bf16.mxu0 0
        %6857 = vmatmul.mubr.bf16.gmra.mrb[0].mxu0 %v6553
        %v6858 = vpop.f32.mrb[0].mxu0
        %v6859 = vadd.f32 0.0, %v6858
        %v6860 = vpop.f32.mrb[0].mxu0
        %v6861 = vadd.f32 0.0, %v6860
        %v6862 = vpop.f32.mrb[0].mxu0
        %v6863 = vadd.f32 0.0, %v6862
        %v6864 = vpop.f32.mrb[0].mxu0
        %v6865 = vadd.f32 0.0, %v6864
        %6866 = vmatprep.mubr.bf16.mxu0 0
        %6867 = vmatmul.mubr.bf16.gmra.mrb[0].mxu0 %v6554
        %v6868 = vpop.f32.mrb[0].mxu0
        %v6869 = vadd.f32 0.0, %v6868
        %v6870 = vpop.f32.mrb[0].mxu0
        %v6871 = vadd.f32 0.0, %v6870
        %v6872 = vpop.f32.mrb[0].mxu0
        %v6873 = vadd.f32 0.0, %v6872
        %v6874 = vpop.f32.mrb[0].mxu0
        %v6875 = vadd.f32 0.0, %v6874
        %6876 = vmatprep.mubr.bf16.mxu0 0
        %6877 = vmatmul.mubr.bf16.gmra.mrb[0].mxu0 %v6555
        %v6878 = vpop.f32.mrb[0].mxu0
        %v6879 = vadd.f32 0.0, %v6878
        %v6880 = vpop.f32.mrb[0].mxu0
        %v6881 = vadd.f32 0.0, %v6880
        %v6882 = vpop.f32.mrb[0].mxu0
        %v6883 = vadd.f32 0.0, %v6882
        %v6884 = vpop.f32.mrb[0].mxu0
        %v6885 = vadd.f32 0.0, %v6884
        %6886 = vmatprep.mubr.bf16.mxu0 0
        %6887 = vmatmul.mubr.bf16.gmra.mrb[0].mxu0 %v6556
        %v6888 = vpop.f32.mrb[0].mxu0
        %v6889 = vadd.f32 0.0, %v6888
        %v6890 = vpop.f32.mrb[0].mxu0
        %v6891 = vadd.f32 0.0, %v6890
        %v6892 = vpop.f32.mrb[0].mxu0
        %v6893 = vadd.f32 0.0, %v6892
        %v6894 = vpop.f32.mrb[0].mxu0
        %v6895 = vadd.f32 0.0, %v6894
        %6896 = vmatprep.mubr.bf16.mxu0 0
        %6897 = vmatmul.mubr.bf16.gmra.mrb[0].mxu0 %v6557
        %v6898 = vpop.f32.mrb[0].mxu0
        %v6899 = vadd.f32 0.0, %v6898
        %v6900 = vpop.f32.mrb[0].mxu0
        %v6901 = vadd.f32 0.0, %v6900
        %v6902 = vpop.f32.mrb[0].mxu0
        %v6903 = vadd.f32 0.0, %v6902
        %v6904 = vpop.f32.mrb[0].mxu0
        %v6905 = vadd.f32 0.0, %v6904
        %6906 = vmatprep.mubr.bf16.mxu0 0
        %6907 = vmatmul.mubr.bf16.gmra.mrb[0].mxu0 %v6558
        %v6908 = vpop.f32.mrb[0].mxu0
        %v6909 = vadd.f32 0.0, %v6908
        %v6910 = vpop.f32.mrb[0].mxu0
        %v6911 = vadd.f32 0.0, %v6910
        %v6912 = vpop.f32.mrb[0].mxu0
        %v6913 = vadd.f32 0.0, %v6912
        %v6914 = vpop.f32.mrb[0].mxu0
        %v6915 = vadd.f32 0.0, %v6914
        %6916 = vmatprep.mubr.bf16.mxu0 0
        %6917 = vmatmul.mubr.bf16.gmra.mrb[0].mxu0 %v6559
        %v6918 = vpop.f32.mrb[0].mxu0
        %v6919 = vadd.f32 0.0, %v6918
        %v6920 = vpop.f32.mrb[0].mxu0
        %v6921 = vadd.f32 0.0, %v6920
        %v6922 = vpop.f32.mrb[0].mxu0
        %v6923 = vadd.f32 0.0, %v6922
        %v6924 = vpop.f32.mrb[0].mxu0
        %v6925 = vadd.f32 0.0, %v6924
        %6926 = vmatprep.mubr.bf16.mxu0 0
        %6927 = vmatmul.mubr.bf16.gmra.mrb[0].mxu0 %v6560
        %v6928 = vpop.f32.mrb[0].mxu0
        %v6929 = vadd.f32 0.0, %v6928
        %v6930 = vpop.f32.mrb[0].mxu0
        %v6931 = vadd.f32 0.0, %v6930
        %v6932 = vpop.f32.mrb[0].mxu0
        %v6933 = vadd.f32 0.0, %v6932
        %v6934 = vpop.f32.mrb[0].mxu0
        %v6935 = vadd.f32 0.0, %v6934
        %6936 = vmatprep.mubr.bf16.mxu0 0
        %6937 = vmatmul.mubr.bf16.gmra.mrb[0].mxu0 %v6561
        %v6938 = vpop.f32.mrb[0].mxu0
        %v6939 = vadd.f32 0.0, %v6938
        %v6940 = vpop.f32.mrb[0].mxu0
        %v6941 = vadd.f32 0.0, %v6940
        %v6942 = vpop.f32.mrb[0].mxu0
        %v6943 = vadd.f32 0.0, %v6942
        %v6944 = vpop.f32.mrb[0].mxu0
        %v6945 = vadd.f32 0.0, %v6944
        %6946 = vdwg.mxu0
        %6947 = vmatprep.subr.bf16.mxu0 %v6693
        %6948 = vmatpush1.bf16.msra.mxu0 %v6692
        %6949 = vmatprep.subr.bf16.mxu0 %v6697
        %6950 = vmatpush1.bf16.msra.mxu0 %v6696
        %6951 = vmatprep.subr.bf16.mxu0 %v6701
        %6952 = vmatpush1.bf16.msra.mxu0 %v6700
        %6953 = vmatprep.subr.bf16.mxu0 %v6705
        %6954 = vmatpush1.bf16.msra.mxu0 %v6704
        %6955 = vmatprep.subr.bf16.mxu0 %v6709
        %6956 = vmatpush1.bf16.msra.mxu0 %v6708
        %6957 = vmatprep.subr.bf16.mxu0 %v6713
        %6958 = vmatpush1.bf16.msra.mxu0 %v6712
        %6959 = vmatprep.subr.bf16.mxu0 %v6717
        %6960 = vmatpush1.bf16.msra.mxu0 %v6716
        %6961 = vmatprep.subr.bf16.mxu0 %v6721
        %6962 = vmatpush1.bf16.msra.mxu0 %v6720
        %6963 = vmatprep.subr.bf16.mxu0 0
        %6964 = vmatpush1.bf16.msra.mxu0 0
        %6965 = vmatprep.subr.bf16.mxu0 0
        %6966 = vmatpush1.bf16.msra.mxu0 0
        %6967 = vmatprep.subr.bf16.mxu0 0
        %6968 = vmatpush1.bf16.msra.mxu0 0
        %6969 = vmatprep.subr.bf16.mxu0 0
        %6970 = vmatpush1.bf16.msra.mxu0 0
        %6971 = vmatprep.subr.bf16.mxu0 0
        %6972 = vmatpush1.bf16.msra.mxu0 0
        %6973 = vmatprep.subr.bf16.mxu0 0
        %6974 = vmatpush1.bf16.msra.mxu0 0
        %6975 = vmatprep.subr.bf16.mxu0 0
        %6976 = vmatpush1.bf16.msra.mxu0 0
        %6977 = vmatprep.subr.bf16.mxu0 0
        %6978 = vmatpush1.bf16.msra.mxu0 0
        %6979 = vmatprep.mubr.bf16.mxu0 0
        %6980 = vmatmul.mubr.bf16.gmra.mrb[0].mxu0 %v6546
        %v6981 = vpop.f32.mrb[0].mxu0
        %v6982 = vadd.f32 0.0, %v6981
        %v6983 = vpop.f32.mrb[0].mxu0
        %v6984 = vadd.f32 0.0, %v6983
        %v6985 = vpop.f32.mrb[0].mxu0
        %v6986 = vadd.f32 0.0, %v6985
        %v6987 = vpop.f32.mrb[0].mxu0
        %v6988 = vadd.f32 0.0, %v6987
        %6989 = vmatprep.mubr.bf16.mxu0 0
        %6990 = vmatmul.mubr.bf16.gmra.mrb[0].mxu0 %v6547
        %v6991 = vpop.f32.mrb[0].mxu0
        %v6992 = vadd.f32 0.0, %v6991
        %v6993 = vpop.f32.mrb[0].mxu0
        %v6994 = vadd.f32 0.0, %v6993
        %v6995 = vpop.f32.mrb[0].mxu0
        %v6996 = vadd.f32 0.0, %v6995
        %v6997 = vpop.f32.mrb[0].mxu0
        %v6998 = vadd.f32 0.0, %v6997
        %6999 = vmatprep.mubr.bf16.mxu0 0
        %7000 = vmatmul.mubr.bf16.gmra.mrb[0].mxu0 %v6548
        %v7001 = vpop.f32.mrb[0].mxu0
        %v7002 = vadd.f32 0.0, %v7001
        %v7003 = vpop.f32.mrb[0].mxu0
        %v7004 = vadd.f32 0.0, %v7003
        %v7005 = vpop.f32.mrb[0].mxu0
        %v7006 = vadd.f32 0.0, %v7005
        %v7007 = vpop.f32.mrb[0].mxu0
        %v7008 = vadd.f32 0.0, %v7007
        %7009 = vmatprep.mubr.bf16.mxu0 0
        %7010 = vmatmul.mubr.bf16.gmra.mrb[0].mxu0 %v6549
        %v7011 = vpop.f32.mrb[0].mxu0
        %v7012 = vadd.f32 0.0, %v7011
        %v7013 = vpop.f32.mrb[0].mxu0
        %v7014 = vadd.f32 0.0, %v7013
        %v7015 = vpop.f32.mrb[0].mxu0
        %v7016 = vadd.f32 0.0, %v7015
        %v7017 = vpop.f32.mrb[0].mxu0
        %v7018 = vadd.f32 0.0, %v7017
        %7019 = vmatprep.mubr.bf16.mxu0 0
        %7020 = vmatmul.mubr.bf16.gmra.mrb[0].mxu0 %v6550
        %v7021 = vpop.f32.mrb[0].mxu0
        %v7022 = vadd.f32 0.0, %v7021
        %v7023 = vpop.f32.mrb[0].mxu0
        %v7024 = vadd.f32 0.0, %v7023
        %v7025 = vpop.f32.mrb[0].mxu0
        %v7026 = vadd.f32 0.0, %v7025
        %v7027 = vpop.f32.mrb[0].mxu0
        %v7028 = vadd.f32 0.0, %v7027
        %7029 = vmatprep.mubr.bf16.mxu0 0
        %7030 = vmatmul.mubr.bf16.gmra.mrb[0].mxu0 %v6551
        %v7031 = vpop.f32.mrb[0].mxu0
        %v7032 = vadd.f32 0.0, %v7031
        %v7033 = vpop.f32.mrb[0].mxu0
        %v7034 = vadd.f32 0.0, %v7033
        %v7035 = vpop.f32.mrb[0].mxu0
        %v7036 = vadd.f32 0.0, %v7035
        %v7037 = vpop.f32.mrb[0].mxu0
        %v7038 = vadd.f32 0.0, %v7037
        %7039 = vmatprep.mubr.bf16.mxu0 0
        %7040 = vmatmul.mubr.bf16.gmra.mrb[0].mxu0 %v6552
        %v7041 = vpop.f32.mrb[0].mxu0
        %v7042 = vadd.f32 0.0, %v7041
        %v7043 = vpop.f32.mrb[0].mxu0
        %v7044 = vadd.f32 0.0, %v7043
        %v7045 = vpop.f32.mrb[0].mxu0
        %v7046 = vadd.f32 0.0, %v7045
        %v7047 = vpop.f32.mrb[0].mxu0
        %v7048 = vadd.f32 0.0, %v7047
        %7049 = vmatprep.mubr.bf16.mxu0 0
        %7050 = vmatmul.mubr.bf16.gmra.mrb[0].mxu0 %v6553
        %v7051 = vpop.f32.mrb[0].mxu0
        %v7052 = vadd.f32 0.0, %v7051
        %v7053 = vpop.f32.mrb[0].mxu0
        %v7054 = vadd.f32 0.0, %v7053
        %v7055 = vpop.f32.mrb[0].mxu0
        %v7056 = vadd.f32 0.0, %v7055
        %v7057 = vpop.f32.mrb[0].mxu0
        %v7058 = vadd.f32 0.0, %v7057
        %7059 = vmatprep.mubr.bf16.mxu0 0
        %7060 = vmatmul.mubr.bf16.gmra.mrb[0].mxu0 %v6554
        %v7061 = vpop.f32.mrb[0].mxu0
        %v7062 = vadd.f32 0.0, %v7061
        %v7063 = vpop.f32.mrb[0].mxu0
        %v7064 = vadd.f32 0.0, %v7063
        %v7065 = vpop.f32.mrb[0].mxu0
        %v7066 = vadd.f32 0.0, %v7065
        %v7067 = vpop.f32.mrb[0].mxu0
        %v7068 = vadd.f32 0.0, %v7067
        %7069 = vmatprep.mubr.bf16.mxu0 0
        %7070 = vmatmul.mubr.bf16.gmra.mrb[0].mxu0 %v6555
        %v7071 = vpop.f32.mrb[0].mxu0
        %v7072 = vadd.f32 0.0, %v7071
        %v7073 = vpop.f32.mrb[0].mxu0
        %v7074 = vadd.f32 0.0, %v7073
        %v7075 = vpop.f32.mrb[0].mxu0
        %v7076 = vadd.f32 0.0, %v7075
        %v7077 = vpop.f32.mrb[0].mxu0
        %v7078 = vadd.f32 0.0, %v7077
        %7079 = vmatprep.mubr.bf16.mxu0 0
        %7080 = vmatmul.mubr.bf16.gmra.mrb[0].mxu0 %v6556
        %v7081 = vpop.f32.mrb[0].mxu0
        %v7082 = vadd.f32 0.0, %v7081
        %v7083 = vpop.f32.mrb[0].mxu0
        %v7084 = vadd.f32 0.0, %v7083
        %v7085 = vpop.f32.mrb[0].mxu0
        %v7086 = vadd.f32 0.0, %v7085
        %v7087 = vpop.f32.mrb[0].mxu0
        %v7088 = vadd.f32 0.0, %v7087
        %7089 = vmatprep.mubr.bf16.mxu0 0
        %7090 = vmatmul.mubr.bf16.gmra.mrb[0].mxu0 %v6557
        %v7091 = vpop.f32.mrb[0].mxu0
        %v7092 = vadd.f32 0.0, %v7091
        %v7093 = vpop.f32.mrb[0].mxu0
        %v7094 = vadd.f32 0.0, %v7093
        %v7095 = vpop.f32.mrb[0].mxu0
        %v7096 = vadd.f32 0.0, %v7095
        %v7097 = vpop.f32.mrb[0].mxu0
        %v7098 = vadd.f32 0.0, %v7097
        %7099 = vmatprep.mubr.bf16.mxu0 0
        %7100 = vmatmul.mubr.bf16.gmra.mrb[0].mxu0 %v6558
        %v7101 = vpop.f32.mrb[0].mxu0
        %v7102 = vadd.f32 0.0, %v7101
        %v7103 = vpop.f32.mrb[0].mxu0
        %v7104 = vadd.f32 0.0, %v7103
        %v7105 = vpop.f32.mrb[0].mxu0
        %v7106 = vadd.f32 0.0, %v7105
        %v7107 = vpop.f32.mrb[0].mxu0
        %v7108 = vadd.f32 0.0, %v7107
        %7109 = vmatprep.mubr.bf16.mxu0 0
        %7110 = vmatmul.mubr.bf16.gmra.mrb[0].mxu0 %v6559
        %v7111 = vpop.f32.mrb[0].mxu0
        %v7112 = vadd.f32 0.0, %v7111
        %v7113 = vpop.f32.mrb[0].mxu0
        %v7114 = vadd.f32 0.0, %v7113
        %v7115 = vpop.f32.mrb[0].mxu0
        %v7116 = vadd.f32 0.0, %v7115
        %v7117 = vpop.f32.mrb[0].mxu0
        %v7118 = vadd.f32 0.0, %v7117
        %7119 = vmatprep.mubr.bf16.mxu0 0
        %7120 = vmatmul.mubr.bf16.gmra.mrb[0].mxu0 %v6560
        %v7121 = vpop.f32.mrb[0].mxu0
        %v7122 = vadd.f32 0.0, %v7121
        %v7123 = vpop.f32.mrb[0].mxu0
        %v7124 = vadd.f32 0.0, %v7123
        %v7125 = vpop.f32.mrb[0].mxu0
        %v7126 = vadd.f32 0.0, %v7125
        %v7127 = vpop.f32.mrb[0].mxu0
        %v7128 = vadd.f32 0.0, %v7127
        %7129 = vmatprep.mubr.bf16.mxu0 0
        %7130 = vmatmul.mubr.bf16.gmra.mrb[0].mxu0 %v6561
        %v7131 = vpop.f32.mrb[0].mxu0
        %v7132 = vadd.f32 0.0, %v7131
        %v7133 = vpop.f32.mrb[0].mxu0
        %v7134 = vadd.f32 0.0, %v7133
        %v7135 = vpop.f32.mrb[0].mxu0
        %v7136 = vadd.f32 0.0, %v7135
        %v7137 = vpop.f32.mrb[0].mxu0
        %v7138 = vadd.f32 0.0, %v7137
        %7139 = vdwg.mxu0
        %v7140 = vld [vmem:[%s18] sm:$0xf]
        %v7142 = vlaneseq
        %v7143 = vshrl.u32 %v7142, 7
        %v7144 = vsub.s32 0, %v7143
        %v7145 = vrot.slane %v7140, %v7144
        %v7146 = vlaneseq
        %v7147 = vshrl.u32 %v7146, 7
        %v7148 = vsub.s32 1, %v7147
        %v7149 = vrot.slane %v7140, %v7148
        %v7150 = vlaneseq
        %v7151 = vshrl.u32 %v7150, 7
        %v7152 = vsub.s32 2, %v7151
        %v7153 = vrot.slane %v7140, %v7152
        %v7154 = vlaneseq
        %v7155 = vshrl.u32 %v7154, 7
        %v7156 = vsub.s32 3, %v7155
        %v7157 = vrot.slane %v7140, %v7156
        %v7162 = vmul.f32 %v6789, %v7145
        %v7163 = vmul.f32 %v6791, %v7149
        %v7164 = vmul.f32 %v6982, %v7153
        %v7165 = vmul.f32 %v6984, %v7157
        %v7166 = vmul.f32 %v6793, %v7145
        %v7167 = vmul.f32 %v6795, %v7149
        %v7168 = vmul.f32 %v6986, %v7153
        %v7169 = vmul.f32 %v6988, %v7157
        %v7170 = vmul.f32 %v6799, %v7145
        %v7171 = vmul.f32 %v6801, %v7149
        %v7172 = vmul.f32 %v6992, %v7153
        %v7173 = vmul.f32 %v6994, %v7157
        %v7174 = vmul.f32 %v6803, %v7145
        %v7175 = vmul.f32 %v6805, %v7149
        %v7176 = vmul.f32 %v6996, %v7153
        %v7177 = vmul.f32 %v6998, %v7157
        %v7178 = vmul.f32 %v6809, %v7145
        %v7179 = vmul.f32 %v6811, %v7149
        %v7180 = vmul.f32 %v7002, %v7153
        %v7181 = vmul.f32 %v7004, %v7157
        %v7182 = vmul.f32 %v6813, %v7145
        %v7183 = vmul.f32 %v6815, %v7149
        %v7184 = vmul.f32 %v7006, %v7153
        %v7185 = vmul.f32 %v7008, %v7157
        %v7186 = vmul.f32 %v6819, %v7145
        %v7187 = vmul.f32 %v6821, %v7149
        %v7188 = vmul.f32 %v7012, %v7153
        %v7189 = vmul.f32 %v7014, %v7157
        %v7190 = vmul.f32 %v6823, %v7145
        %v7191 = vmul.f32 %v6825, %v7149
        %v7192 = vmul.f32 %v7016, %v7153
        %v7193 = vmul.f32 %v7018, %v7157
        %v7194 = vmul.f32 %v6829, %v7145
        %v7195 = vmul.f32 %v6831, %v7149
        %v7196 = vmul.f32 %v7022, %v7153
        %v7197 = vmul.f32 %v7024, %v7157
        %v7198 = vmul.f32 %v6833, %v7145
        %v7199 = vmul.f32 %v6835, %v7149
        %v7200 = vmul.f32 %v7026, %v7153
        %v7201 = vmul.f32 %v7028, %v7157
        %v7202 = vmul.f32 %v6839, %v7145
        %v7203 = vmul.f32 %v6841, %v7149
        %v7204 = vmul.f32 %v7032, %v7153
        %v7205 = vmul.f32 %v7034, %v7157
        %v7206 = vmul.f32 %v6843, %v7145
        %v7207 = vmul.f32 %v6845, %v7149
        %v7208 = vmul.f32 %v7036, %v7153
        %v7209 = vmul.f32 %v7038, %v7157
        %v7210 = vmul.f32 %v6849, %v7145
        %v7211 = vmul.f32 %v6851, %v7149
        %v7212 = vmul.f32 %v7042, %v7153
        %v7213 = vmul.f32 %v7044, %v7157
        %v7214 = vmul.f32 %v6853, %v7145
        %v7215 = vmul.f32 %v6855, %v7149
        %v7216 = vmul.f32 %v7046, %v7153
        %v7217 = vmul.f32 %v7048, %v7157
        %v7218 = vmul.f32 %v6859, %v7145
        %v7219 = vmul.f32 %v6861, %v7149
        %v7220 = vmul.f32 %v7052, %v7153
        %v7221 = vmul.f32 %v7054, %v7157
        %v7222 = vmul.f32 %v6863, %v7145
        %v7223 = vmul.f32 %v6865, %v7149
        %v7224 = vmul.f32 %v7056, %v7153
        %v7225 = vmul.f32 %v7058, %v7157
        %v7226 = vmul.f32 %v6869, %v7145
        %v7227 = vmul.f32 %v6871, %v7149
        %v7228 = vmul.f32 %v7062, %v7153
        %v7229 = vmul.f32 %v7064, %v7157
        %v7230 = vmul.f32 %v6873, %v7145
        %v7231 = vmul.f32 %v6875, %v7149
        %v7232 = vmul.f32 %v7066, %v7153
        %v7233 = vmul.f32 %v7068, %v7157
        %v7234 = vmul.f32 %v6879, %v7145
        %v7235 = vmul.f32 %v6881, %v7149
        %v7236 = vmul.f32 %v7072, %v7153
        %v7237 = vmul.f32 %v7074, %v7157
        %v7238 = vmul.f32 %v6883, %v7145
        %v7239 = vmul.f32 %v6885, %v7149
        %v7240 = vmul.f32 %v7076, %v7153
        %v7241 = vmul.f32 %v7078, %v7157
        %v7242 = vmul.f32 %v6889, %v7145
        %v7243 = vmul.f32 %v6891, %v7149
        %v7244 = vmul.f32 %v7082, %v7153
        %v7245 = vmul.f32 %v7084, %v7157
        %v7246 = vmul.f32 %v6893, %v7145
        %v7247 = vmul.f32 %v6895, %v7149
        %v7248 = vmul.f32 %v7086, %v7153
        %v7249 = vmul.f32 %v7088, %v7157
        %v7250 = vmul.f32 %v6899, %v7145
        %v7251 = vmul.f32 %v6901, %v7149
        %v7252 = vmul.f32 %v7092, %v7153
        %v7253 = vmul.f32 %v7094, %v7157
        %v7254 = vmul.f32 %v6903, %v7145
        %v7255 = vmul.f32 %v6905, %v7149
        %v7256 = vmul.f32 %v7096, %v7153
        %v7257 = vmul.f32 %v7098, %v7157
        %v7258 = vmul.f32 %v6909, %v7145
        %v7259 = vmul.f32 %v6911, %v7149
        %v7260 = vmul.f32 %v7102, %v7153
        %v7261 = vmul.f32 %v7104, %v7157
        %v7262 = vmul.f32 %v6913, %v7145
        %v7263 = vmul.f32 %v6915, %v7149
        %v7264 = vmul.f32 %v7106, %v7153
        %v7265 = vmul.f32 %v7108, %v7157
        %v7266 = vmul.f32 %v6919, %v7145
        %v7267 = vmul.f32 %v6921, %v7149
        %v7268 = vmul.f32 %v7112, %v7153
        %v7269 = vmul.f32 %v7114, %v7157
        %v7270 = vmul.f32 %v6923, %v7145
        %v7271 = vmul.f32 %v6925, %v7149
        %v7272 = vmul.f32 %v7116, %v7153
        %v7273 = vmul.f32 %v7118, %v7157
        %v7274 = vmul.f32 %v6929, %v7145
        %v7275 = vmul.f32 %v6931, %v7149
        %v7276 = vmul.f32 %v7122, %v7153
        %v7277 = vmul.f32 %v7124, %v7157
        %v7278 = vmul.f32 %v6933, %v7145
        %v7279 = vmul.f32 %v6935, %v7149
        %v7280 = vmul.f32 %v7126, %v7153
        %v7281 = vmul.f32 %v7128, %v7157
        %v7282 = vmul.f32 %v6939, %v7145
        %v7283 = vmul.f32 %v6941, %v7149
        %v7284 = vmul.f32 %v7132, %v7153
        %v7285 = vmul.f32 %v7134, %v7157
        %v7286 = vmul.f32 %v6943, %v7145
        %v7287 = vmul.f32 %v6945, %v7149
        %v7288 = vmul.f32 %v7136, %v7153
        %v7289 = vmul.f32 %v7138, %v7157
        %v7290 = vld [vmem:[%s19] sm:$0xf]
        %v7292 = vlaneseq
        %v7293 = vshrl.u32 %v7292, 7
        %v7294 = vsub.s32 0, %v7293
        %v7295 = vrot.slane %v7290, %v7294
        %v7296 = vlaneseq
        %v7297 = vshrl.u32 %v7296, 7
        %v7298 = vsub.s32 1, %v7297
        %v7299 = vrot.slane %v7290, %v7298
        %v7300 = vlaneseq
        %v7301 = vshrl.u32 %v7300, 7
        %v7302 = vsub.s32 2, %v7301
        %v7303 = vrot.slane %v7290, %v7302
        %v7304 = vlaneseq
        %v7305 = vshrl.u32 %v7304, 7
        %v7306 = vsub.s32 3, %v7305
        %v7307 = vrot.slane %v7290, %v7306
        %v7312 = vadd.f32 %v7162, %v7295
        %v7313 = vadd.f32 %v7163, %v7299
        %v7314 = vadd.f32 %v7164, %v7303
        %v7315 = vadd.f32 %v7165, %v7307
        %v7316 = vadd.f32 %v7166, %v7295
        %v7317 = vadd.f32 %v7167, %v7299
        %v7318 = vadd.f32 %v7168, %v7303
        %v7319 = vadd.f32 %v7169, %v7307
        %v7320 = vadd.f32 %v7170, %v7295
        %v7321 = vadd.f32 %v7171, %v7299
        %v7322 = vadd.f32 %v7172, %v7303
        %v7323 = vadd.f32 %v7173, %v7307
        %v7324 = vadd.f32 %v7174, %v7295
        %v7325 = vadd.f32 %v7175, %v7299
        %v7326 = vadd.f32 %v7176, %v7303
        %v7327 = vadd.f32 %v7177, %v7307
        %v7328 = vadd.f32 %v7178, %v7295
        %v7329 = vadd.f32 %v7179, %v7299
        %v7330 = vadd.f32 %v7180, %v7303
        %v7331 = vadd.f32 %v7181, %v7307
        %v7332 = vadd.f32 %v7182, %v7295
        %v7333 = vadd.f32 %v7183, %v7299
        %v7334 = vadd.f32 %v7184, %v7303
        %v7335 = vadd.f32 %v7185, %v7307
        %v7336 = vadd.f32 %v7186, %v7295
        %v7337 = vadd.f32 %v7187, %v7299
        %v7338 = vadd.f32 %v7188, %v7303
        %v7339 = vadd.f32 %v7189, %v7307
        %v7340 = vadd.f32 %v7190, %v7295
        %v7341 = vadd.f32 %v7191, %v7299
        %v7342 = vadd.f32 %v7192, %v7303
        %v7343 = vadd.f32 %v7193, %v7307
        %v7344 = vadd.f32 %v7194, %v7295
        %v7345 = vadd.f32 %v7195, %v7299
        %v7346 = vadd.f32 %v7196, %v7303
        %v7347 = vadd.f32 %v7197, %v7307
        %v7348 = vadd.f32 %v7198, %v7295
        %v7349 = vadd.f32 %v7199, %v7299
        %v7350 = vadd.f32 %v7200, %v7303
        %v7351 = vadd.f32 %v7201, %v7307
        %v7352 = vadd.f32 %v7202, %v7295
        %v7353 = vadd.f32 %v7203, %v7299
        %v7354 = vadd.f32 %v7204, %v7303
        %v7355 = vadd.f32 %v7205, %v7307
        %v7356 = vadd.f32 %v7206, %v7295
        %v7357 = vadd.f32 %v7207, %v7299
        %v7358 = vadd.f32 %v7208, %v7303
        %v7359 = vadd.f32 %v7209, %v7307
        %v7360 = vadd.f32 %v7210, %v7295
        %v7361 = vadd.f32 %v7211, %v7299
        %v7362 = vadd.f32 %v7212, %v7303
        %v7363 = vadd.f32 %v7213, %v7307
        %v7364 = vadd.f32 %v7214, %v7295
        %v7365 = vadd.f32 %v7215, %v7299
        %v7366 = vadd.f32 %v7216, %v7303
        %v7367 = vadd.f32 %v7217, %v7307
        %v7368 = vadd.f32 %v7218, %v7295
        %v7369 = vadd.f32 %v7219, %v7299
        %v7370 = vadd.f32 %v7220, %v7303
        %v7371 = vadd.f32 %v7221, %v7307
        %v7372 = vadd.f32 %v7222, %v7295
        %v7373 = vadd.f32 %v7223, %v7299
        %v7374 = vadd.f32 %v7224, %v7303
        %v7375 = vadd.f32 %v7225, %v7307
        %v7376 = vadd.f32 %v7226, %v7295
        %v7377 = vadd.f32 %v7227, %v7299
        %v7378 = vadd.f32 %v7228, %v7303
        %v7379 = vadd.f32 %v7229, %v7307
        %v7380 = vadd.f32 %v7230, %v7295
        %v7381 = vadd.f32 %v7231, %v7299
        %v7382 = vadd.f32 %v7232, %v7303
        %v7383 = vadd.f32 %v7233, %v7307
        %v7384 = vadd.f32 %v7234, %v7295
        %v7385 = vadd.f32 %v7235, %v7299
        %v7386 = vadd.f32 %v7236, %v7303
        %v7387 = vadd.f32 %v7237, %v7307
        %v7388 = vadd.f32 %v7238, %v7295
        %v7389 = vadd.f32 %v7239, %v7299
        %v7390 = vadd.f32 %v7240, %v7303
        %v7391 = vadd.f32 %v7241, %v7307
        %v7392 = vadd.f32 %v7242, %v7295
        %v7393 = vadd.f32 %v7243, %v7299
        %v7394 = vadd.f32 %v7244, %v7303
        %v7395 = vadd.f32 %v7245, %v7307
        %v7396 = vadd.f32 %v7246, %v7295
        %v7397 = vadd.f32 %v7247, %v7299
        %v7398 = vadd.f32 %v7248, %v7303
        %v7399 = vadd.f32 %v7249, %v7307
        %v7400 = vadd.f32 %v7250, %v7295
        %v7401 = vadd.f32 %v7251, %v7299
        %v7402 = vadd.f32 %v7252, %v7303
        %v7403 = vadd.f32 %v7253, %v7307
        %v7404 = vadd.f32 %v7254, %v7295
        %v7405 = vadd.f32 %v7255, %v7299
        %v7406 = vadd.f32 %v7256, %v7303
        %v7407 = vadd.f32 %v7257, %v7307
        %v7408 = vadd.f32 %v7258, %v7295
        %v7409 = vadd.f32 %v7259, %v7299
        %v7410 = vadd.f32 %v7260, %v7303
        %v7411 = vadd.f32 %v7261, %v7307
        %v7412 = vadd.f32 %v7262, %v7295
        %v7413 = vadd.f32 %v7263, %v7299
        %v7414 = vadd.f32 %v7264, %v7303
        %v7415 = vadd.f32 %v7265, %v7307
        %v7416 = vadd.f32 %v7266, %v7295
        %v7417 = vadd.f32 %v7267, %v7299
        %v7418 = vadd.f32 %v7268, %v7303
        %v7419 = vadd.f32 %v7269, %v7307
        %v7420 = vadd.f32 %v7270, %v7295
        %v7421 = vadd.f32 %v7271, %v7299
        %v7422 = vadd.f32 %v7272, %v7303
        %v7423 = vadd.f32 %v7273, %v7307
        %v7424 = vadd.f32 %v7274, %v7295
        %v7425 = vadd.f32 %v7275, %v7299
        %v7426 = vadd.f32 %v7276, %v7303
        %v7427 = vadd.f32 %v7277, %v7307
        %v7428 = vadd.f32 %v7278, %v7295
        %v7429 = vadd.f32 %v7279, %v7299
        %v7430 = vadd.f32 %v7280, %v7303
        %v7431 = vadd.f32 %v7281, %v7307
        %v7432 = vadd.f32 %v7282, %v7295
        %v7433 = vadd.f32 %v7283, %v7299
        %v7434 = vadd.f32 %v7284, %v7303
        %v7435 = vadd.f32 %v7285, %v7307
        %v7436 = vadd.f32 %v7286, %v7295
        %v7437 = vadd.f32 %v7287, %v7299
        %v7438 = vadd.f32 %v7288, %v7303
        %v7439 = vadd.f32 %v7289, %v7307
        %v7440 = vmax.f32 %v7312, 0.0
        %v7441 = vmax.f32 %v7313, 0.0
        %v7442 = vmax.f32 %v7314, 0.0
        %v7443 = vmax.f32 %v7315, 0.0
        %v7444 = vmax.f32 %v7316, 0.0
        %v7445 = vmax.f32 %v7317, 0.0
        %v7446 = vmax.f32 %v7318, 0.0
        %v7447 = vmax.f32 %v7319, 0.0
        %v7448 = vmax.f32 %v7320, 0.0
        %v7449 = vmax.f32 %v7321, 0.0
        %v7450 = vmax.f32 %v7322, 0.0
        %v7451 = vmax.f32 %v7323, 0.0
        %v7452 = vmax.f32 %v7324, 0.0
        %v7453 = vmax.f32 %v7325, 0.0
        %v7454 = vmax.f32 %v7326, 0.0
        %v7455 = vmax.f32 %v7327, 0.0
        %v7456 = vmax.f32 %v7328, 0.0
        %v7457 = vmax.f32 %v7329, 0.0
        %v7458 = vmax.f32 %v7330, 0.0
        %v7459 = vmax.f32 %v7331, 0.0
        %v7460 = vmax.f32 %v7332, 0.0
        %v7461 = vmax.f32 %v7333, 0.0
        %v7462 = vmax.f32 %v7334, 0.0
        %v7463 = vmax.f32 %v7335, 0.0
        %v7464 = vmax.f32 %v7336, 0.0
        %v7465 = vmax.f32 %v7337, 0.0
        %v7466 = vmax.f32 %v7338, 0.0
        %v7467 = vmax.f32 %v7339, 0.0
        %v7468 = vmax.f32 %v7340, 0.0
        %v7469 = vmax.f32 %v7341, 0.0
        %v7470 = vmax.f32 %v7342, 0.0
        %v7471 = vmax.f32 %v7343, 0.0
        %v7472 = vmax.f32 %v7344, 0.0
        %v7473 = vmax.f32 %v7345, 0.0
        %v7474 = vmax.f32 %v7346, 0.0
        %v7475 = vmax.f32 %v7347, 0.0
        %v7476 = vmax.f32 %v7348, 0.0
        %v7477 = vmax.f32 %v7349, 0.0
        %v7478 = vmax.f32 %v7350, 0.0
        %v7479 = vmax.f32 %v7351, 0.0
        %v7480 = vmax.f32 %v7352, 0.0
        %v7481 = vmax.f32 %v7353, 0.0
        %v7482 = vmax.f32 %v7354, 0.0
        %v7483 = vmax.f32 %v7355, 0.0
        %v7484 = vmax.f32 %v7356, 0.0
        %v7485 = vmax.f32 %v7357, 0.0
        %v7486 = vmax.f32 %v7358, 0.0
        %v7487 = vmax.f32 %v7359, 0.0
        %v7488 = vmax.f32 %v7360, 0.0
        %v7489 = vmax.f32 %v7361, 0.0
        %v7490 = vmax.f32 %v7362, 0.0
        %v7491 = vmax.f32 %v7363, 0.0
        %v7492 = vmax.f32 %v7364, 0.0
        %v7493 = vmax.f32 %v7365, 0.0
        %v7494 = vmax.f32 %v7366, 0.0
        %v7495 = vmax.f32 %v7367, 0.0
        %v7496 = vmax.f32 %v7368, 0.0
        %v7497 = vmax.f32 %v7369, 0.0
        %v7498 = vmax.f32 %v7370, 0.0
        %v7499 = vmax.f32 %v7371, 0.0
        %v7500 = vmax.f32 %v7372, 0.0
        %v7501 = vmax.f32 %v7373, 0.0
        %v7502 = vmax.f32 %v7374, 0.0
        %v7503 = vmax.f32 %v7375, 0.0
        %v7504 = vmax.f32 %v7376, 0.0
        %v7505 = vmax.f32 %v7377, 0.0
        %v7506 = vmax.f32 %v7378, 0.0
        %v7507 = vmax.f32 %v7379, 0.0
        %v7508 = vmax.f32 %v7380, 0.0
        %v7509 = vmax.f32 %v7381, 0.0
        %v7510 = vmax.f32 %v7382, 0.0
        %v7511 = vmax.f32 %v7383, 0.0
        %v7512 = vmax.f32 %v7384, 0.0
        %v7513 = vmax.f32 %v7385, 0.0
        %v7514 = vmax.f32 %v7386, 0.0
        %v7515 = vmax.f32 %v7387, 0.0
        %v7516 = vmax.f32 %v7388, 0.0
        %v7517 = vmax.f32 %v7389, 0.0
        %v7518 = vmax.f32 %v7390, 0.0
        %v7519 = vmax.f32 %v7391, 0.0
        %v7520 = vmax.f32 %v7392, 0.0
        %v7521 = vmax.f32 %v7393, 0.0
        %v7522 = vmax.f32 %v7394, 0.0
        %v7523 = vmax.f32 %v7395, 0.0
        %v7524 = vmax.f32 %v7396, 0.0
        %v7525 = vmax.f32 %v7397, 0.0
        %v7526 = vmax.f32 %v7398, 0.0
        %v7527 = vmax.f32 %v7399, 0.0
        %v7528 = vmax.f32 %v7400, 0.0
        %v7529 = vmax.f32 %v7401, 0.0
        %v7530 = vmax.f32 %v7402, 0.0
        %v7531 = vmax.f32 %v7403, 0.0
        %v7532 = vmax.f32 %v7404, 0.0
        %v7533 = vmax.f32 %v7405, 0.0
        %v7534 = vmax.f32 %v7406, 0.0
        %v7535 = vmax.f32 %v7407, 0.0
        %v7536 = vmax.f32 %v7408, 0.0
        %v7537 = vmax.f32 %v7409, 0.0
        %v7538 = vmax.f32 %v7410, 0.0
        %v7539 = vmax.f32 %v7411, 0.0
        %v7540 = vmax.f32 %v7412, 0.0
        %v7541 = vmax.f32 %v7413, 0.0
        %v7542 = vmax.f32 %v7414, 0.0
        %v7543 = vmax.f32 %v7415, 0.0
        %v7544 = vmax.f32 %v7416, 0.0
        %v7545 = vmax.f32 %v7417, 0.0
        %v7546 = vmax.f32 %v7418, 0.0
        %v7547 = vmax.f32 %v7419, 0.0
        %v7548 = vmax.f32 %v7420, 0.0
        %v7549 = vmax.f32 %v7421, 0.0
        %v7550 = vmax.f32 %v7422, 0.0
        %v7551 = vmax.f32 %v7423, 0.0
        %v7552 = vmax.f32 %v7424, 0.0
        %v7553 = vmax.f32 %v7425, 0.0
        %v7554 = vmax.f32 %v7426, 0.0
        %v7555 = vmax.f32 %v7427, 0.0
        %v7556 = vmax.f32 %v7428, 0.0
        %v7557 = vmax.f32 %v7429, 0.0
        %v7558 = vmax.f32 %v7430, 0.0
        %v7559 = vmax.f32 %v7431, 0.0
        %v7560 = vmax.f32 %v7432, 0.0
        %v7561 = vmax.f32 %v7433, 0.0
        %v7562 = vmax.f32 %v7434, 0.0
        %v7563 = vmax.f32 %v7435, 0.0
        %v7564 = vmax.f32 %v7436, 0.0
        %v7565 = vmax.f32 %v7437, 0.0
        %v7566 = vmax.f32 %v7438, 0.0
        %v7567 = vmax.f32 %v7439, 0.0
        %v7568 = vpack.c.bf16 %v7444, %v7440
        %v7569 = vpack.c.bf16 %v7445, %v7441
        %v7570 = vpack.c.bf16 %v7446, %v7442
        %v7571 = vpack.c.bf16 %v7447, %v7443
        %v7572 = vpack.c.bf16 %v7452, %v7448
        %v7573 = vpack.c.bf16 %v7453, %v7449
        %v7574 = vpack.c.bf16 %v7454, %v7450
        %v7575 = vpack.c.bf16 %v7455, %v7451
        %v7576 = vpack.c.bf16 %v7460, %v7456
        %v7577 = vpack.c.bf16 %v7461, %v7457
        %v7578 = vpack.c.bf16 %v7462, %v7458
        %v7579 = vpack.c.bf16 %v7463, %v7459
        %v7580 = vpack.c.bf16 %v7468, %v7464
        %v7581 = vpack.c.bf16 %v7469, %v7465
        %v7582 = vpack.c.bf16 %v7470, %v7466
        %v7583 = vpack.c.bf16 %v7471, %v7467
        %v7584 = vpack.c.bf16 %v7476, %v7472
        %v7585 = vpack.c.bf16 %v7477, %v7473
        %v7586 = vpack.c.bf16 %v7478, %v7474
        %v7587 = vpack.c.bf16 %v7479, %v7475
        %v7588 = vpack.c.bf16 %v7484, %v7480
        %v7589 = vpack.c.bf16 %v7485, %v7481
        %v7590 = vpack.c.bf16 %v7486, %v7482
        %v7591 = vpack.c.bf16 %v7487, %v7483
        %v7592 = vpack.c.bf16 %v7492, %v7488
        %v7593 = vpack.c.bf16 %v7493, %v7489
        %v7594 = vpack.c.bf16 %v7494, %v7490
        %v7595 = vpack.c.bf16 %v7495, %v7491
        %v7596 = vpack.c.bf16 %v7500, %v7496
        %v7597 = vpack.c.bf16 %v7501, %v7497
        %v7598 = vpack.c.bf16 %v7502, %v7498
        %v7599 = vpack.c.bf16 %v7503, %v7499
        %v7600 = vpack.c.bf16 %v7508, %v7504
        %v7601 = vpack.c.bf16 %v7509, %v7505
        %v7602 = vpack.c.bf16 %v7510, %v7506
        %v7603 = vpack.c.bf16 %v7511, %v7507
        %v7604 = vpack.c.bf16 %v7516, %v7512
        %v7605 = vpack.c.bf16 %v7517, %v7513
        %v7606 = vpack.c.bf16 %v7518, %v7514
        %v7607 = vpack.c.bf16 %v7519, %v7515
        %v7608 = vpack.c.bf16 %v7524, %v7520
        %v7609 = vpack.c.bf16 %v7525, %v7521
        %v7610 = vpack.c.bf16 %v7526, %v7522
        %v7611 = vpack.c.bf16 %v7527, %v7523
        %v7612 = vpack.c.bf16 %v7532, %v7528
        %v7613 = vpack.c.bf16 %v7533, %v7529
        %v7614 = vpack.c.bf16 %v7534, %v7530
        %v7615 = vpack.c.bf16 %v7535, %v7531
        %v7616 = vpack.c.bf16 %v7540, %v7536
        %v7617 = vpack.c.bf16 %v7541, %v7537
        %v7618 = vpack.c.bf16 %v7542, %v7538
        %v7619 = vpack.c.bf16 %v7543, %v7539
        %v7620 = vpack.c.bf16 %v7548, %v7544
        %v7621 = vpack.c.bf16 %v7549, %v7545
        %v7622 = vpack.c.bf16 %v7550, %v7546
        %v7623 = vpack.c.bf16 %v7551, %v7547
        %v7624 = vpack.c.bf16 %v7556, %v7552
        %v7625 = vpack.c.bf16 %v7557, %v7553
        %v7626 = vpack.c.bf16 %v7558, %v7554
        %v7627 = vpack.c.bf16 %v7559, %v7555
        %v7628 = vpack.c.bf16 %v7564, %v7560
        %v7629 = vpack.c.bf16 %v7565, %v7561
        %v7630 = vpack.c.bf16 %v7566, %v7562
        %v7631 = vpack.c.bf16 %v7567, %v7563
        %7632 = vmatprep.subr.bf16.mxu0 %v7569
        %7633 = vmatpush1.bf16.msra.mxu0 %v7568
        %7634 = vmatprep.subr.bf16.mxu0 %v7573
        %7635 = vmatpush1.bf16.msra.mxu0 %v7572
        %7636 = vmatprep.subr.bf16.mxu0 %v7577
        %7637 = vmatpush1.bf16.msra.mxu0 %v7576
        %7638 = vmatprep.subr.bf16.mxu0 %v7581
        %7639 = vmatpush1.bf16.msra.mxu0 %v7580
        %7640 = vmatprep.subr.bf16.mxu0 %v7585
        %7641 = vmatpush1.bf16.msra.mxu0 %v7584
        %7642 = vmatprep.subr.bf16.mxu0 %v7589
        %7643 = vmatpush1.bf16.msra.mxu0 %v7588
        %7644 = vmatprep.subr.bf16.mxu0 %v7593
        %7645 = vmatpush1.bf16.msra.mxu0 %v7592
        %7646 = vmatprep.subr.bf16.mxu0 %v7597
        %7647 = vmatpush1.bf16.msra.mxu0 %v7596
        %7648 = vmatprep.subr.bf16.mxu0 %v7601
        %7649 = vmatpush1.bf16.msra.mxu0 %v7600
        %7650 = vmatprep.subr.bf16.mxu0 %v7605
        %7651 = vmatpush1.bf16.msra.mxu0 %v7604
        %7652 = vmatprep.subr.bf16.mxu0 %v7609
        %7653 = vmatpush1.bf16.msra.mxu0 %v7608
        %7654 = vmatprep.subr.bf16.mxu0 %v7613
        %7655 = vmatpush1.bf16.msra.mxu0 %v7612
        %7656 = vmatprep.subr.bf16.mxu0 %v7617
        %7657 = vmatpush1.bf16.msra.mxu0 %v7616
        %7658 = vmatprep.subr.bf16.mxu0 %v7621
        %7659 = vmatpush1.bf16.msra.mxu0 %v7620
        %7660 = vmatprep.subr.bf16.mxu0 %v7625
        %7661 = vmatpush1.bf16.msra.mxu0 %v7624
        %7662 = vmatprep.subr.bf16.mxu0 %v7629
        %7663 = vmatpush1.bf16.msra.mxu0 %v7628
        %7664 = vmatprep.mubr.bf16.mxu0 998259584
        %7665 = vmatmul.mubr.bf16.gmra.mrb[0].mxu0 998259584
        %v7666 = vpop.f32.mrb[0].mxu0
        %v7667 = vadd.f32 0.0, %v7666
        %v7668 = vpop.f32.mrb[0].mxu0
        %v7669 = vadd.f32 0.0, %v7668
        %v7670 = vpop.f32.mrb[0].mxu0
        %v7671 = vpop.f32.mrb[0].mxu0
        %7672 = vdwg.mxu0
        %7673 = vmatprep.subr.bf16.mxu0 %v7571
        %7674 = vmatpush1.bf16.msra.mxu0 %v7570
        %7675 = vmatprep.subr.bf16.mxu0 %v7575
        %7676 = vmatpush1.bf16.msra.mxu0 %v7574
        %7677 = vmatprep.subr.bf16.mxu0 %v7579
        %7678 = vmatpush1.bf16.msra.mxu0 %v7578
        %7679 = vmatprep.subr.bf16.mxu0 %v7583
        %7680 = vmatpush1.bf16.msra.mxu0 %v7582
        %7681 = vmatprep.subr.bf16.mxu0 %v7587
        %7682 = vmatpush1.bf16.msra.mxu0 %v7586
        %7683 = vmatprep.subr.bf16.mxu0 %v7591
        %7684 = vmatpush1.bf16.msra.mxu0 %v7590
        %7685 = vmatprep.subr.bf16.mxu0 %v7595
        %7686 = vmatpush1.bf16.msra.mxu0 %v7594
        %7687 = vmatprep.subr.bf16.mxu0 %v7599
        %7688 = vmatpush1.bf16.msra.mxu0 %v7598
        %7689 = vmatprep.subr.bf16.mxu0 %v7603
        %7690 = vmatpush1.bf16.msra.mxu0 %v7602
        %7691 = vmatprep.subr.bf16.mxu0 %v7607
        %7692 = vmatpush1.bf16.msra.mxu0 %v7606
        %7693 = vmatprep.subr.bf16.mxu0 %v7611
        %7694 = vmatpush1.bf16.msra.mxu0 %v7610
        %7695 = vmatprep.subr.bf16.mxu0 %v7615
        %7696 = vmatpush1.bf16.msra.mxu0 %v7614
        %7697 = vmatprep.subr.bf16.mxu0 %v7619
        %7698 = vmatpush1.bf16.msra.mxu0 %v7618
        %7699 = vmatprep.subr.bf16.mxu0 %v7623
        %7700 = vmatpush1.bf16.msra.mxu0 %v7622
        %7701 = vmatprep.subr.bf16.mxu0 %v7627
        %7702 = vmatpush1.bf16.msra.mxu0 %v7626
        %7703 = vmatprep.subr.bf16.mxu0 %v7631
        %7704 = vmatpush1.bf16.msra.mxu0 %v7630
        %7705 = vmatprep.mubr.bf16.mxu0 998259584
        %7706 = vmatmul.mubr.bf16.gmra.mrb[0].mxu0 998259584
        %v7707 = vpop.f32.mrb[0].mxu0
        %v7708 = vadd.f32 0.0, %v7707
        %v7709 = vpop.f32.mrb[0].mxu0
        %v7710 = vadd.f32 0.0, %v7709
        %v7711 = vpop.f32.mrb[0].mxu0
        %v7712 = vpop.f32.mrb[0].mxu0
        %7713 = vdwg.mxu0
        %v7718 = vcombine.low %v7667, %v7669
        %v7719 = vcombine.low %v7708, %v7710
        %v7721 = vunpack.c.l.s4 1966171168
        %v7722 = vunpack.c.0.s8 %v7721
        %v7723 = vlaneseq
        %v7724 = vshrl.u32 %v7723, 7
        %v7725 = vsub.s32 %v7722, %v7724
        %v7726 = vrot.slane %v7718, %v7725
        %v7728 = vunpack.c.l.s4 1966171168
        %v7729 = vunpack.c.0.s8 %v7728
        %v7730 = vlaneseq
        %v7731 = vshrl.u32 %v7730, 7
        %v7732 = vsub.s32 %v7729, %v7731
        %v7733 = vrot.slane %v7719, %v7732
        %v7734 = vcombine.low %v7726, %v7733
        %v7736 = vunpack.c.l.s4 1966171168
        %v7737 = vunpack.c.0.s8 %v7736
        %v7738 = vlaneseq
        %v7739 = vshrl.u32 %v7738, 7
        %v7740 = vsub.s32 %v7737, %v7739
        %v7741 = vrot.slane %v7734, %v7740
        %v7743 = vlaneseq
        %vm7744 = vcmp.ge.s32.totalorder %v7743, 0
        %vm7745 = vcmp.lt.s32.totalorder %v7743, 512
        %vm7746 = vmand %vm7744, %vm7745
        %7747 = vst.msk [vmem:[%s818] sm:$0xf] %vm7746, %v7741
        %s7748 = sand.u32 %s476, 1
        %s7749 = scalar_lea.sflag [#allocation4], %s7748
        %s7750 = sand.u32 %s476, 1
        %s7751 = smul.addr %s7750, 4
        %s7752 = scalar_lea.vmem [#allocation27], %s7751
        // Predicated region
        $region161: #{tpu_custom_call.1} parent=99 // pred_check
          %p7753 = pneg %p486
        $region162: #{tpu_custom_call.1} parent=99 // pred_check_branch
          %7755 = sbr.rel (%p7753) target = $region164
        $region163: #{tpu_custom_call.1} parent=99 // pred_region
          %s7757 = ssub.s32 64, 64
          %7758 = vsyncadd %s7749, %s7757
          %s7759 = smul.addr %s43, 4
          %s7760 = smul.addr %s7759, 16
          %s7761 = scalar_lea.hbm %s20, %s7760
          %s7763 = sshll.u32 %s7752, 4
          %s7764 = int_to_ptr.vmem [resolvable:$true] %s7763
          %7766 = dma.vmem_to_hbm [thread:$0]  %s7764, 64, %s7761, %s7749
        $region164: #{tpu_custom_call.1} parent=99 // pred_fallthru
          _
      $region100: #{tpu_custom_call.1} parent=5 // pred_fallthru
        _
      %p7767 = scmp.le.s32.totalorder 2, %s38
      // Predicated region
      $region165: #{tpu_custom_call.1} parent=5 // pred_check
        %p7768 = pneg %p7767
      $region166: #{tpu_custom_call.1} parent=5 // pred_check_branch
        %7770 = sbr.rel (%p7768) target = $region168
      $region167: #{tpu_custom_call.1} parent=5 // pred_region
        %s7771 = ssub.s32 %s38, 2
        // Predicated region
        $region169: #{tpu_custom_call.1} parent=167 // pred_check
          %p7772 = pneg %p492
        $region170: #{tpu_custom_call.1} parent=167 // pred_check_branch
          %7774 = sbr.rel (%p7772) target = $region172
        $region171: #{tpu_custom_call.1} parent=167 // pred_region
          %s7775 = sand.u32 %s477, 1
          %s7776 = scalar_lea.sflag [#allocation4], %s7775
          %s7777 = sand.u32 %s477, 1
          %s7778 = smul.addr %s7777, 4
          %s7779 = scalar_lea.vmem [#allocation27], %s7778
          %7780 = dma.done %s7776, 64
        $region172: #{tpu_custom_call.1} parent=167 // pred_fallthru
          _
      $region168: #{tpu_custom_call.1} parent=5 // pred_fallthru
        _
    $region6: #{tpu_custom_call.1} parent=1 // loop_footer
      %s42 = sadd.s32 1, %s38
    $region7: #{tpu_custom_call.1} parent=1 // loop_footer_branch
      %37 = sbr.rel target = $region3
    $region8: #{tpu_custom_call.1} parent=1 // loop_exit
      _
    %7781 = vsyncpa [#allocation3], 1
    %s7782 = scalar_lea.sflag [#allocation3], 1
    %7783 = vsyncpa %s7782, 1
    %7784 = vsyncpa [#allocation8], 1
    %7785 = vsyncpa [#allocation11], 1
    %7786 = vsyncpa [#allocation14], 1
    %7787 = vsyncpa [#allocation17], 1
    %7788 = vsyncpa [#allocation20], 1
    %7789 = vsyncpa [#allocation23], 1
    %7790 = vsyncpa [#allocation26], 1
    %7791 = vsyncpa [#allocation4], 1
    %s7792 = scalar_lea.sflag [#allocation4], 1
    %7793 = vsyncpa %s7792, 1
    %7794 = vsyncpa [#allocation5], 1
    %s7795 = scalar_lea.sflag [#allocation5], 1
    %7796 = vsyncpa %s7795, 1

</llo_original>
